<compile_context>
chip_gen: v6e
topology: v6e:2x2x1
jax: 0.10.0
libtpu: 0.0.40
codegen_flags: <defaults>
</compile_context>

<pallas_src>
import functools
import numpy as np

import jax
import jax.numpy as jnp
from jax import lax
from jax.experimental import pallas as pl
from jax.experimental.pallas import tpu as pltpu

EPS = 1e-5
_SQRT1_2 = 0.7071067811865476
_GELU_C = 0.7978845608028654          # sqrt(2/pi)


def _layernorm(x, g, b):
    # f32 statistics, biased variance, eps inside rsqrt == torch.nn.LayerNorm.
    mu = jnp.mean(x, axis=-1, keepdims=True)
    var = jnp.mean((x - mu) ** 2, axis=-1, keepdims=True)
    return (x - mu) * lax.rsqrt(var + EPS) * g + b


# -------------------- fused depth-stack LeWin block kernel -------------------

def lewin_stack_kernel(x_ref, g1_ref, b1_ref, wqkv_ref, bqkv_ref, bias_ref,
                       wp_ref, bp_ref, g2_ref, b2_ref,
                       w1_ref, bm1_ref, w2_ref, bm2_ref, o_ref, attn_scratch,
                       *, num_heads, head_dim, win_size, compute_dtype,
                       exact_gelu):
    d = pl.program_id(2)                      # block index within the stack
    C = num_heads * head_dim
    N = win_size * win_size
    wins = x_ref.shape[1]                     # whole windows in this tile
    tokens = wins * N

    # Seed the VMEM-resident activation from HBM at the first block.  The
    # output block index is constant along the depth axis, so later blocks
    # read the previous block's result straight out of o_ref (no HBM round
    # trip between blocks); the block is written back to HBM once per group.
    @pl.when(d == 0)
    def _():
        o_ref[...] = x_ref[...]

    x2 = o_ref[...].reshape(tokens, C).astype(jnp.float32)

    # ---- LN1 (f32 statistics) ----
    ln1 = _layernorm(x2, g1_ref[0], b1_ref[0])

    # ---- fused QKV projection (bf16 on the MXU, f32 accumulation).  The
    # attention scale is already folded into the Q columns of wqkv/bqkv. ----
    qkv = jnp.dot(ln1.astype(compute_dtype), wqkv_ref[0],
                  preferred_element_type=jnp.float32) + bqkv_ref[0]
    q = qkv[:, 0:C].reshape(wins, N, C).astype(compute_dtype)
    k = qkv[:, C:2 * C].reshape(wins, N, C).astype(compute_dtype)
    v = qkv[:, 2 * C:3 * C].reshape(wins, N, C).astype(compute_dtype)
    bias = bias_ref[0]                        # (num_heads, N, N)

    # ---- window-batched attention; heads as a short unrolled loop ----
    # TODO(synk): the head axis stays a small unrolled loop of head_dim-wide
    # lane slices (a full (heads, N, head_dim) relayout needs a non-minormost
    # transpose Mosaic does not lower).  The window axis is fully MXU-batched,
    # per-head outputs land in a (tokens, C) VMEM scratch at their lane slice,
    # and ONE full K=C output projection replaces num_heads K=head_dim dots.
    for hh in range(num_heads):
        sl = slice(hh * head_dim, (hh + 1) * head_dim)
        s = jnp.einsum('bqd,bkd->bqk', q[:, :, sl], k[:, :, sl],
                       preferred_element_type=jnp.float32)     # (wins, N, N)
        s = s + bias[hh][None].astype(jnp.float32)
        s = s - jnp.max(s, axis=-1, keepdims=True)
        e = jnp.exp(s)
        p = e * pl.reciprocal(jnp.sum(e, axis=-1, keepdims=True), approx=True)
        o_h = jnp.einsum('bqk,bkd->bqd', p.astype(compute_dtype), v[:, :, sl],
                         preferred_element_type=jnp.float32)    # (wins, N, hd)
        attn_scratch[:, hh * head_dim:(hh + 1) * head_dim] = (
            o_h.reshape(tokens, head_dim))

    attn = jnp.dot(attn_scratch[...].astype(compute_dtype), wp_ref[0],
                   preferred_element_type=jnp.float32) + bp_ref[0]

    # ---- residual 1 ----
    y = x2 + attn

    # ---- LN2 + FFN (GELU) + residual 2 ----
    ln2 = _layernorm(y, g2_ref[0], b2_ref[0])
    hdn = jnp.dot(ln2.astype(compute_dtype), w1_ref[0],
                  preferred_element_type=jnp.float32) + bm1_ref[0]
    if exact_gelu:
        hdn = 0.5 * hdn * (1.0 + lax.erf(hdn * _SQRT1_2))       # exact GELU
    else:
        # tanh GELU: routes the transcendental to the otherwise-idle EUP slot.
        hdn = 0.5 * hdn * (1.0 + jnp.tanh(
            _GELU_C * (hdn + 0.044715 * (hdn * hdn * hdn))))
    mlp = jnp.dot(hdn.astype(compute_dtype), w2_ref[0],
                  preferred_element_type=jnp.float32) + bm2_ref[0]

    o_ref[...] = (y + mlp).reshape(o_ref.shape).astype(o_ref.dtype)


# ------------------------------ Pallas wrapper -------------------------------

def pallas_lewin_stack(xw, p, *, num_heads, win_size, wins_per_group,
                       compute_dtype, exact_gelu, vmem_limit):
    """xw: window-major activations (B, nwin, N, C). Runs all depth blocks."""
    B, nwin, N, C = xw.shape
    depth = p['wqkv'].shape[0]
    G = nwin // wins_per_group
    tokens = wins_per_group * N

    kern = functools.partial(
        lewin_stack_kernel, num_heads=num_heads, head_dim=C // num_heads,
        win_size=win_size, compute_dtype=compute_dtype, exact_gelu=exact_gelu)

    # With depth > 1 the weight blocks change every step -> keep the default
    # double buffering so the next block's weights prefetch under compute.
    # With depth == 1 they are constant -> single-buffer to save VMEM (v7x).
    wkw = {'pipeline_mode': pl.Buffered(1)} if depth == 1 else {}

    def wspec(arr):                      # per-depth-slice weight spec
        nd = arr.ndim
        return pl.BlockSpec((1,) + tuple(arr.shape[1:]),
                            lambda b, g, d: (d,) + (0,) * (nd - 1), **wkw)

    # Activation tile: `wins_per_group` whole windows; block index constant
    # along the depth axis -> resident accumulator across the block stack.
    act_spec = pl.BlockSpec((1, wins_per_group, N, C),
                            lambda b, g, d: (b, g, 0, 0))

    return pl.pallas_call(
        kern,
        out_shape=jax.ShapeDtypeStruct(xw.shape, xw.dtype),
        grid=(B, G, depth),
        in_specs=[act_spec,
                  wspec(p['g1']), wspec(p['b1']),
                  wspec(p['wqkv']), wspec(p['bqkv']), wspec(p['bias']),
                  wspec(p['wproj']), wspec(p['bproj']),
                  wspec(p['g2']), wspec(p['b2']),
                  wspec(p['w1']), wspec(p['bm1']),
                  wspec(p['w2']), wspec(p['bm2'])],
        out_specs=act_spec,
        scratch_shapes=[pltpu.VMEM((tokens, C), jnp.float32)],
        compiler_params=pltpu.CompilerParams(
            dimension_semantics=("parallel", "parallel", "arbitrary"),
            vmem_limit_bytes=vmem_limit),
    )(xw, p['g1'], p['b1'], p['wqkv'], p['bqkv'], p['bias'],
      p['wproj'], p['bproj'], p['g2'], p['b2'],
      p['w1'], p['bm1'], p['w2'], p['bm2'])


# --------------------------------- params ------------------------------------

def relative_position_index(ws):
    coords = np.stack(np.meshgrid(np.arange(ws), np.arange(ws), indexing='ij'))
    coords_flat = coords.reshape(2, -1)
    rel = coords_flat[:, :, None] - coords_flat[:, None, :]
    rel = rel.transpose(1, 2, 0).astype(np.int64)
    rel[:, :, 0] += ws - 1
    rel[:, :, 1] += ws - 1
    rel[:, :, 0] *= 2 * ws - 1
    return rel.sum(-1)                          # (N, N)


def init_block_params(key, dim, num_heads, win_size, mlp_ratio, rp_index,
                      compute_dtype):
    hidden = int(dim * mlp_ratio)
    N = win_size * win_size
    head_dim = dim // num_heads
    ks = jax.random.split(key, 5)
    table = 0.02 * jax.random.normal(
        ks[1], ((2 * win_size - 1) ** 2, num_heads), jnp.float32)
    # relative-position bias is a constant of the parameters: precompute the
    # gathered + permuted (num_heads, N, N) tensor once at init time.  Stored
    # in compute_dtype (upcast at the f32 score add) to halve its VMEM/DMA.
    bias = table[np.asarray(rp_index).reshape(-1)]
    bias = bias.reshape(N, N, num_heads).transpose(2, 0, 1)
    # fold the attention scale (head_dim**-0.5) into the Q third of the fused
    # QKV projection -> removes an in-kernel (tokens, C) multiply per step.
    col_scale = jnp.concatenate(
        [jnp.full((dim,), head_dim ** -0.5, jnp.float32),
         jnp.ones((2 * dim,), jnp.float32)])
    wqkv = (0.02 * jax.random.normal(ks[0], (dim, 3 * dim), jnp.float32)
            * col_scale[None, :])
    bqkv = jnp.zeros((1, 3 * dim), jnp.float32) * col_scale[None, :]
    return {
        'g1': jnp.ones((1, dim), jnp.float32),
        'b1': jnp.zeros((1, dim), jnp.float32),
        'wqkv': wqkv.astype(compute_dtype),
        'bqkv': bqkv,
        'bias': jnp.asarray(bias, compute_dtype),
        'wproj': (0.02 * jax.random.normal(ks[2], (dim, dim),
                                           jnp.float32)).astype(compute_dtype),
        'bproj': jnp.zeros((1, dim), jnp.float32),
        'g2': jnp.ones((1, dim), jnp.float32),
        'b2': jnp.zeros((1, dim), jnp.float32),
        'w1': (0.02 * jax.random.normal(ks[3], (dim, hidden),
                                        jnp.float32)).astype(compute_dtype),
        'bm1': jnp.zeros((1, hidden), jnp.float32),
        'w2': (0.02 * jax.random.normal(ks[4], (hidden, dim),
                                        jnp.float32)).astype(compute_dtype),
        'bm2': jnp.zeros((1, dim), jnp.float32),
    }


def init_layer_params(key, dim, depth, num_heads, win_size, mlp_ratio,
                      compute_dtype):
    rp_index = relative_position_index(win_size)
    keys = jax.random.split(key, depth)
    blocks = [init_block_params(keys[i], dim, num_heads, win_size, mlp_ratio,
                                rp_index, compute_dtype)
              for i in range(depth)]
    # stack every per-block parameter along a leading depth axis
    return jax.tree_util.tree_map(lambda *xs: jnp.stack(xs, axis=0), *blocks)


# ------------------------------- sizing helpers -------------------------------

def _default_vmem_limit():
    # Size the Mosaic VMEM limit from the actual part (v5e/v6e: 128 MiB,
    # v7x: 64 MiB) instead of a fixed 32 MiB cap; leave headroom for
    # compiler-internal scratch.
    try:
        cap = int(pltpu.get_tpu_info().vmem_capacity_bytes)
        return int(min(cap * 3 // 4, 96 * 1024 * 1024))
    except Exception:
        return 64 * 1024 * 1024


def _choose_windows_per_group(nwin, N, C, hidden, num_heads,
                              budget_bytes=24 * 1024 * 1024):
    """Pick how many whole windows each grid step processes.

    Prefer the whole image (fewest grid steps, biggest matmul M); otherwise
    the largest multiple-of-8 divisor of nwin whose estimated f32 working set
    stays inside the budget (keeps v7x's 64 MiB part safe).
    """
    per_win = N * (10 * C + 3 * hidden) * 4 + 2 * num_heads * N * N * 4
    if nwin * per_win <= budget_bytes:
        return nwin
    best = 0
    cand = 8
    while cand < nwin:
        if nwin % cand == 0 and cand * per_win <= budget_bytes:
            best = cand
        cand += 8
    return best if best > 0 else nwin


# ------------------------------ layer forward ---------------------------------

@functools.partial(jax.jit,
                   static_argnames=('h', 'w', 'num_heads', 'win_size',
                                    'wins_per_group', 'compute_dtype',
                                    'exact_gelu', 'vmem_limit'))
def uformer_layer_forward(x, params, *, h, w, num_heads, win_size,
                          wins_per_group, compute_dtype, exact_gelu,
                          vmem_limit):
    B, L, C = x.shape
    ws = win_size
    nH, nW = h // ws, w // ws
    nwin, N = nH * nW, ws * ws
    # One window_partition transpose in / window_reverse out for the WHOLE
    # stack of blocks (shift_size == 0 for every block -> identical windows).
    xw = x.reshape(B, nH, ws, nW, ws, C).transpose(0, 1, 3, 2, 4, 5)
    xw = xw.reshape(B, nwin, N, C)
    yw = pallas_lewin_stack(xw, params, num_heads=num_heads, win_size=ws,
                            wins_per_group=wins_per_group,
                            compute_dtype=compute_dtype,
                            exact_gelu=exact_gelu, vmem_limit=vmem_limit)
    y = yw.reshape(B, nH, nW, ws, ws, C).transpose(0, 1, 3, 2, 4, 5)
    return y.reshape(B, L, C)


class BasicUformerLayerPallas:
    """Pallas-TPU equivalent of BasicUformerLayer (shift_size=0 path).

    Pass bf16 activations to carry the inter-layer activation in bf16 over
    HBM (v5e bandwidth); in-kernel LN/softmax/residual math is always f32.
    """

    def __init__(self, key, dim, depth, num_heads, win_size, mlp_ratio=4.0,
                 compute_dtype=jnp.bfloat16, exact_gelu=False):
        assert dim % num_heads == 0
        self.dim = dim
        self.depth = depth
        self.num_heads = num_heads
        self.win_size = win_size
        self.hidden = int(dim * mlp_ratio)
        self.compute_dtype = compute_dtype
        self.exact_gelu = exact_gelu
        self.vmem_limit = _default_vmem_limit()
        self.params = init_layer_params(key, dim, depth, num_heads, win_size,
                                        mlp_ratio, compute_dtype)

    def __call__(self, x, h, w, mask=None, flows=None, state=None):
        # attn_mode contains 'nl' -> shift_flag False -> no shift mask is ever
        # built; drop/drop_path are 0 -> identity.  mask/flows/state unused.
        # TODO(synk): h % win_size == 0 and w % win_size == 0 is required (the
        # reference window_partition has the same constraint; no padding path).
        B, L, C = x.shape
        assert L == h * w and C == self.dim
        assert h % self.win_size == 0 and w % self.win_size == 0
        nwin = (h // self.win_size) * (w // self.win_size)
        wpg = _choose_windows_per_group(nwin, self.win_size ** 2, self.dim,
                                        self.hidden, self.num_heads)
        return uformer_layer_forward(
            x, self.params, h=int(h), w=int(w), num_heads=self.num_heads,
            win_size=self.win_size, wins_per_group=int(wpg),
            compute_dtype=self.compute_dtype, exact_gelu=self.exact_gelu,
            vmem_limit=int(self.vmem_limit))


# ----------------------------------- main -------------------------------------

if __name__ == "__main__":
    B, h, w = 2, 16, 16
    dim = 32
    depth = 2
    num_heads = 4
    win_size = 8
    L = h * w

    key = jax.random.PRNGKey(0)
    k_x, k_p = jax.random.split(key)
    x = jax.random.normal(k_x, (B, L, dim), jnp.float32)

    layer = BasicUformerLayerPallas(k_p, dim=dim, depth=depth,
                                    num_heads=num_heads, win_size=win_size,
                                    mlp_ratio=4.0)
    out = layer(x, h, w)
    out = jax.block_until_ready(out)
    assert out.shape == (B, L, dim) and out.dtype == jnp.float32
    assert bool(jnp.all(jnp.isfinite(out)))
    print("KERNEL_OK")
</pallas_src>

<mosaic_0001>
module attributes {stable_mosaic.version = 11 : i64} {
  func.func @lewin_stack_kernel(%arg0: i32, %arg1: i32, %arg2: i32, %arg3: memref<1x4x64x32xf32, #tpu.memory_space<vmem>>, %arg4: memref<1x1x32xf32, #tpu.memory_space<vmem>>, %arg5: memref<1x1x32xf32, #tpu.memory_space<vmem>>, %arg6: memref<1x32x96xbf16, #tpu.memory_space<vmem>>, %arg7: memref<1x1x96xf32, #tpu.memory_space<vmem>>, %arg8: memref<1x4x64x64xbf16, #tpu.memory_space<vmem>>, %arg9: memref<1x32x32xbf16, #tpu.memory_space<vmem>>, %arg10: memref<1x1x32xf32, #tpu.memory_space<vmem>>, %arg11: memref<1x1x32xf32, #tpu.memory_space<vmem>>, %arg12: memref<1x1x32xf32, #tpu.memory_space<vmem>>, %arg13: memref<1x32x128xbf16, #tpu.memory_space<vmem>>, %arg14: memref<1x1x128xf32, #tpu.memory_space<vmem>>, %arg15: memref<1x128x32xbf16, #tpu.memory_space<vmem>>, %arg16: memref<1x1x32xf32, #tpu.memory_space<vmem>>, %arg17: memref<1x4x64x32xf32, #tpu.memory_space<vmem>>, %arg18: memref<256x32xf32, #tpu.memory_space<vmem>>) attributes {dimension_semantics = [#tpu.dimension_semantics<parallel>, #tpu.dimension_semantics<parallel>, #tpu.dimension_semantics<arbitrary>], iteration_bounds = array<i64: 2, 1, 2>, scalar_prefetch = 0 : i64, scratch_operands = 1 : i64, tpu.core_type = #tpu.core_type<tc>, window_params = [{transform_indices = @transform_0, window_bounds = array<i64: 1, 4, 64, 32>}, {transform_indices = @transform_1, window_bounds = array<i64: 1, 1, 32>}, {transform_indices = @transform_2, window_bounds = array<i64: 1, 1, 32>}, {transform_indices = @transform_3, window_bounds = array<i64: 1, 32, 96>}, {transform_indices = @transform_4, window_bounds = array<i64: 1, 1, 96>}, {transform_indices = @transform_5, window_bounds = array<i64: 1, 4, 64, 64>}, {transform_indices = @transform_6, window_bounds = array<i64: 1, 32, 32>}, {transform_indices = @transform_7, window_bounds = array<i64: 1, 1, 32>}, {transform_indices = @transform_8, window_bounds = array<i64: 1, 1, 32>}, {transform_indices = @transform_9, window_bounds = array<i64: 1, 1, 32>}, {transform_indices = @transform_10, window_bounds = array<i64: 1, 32, 128>}, {transform_indices = @transform_11, window_bounds = array<i64: 1, 1, 128>}, {transform_indices = @transform_12, window_bounds = array<i64: 1, 128, 32>}, {transform_indices = @transform_13, window_bounds = array<i64: 1, 1, 32>}, {transform_indices = @transform_14, window_bounds = array<i64: 1, 4, 64, 32>}]} {
    %c0_i32 = arith.constant 0 : i32
    %0 = arith.cmpi eq, %arg2, %c0_i32 : i32
    %1 = arith.extui %0 : i1 to i32
    %c0_i32_0 = arith.constant 0 : i32
    %2 = arith.cmpi ne, %1, %c0_i32_0 : i32
    scf.if %2 {
      %c0_88 = arith.constant 0 : index
      %c0_89 = arith.constant 0 : index
      %c0_90 = arith.constant 0 : index
      %c0_91 = arith.constant 0 : index
      %214 = vector.load %arg3[%c0_88, %c0_89, %c0_90, %c0_91] : memref<1x4x64x32xf32, #tpu.memory_space<vmem>>, vector<1x4x64x32xf32>
      %c0_92 = arith.constant 0 : index
      %c0_93 = arith.constant 0 : index
      %c0_94 = arith.constant 0 : index
      %c0_95 = arith.constant 0 : index
      %215 = vector.load %arg17[%c0_92, %c0_93, %c0_94, %c0_95] : memref<1x4x64x32xf32, #tpu.memory_space<vmem>>, vector<1x4x64x32xf32>
      tpu.vector_store %arg17[%c0_92, %c0_93, %c0_94, %c0_95], %214 {strides = array<i32>} : memref<1x4x64x32xf32, #tpu.memory_space<vmem>>, vector<1x4x64x32xf32>,
    } else {
    }
    %c0 = arith.constant 0 : index
    %c0_1 = arith.constant 0 : index
    %c0_2 = arith.constant 0 : index
    %c0_3 = arith.constant 0 : index
    %3 = vector.load %arg17[%c0, %c0_1, %c0_2, %c0_3] : memref<1x4x64x32xf32, #tpu.memory_space<vmem>>, vector<1x4x64x32xf32>
    %4 = vector.shape_cast %3 : vector<1x4x64x32xf32> to vector<256x32xf32>
    %c0_4 = arith.constant 0 : index
    %c0_5 = arith.constant 0 : index
    %c0_6 = arith.constant 0 : index
    %5 = vector.load %arg4[%c0_4, %c0_5, %c0_6] : memref<1x1x32xf32, #tpu.memory_space<vmem>>, vector<1x1x32xf32>
    %6 = vector.shape_cast %5 : vector<1x1x32xf32> to vector<1x32xf32>
    %c0_7 = arith.constant 0 : index
    %c0_8 = arith.constant 0 : index
    %c0_9 = arith.constant 0 : index
    %7 = vector.load %arg5[%c0_7, %c0_8, %c0_9] : memref<1x1x32xf32, #tpu.memory_space<vmem>>, vector<1x1x32xf32>
    %8 = vector.shape_cast %7 : vector<1x1x32xf32> to vector<1x32xf32>
    %cst = arith.constant dense<0.000000e+00> : vector<256xf32>
    %9 = vector.multi_reduction <add>, %4, %cst [1] : vector<256x32xf32> to vector<256xf32>
    %10 = vector.shape_cast %9 : vector<256xf32> to vector<256x1xf32>
    %cst_10 = arith.constant 3.200000e+01 : f32
    %11 = vector.broadcast %cst_10 : f32 to vector<256x1xf32>
    %12 = arith.divf %10, %11 : vector<256x1xf32>
    %13 = vector.broadcast %12 : vector<256x1xf32> to vector<256x32xf32>
    %14 = arith.subf %4, %13 : vector<256x32xf32>
    %15 = arith.mulf %14, %14 : vector<256x32xf32>
    %cst_11 = arith.constant dense<0.000000e+00> : vector<256xf32>
    %16 = vector.multi_reduction <add>, %15, %cst_11 [1] : vector<256x32xf32> to vector<256xf32>
    %17 = vector.shape_cast %16 : vector<256xf32> to vector<256x1xf32>
    %cst_12 = arith.constant 3.200000e+01 : f32
    %18 = vector.broadcast %cst_12 : f32 to vector<256x1xf32>
    %19 = arith.divf %17, %18 : vector<256x1xf32>
    %20 = vector.broadcast %12 : vector<256x1xf32> to vector<256x32xf32>
    %21 = arith.subf %4, %20 : vector<256x32xf32>
    %cst_13 = arith.constant 9.99999974E-6 : f32
    %22 = vector.broadcast %cst_13 : f32 to vector<256x1xf32>
    %23 = arith.addf %19, %22 : vector<256x1xf32>
    %24 = math.rsqrt %23 : vector<256x1xf32>
    %25 = vector.broadcast %24 : vector<256x1xf32> to vector<256x32xf32>
    %26 = arith.mulf %21, %25 : vector<256x32xf32>
    %27 = vector.broadcast %6 : vector<1x32xf32> to vector<256x32xf32>
    %28 = arith.mulf %26, %27 : vector<256x32xf32>
    %29 = vector.broadcast %8 : vector<1x32xf32> to vector<256x32xf32>
    %30 = arith.addf %28, %29 : vector<256x32xf32>
    %31 = arith.truncf %30 : vector<256x32xf32> to vector<256x32xbf16>
    %c0_14 = arith.constant 0 : index
    %c0_15 = arith.constant 0 : index
    %c0_16 = arith.constant 0 : index
    %32 = vector.load %arg6[%c0_14, %c0_15, %c0_16] : memref<1x32x96xbf16, #tpu.memory_space<vmem>>, vector<1x32x96xbf16>
    %33 = vector.shape_cast %32 : vector<1x32x96xbf16> to vector<32x96xbf16>
    %cst_17 = arith.constant dense<0.000000e+00> : vector<256x96xf32>
    %34 = tpu.matmul %31, %33, %cst_17 {dimension_numbers = #tpu.dot_dimension_numbers<[1], [0], [0], [1], [0, 0, 1, 1], [], []>} : vector<256x32xbf16>, vector<32x96xbf16>, vector<256x96xf32> -> vector<256x96xf32>
    %c0_18 = arith.constant 0 : index
    %c0_19 = arith.constant 0 : index
    %c0_20 = arith.constant 0 : index
    %35 = vector.load %arg7[%c0_18, %c0_19, %c0_20] : memref<1x1x96xf32, #tpu.memory_space<vmem>>, vector<1x1x96xf32>
    %36 = vector.shape_cast %35 : vector<1x1x96xf32> to vector<1x96xf32>
    %37 = vector.broadcast %36 : vector<1x96xf32> to vector<256x96xf32>
    %38 = arith.addf %34, %37 : vector<256x96xf32>
    %39 = vector.extract_strided_slice %38 {offsets = [0, 0], sizes = [256, 32], strides = [1, 1]} : vector<256x96xf32> to vector<256x32xf32>
    %40 = vector.shape_cast %39 : vector<256x32xf32> to vector<4x64x32xf32>
    %41 = arith.truncf %40 : vector<4x64x32xf32> to vector<4x64x32xbf16>
    %42 = vector.extract_strided_slice %38 {offsets = [0, 32], sizes = [256, 32], strides = [1, 1]} : vector<256x96xf32> to vector<256x32xf32>
    %43 = vector.shape_cast %42 : vector<256x32xf32> to vector<4x64x32xf32>
    %44 = arith.truncf %43 : vector<4x64x32xf32> to vector<4x64x32xbf16>
    %45 = vector.extract_strided_slice %38 {offsets = [0, 64], sizes = [256, 32], strides = [1, 1]} : vector<256x96xf32> to vector<256x32xf32>
    %46 = vector.shape_cast %45 : vector<256x32xf32> to vector<4x64x32xf32>
    %47 = arith.truncf %46 : vector<4x64x32xf32> to vector<4x64x32xbf16>
    %c0_21 = arith.constant 0 : index
    %c0_22 = arith.constant 0 : index
    %c0_23 = arith.constant 0 : index
    %c0_24 = arith.constant 0 : index
    %48 = vector.load %arg8[%c0_21, %c0_22, %c0_23, %c0_24] : memref<1x4x64x64xbf16, #tpu.memory_space<vmem>>, vector<1x4x64x64xbf16>
    %49 = vector.shape_cast %48 : vector<1x4x64x64xbf16> to vector<4x64x64xbf16>
    %50 = vector.extract_strided_slice %41 {offsets = [0, 0, 0], sizes = [4, 64, 8], strides = [1, 1, 1]} : vector<4x64x32xbf16> to vector<4x64x8xbf16>
    %51 = vector.extract_strided_slice %44 {offsets = [0, 0, 0], sizes = [4, 64, 8], strides = [1, 1, 1]} : vector<4x64x32xbf16> to vector<4x64x8xbf16>
    "tpu.trace_start"() <{level = 10 : i32, message = "bqd,bkd->bqk"}> : () -> ()
    %cst_25 = arith.constant dense<0.000000e+00> : vector<4x64x64xf32>
    %52 = tpu.matmul %50, %51, %cst_25 {dimension_numbers = #tpu.dot_dimension_numbers<[2], [2], [1], [1], [0, 0, 0, 1, 1, 1], [0], [0]>} : vector<4x64x8xbf16>, vector<4x64x8xbf16>, vector<4x64x64xf32> -> vector<4x64x64xf32>
    "tpu.trace_stop"() : () -> ()
    %53 = vector.extract_strided_slice %49 {offsets = [0, 0, 0], sizes = [1, 64, 64], strides = [1, 1, 1]} : vector<4x64x64xbf16> to vector<1x64x64xbf16>
    %54 = vector.shape_cast %53 : vector<1x64x64xbf16> to vector<64x64xbf16>
    %55 = vector.shape_cast %54 : vector<64x64xbf16> to vector<1x64x64xbf16>
    %56 = arith.extf %55 : vector<1x64x64xbf16> to vector<1x64x64xf32>
    %57 = vector.broadcast %56 : vector<1x64x64xf32> to vector<4x64x64xf32>
    %58 = arith.addf %52, %57 : vector<4x64x64xf32>
    %cst_26 = arith.constant dense<0xFF800000> : vector<4x64xf32>
    %59 = vector.multi_reduction <maximumf>, %58, %cst_26 [2] : vector<4x64x64xf32> to vector<4x64xf32>
    %60 = vector.shape_cast %59 : vector<4x64xf32> to vector<4x64x1xf32>
    %61 = vector.broadcast %60 : vector<4x64x1xf32> to vector<4x64x64xf32>
    %62 = arith.subf %58, %61 : vector<4x64x64xf32>
    %63 = math.exp %62 : vector<4x64x64xf32>
    %cst_27 = arith.constant dense<0.000000e+00> : vector<4x64xf32>
    %64 = vector.multi_reduction <add>, %63, %cst_27 [2] : vector<4x64x64xf32> to vector<4x64xf32>
    %65 = vector.shape_cast %64 : vector<4x64xf32> to vector<4x64x1xf32>
    %66 = tpu.reciprocal %65 {approx = true} : vector<4x64x1xf32> -> vector<4x64x1xf32>
    %67 = vector.broadcast %66 : vector<4x64x1xf32> to vector<4x64x64xf32>
    %68 = arith.mulf %63, %67 : vector<4x64x64xf32>
    %69 = arith.truncf %68 : vector<4x64x64xf32> to vector<4x64x64xbf16>
    %70 = vector.extract_strided_slice %47 {offsets = [0, 0, 0], sizes = [4, 64, 8], strides = [1, 1, 1]} : vector<4x64x32xbf16> to vector<4x64x8xbf16>
    "tpu.trace_start"() <{level = 10 : i32, message = "bqk,bkd->bqd"}> : () -> ()
    %cst_28 = arith.constant dense<0.000000e+00> : vector<4x64x8xf32>
    %71 = tpu.matmul %69, %70, %cst_28 {dimension_numbers = #tpu.dot_dimension_numbers<[2], [1], [1], [2], [0, 0, 0, 1, 1, 2], [0], [0]>} : vector<4x64x64xbf16>, vector<4x64x8xbf16>, vector<4x64x8xf32> -> vector<4x64x8xf32>
    "tpu.trace_stop"() : () -> ()
    %72 = vector.shape_cast %71 : vector<4x64x8xf32> to vector<256x8xf32>
    %c0_29 = arith.constant 0 : index
    %c0_30 = arith.constant 0 : index
    %73 = vector.load %arg18[%c0_29, %c0_30] : memref<256x32xf32, #tpu.memory_space<vmem>>, vector<256x8xf32>
    tpu.vector_store %arg18[%c0_29, %c0_30], %72 {strides = array<i32>} : memref<256x32xf32, #tpu.memory_space<vmem>>, vector<256x8xf32>,
    %74 = vector.extract_strided_slice %41 {offsets = [0, 0, 8], sizes = [4, 64, 8], strides = [1, 1, 1]} : vector<4x64x32xbf16> to vector<4x64x8xbf16>
    %75 = vector.extract_strided_slice %44 {offsets = [0, 0, 8], sizes = [4, 64, 8], strides = [1, 1, 1]} : vector<4x64x32xbf16> to vector<4x64x8xbf16>
    "tpu.trace_start"() <{level = 10 : i32, message = "bqd,bkd->bqk"}> : () -> ()
    %cst_31 = arith.constant dense<0.000000e+00> : vector<4x64x64xf32>
    %76 = tpu.matmul %74, %75, %cst_31 {dimension_numbers = #tpu.dot_dimension_numbers<[2], [2], [1], [1], [0, 0, 0, 1, 1, 1], [0], [0]>} : vector<4x64x8xbf16>, vector<4x64x8xbf16>, vector<4x64x64xf32> -> vector<4x64x64xf32>
    "tpu.trace_stop"() : () -> ()
    %77 = vector.extract_strided_slice %49 {offsets = [1, 0, 0], sizes = [1, 64, 64], strides = [1, 1, 1]} : vector<4x64x64xbf16> to vector<1x64x64xbf16>
    %78 = vector.shape_cast %77 : vector<1x64x64xbf16> to vector<64x64xbf16>
    %79 = vector.shape_cast %78 : vector<64x64xbf16> to vector<1x64x64xbf16>
    %80 = arith.extf %79 : vector<1x64x64xbf16> to vector<1x64x64xf32>
    %81 = vector.broadcast %80 : vector<1x64x64xf32> to vector<4x64x64xf32>
    %82 = arith.addf %76, %81 : vector<4x64x64xf32>
    %cst_32 = arith.constant dense<0xFF800000> : vector<4x64xf32>
    %83 = vector.multi_reduction <maximumf>, %82, %cst_32 [2] : vector<4x64x64xf32> to vector<4x64xf32>
    %84 = vector.shape_cast %83 : vector<4x64xf32> to vector<4x64x1xf32>
    %85 = vector.broadcast %84 : vector<4x64x1xf32> to vector<4x64x64xf32>
    %86 = arith.subf %82, %85 : vector<4x64x64xf32>
    %87 = math.exp %86 : vector<4x64x64xf32>
    %cst_33 = arith.constant dense<0.000000e+00> : vector<4x64xf32>
    %88 = vector.multi_reduction <add>, %87, %cst_33 [2] : vector<4x64x64xf32> to vector<4x64xf32>
    %89 = vector.shape_cast %88 : vector<4x64xf32> to vector<4x64x1xf32>
    %90 = tpu.reciprocal %89 {approx = true} : vector<4x64x1xf32> -> vector<4x64x1xf32>
    %91 = vector.broadcast %90 : vector<4x64x1xf32> to vector<4x64x64xf32>
    %92 = arith.mulf %87, %91 : vector<4x64x64xf32>
    %93 = arith.truncf %92 : vector<4x64x64xf32> to vector<4x64x64xbf16>
    %94 = vector.extract_strided_slice %47 {offsets = [0, 0, 8], sizes = [4, 64, 8], strides = [1, 1, 1]} : vector<4x64x32xbf16> to vector<4x64x8xbf16>
    "tpu.trace_start"() <{level = 10 : i32, message = "bqk,bkd->bqd"}> : () -> ()
    %cst_34 = arith.constant dense<0.000000e+00> : vector<4x64x8xf32>
    %95 = tpu.matmul %93, %94, %cst_34 {dimension_numbers = #tpu.dot_dimension_numbers<[2], [1], [1], [2], [0, 0, 0, 1, 1, 2], [0], [0]>} : vector<4x64x64xbf16>, vector<4x64x8xbf16>, vector<4x64x8xf32> -> vector<4x64x8xf32>
    "tpu.trace_stop"() : () -> ()
    %96 = vector.shape_cast %95 : vector<4x64x8xf32> to vector<256x8xf32>
    %c0_35 = arith.constant 0 : index
    %c8 = arith.constant 8 : index
    %97 = vector.load %arg18[%c0_35, %c8] : memref<256x32xf32, #tpu.memory_space<vmem>>, vector<256x8xf32>
    tpu.vector_store %arg18[%c0_35, %c8], %96 {strides = array<i32>} : memref<256x32xf32, #tpu.memory_space<vmem>>, vector<256x8xf32>,
    %98 = vector.extract_strided_slice %41 {offsets = [0, 0, 16], sizes = [4, 64, 8], strides = [1, 1, 1]} : vector<4x64x32xbf16> to vector<4x64x8xbf16>
    %99 = vector.extract_strided_slice %44 {offsets = [0, 0, 16], sizes = [4, 64, 8], strides = [1, 1, 1]} : vector<4x64x32xbf16> to vector<4x64x8xbf16>
    "tpu.trace_start"() <{level = 10 : i32, message = "bqd,bkd->bqk"}> : () -> ()
    %cst_36 = arith.constant dense<0.000000e+00> : vector<4x64x64xf32>
    %100 = tpu.matmul %98, %99, %cst_36 {dimension_numbers = #tpu.dot_dimension_numbers<[2], [2], [1], [1], [0, 0, 0, 1, 1, 1], [0], [0]>} : vector<4x64x8xbf16>, vector<4x64x8xbf16>, vector<4x64x64xf32> -> vector<4x64x64xf32>
    "tpu.trace_stop"() : () -> ()
    %101 = vector.extract_strided_slice %49 {offsets = [2, 0, 0], sizes = [1, 64, 64], strides = [1, 1, 1]} : vector<4x64x64xbf16> to vector<1x64x64xbf16>
    %102 = vector.shape_cast %101 : vector<1x64x64xbf16> to vector<64x64xbf16>
    %103 = vector.shape_cast %102 : vector<64x64xbf16> to vector<1x64x64xbf16>
    %104 = arith.extf %103 : vector<1x64x64xbf16> to vector<1x64x64xf32>
    %105 = vector.broadcast %104 : vector<1x64x64xf32> to vector<4x64x64xf32>
    %106 = arith.addf %100, %105 : vector<4x64x64xf32>
    %cst_37 = arith.constant dense<0xFF800000> : vector<4x64xf32>
    %107 = vector.multi_reduction <maximumf>, %106, %cst_37 [2] : vector<4x64x64xf32> to vector<4x64xf32>
    %108 = vector.shape_cast %107 : vector<4x64xf32> to vector<4x64x1xf32>
    %109 = vector.broadcast %108 : vector<4x64x1xf32> to vector<4x64x64xf32>
    %110 = arith.subf %106, %109 : vector<4x64x64xf32>
    %111 = math.exp %110 : vector<4x64x64xf32>
    %cst_38 = arith.constant dense<0.000000e+00> : vector<4x64xf32>
    %112 = vector.multi_reduction <add>, %111, %cst_38 [2] : vector<4x64x64xf32> to vector<4x64xf32>
    %113 = vector.shape_cast %112 : vector<4x64xf32> to vector<4x64x1xf32>
    %114 = tpu.reciprocal %113 {approx = true} : vector<4x64x1xf32> -> vector<4x64x1xf32>
    %115 = vector.broadcast %114 : vector<4x64x1xf32> to vector<4x64x64xf32>
    %116 = arith.mulf %111, %115 : vector<4x64x64xf32>
    %117 = arith.truncf %116 : vector<4x64x64xf32> to vector<4x64x64xbf16>
    %118 = vector.extract_strided_slice %47 {offsets = [0, 0, 16], sizes = [4, 64, 8], strides = [1, 1, 1]} : vector<4x64x32xbf16> to vector<4x64x8xbf16>
    "tpu.trace_start"() <{level = 10 : i32, message = "bqk,bkd->bqd"}> : () -> ()
    %cst_39 = arith.constant dense<0.000000e+00> : vector<4x64x8xf32>
    %119 = tpu.matmul %117, %118, %cst_39 {dimension_numbers = #tpu.dot_dimension_numbers<[2], [1], [1], [2], [0, 0, 0, 1, 1, 2], [0], [0]>} : vector<4x64x64xbf16>, vector<4x64x8xbf16>, vector<4x64x8xf32> -> vector<4x64x8xf32>
    "tpu.trace_stop"() : () -> ()
    %120 = vector.shape_cast %119 : vector<4x64x8xf32> to vector<256x8xf32>
    %c0_40 = arith.constant 0 : index
    %c16 = arith.constant 16 : index
    %121 = vector.load %arg18[%c0_40, %c16] : memref<256x32xf32, #tpu.memory_space<vmem>>, vector<256x8xf32>
    tpu.vector_store %arg18[%c0_40, %c16], %120 {strides = array<i32>} : memref<256x32xf32, #tpu.memory_space<vmem>>, vector<256x8xf32>,
    %122 = vector.extract_strided_slice %41 {offsets = [0, 0, 24], sizes = [4, 64, 8], strides = [1, 1, 1]} : vector<4x64x32xbf16> to vector<4x64x8xbf16>
    %123 = vector.extract_strided_slice %44 {offsets = [0, 0, 24], sizes = [4, 64, 8], strides = [1, 1, 1]} : vector<4x64x32xbf16> to vector<4x64x8xbf16>
    "tpu.trace_start"() <{level = 10 : i32, message = "bqd,bkd->bqk"}> : () -> ()
    %cst_41 = arith.constant dense<0.000000e+00> : vector<4x64x64xf32>
    %124 = tpu.matmul %122, %123, %cst_41 {dimension_numbers = #tpu.dot_dimension_numbers<[2], [2], [1], [1], [0, 0, 0, 1, 1, 1], [0], [0]>} : vector<4x64x8xbf16>, vector<4x64x8xbf16>, vector<4x64x64xf32> -> vector<4x64x64xf32>
    "tpu.trace_stop"() : () -> ()
    %125 = vector.extract_strided_slice %49 {offsets = [3, 0, 0], sizes = [1, 64, 64], strides = [1, 1, 1]} : vector<4x64x64xbf16> to vector<1x64x64xbf16>
    %126 = vector.shape_cast %125 : vector<1x64x64xbf16> to vector<64x64xbf16>
    %127 = vector.shape_cast %126 : vector<64x64xbf16> to vector<1x64x64xbf16>
    %128 = arith.extf %127 : vector<1x64x64xbf16> to vector<1x64x64xf32>
    %129 = vector.broadcast %128 : vector<1x64x64xf32> to vector<4x64x64xf32>
    %130 = arith.addf %124, %129 : vector<4x64x64xf32>
    %cst_42 = arith.constant dense<0xFF800000> : vector<4x64xf32>
    %131 = vector.multi_reduction <maximumf>, %130, %cst_42 [2] : vector<4x64x64xf32> to vector<4x64xf32>
    %132 = vector.shape_cast %131 : vector<4x64xf32> to vector<4x64x1xf32>
    %133 = vector.broadcast %132 : vector<4x64x1xf32> to vector<4x64x64xf32>
    %134 = arith.subf %130, %133 : vector<4x64x64xf32>
    %135 = math.exp %134 : vector<4x64x64xf32>
    %cst_43 = arith.constant dense<0.000000e+00> : vector<4x64xf32>
    %136 = vector.multi_reduction <add>, %135, %cst_43 [2] : vector<4x64x64xf32> to vector<4x64xf32>
    %137 = vector.shape_cast %136 : vector<4x64xf32> to vector<4x64x1xf32>
    %138 = tpu.reciprocal %137 {approx = true} : vector<4x64x1xf32> -> vector<4x64x1xf32>
    %139 = vector.broadcast %138 : vector<4x64x1xf32> to vector<4x64x64xf32>
    %140 = arith.mulf %135, %139 : vector<4x64x64xf32>
    %141 = arith.truncf %140 : vector<4x64x64xf32> to vector<4x64x64xbf16>
    %142 = vector.extract_strided_slice %47 {offsets = [0, 0, 24], sizes = [4, 64, 8], strides = [1, 1, 1]} : vector<4x64x32xbf16> to vector<4x64x8xbf16>
    "tpu.trace_start"() <{level = 10 : i32, message = "bqk,bkd->bqd"}> : () -> ()
    %cst_44 = arith.constant dense<0.000000e+00> : vector<4x64x8xf32>
    %143 = tpu.matmul %141, %142, %cst_44 {dimension_numbers = #tpu.dot_dimension_numbers<[2], [1], [1], [2], [0, 0, 0, 1, 1, 2], [0], [0]>} : vector<4x64x64xbf16>, vector<4x64x8xbf16>, vector<4x64x8xf32> -> vector<4x64x8xf32>
    "tpu.trace_stop"() : () -> ()
    %144 = vector.shape_cast %143 : vector<4x64x8xf32> to vector<256x8xf32>
    %c0_45 = arith.constant 0 : index
    %c24 = arith.constant 24 : index
    %145 = vector.load %arg18[%c0_45, %c24] : memref<256x32xf32, #tpu.memory_space<vmem>>, vector<256x8xf32>
    tpu.vector_store %arg18[%c0_45, %c24], %144 {strides = array<i32>} : memref<256x32xf32, #tpu.memory_space<vmem>>, vector<256x8xf32>,
    %c0_46 = arith.constant 0 : index
    %c0_47 = arith.constant 0 : index
    %146 = vector.load %arg18[%c0_46, %c0_47] : memref<256x32xf32, #tpu.memory_space<vmem>>, vector<256x32xf32>
    %147 = arith.truncf %146 : vector<256x32xf32> to vector<256x32xbf16>
    %c0_48 = arith.constant 0 : index
    %c0_49 = arith.constant 0 : index
    %c0_50 = arith.constant 0 : index
    %148 = vector.load %arg9[%c0_48, %c0_49, %c0_50] : memref<1x32x32xbf16, #tpu.memory_space<vmem>>, vector<1x32x32xbf16>
    %149 = vector.shape_cast %148 : vector<1x32x32xbf16> to vector<32x32xbf16>
    %cst_51 = arith.constant dense<0.000000e+00> : vector<256x32xf32>
    %150 = tpu.matmul %147, %149, %cst_51 {dimension_numbers = #tpu.dot_dimension_numbers<[1], [0], [0], [1], [0, 0, 1, 1], [], []>} : vector<256x32xbf16>, vector<32x32xbf16>, vector<256x32xf32> -> vector<256x32xf32>
    %c0_52 = arith.constant 0 : index
    %c0_53 = arith.constant 0 : index
    %c0_54 = arith.constant 0 : index
    %151 = vector.load %arg10[%c0_52, %c0_53, %c0_54] : memref<1x1x32xf32, #tpu.memory_space<vmem>>, vector<1x1x32xf32>
    %152 = vector.shape_cast %151 : vector<1x1x32xf32> to vector<1x32xf32>
    %153 = vector.broadcast %152 : vector<1x32xf32> to vector<256x32xf32>
    %154 = arith.addf %150, %153 : vector<256x32xf32>
    %155 = arith.addf %4, %154 : vector<256x32xf32>
    %c0_55 = arith.constant 0 : index
    %c0_56 = arith.constant 0 : index
    %c0_57 = arith.constant 0 : index
    %156 = vector.load %arg11[%c0_55, %c0_56, %c0_57] : memref<1x1x32xf32, #tpu.memory_space<vmem>>, vector<1x1x32xf32>
    %157 = vector.shape_cast %156 : vector<1x1x32xf32> to vector<1x32xf32>
    %c0_58 = arith.constant 0 : index
    %c0_59 = arith.constant 0 : index
    %c0_60 = arith.constant 0 : index
    %158 = vector.load %arg12[%c0_58, %c0_59, %c0_60] : memref<1x1x32xf32, #tpu.memory_space<vmem>>, vector<1x1x32xf32>
    %159 = vector.shape_cast %158 : vector<1x1x32xf32> to vector<1x32xf32>
    %cst_61 = arith.constant dense<0.000000e+00> : vector<256xf32>
    %160 = vector.multi_reduction <add>, %155, %cst_61 [1] : vector<256x32xf32> to vector<256xf32>
    %161 = vector.shape_cast %160 : vector<256xf32> to vector<256x1xf32>
    %cst_62 = arith.constant 3.200000e+01 : f32
    %162 = vector.broadcast %cst_62 : f32 to vector<256x1xf32>
    %163 = arith.divf %161, %162 : vector<256x1xf32>
    %164 = vector.broadcast %163 : vector<256x1xf32> to vector<256x32xf32>
    %165 = arith.subf %155, %164 : vector<256x32xf32>
    %166 = arith.mulf %165, %165 : vector<256x32xf32>
    %cst_63 = arith.constant dense<0.000000e+00> : vector<256xf32>
    %167 = vector.multi_reduction <add>, %166, %cst_63 [1] : vector<256x32xf32> to vector<256xf32>
    %168 = vector.shape_cast %167 : vector<256xf32> to vector<256x1xf32>
    %cst_64 = arith.constant 3.200000e+01 : f32
    %169 = vector.broadcast %cst_64 : f32 to vector<256x1xf32>
    %170 = arith.divf %168, %169 : vector<256x1xf32>
    %171 = vector.broadcast %163 : vector<256x1xf32> to vector<256x32xf32>
    %172 = arith.subf %155, %171 : vector<256x32xf32>
    %cst_65 = arith.constant 9.99999974E-6 : f32
    %173 = vector.broadcast %cst_65 : f32 to vector<256x1xf32>
    %174 = arith.addf %170, %173 : vector<256x1xf32>
    %175 = math.rsqrt %174 : vector<256x1xf32>
    %176 = vector.broadcast %175 : vector<256x1xf32> to vector<256x32xf32>
    %177 = arith.mulf %172, %176 : vector<256x32xf32>
    %178 = vector.broadcast %157 : vector<1x32xf32> to vector<256x32xf32>
    %179 = arith.mulf %177, %178 : vector<256x32xf32>
    %180 = vector.broadcast %159 : vector<1x32xf32> to vector<256x32xf32>
    %181 = arith.addf %179, %180 : vector<256x32xf32>
    %182 = arith.truncf %181 : vector<256x32xf32> to vector<256x32xbf16>
    %c0_66 = arith.constant 0 : index
    %c0_67 = arith.constant 0 : index
    %c0_68 = arith.constant 0 : index
    %183 = vector.load %arg13[%c0_66, %c0_67, %c0_68] : memref<1x32x128xbf16, #tpu.memory_space<vmem>>, vector<1x32x128xbf16>
    %184 = vector.shape_cast %183 : vector<1x32x128xbf16> to vector<32x128xbf16>
    %cst_69 = arith.constant dense<0.000000e+00> : vector<256x128xf32>
    %185 = tpu.matmul %182, %184, %cst_69 {dimension_numbers = #tpu.dot_dimension_numbers<[1], [0], [0], [1], [0, 0, 1, 1], [], []>} : vector<256x32xbf16>, vector<32x128xbf16>, vector<256x128xf32> -> vector<256x128xf32>
    %c0_70 = arith.constant 0 : index
    %c0_71 = arith.constant 0 : index
    %c0_72 = arith.constant 0 : index
    %186 = vector.load %arg14[%c0_70, %c0_71, %c0_72] : memref<1x1x128xf32, #tpu.memory_space<vmem>>, vector<1x1x128xf32>
    %187 = vector.shape_cast %186 : vector<1x1x128xf32> to vector<1x128xf32>
    %188 = vector.broadcast %187 : vector<1x128xf32> to vector<256x128xf32>
    %189 = arith.addf %185, %188 : vector<256x128xf32>
    %cst_73 = arith.constant 5.000000e-01 : f32
    %190 = vector.broadcast %cst_73 : f32 to vector<256x128xf32>
    %191 = arith.mulf %190, %189 : vector<256x128xf32>
    %192 = arith.mulf %189, %189 : vector<256x128xf32>
    %193 = arith.mulf %192, %189 : vector<256x128xf32>
    %cst_74 = arith.constant 4.471500e-02 : f32
    %194 = vector.broadcast %cst_74 : f32 to vector<256x128xf32>
    %195 = arith.mulf %194, %193 : vector<256x128xf32>
    %196 = arith.addf %189, %195 : vector<256x128xf32>
    %cst_75 = arith.constant 0.797884583 : f32
    %197 = vector.broadcast %cst_75 : f32 to vector<256x128xf32>
    %198 = arith.mulf %197, %196 : vector<256x128xf32>
    %199 = math.tanh %198 : vector<256x128xf32>
    %cst_76 = arith.constant 1.000000e+00 : f32
    %200 = vector.broadcast %cst_76 : f32 to vector<256x128xf32>
    %201 = arith.addf %200, %199 : vector<256x128xf32>
    %202 = arith.mulf %191, %201 : vector<256x128xf32>
    %203 = arith.truncf %202 : vector<256x128xf32> to vector<256x128xbf16>
    %c0_77 = arith.constant 0 : index
    %c0_78 = arith.constant 0 : index
    %c0_79 = arith.constant 0 : index
    %204 = vector.load %arg15[%c0_77, %c0_78, %c0_79] : memref<1x128x32xbf16, #tpu.memory_space<vmem>>, vector<1x128x32xbf16>
    %205 = vector.shape_cast %204 : vector<1x128x32xbf16> to vector<128x32xbf16>
    %cst_80 = arith.constant dense<0.000000e+00> : vector<256x32xf32>
    %206 = tpu.matmul %203, %205, %cst_80 {dimension_numbers = #tpu.dot_dimension_numbers<[1], [0], [0], [1], [0, 0, 1, 1], [], []>} : vector<256x128xbf16>, vector<128x32xbf16>, vector<256x32xf32> -> vector<256x32xf32>
    %c0_81 = arith.constant 0 : index
    %c0_82 = arith.constant 0 : index
    %c0_83 = arith.constant 0 : index
    %207 = vector.load %arg16[%c0_81, %c0_82, %c0_83] : memref<1x1x32xf32, #tpu.memory_space<vmem>>, vector<1x1x32xf32>
    %208 = vector.shape_cast %207 : vector<1x1x32xf32> to vector<1x32xf32>
    %209 = vector.broadcast %208 : vector<1x32xf32> to vector<256x32xf32>
    %210 = arith.addf %206, %209 : vector<256x32xf32>
    %211 = arith.addf %155, %210 : vector<256x32xf32>
    %212 = vector.shape_cast %211 : vector<256x32xf32> to vector<1x4x64x32xf32>
    %c0_84 = arith.constant 0 : index
    %c0_85 = arith.constant 0 : index
    %c0_86 = arith.constant 0 : index
    %c0_87 = arith.constant 0 : index
    %213 = vector.load %arg17[%c0_84, %c0_85, %c0_86, %c0_87] : memref<1x4x64x32xf32, #tpu.memory_space<vmem>>, vector<1x4x64x32xf32>
    tpu.vector_store %arg17[%c0_84, %c0_85, %c0_86, %c0_87], %212 {strides = array<i32>} : memref<1x4x64x32xf32, #tpu.memory_space<vmem>>, vector<1x4x64x32xf32>,
    return
  }
  func.func @transform_0(%arg0: i32, %arg1: i32, %arg2: i32) -> (i32, i32, i32, i32) {
    %c0_i32 = arith.constant 0 : i32
    %c0_i32_0 = arith.constant 0 : i32
    %c0_i32_1 = arith.constant 0 : i32
    return %arg0, %arg1, %c0_i32, %c0_i32_0 : i32, i32, i32, i32
  }
  func.func @transform_1(%arg0: i32, %arg1: i32, %arg2: i32) -> (i32, i32, i32) {
    %c0_i32 = arith.constant 0 : i32
    %c0_i32_0 = arith.constant 0 : i32
    %c0_i32_1 = arith.constant 0 : i32
    return %arg2, %c0_i32, %c0_i32_0 : i32, i32, i32
  }
  func.func @transform_2(%arg0: i32, %arg1: i32, %arg2: i32) -> (i32, i32, i32) {
    %c0_i32 = arith.constant 0 : i32
    %c0_i32_0 = arith.constant 0 : i32
    %c0_i32_1 = arith.constant 0 : i32
    return %arg2, %c0_i32, %c0_i32_0 : i32, i32, i32
  }
  func.func @transform_3(%arg0: i32, %arg1: i32, %arg2: i32) -> (i32, i32, i32) {
    %c0_i32 = arith.constant 0 : i32
    %c0_i32_0 = arith.constant 0 : i32
    %c0_i32_1 = arith.constant 0 : i32
    return %arg2, %c0_i32, %c0_i32_0 : i32, i32, i32
  }
  func.func @transform_4(%arg0: i32, %arg1: i32, %arg2: i32) -> (i32, i32, i32) {
    %c0_i32 = arith.constant 0 : i32
    %c0_i32_0 = arith.constant 0 : i32
    %c0_i32_1 = arith.constant 0 : i32
    return %arg2, %c0_i32, %c0_i32_0 : i32, i32, i32
  }
  func.func @transform_5(%arg0: i32, %arg1: i32, %arg2: i32) -> (i32, i32, i32, i32) {
    %c0_i32 = arith.constant 0 : i32
    %c0_i32_0 = arith.constant 0 : i32
    %c0_i32_1 = arith.constant 0 : i32
    %c0_i32_2 = arith.constant 0 : i32
    return %arg2, %c0_i32, %c0_i32_0, %c0_i32_1 : i32, i32, i32, i32
  }
  func.func @transform_6(%arg0: i32, %arg1: i32, %arg2: i32) -> (i32, i32, i32) {
    %c0_i32 = arith.constant 0 : i32
    %c0_i32_0 = arith.constant 0 : i32
    %c0_i32_1 = arith.constant 0 : i32
    return %arg2, %c0_i32, %c0_i32_0 : i32, i32, i32
  }
  func.func @transform_7(%arg0: i32, %arg1: i32, %arg2: i32) -> (i32, i32, i32) {
    %c0_i32 = arith.constant 0 : i32
    %c0_i32_0 = arith.constant 0 : i32
    %c0_i32_1 = arith.constant 0 : i32
    return %arg2, %c0_i32, %c0_i32_0 : i32, i32, i32
  }
  func.func @transform_8(%arg0: i32, %arg1: i32, %arg2: i32) -> (i32, i32, i32) {
    %c0_i32 = arith.constant 0 : i32
    %c0_i32_0 = arith.constant 0 : i32
    %c0_i32_1 = arith.constant 0 : i32
    return %arg2, %c0_i32, %c0_i32_0 : i32, i32, i32
  }
  func.func @transform_9(%arg0: i32, %arg1: i32, %arg2: i32) -> (i32, i32, i32) {
    %c0_i32 = arith.constant 0 : i32
    %c0_i32_0 = arith.constant 0 : i32
    %c0_i32_1 = arith.constant 0 : i32
    return %arg2, %c0_i32, %c0_i32_0 : i32, i32, i32
  }
  func.func @transform_10(%arg0: i32, %arg1: i32, %arg2: i32) -> (i32, i32, i32) {
    %c0_i32 = arith.constant 0 : i32
    %c0_i32_0 = arith.constant 0 : i32
    %c0_i32_1 = arith.constant 0 : i32
    return %arg2, %c0_i32, %c0_i32_0 : i32, i32, i32
  }
  func.func @transform_11(%arg0: i32, %arg1: i32, %arg2: i32) -> (i32, i32, i32) {
    %c0_i32 = arith.constant 0 : i32
    %c0_i32_0 = arith.constant 0 : i32
    %c0_i32_1 = arith.constant 0 : i32
    return %arg2, %c0_i32, %c0_i32_0 : i32, i32, i32
  }
  func.func @transform_12(%arg0: i32, %arg1: i32, %arg2: i32) -> (i32, i32, i32) {
    %c0_i32 = arith.constant 0 : i32
    %c0_i32_0 = arith.constant 0 : i32
    %c0_i32_1 = arith.constant 0 : i32
    return %arg2, %c0_i32, %c0_i32_0 : i32, i32, i32
  }
  func.func @transform_13(%arg0: i32, %arg1: i32, %arg2: i32) -> (i32, i32, i32) {
    %c0_i32 = arith.constant 0 : i32
    %c0_i32_0 = arith.constant 0 : i32
    %c0_i32_1 = arith.constant 0 : i32
    return %arg2, %c0_i32, %c0_i32_0 : i32, i32, i32
  }
  func.func @transform_14(%arg0: i32, %arg1: i32, %arg2: i32) -> (i32, i32, i32, i32) {
    %c0_i32 = arith.constant 0 : i32
    %c0_i32_0 = arith.constant 0 : i32
    %c0_i32_1 = arith.constant 0 : i32
    return %arg0, %arg1, %c0_i32, %c0_i32_0 : i32, i32, i32, i32
  }
}

</mosaic_0001>

<llo_original>
// kernel: uformer_layer_forward.1
$region0: #{uformer_layer_forward.1}
  #allocation0 [shape = 'u32[]', space=smem, size = 0x4, offset = 0x4, fixed_abs, tag = 'smem constant byte address 0x4 - core index']
  #allocation1 [shape = 'u32[144,128]{1,0:T(1,128)}', space=vmem, size = 0x12000, scoped, tag = 'internal scratch']
  #allocation2 [shape = 'f32[256,32]{1,0:T(8,128)}', space=vmem, size = 0x20000, scoped, tag = 'scratch operand']
  %s0 = inlined_call_operand.vmem [shape: f32[2,4,64,32], index: 0, kind: input, shape index: {}]
  %s1 = inlined_call_operand.vmem [shape: f32[2,1,32], index: 1, kind: input, shape index: {}]
  %s2 = inlined_call_operand.vmem [shape: f32[2,1,32], index: 2, kind: input, shape index: {}]
  %s3 = inlined_call_operand.vmem [shape: bf16[2,32,96], index: 3, kind: input, shape index: {}]
  %s4 = inlined_call_operand.vmem [shape: f32[2,1,96], index: 4, kind: input, shape index: {}]
  %s5 = inlined_call_operand.vmem [shape: bf16[2,4,64,64], index: 5, kind: input, shape index: {}]
  %s6 = inlined_call_operand.vmem [shape: bf16[2,32,32], index: 6, kind: input, shape index: {}]
  %s7 = inlined_call_operand.vmem [shape: f32[2,1,32], index: 7, kind: input, shape index: {}]
  %s8 = inlined_call_operand.vmem [shape: f32[2,1,32], index: 8, kind: input, shape index: {}]
  %s9 = inlined_call_operand.vmem [shape: f32[2,1,32], index: 9, kind: input, shape index: {}]
  %s10 = inlined_call_operand.vmem [shape: bf16[2,32,128], index: 10, kind: input, shape index: {}]
  %s11 = inlined_call_operand.vmem [shape: f32[2,1,128], index: 11, kind: input, shape index: {}]
  %s12 = inlined_call_operand.vmem [shape: bf16[2,128,32], index: 12, kind: input, shape index: {}]
  %s13 = inlined_call_operand.vmem [shape: f32[2,1,32], index: 13, kind: input, shape index: {}]
  %s14 = inlined_call_operand.vmem [shape: f32[2,4,64,32], index: 14, kind: output, shape index: {}]
  %s15 = sld [smem:[#allocation0]]
  $region93: #{uformer_layer_forward.1} parent=0
    _
  %s17 = ssub.s32 1, %s15
  %s18 = scalar_select 0, %s17, %s15
  loop: start=0, step=1, limit=6
  $region2: #{uformer_layer_forward.1} parent=0 // loop_pre_header
    _
  $region3: #{uformer_layer_forward.1} parent=0 // loop_header
    %s20 = sphi 0, %s24
    %p21 = scmp.ge.s32.totalorder %s20, 6
    %s27 = sphi 0, %s46
    %s28 = sphi 0, %s42
    %s29 = sphi 0, %s38
    %s30 = sphi 0, %s27
    %s31 = sphi 0, %s28
    %s32 = sphi 0, %s29
    %s33 = sphi 0, %s30
    %s34 = sphi 0, %s31
    %s35 = sphi 0, %s32
    %s51 = sphi 0, %s53
    %s54 = sphi 0, %s51
    %s55 = sphi 0, %s54
    %s71 = sphi 0, %s55
    %s77 = sphi 0, %s79
    %s80 = sphi 0, %s77
    %s81 = sphi 0, %s80
    %s97 = sphi 0, %s81
    %s103 = sphi 0, %s105
    %s106 = sphi 0, %s103
    %s107 = sphi 0, %s106
    %s123 = sphi 0, %s107
    %s129 = sphi 0, %s131
    %s132 = sphi 0, %s129
    %s133 = sphi 0, %s132
    %s149 = sphi 0, %s133
    %s155 = sphi 0, %s157
    %s158 = sphi 0, %s155
    %s159 = sphi 0, %s158
    %s175 = sphi 0, %s159
    %s181 = sphi 0, %s183
    %s184 = sphi 0, %s181
    %s185 = sphi 0, %s184
    %s201 = sphi 0, %s185
    %s207 = sphi 0, %s209
    %s210 = sphi 0, %s207
    %s211 = sphi 0, %s210
    %s227 = sphi 0, %s211
    %s233 = sphi 0, %s235
    %s236 = sphi 0, %s233
    %s237 = sphi 0, %s236
    %s253 = sphi 0, %s237
    %s259 = sphi 0, %s261
    %s262 = sphi 0, %s259
    %s263 = sphi 0, %s262
    %s279 = sphi 0, %s263
    %s285 = sphi 0, %s287
    %s288 = sphi 0, %s285
    %s289 = sphi 0, %s288
    %s305 = sphi 0, %s289
    %s311 = sphi 0, %s313
    %s314 = sphi 0, %s311
    %s315 = sphi 0, %s314
    %s331 = sphi 0, %s315
    %s337 = sphi 0, %s339
    %s340 = sphi 0, %s337
    %s341 = sphi 0, %s340
    %s357 = sphi 0, %s341
    %s363 = sphi 0, %s365
    %s366 = sphi 0, %s363
    %s367 = sphi 0, %s366
    %s383 = sphi 0, %s367
    %s389 = sphi 0, %s391
    %s392 = sphi 0, %s389
    %s393 = sphi 0, %s392
    %s409 = sphi 0, %s393
    %s417 = sphi 0, %s419
    %s420 = sphi 0, %s417
    %s421 = sphi 0, %s420
    %s437 = sphi 0, %s421
  $region4: #{uformer_layer_forward.1} parent=0 // loop_header_branch
    %23 = sbr.rel (%p21) target = $region8
  $region5: #{uformer_layer_forward.1} parent=0 // loop_body
    %s25 = ssub.s32 %s20, 1
    %s26 = ssub.s32 %s20, 2
    %s36 = sadd.s32 1, %s29
    %p37 = scmp.ge.s32.totalorder %s36, 2
    %s38 = scalar_select %p37, 0, %s36
    %s39 = sadd.s32 1, %s28
    %s40 = scalar_select %p37, %s39, %s28
    %p41 = scmp.ge.s32.totalorder %s40, 1
    %s42 = scalar_select %p41, 0, %s40
    %s43 = sadd.s32 1, %s27
    %s44 = scalar_select %p41, %s43, %s27
    %p45 = scmp.ge.s32.totalorder %s44, 2
    %s46 = scalar_select %p45, 0, %s44
    %s47 = ssub.s32 %s27, %s46
    %s48 = ssub.s32 %s28, %s42
    %s49 = sor.u32 %s47, %s48
    %p50 = scmp.eq.s32.totalorder %s49, 0
    %s52 = sadd.s32 %s51, 1
    %s53 = scalar_select %p50, %s51, %s52
    %p56 = pneg %p50
    %p57 = scmp.eq.s32.totalorder %s20, 3
    %p58 = por %p56, %p57
    %p59 = scmp.ne.s32.totalorder %s51, %s54
    %p60 = scmp.eq.s32.totalorder %s20, 0
    %p61 = por %p59, %p60
    %p62 = scmp.ne.s32.totalorder %s51, %s54
    %p63 = scmp.eq.s32.totalorder %s25, 3
    %p64 = por %p62, %p63
    %p65 = scmp.ne.s32.totalorder %s54, %s55
    %p66 = scmp.eq.s32.totalorder %s25, 0
    %p67 = por %p65, %p66
    %p68 = scmp.ne.s32.totalorder %s54, %s55
    %p69 = scmp.eq.s32.totalorder %s26, 3
    %p70 = por %p68, %p69
    %p72 = scmp.ne.s32.totalorder %s55, %s71
    %p73 = scmp.eq.s32.totalorder %s26, 0
    %p74 = por %p72, %p73
    %s75 = ssub.s32 %s29, %s38
    %p76 = scmp.eq.s32.totalorder %s75, 0
    %s78 = sadd.s32 %s77, 1
    %s79 = scalar_select %p76, %s77, %s78
    %p82 = pneg %p76
    %p83 = scmp.eq.s32.totalorder %s20, 3
    %p84 = por %p82, %p83
    %p85 = scmp.ne.s32.totalorder %s77, %s80
    %p86 = scmp.eq.s32.totalorder %s20, 0
    %p87 = por %p85, %p86
    %p88 = scmp.ne.s32.totalorder %s77, %s80
    %p89 = scmp.eq.s32.totalorder %s25, 3
    %p90 = por %p88, %p89
    %p91 = scmp.ne.s32.totalorder %s80, %s81
    %p92 = scmp.eq.s32.totalorder %s25, 0
    %p93 = por %p91, %p92
    %p94 = scmp.ne.s32.totalorder %s80, %s81
    %p95 = scmp.eq.s32.totalorder %s26, 3
    %p96 = por %p94, %p95
    %p98 = scmp.ne.s32.totalorder %s81, %s97
    %p99 = scmp.eq.s32.totalorder %s26, 0
    %p100 = por %p98, %p99
    %s101 = ssub.s32 %s29, %s38
    %p102 = scmp.eq.s32.totalorder %s101, 0
    %s104 = sadd.s32 %s103, 1
    %s105 = scalar_select %p102, %s103, %s104
    %p108 = pneg %p102
    %p109 = scmp.eq.s32.totalorder %s20, 3
    %p110 = por %p108, %p109
    %p111 = scmp.ne.s32.totalorder %s103, %s106
    %p112 = scmp.eq.s32.totalorder %s20, 0
    %p113 = por %p111, %p112
    %p114 = scmp.ne.s32.totalorder %s103, %s106
    %p115 = scmp.eq.s32.totalorder %s25, 3
    %p116 = por %p114, %p115
    %p117 = scmp.ne.s32.totalorder %s106, %s107
    %p118 = scmp.eq.s32.totalorder %s25, 0
    %p119 = por %p117, %p118
    %p120 = scmp.ne.s32.totalorder %s106, %s107
    %p121 = scmp.eq.s32.totalorder %s26, 3
    %p122 = por %p120, %p121
    %p124 = scmp.ne.s32.totalorder %s107, %s123
    %p125 = scmp.eq.s32.totalorder %s26, 0
    %p126 = por %p124, %p125
    %s127 = ssub.s32 %s29, %s38
    %p128 = scmp.eq.s32.totalorder %s127, 0
    %s130 = sadd.s32 %s129, 1
    %s131 = scalar_select %p128, %s129, %s130
    %p134 = pneg %p128
    %p135 = scmp.eq.s32.totalorder %s20, 3
    %p136 = por %p134, %p135
    %p137 = scmp.ne.s32.totalorder %s129, %s132
    %p138 = scmp.eq.s32.totalorder %s20, 0
    %p139 = por %p137, %p138
    %p140 = scmp.ne.s32.totalorder %s129, %s132
    %p141 = scmp.eq.s32.totalorder %s25, 3
    %p142 = por %p140, %p141
    %p143 = scmp.ne.s32.totalorder %s132, %s133
    %p144 = scmp.eq.s32.totalorder %s25, 0
    %p145 = por %p143, %p144
    %p146 = scmp.ne.s32.totalorder %s132, %s133
    %p147 = scmp.eq.s32.totalorder %s26, 3
    %p148 = por %p146, %p147
    %p150 = scmp.ne.s32.totalorder %s133, %s149
    %p151 = scmp.eq.s32.totalorder %s26, 0
    %p152 = por %p150, %p151
    %s153 = ssub.s32 %s29, %s38
    %p154 = scmp.eq.s32.totalorder %s153, 0
    %s156 = sadd.s32 %s155, 1
    %s157 = scalar_select %p154, %s155, %s156
    %p160 = pneg %p154
    %p161 = scmp.eq.s32.totalorder %s20, 3
    %p162 = por %p160, %p161
    %p163 = scmp.ne.s32.totalorder %s155, %s158
    %p164 = scmp.eq.s32.totalorder %s20, 0
    %p165 = por %p163, %p164
    %p166 = scmp.ne.s32.totalorder %s155, %s158
    %p167 = scmp.eq.s32.totalorder %s25, 3
    %p168 = por %p166, %p167
    %p169 = scmp.ne.s32.totalorder %s158, %s159
    %p170 = scmp.eq.s32.totalorder %s25, 0
    %p171 = por %p169, %p170
    %p172 = scmp.ne.s32.totalorder %s158, %s159
    %p173 = scmp.eq.s32.totalorder %s26, 3
    %p174 = por %p172, %p173
    %p176 = scmp.ne.s32.totalorder %s159, %s175
    %p177 = scmp.eq.s32.totalorder %s26, 0
    %p178 = por %p176, %p177
    %s179 = ssub.s32 %s29, %s38
    %p180 = scmp.eq.s32.totalorder %s179, 0
    %s182 = sadd.s32 %s181, 1
    %s183 = scalar_select %p180, %s181, %s182
    %p186 = pneg %p180
    %p187 = scmp.eq.s32.totalorder %s20, 3
    %p188 = por %p186, %p187
    %p189 = scmp.ne.s32.totalorder %s181, %s184
    %p190 = scmp.eq.s32.totalorder %s20, 0
    %p191 = por %p189, %p190
    %p192 = scmp.ne.s32.totalorder %s181, %s184
    %p193 = scmp.eq.s32.totalorder %s25, 3
    %p194 = por %p192, %p193
    %p195 = scmp.ne.s32.totalorder %s184, %s185
    %p196 = scmp.eq.s32.totalorder %s25, 0
    %p197 = por %p195, %p196
    %p198 = scmp.ne.s32.totalorder %s184, %s185
    %p199 = scmp.eq.s32.totalorder %s26, 3
    %p200 = por %p198, %p199
    %p202 = scmp.ne.s32.totalorder %s185, %s201
    %p203 = scmp.eq.s32.totalorder %s26, 0
    %p204 = por %p202, %p203
    %s205 = ssub.s32 %s29, %s38
    %p206 = scmp.eq.s32.totalorder %s205, 0
    %s208 = sadd.s32 %s207, 1
    %s209 = scalar_select %p206, %s207, %s208
    %p212 = pneg %p206
    %p213 = scmp.eq.s32.totalorder %s20, 3
    %p214 = por %p212, %p213
    %p215 = scmp.ne.s32.totalorder %s207, %s210
    %p216 = scmp.eq.s32.totalorder %s20, 0
    %p217 = por %p215, %p216
    %p218 = scmp.ne.s32.totalorder %s207, %s210
    %p219 = scmp.eq.s32.totalorder %s25, 3
    %p220 = por %p218, %p219
    %p221 = scmp.ne.s32.totalorder %s210, %s211
    %p222 = scmp.eq.s32.totalorder %s25, 0
    %p223 = por %p221, %p222
    %p224 = scmp.ne.s32.totalorder %s210, %s211
    %p225 = scmp.eq.s32.totalorder %s26, 3
    %p226 = por %p224, %p225
    %p228 = scmp.ne.s32.totalorder %s211, %s227
    %p229 = scmp.eq.s32.totalorder %s26, 0
    %p230 = por %p228, %p229
    %s231 = ssub.s32 %s29, %s38
    %p232 = scmp.eq.s32.totalorder %s231, 0
    %s234 = sadd.s32 %s233, 1
    %s235 = scalar_select %p232, %s233, %s234
    %p238 = pneg %p232
    %p239 = scmp.eq.s32.totalorder %s20, 3
    %p240 = por %p238, %p239
    %p241 = scmp.ne.s32.totalorder %s233, %s236
    %p242 = scmp.eq.s32.totalorder %s20, 0
    %p243 = por %p241, %p242
    %p244 = scmp.ne.s32.totalorder %s233, %s236
    %p245 = scmp.eq.s32.totalorder %s25, 3
    %p246 = por %p244, %p245
    %p247 = scmp.ne.s32.totalorder %s236, %s237
    %p248 = scmp.eq.s32.totalorder %s25, 0
    %p249 = por %p247, %p248
    %p250 = scmp.ne.s32.totalorder %s236, %s237
    %p251 = scmp.eq.s32.totalorder %s26, 3
    %p252 = por %p250, %p251
    %p254 = scmp.ne.s32.totalorder %s237, %s253
    %p255 = scmp.eq.s32.totalorder %s26, 0
    %p256 = por %p254, %p255
    %s257 = ssub.s32 %s29, %s38
    %p258 = scmp.eq.s32.totalorder %s257, 0
    %s260 = sadd.s32 %s259, 1
    %s261 = scalar_select %p258, %s259, %s260
    %p264 = pneg %p258
    %p265 = scmp.eq.s32.totalorder %s20, 3
    %p266 = por %p264, %p265
    %p267 = scmp.ne.s32.totalorder %s259, %s262
    %p268 = scmp.eq.s32.totalorder %s20, 0
    %p269 = por %p267, %p268
    %p270 = scmp.ne.s32.totalorder %s259, %s262
    %p271 = scmp.eq.s32.totalorder %s25, 3
    %p272 = por %p270, %p271
    %p273 = scmp.ne.s32.totalorder %s262, %s263
    %p274 = scmp.eq.s32.totalorder %s25, 0
    %p275 = por %p273, %p274
    %p276 = scmp.ne.s32.totalorder %s262, %s263
    %p277 = scmp.eq.s32.totalorder %s26, 3
    %p278 = por %p276, %p277
    %p280 = scmp.ne.s32.totalorder %s263, %s279
    %p281 = scmp.eq.s32.totalorder %s26, 0
    %p282 = por %p280, %p281
    %s283 = ssub.s32 %s29, %s38
    %p284 = scmp.eq.s32.totalorder %s283, 0
    %s286 = sadd.s32 %s285, 1
    %s287 = scalar_select %p284, %s285, %s286
    %p290 = pneg %p284
    %p291 = scmp.eq.s32.totalorder %s20, 3
    %p292 = por %p290, %p291
    %p293 = scmp.ne.s32.totalorder %s285, %s288
    %p294 = scmp.eq.s32.totalorder %s20, 0
    %p295 = por %p293, %p294
    %p296 = scmp.ne.s32.totalorder %s285, %s288
    %p297 = scmp.eq.s32.totalorder %s25, 3
    %p298 = por %p296, %p297
    %p299 = scmp.ne.s32.totalorder %s288, %s289
    %p300 = scmp.eq.s32.totalorder %s25, 0
    %p301 = por %p299, %p300
    %p302 = scmp.ne.s32.totalorder %s288, %s289
    %p303 = scmp.eq.s32.totalorder %s26, 3
    %p304 = por %p302, %p303
    %p306 = scmp.ne.s32.totalorder %s289, %s305
    %p307 = scmp.eq.s32.totalorder %s26, 0
    %p308 = por %p306, %p307
    %s309 = ssub.s32 %s29, %s38
    %p310 = scmp.eq.s32.totalorder %s309, 0
    %s312 = sadd.s32 %s311, 1
    %s313 = scalar_select %p310, %s311, %s312
    %p316 = pneg %p310
    %p317 = scmp.eq.s32.totalorder %s20, 3
    %p318 = por %p316, %p317
    %p319 = scmp.ne.s32.totalorder %s311, %s314
    %p320 = scmp.eq.s32.totalorder %s20, 0
    %p321 = por %p319, %p320
    %p322 = scmp.ne.s32.totalorder %s311, %s314
    %p323 = scmp.eq.s32.totalorder %s25, 3
    %p324 = por %p322, %p323
    %p325 = scmp.ne.s32.totalorder %s314, %s315
    %p326 = scmp.eq.s32.totalorder %s25, 0
    %p327 = por %p325, %p326
    %p328 = scmp.ne.s32.totalorder %s314, %s315
    %p329 = scmp.eq.s32.totalorder %s26, 3
    %p330 = por %p328, %p329
    %p332 = scmp.ne.s32.totalorder %s315, %s331
    %p333 = scmp.eq.s32.totalorder %s26, 0
    %p334 = por %p332, %p333
    %s335 = ssub.s32 %s29, %s38
    %p336 = scmp.eq.s32.totalorder %s335, 0
    %s338 = sadd.s32 %s337, 1
    %s339 = scalar_select %p336, %s337, %s338
    %p342 = pneg %p336
    %p343 = scmp.eq.s32.totalorder %s20, 3
    %p344 = por %p342, %p343
    %p345 = scmp.ne.s32.totalorder %s337, %s340
    %p346 = scmp.eq.s32.totalorder %s20, 0
    %p347 = por %p345, %p346
    %p348 = scmp.ne.s32.totalorder %s337, %s340
    %p349 = scmp.eq.s32.totalorder %s25, 3
    %p350 = por %p348, %p349
    %p351 = scmp.ne.s32.totalorder %s340, %s341
    %p352 = scmp.eq.s32.totalorder %s25, 0
    %p353 = por %p351, %p352
    %p354 = scmp.ne.s32.totalorder %s340, %s341
    %p355 = scmp.eq.s32.totalorder %s26, 3
    %p356 = por %p354, %p355
    %p358 = scmp.ne.s32.totalorder %s341, %s357
    %p359 = scmp.eq.s32.totalorder %s26, 0
    %p360 = por %p358, %p359
    %s361 = ssub.s32 %s29, %s38
    %p362 = scmp.eq.s32.totalorder %s361, 0
    %s364 = sadd.s32 %s363, 1
    %s365 = scalar_select %p362, %s363, %s364
    %p368 = pneg %p362
    %p369 = scmp.eq.s32.totalorder %s20, 3
    %p370 = por %p368, %p369
    %p371 = scmp.ne.s32.totalorder %s363, %s366
    %p372 = scmp.eq.s32.totalorder %s20, 0
    %p373 = por %p371, %p372
    %p374 = scmp.ne.s32.totalorder %s363, %s366
    %p375 = scmp.eq.s32.totalorder %s25, 3
    %p376 = por %p374, %p375
    %p377 = scmp.ne.s32.totalorder %s366, %s367
    %p378 = scmp.eq.s32.totalorder %s25, 0
    %p379 = por %p377, %p378
    %p380 = scmp.ne.s32.totalorder %s366, %s367
    %p381 = scmp.eq.s32.totalorder %s26, 3
    %p382 = por %p380, %p381
    %p384 = scmp.ne.s32.totalorder %s367, %s383
    %p385 = scmp.eq.s32.totalorder %s26, 0
    %p386 = por %p384, %p385
    %s387 = ssub.s32 %s29, %s38
    %p388 = scmp.eq.s32.totalorder %s387, 0
    %s390 = sadd.s32 %s389, 1
    %s391 = scalar_select %p388, %s389, %s390
    %p394 = pneg %p388
    %p395 = scmp.eq.s32.totalorder %s20, 3
    %p396 = por %p394, %p395
    %p397 = scmp.ne.s32.totalorder %s389, %s392
    %p398 = scmp.eq.s32.totalorder %s20, 0
    %p399 = por %p397, %p398
    %p400 = scmp.ne.s32.totalorder %s389, %s392
    %p401 = scmp.eq.s32.totalorder %s25, 3
    %p402 = por %p400, %p401
    %p403 = scmp.ne.s32.totalorder %s392, %s393
    %p404 = scmp.eq.s32.totalorder %s25, 0
    %p405 = por %p403, %p404
    %p406 = scmp.ne.s32.totalorder %s392, %s393
    %p407 = scmp.eq.s32.totalorder %s26, 3
    %p408 = por %p406, %p407
    %p410 = scmp.ne.s32.totalorder %s393, %s409
    %p411 = scmp.eq.s32.totalorder %s26, 0
    %p412 = por %p410, %p411
    %s413 = ssub.s32 %s27, %s46
    %s414 = ssub.s32 %s28, %s42
    %s415 = sor.u32 %s413, %s414
    %p416 = scmp.eq.s32.totalorder %s415, 0
    %s418 = sadd.s32 %s417, 1
    %s419 = scalar_select %p416, %s417, %s418
    %p422 = pneg %p416
    %p423 = scmp.eq.s32.totalorder %s20, 3
    %p424 = por %p422, %p423
    %p425 = scmp.ne.s32.totalorder %s417, %s420
    %p426 = scmp.eq.s32.totalorder %s20, 0
    %p427 = por %p425, %p426
    %p428 = scmp.ne.s32.totalorder %s417, %s420
    %p429 = scmp.eq.s32.totalorder %s25, 3
    %p430 = por %p428, %p429
    %p431 = scmp.ne.s32.totalorder %s420, %s421
    %p432 = scmp.eq.s32.totalorder %s25, 0
    %p433 = por %p431, %p432
    %p434 = scmp.ne.s32.totalorder %s420, %s421
    %p435 = scmp.eq.s32.totalorder %s26, 3
    %p436 = por %p434, %p435
    %p438 = scmp.ne.s32.totalorder %s421, %s437
    %p439 = scmp.eq.s32.totalorder %s26, 0
    %p440 = por %p438, %p439
    %p441 = scmp.le.s32.totalorder 1, %s20
    %p442 = scmp.lt.s32.totalorder %s20, 5
    %p443 = pnand %p441, %p442
    %p444 = pneg %p443
    // Predicated region
    $region9: #{uformer_layer_forward.1} parent=5 // pred_check
      _
    $region10: #{uformer_layer_forward.1} parent=5 // pred_check_branch
      %446 = sbr.rel (%p443) target = $region12
    $region11: #{uformer_layer_forward.1} parent=5 // pred_region
      %s447 = ssub.s32 %s20, 1
    $region12: #{uformer_layer_forward.1} parent=5 // pred_fallthru
      _
    %p448 = scmp.lt.s32.totalorder %s20, 4
    // Predicated region
    $region13: #{uformer_layer_forward.1} parent=5 // pred_check
      %p449 = pneg %p448
    $region14: #{uformer_layer_forward.1} parent=5 // pred_check_branch
      %451 = sbr.rel (%p449) target = $region16
    $region15: #{uformer_layer_forward.1} parent=5 // pred_region
      // Predicated region
      $region17: #{uformer_layer_forward.1} parent=15 // pred_check
        %p452 = pneg %p61
      $region18: #{uformer_layer_forward.1} parent=15 // pred_check_branch
        %454 = sbr.rel (%p452) target = $region20
      $region19: #{uformer_layer_forward.1} parent=15 // pred_region
        %s455 = smul.u32 4, %s28
        %p456 = scmp.lt.s32.totalorder %s27, 1
        %s457 = scalar_select %p456, %s27, 1
        %p458 = scmp.lt.s32.totalorder %s455, 3
        %s459 = scalar_select %p458, %s455, 3
        %s460 = smul.addr %s459, 8
        %s461 = smul.addr %s457, 32
        %s462 = sadd.s32 %s460, %s461
        %s463 = smul.addr %s462, 8
        %s464 = scalar_lea.vmem %s0, %s463
        %s465 = smul.u32 4, %s28
      $region20: #{uformer_layer_forward.1} parent=15 // pred_fallthru
        _
      // Predicated region
      $region21: #{uformer_layer_forward.1} parent=15 // pred_check
        %p466 = pneg %p87
      $region22: #{uformer_layer_forward.1} parent=15 // pred_check_branch
        %468 = sbr.rel (%p466) target = $region24
      $region23: #{uformer_layer_forward.1} parent=15 // pred_region
        %p469 = scmp.lt.s32.totalorder %s29, 1
        %s470 = scalar_select %p469, %s29, 1
        %s471 = scalar_lea.vmem %s1, %s470
      $region24: #{uformer_layer_forward.1} parent=15 // pred_fallthru
        _
      // Predicated region
      $region25: #{uformer_layer_forward.1} parent=15 // pred_check
        %p472 = pneg %p113
      $region26: #{uformer_layer_forward.1} parent=15 // pred_check_branch
        %474 = sbr.rel (%p472) target = $region28
      $region27: #{uformer_layer_forward.1} parent=15 // pred_region
        %p475 = scmp.lt.s32.totalorder %s29, 1
        %s476 = scalar_select %p475, %s29, 1
        %s477 = scalar_lea.vmem %s2, %s476
      $region28: #{uformer_layer_forward.1} parent=15 // pred_fallthru
        _
      // Predicated region
      $region29: #{uformer_layer_forward.1} parent=15 // pred_check
        %p478 = pneg %p139
      $region30: #{uformer_layer_forward.1} parent=15 // pred_check_branch
        %480 = sbr.rel (%p478) target = $region32
      $region31: #{uformer_layer_forward.1} parent=15 // pred_region
        %p481 = scmp.lt.s32.totalorder %s29, 1
        %s482 = scalar_select %p481, %s29, 1
        %s483 = smul.addr %s482, 4
        %s484 = smul.addr %s483, 4
        %s485 = scalar_lea.vmem %s3, %s484
      $region32: #{uformer_layer_forward.1} parent=15 // pred_fallthru
        _
      // Predicated region
      $region33: #{uformer_layer_forward.1} parent=15 // pred_check
        %p486 = pneg %p165
      $region34: #{uformer_layer_forward.1} parent=15 // pred_check_branch
        %488 = sbr.rel (%p486) target = $region36
      $region35: #{uformer_layer_forward.1} parent=15 // pred_region
        %p489 = scmp.lt.s32.totalorder %s29, 1
        %s490 = scalar_select %p489, %s29, 1
        %s491 = scalar_lea.vmem %s4, %s490
      $region36: #{uformer_layer_forward.1} parent=15 // pred_fallthru
        _
      // Predicated region
      $region37: #{uformer_layer_forward.1} parent=15 // pred_check
        %p492 = pneg %p191
      $region38: #{uformer_layer_forward.1} parent=15 // pred_check_branch
        %494 = sbr.rel (%p492) target = $region40
      $region39: #{uformer_layer_forward.1} parent=15 // pred_region
        %p495 = scmp.lt.s32.totalorder %s29, 1
        %s496 = scalar_select %p495, %s29, 1
        %s497 = smul.addr %s496, 32
        %s498 = smul.addr %s497, 4
        %s499 = scalar_lea.vmem %s5, %s498
      $region40: #{uformer_layer_forward.1} parent=15 // pred_fallthru
        _
      // Predicated region
      $region41: #{uformer_layer_forward.1} parent=15 // pred_check
        %p500 = pneg %p217
      $region42: #{uformer_layer_forward.1} parent=15 // pred_check_branch
        %502 = sbr.rel (%p500) target = $region44
      $region43: #{uformer_layer_forward.1} parent=15 // pred_region
        %p503 = scmp.lt.s32.totalorder %s29, 1
        %s504 = scalar_select %p503, %s29, 1
        %s505 = smul.addr %s504, 4
        %s506 = smul.addr %s505, 4
        %s507 = scalar_lea.vmem %s6, %s506
      $region44: #{uformer_layer_forward.1} parent=15 // pred_fallthru
        _
      // Predicated region
      $region45: #{uformer_layer_forward.1} parent=15 // pred_check
        %p508 = pneg %p243
      $region46: #{uformer_layer_forward.1} parent=15 // pred_check_branch
        %510 = sbr.rel (%p508) target = $region48
      $region47: #{uformer_layer_forward.1} parent=15 // pred_region
        %p511 = scmp.lt.s32.totalorder %s29, 1
        %s512 = scalar_select %p511, %s29, 1
        %s513 = scalar_lea.vmem %s7, %s512
      $region48: #{uformer_layer_forward.1} parent=15 // pred_fallthru
        _
      // Predicated region
      $region49: #{uformer_layer_forward.1} parent=15 // pred_check
        %p514 = pneg %p269
      $region50: #{uformer_layer_forward.1} parent=15 // pred_check_branch
        %516 = sbr.rel (%p514) target = $region52
      $region51: #{uformer_layer_forward.1} parent=15 // pred_region
        %p517 = scmp.lt.s32.totalorder %s29, 1
        %s518 = scalar_select %p517, %s29, 1
        %s519 = scalar_lea.vmem %s8, %s518
      $region52: #{uformer_layer_forward.1} parent=15 // pred_fallthru
        _
      // Predicated region
      $region53: #{uformer_layer_forward.1} parent=15 // pred_check
        %p520 = pneg %p295
      $region54: #{uformer_layer_forward.1} parent=15 // pred_check_branch
        %522 = sbr.rel (%p520) target = $region56
      $region55: #{uformer_layer_forward.1} parent=15 // pred_region
        %p523 = scmp.lt.s32.totalorder %s29, 1
        %s524 = scalar_select %p523, %s29, 1
        %s525 = scalar_lea.vmem %s9, %s524
      $region56: #{uformer_layer_forward.1} parent=15 // pred_fallthru
        _
      // Predicated region
      $region57: #{uformer_layer_forward.1} parent=15 // pred_check
        %p526 = pneg %p321
      $region58: #{uformer_layer_forward.1} parent=15 // pred_check_branch
        %528 = sbr.rel (%p526) target = $region60
      $region59: #{uformer_layer_forward.1} parent=15 // pred_region
        %p529 = scmp.lt.s32.totalorder %s29, 1
        %s530 = scalar_select %p529, %s29, 1
        %s531 = smul.addr %s530, 4
        %s532 = smul.addr %s531, 4
        %s533 = scalar_lea.vmem %s10, %s532
      $region60: #{uformer_layer_forward.1} parent=15 // pred_fallthru
        _
      // Predicated region
      $region61: #{uformer_layer_forward.1} parent=15 // pred_check
        %p534 = pneg %p347
      $region62: #{uformer_layer_forward.1} parent=15 // pred_check_branch
        %536 = sbr.rel (%p534) target = $region64
      $region63: #{uformer_layer_forward.1} parent=15 // pred_region
        %p537 = scmp.lt.s32.totalorder %s29, 1
        %s538 = scalar_select %p537, %s29, 1
        %s539 = scalar_lea.vmem %s11, %s538
      $region64: #{uformer_layer_forward.1} parent=15 // pred_fallthru
        _
      // Predicated region
      $region65: #{uformer_layer_forward.1} parent=15 // pred_check
        %p540 = pneg %p373
      $region66: #{uformer_layer_forward.1} parent=15 // pred_check_branch
        %542 = sbr.rel (%p540) target = $region68
      $region67: #{uformer_layer_forward.1} parent=15 // pred_region
        %p543 = scmp.lt.s32.totalorder %s29, 1
        %s544 = scalar_select %p543, %s29, 1
        %s545 = smul.addr %s544, 16
        %s546 = smul.addr %s545, 4
        %s547 = scalar_lea.vmem %s12, %s546
      $region68: #{uformer_layer_forward.1} parent=15 // pred_fallthru
        _
      // Predicated region
      $region69: #{uformer_layer_forward.1} parent=15 // pred_check
        %p548 = pneg %p399
      $region70: #{uformer_layer_forward.1} parent=15 // pred_check_branch
        %550 = sbr.rel (%p548) target = $region72
      $region71: #{uformer_layer_forward.1} parent=15 // pred_region
        %p551 = scmp.lt.s32.totalorder %s29, 1
        %s552 = scalar_select %p551, %s29, 1
        %s553 = scalar_lea.vmem %s13, %s552
      $region72: #{uformer_layer_forward.1} parent=15 // pred_fallthru
        _
    $region16: #{uformer_layer_forward.1} parent=5 // pred_fallthru
      _
    %p554 = scmp.le.s32.totalorder 1, %s20
    %p555 = scmp.lt.s32.totalorder %s20, 5
    %p556 = pnand %p554, %p555
    %p557 = pneg %p556
    // Predicated region
    $region73: #{uformer_layer_forward.1} parent=5 // pred_check
      _
    $region74: #{uformer_layer_forward.1} parent=5 // pred_check_branch
      %559 = sbr.rel (%p556) target = $region76
    $region75: #{uformer_layer_forward.1} parent=5 // pred_region
      %s560 = ssub.s32 %s20, 1
      %s561 = smul.u32 4, %s31
      %p562 = scmp.lt.s32.totalorder %s30, 1
      %s563 = scalar_select %p562, %s30, 1
      %p564 = scmp.lt.s32.totalorder %s561, 3
      %s565 = scalar_select %p564, %s561, 3
      %s566 = smul.addr %s565, 8
      %s567 = smul.addr %s563, 32
      %s568 = sadd.s32 %s566, %s567
      %s569 = smul.addr %s568, 8
      %s570 = scalar_lea.vmem %s0, %s569
      %p571 = pneg %p67
      %p572 = pneg %p64
      %p573 = scmp.lt.s32.totalorder %s32, 1
      %s574 = scalar_select %p573, %s32, 1
      %s575 = scalar_lea.vmem %s1, %s574
      %p576 = pneg %p93
      %p577 = pneg %p90
      %p578 = scmp.lt.s32.totalorder %s32, 1
      %s579 = scalar_select %p578, %s32, 1
      %s580 = scalar_lea.vmem %s2, %s579
      %p581 = pneg %p119
      %p582 = pneg %p116
      %p583 = scmp.lt.s32.totalorder %s32, 1
      %s584 = scalar_select %p583, %s32, 1
      %s585 = smul.addr %s584, 4
      %s586 = smul.addr %s585, 4
      %s587 = scalar_lea.vmem %s3, %s586
      %p588 = pneg %p145
      %p589 = pneg %p142
      %p590 = scmp.lt.s32.totalorder %s32, 1
      %s591 = scalar_select %p590, %s32, 1
      %s592 = scalar_lea.vmem %s4, %s591
      %p593 = pneg %p171
      %p594 = pneg %p168
      %p595 = scmp.lt.s32.totalorder %s32, 1
      %s596 = scalar_select %p595, %s32, 1
      %s597 = smul.addr %s596, 32
      %s598 = smul.addr %s597, 4
      %s599 = scalar_lea.vmem %s5, %s598
      %p600 = pneg %p197
      %p601 = pneg %p194
      %p602 = scmp.lt.s32.totalorder %s32, 1
      %s603 = scalar_select %p602, %s32, 1
      %s604 = smul.addr %s603, 4
      %s605 = smul.addr %s604, 4
      %s606 = scalar_lea.vmem %s6, %s605
      %p607 = pneg %p223
      %p608 = pneg %p220
      %p609 = scmp.lt.s32.totalorder %s32, 1
      %s610 = scalar_select %p609, %s32, 1
      %s611 = scalar_lea.vmem %s7, %s610
      %p612 = pneg %p249
      %p613 = pneg %p246
      %p614 = scmp.lt.s32.totalorder %s32, 1
      %s615 = scalar_select %p614, %s32, 1
      %s616 = scalar_lea.vmem %s8, %s615
      %p617 = pneg %p275
      %p618 = pneg %p272
      %p619 = scmp.lt.s32.totalorder %s32, 1
      %s620 = scalar_select %p619, %s32, 1
      %s621 = scalar_lea.vmem %s9, %s620
      %p622 = pneg %p301
      %p623 = pneg %p298
      %p624 = scmp.lt.s32.totalorder %s32, 1
      %s625 = scalar_select %p624, %s32, 1
      %s626 = smul.addr %s625, 4
      %s627 = smul.addr %s626, 4
      %s628 = scalar_lea.vmem %s10, %s627
      %p629 = pneg %p327
      %p630 = pneg %p324
      %p631 = scmp.lt.s32.totalorder %s32, 1
      %s632 = scalar_select %p631, %s32, 1
      %s633 = scalar_lea.vmem %s11, %s632
      %p634 = pneg %p353
      %p635 = pneg %p350
      %p636 = scmp.lt.s32.totalorder %s32, 1
      %s637 = scalar_select %p636, %s32, 1
      %s638 = smul.addr %s637, 16
      %s639 = smul.addr %s638, 4
      %s640 = scalar_lea.vmem %s12, %s639
      %p641 = pneg %p379
      %p642 = pneg %p376
      %p643 = scmp.lt.s32.totalorder %s32, 1
      %s644 = scalar_select %p643, %s32, 1
      %s645 = scalar_lea.vmem %s13, %s644
      %p646 = pneg %p405
      %p647 = pneg %p402
      %p648 = pneg %p433
      %p649 = pneg %p430
      %s650 = smul.u32 4, %s31
      %p651 = scmp.lt.s32.totalorder %s30, 1
      %s652 = scalar_select %p651, %s30, 1
      %p653 = scmp.lt.s32.totalorder %s650, 3
      %s654 = scalar_select %p653, %s650, 3
      %s655 = smul.addr %s654, 8
      %s656 = smul.addr %s652, 32
      %s657 = sadd.s32 %s655, %s656
      %s658 = smul.addr %s657, 8
      %s659 = scalar_lea.vmem %s14, %s658
      %s660 = smul.u32 4, %s31
      %p661 = scmp.lt.s32.totalorder %s30, 1
      %s662 = scalar_select %p661, %s30, 1
      %p663 = scmp.lt.s32.totalorder %s660, 3
      %s664 = scalar_select %p663, %s660, 3
      %s665 = smul.addr %s664, 8
      %s666 = smul.addr %s662, 32
      %s667 = sadd.s32 %s665, %s666
      %s668 = smul.addr %s667, 8
      %s669 = scalar_lea.vmem %s0, %s668
      %s670 = smul.u32 4, %s31
      %p671 = scmp.lt.s32.totalorder %s32, 1
      %s672 = scalar_select %p671, %s32, 1
      %s673 = scalar_lea.vmem %s1, %s672
      %p674 = scmp.lt.s32.totalorder %s32, 1
      %s675 = scalar_select %p674, %s32, 1
      %s676 = scalar_lea.vmem %s2, %s675
      %p677 = scmp.lt.s32.totalorder %s32, 1
      %s678 = scalar_select %p677, %s32, 1
      %s679 = smul.addr %s678, 4
      %s680 = smul.addr %s679, 4
      %s681 = scalar_lea.vmem %s3, %s680
      %p682 = scmp.lt.s32.totalorder %s32, 1
      %s683 = scalar_select %p682, %s32, 1
      %s684 = scalar_lea.vmem %s4, %s683
      %p685 = scmp.lt.s32.totalorder %s32, 1
      %s686 = scalar_select %p685, %s32, 1
      %s687 = smul.addr %s686, 32
      %s688 = smul.addr %s687, 4
      %s689 = scalar_lea.vmem %s5, %s688
      %p690 = scmp.lt.s32.totalorder %s32, 1
      %s691 = scalar_select %p690, %s32, 1
      %s692 = smul.addr %s691, 4
      %s693 = smul.addr %s692, 4
      %s694 = scalar_lea.vmem %s6, %s693
      %p695 = scmp.lt.s32.totalorder %s32, 1
      %s696 = scalar_select %p695, %s32, 1
      %s697 = scalar_lea.vmem %s7, %s696
      %p698 = scmp.lt.s32.totalorder %s32, 1
      %s699 = scalar_select %p698, %s32, 1
      %s700 = scalar_lea.vmem %s8, %s699
      %p701 = scmp.lt.s32.totalorder %s32, 1
      %s702 = scalar_select %p701, %s32, 1
      %s703 = scalar_lea.vmem %s9, %s702
      %p704 = scmp.lt.s32.totalorder %s32, 1
      %s705 = scalar_select %p704, %s32, 1
      %s706 = smul.addr %s705, 4
      %s707 = smul.addr %s706, 4
      %s708 = scalar_lea.vmem %s10, %s707
      %p709 = scmp.lt.s32.totalorder %s32, 1
      %s710 = scalar_select %p709, %s32, 1
      %s711 = scalar_lea.vmem %s11, %s710
      %p712 = scmp.lt.s32.totalorder %s32, 1
      %s713 = scalar_select %p712, %s32, 1
      %s714 = smul.addr %s713, 16
      %s715 = smul.addr %s714, 4
      %s716 = scalar_lea.vmem %s12, %s715
      %p717 = scmp.lt.s32.totalorder %s32, 1
      %s718 = scalar_select %p717, %s32, 1
      %s719 = scalar_lea.vmem %s13, %s718
      %s720 = smul.u32 4, %s31
      %p721 = scmp.lt.s32.totalorder %s30, 1
      %s722 = scalar_select %p721, %s30, 1
      %p723 = scmp.lt.s32.totalorder %s720, 3
      %s724 = scalar_select %p723, %s720, 3
      %s725 = smul.addr %s724, 8
      %s726 = smul.addr %s722, 32
      %s727 = sadd.s32 %s725, %s726
      %s728 = smul.addr %s727, 8
      %s729 = scalar_lea.vmem %s14, %s728
      %s730 = smul.u32 4, %s31
      %p732 = scmp.eq.s32.totalorder %s32, 0
      // Predicated region
      $region77: #{uformer_layer_forward.1} parent=75 // pred_check
        %p733 = pneg %p732
      $region78: #{uformer_layer_forward.1} parent=75 // pred_check_branch
        %735 = sbr.rel (%p733) target = $region80
      $region79: #{uformer_layer_forward.1} parent=75 // pred_region
        %v736 = vld [vmem:[%s669] sm:$0xff]
        %v737 = vld [vmem:[%s669 + $0x8] sm:$0xff]
        %v738 = vld [vmem:[%s669 + $0x10] sm:$0xff]
        %v739 = vld [vmem:[%s669 + $0x18] sm:$0xff]
        %v740 = vld [vmem:[%s669 + $0x20] sm:$0xff]
        %v741 = vld [vmem:[%s669 + $0x28] sm:$0xff]
        %v742 = vld [vmem:[%s669 + $0x30] sm:$0xff]
        %v743 = vld [vmem:[%s669 + $0x38] sm:$0xff]
        %v744 = vld [vmem:[%s669 + $0x40] sm:$0xff]
        %v745 = vld [vmem:[%s669 + $0x48] sm:$0xff]
        %v746 = vld [vmem:[%s669 + $0x50] sm:$0xff]
        %v747 = vld [vmem:[%s669 + $0x58] sm:$0xff]
        %v748 = vld [vmem:[%s669 + $0x60] sm:$0xff]
        %v749 = vld [vmem:[%s669 + $0x68] sm:$0xff]
        %v750 = vld [vmem:[%s669 + $0x70] sm:$0xff]
        %v751 = vld [vmem:[%s669 + $0x78] sm:$0xff]
        %v752 = vld [vmem:[%s669 + $0x80] sm:$0xff]
        %v753 = vld [vmem:[%s669 + $0x88] sm:$0xff]
        %v754 = vld [vmem:[%s669 + $0x90] sm:$0xff]
        %v755 = vld [vmem:[%s669 + $0x98] sm:$0xff]
        %v756 = vld [vmem:[%s669 + $0xa0] sm:$0xff]
        %v757 = vld [vmem:[%s669 + $0xa8] sm:$0xff]
        %v758 = vld [vmem:[%s669 + $0xb0] sm:$0xff]
        %v759 = vld [vmem:[%s669 + $0xb8] sm:$0xff]
        %v760 = vld [vmem:[%s669 + $0xc0] sm:$0xff]
        %v761 = vld [vmem:[%s669 + $0xc8] sm:$0xff]
        %v762 = vld [vmem:[%s669 + $0xd0] sm:$0xff]
        %v763 = vld [vmem:[%s669 + $0xd8] sm:$0xff]
        %v764 = vld [vmem:[%s669 + $0xe0] sm:$0xff]
        %v765 = vld [vmem:[%s669 + $0xe8] sm:$0xff]
        %v766 = vld [vmem:[%s669 + $0xf0] sm:$0xff]
        %v767 = vld [vmem:[%s669 + $0xf8] sm:$0xff]
        %vm768 = vcmask 261120
        %769 = vst.msk [vmem:[%s729] sm:$0xff] %vm768, %v736
        %770 = vst.msk [vmem:[%s729 + $0x8] sm:$0xff] %vm768, %v737
        %771 = vst.msk [vmem:[%s729 + $0x10] sm:$0xff] %vm768, %v738
        %772 = vst.msk [vmem:[%s729 + $0x18] sm:$0xff] %vm768, %v739
        %773 = vst.msk [vmem:[%s729 + $0x20] sm:$0xff] %vm768, %v740
        %774 = vst.msk [vmem:[%s729 + $0x28] sm:$0xff] %vm768, %v741
        %775 = vst.msk [vmem:[%s729 + $0x30] sm:$0xff] %vm768, %v742
        %776 = vst.msk [vmem:[%s729 + $0x38] sm:$0xff] %vm768, %v743
        %777 = vst.msk [vmem:[%s729 + $0x40] sm:$0xff] %vm768, %v744
        %778 = vst.msk [vmem:[%s729 + $0x48] sm:$0xff] %vm768, %v745
        %779 = vst.msk [vmem:[%s729 + $0x50] sm:$0xff] %vm768, %v746
        %780 = vst.msk [vmem:[%s729 + $0x58] sm:$0xff] %vm768, %v747
        %781 = vst.msk [vmem:[%s729 + $0x60] sm:$0xff] %vm768, %v748
        %782 = vst.msk [vmem:[%s729 + $0x68] sm:$0xff] %vm768, %v749
        %783 = vst.msk [vmem:[%s729 + $0x70] sm:$0xff] %vm768, %v750
        %784 = vst.msk [vmem:[%s729 + $0x78] sm:$0xff] %vm768, %v751
        %785 = vst.msk [vmem:[%s729 + $0x80] sm:$0xff] %vm768, %v752
        %786 = vst.msk [vmem:[%s729 + $0x88] sm:$0xff] %vm768, %v753
        %787 = vst.msk [vmem:[%s729 + $0x90] sm:$0xff] %vm768, %v754
        %788 = vst.msk [vmem:[%s729 + $0x98] sm:$0xff] %vm768, %v755
        %789 = vst.msk [vmem:[%s729 + $0xa0] sm:$0xff] %vm768, %v756
        %790 = vst.msk [vmem:[%s729 + $0xa8] sm:$0xff] %vm768, %v757
        %791 = vst.msk [vmem:[%s729 + $0xb0] sm:$0xff] %vm768, %v758
        %792 = vst.msk [vmem:[%s729 + $0xb8] sm:$0xff] %vm768, %v759
        %793 = vst.msk [vmem:[%s729 + $0xc0] sm:$0xff] %vm768, %v760
        %794 = vst.msk [vmem:[%s729 + $0xc8] sm:$0xff] %vm768, %v761
        %795 = vst.msk [vmem:[%s729 + $0xd0] sm:$0xff] %vm768, %v762
        %796 = vst.msk [vmem:[%s729 + $0xd8] sm:$0xff] %vm768, %v763
        %797 = vst.msk [vmem:[%s729 + $0xe0] sm:$0xff] %vm768, %v764
        %798 = vst.msk [vmem:[%s729 + $0xe8] sm:$0xff] %vm768, %v765
        %799 = vst.msk [vmem:[%s729 + $0xf0] sm:$0xff] %vm768, %v766
        %800 = vst.msk [vmem:[%s729 + $0xf8] sm:$0xff] %vm768, %v767
      $region80: #{uformer_layer_forward.1} parent=75 // pred_fallthru
        _
      %v801 = vld [vmem:[%s729] sm:$0xff]
      %v802 = vld [vmem:[%s729 + $0x8] sm:$0xff]
      %v803 = vld [vmem:[%s729 + $0x10] sm:$0xff]
      %v804 = vld [vmem:[%s729 + $0x18] sm:$0xff]
      %v805 = vld [vmem:[%s729 + $0x20] sm:$0xff]
      %v806 = vld [vmem:[%s729 + $0x28] sm:$0xff]
      %v807 = vld [vmem:[%s729 + $0x30] sm:$0xff]
      %v808 = vld [vmem:[%s729 + $0x38] sm:$0xff]
      %v809 = vld [vmem:[%s729 + $0x40] sm:$0xff]
      %v810 = vld [vmem:[%s729 + $0x48] sm:$0xff]
      %v811 = vld [vmem:[%s729 + $0x50] sm:$0xff]
      %v812 = vld [vmem:[%s729 + $0x58] sm:$0xff]
      %v813 = vld [vmem:[%s729 + $0x60] sm:$0xff]
      %v814 = vld [vmem:[%s729 + $0x68] sm:$0xff]
      %v815 = vld [vmem:[%s729 + $0x70] sm:$0xff]
      %v816 = vld [vmem:[%s729 + $0x78] sm:$0xff]
      %v817 = vld [vmem:[%s729 + $0x80] sm:$0xff]
      %v818 = vld [vmem:[%s729 + $0x88] sm:$0xff]
      %v819 = vld [vmem:[%s729 + $0x90] sm:$0xff]
      %v820 = vld [vmem:[%s729 + $0x98] sm:$0xff]
      %v821 = vld [vmem:[%s729 + $0xa0] sm:$0xff]
      %v822 = vld [vmem:[%s729 + $0xa8] sm:$0xff]
      %v823 = vld [vmem:[%s729 + $0xb0] sm:$0xff]
      %v824 = vld [vmem:[%s729 + $0xb8] sm:$0xff]
      %v825 = vld [vmem:[%s729 + $0xc0] sm:$0xff]
      %v826 = vld [vmem:[%s729 + $0xc8] sm:$0xff]
      %v827 = vld [vmem:[%s729 + $0xd0] sm:$0xff]
      %v828 = vld [vmem:[%s729 + $0xd8] sm:$0xff]
      %v829 = vld [vmem:[%s729 + $0xe0] sm:$0xff]
      %v830 = vld [vmem:[%s729 + $0xe8] sm:$0xff]
      %v831 = vld [vmem:[%s729 + $0xf0] sm:$0xff]
      %v832 = vld [vmem:[%s729 + $0xf8] sm:$0xff]
      %v833 = vld [vmem:[%s673] sm:$0x1]
      %v834 = vld [vmem:[%s676] sm:$0x1]
      %vm835 = vcmask 261120
      %v836 = vsel %vm835, %v801, 0.0
      %837 = vadd.xlane.f32.xlu0 %v836
      %v838 = vpop.xlane.xlu0 %837
      %v839 = vsel %vm835, %v802, 0.0
      %840 = vadd.xlane.f32.xlu0 %v839
      %v841 = vpop.xlane.xlu0 %840
      %v842 = vsel %vm835, %v803, 0.0
      %843 = vadd.xlane.f32.xlu0 %v842
      %v844 = vpop.xlane.xlu0 %843
      %v845 = vsel %vm835, %v804, 0.0
      %846 = vadd.xlane.f32.xlu0 %v845
      %v847 = vpop.xlane.xlu0 %846
      %v848 = vsel %vm835, %v805, 0.0
      %849 = vadd.xlane.f32.xlu0 %v848
      %v850 = vpop.xlane.xlu0 %849
      %v851 = vsel %vm835, %v806, 0.0
      %852 = vadd.xlane.f32.xlu0 %v851
      %v853 = vpop.xlane.xlu0 %852
      %v854 = vsel %vm835, %v807, 0.0
      %855 = vadd.xlane.f32.xlu0 %v854
      %v856 = vpop.xlane.xlu0 %855
      %v857 = vsel %vm835, %v808, 0.0
      %858 = vadd.xlane.f32.xlu0 %v857
      %v859 = vpop.xlane.xlu0 %858
      %v860 = vsel %vm835, %v809, 0.0
      %861 = vadd.xlane.f32.xlu0 %v860
      %v862 = vpop.xlane.xlu0 %861
      %v863 = vsel %vm835, %v810, 0.0
      %864 = vadd.xlane.f32.xlu0 %v863
      %v865 = vpop.xlane.xlu0 %864
      %v866 = vsel %vm835, %v811, 0.0
      %867 = vadd.xlane.f32.xlu0 %v866
      %v868 = vpop.xlane.xlu0 %867
      %v869 = vsel %vm835, %v812, 0.0
      %870 = vadd.xlane.f32.xlu0 %v869
      %v871 = vpop.xlane.xlu0 %870
      %v872 = vsel %vm835, %v813, 0.0
      %873 = vadd.xlane.f32.xlu0 %v872
      %v874 = vpop.xlane.xlu0 %873
      %v875 = vsel %vm835, %v814, 0.0
      %876 = vadd.xlane.f32.xlu0 %v875
      %v877 = vpop.xlane.xlu0 %876
      %v878 = vsel %vm835, %v815, 0.0
      %879 = vadd.xlane.f32.xlu0 %v878
      %v880 = vpop.xlane.xlu0 %879
      %v881 = vsel %vm835, %v816, 0.0
      %882 = vadd.xlane.f32.xlu0 %v881
      %v883 = vpop.xlane.xlu0 %882
      %v884 = vsel %vm835, %v817, 0.0
      %885 = vadd.xlane.f32.xlu0 %v884
      %v886 = vpop.xlane.xlu0 %885
      %v887 = vsel %vm835, %v818, 0.0
      %888 = vadd.xlane.f32.xlu0 %v887
      %v889 = vpop.xlane.xlu0 %888
      %v890 = vsel %vm835, %v819, 0.0
      %891 = vadd.xlane.f32.xlu0 %v890
      %v892 = vpop.xlane.xlu0 %891
      %v893 = vsel %vm835, %v820, 0.0
      %894 = vadd.xlane.f32.xlu0 %v893
      %v895 = vpop.xlane.xlu0 %894
      %v896 = vsel %vm835, %v821, 0.0
      %897 = vadd.xlane.f32.xlu0 %v896
      %v898 = vpop.xlane.xlu0 %897
      %v899 = vsel %vm835, %v822, 0.0
      %900 = vadd.xlane.f32.xlu0 %v899
      %v901 = vpop.xlane.xlu0 %900
      %v902 = vsel %vm835, %v823, 0.0
      %903 = vadd.xlane.f32.xlu0 %v902
      %v904 = vpop.xlane.xlu0 %903
      %v905 = vsel %vm835, %v824, 0.0
      %906 = vadd.xlane.f32.xlu0 %v905
      %v907 = vpop.xlane.xlu0 %906
      %v908 = vsel %vm835, %v825, 0.0
      %909 = vadd.xlane.f32.xlu0 %v908
      %v910 = vpop.xlane.xlu0 %909
      %v911 = vsel %vm835, %v826, 0.0
      %912 = vadd.xlane.f32.xlu0 %v911
      %v913 = vpop.xlane.xlu0 %912
      %v914 = vsel %vm835, %v827, 0.0
      %915 = vadd.xlane.f32.xlu0 %v914
      %v916 = vpop.xlane.xlu0 %915
      %v917 = vsel %vm835, %v828, 0.0
      %918 = vadd.xlane.f32.xlu0 %v917
      %v919 = vpop.xlane.xlu0 %918
      %v920 = vsel %vm835, %v829, 0.0
      %921 = vadd.xlane.f32.xlu0 %v920
      %v922 = vpop.xlane.xlu0 %921
      %v923 = vsel %vm835, %v830, 0.0
      %924 = vadd.xlane.f32.xlu0 %v923
      %v925 = vpop.xlane.xlu0 %924
      %v926 = vsel %vm835, %v831, 0.0
      %927 = vadd.xlane.f32.xlu0 %v926
      %v928 = vpop.xlane.xlu0 %927
      %v929 = vsel %vm835, %v832, 0.0
      %930 = vadd.xlane.f32.xlu0 %v929
      %v931 = vpop.xlane.xlu0 %930
      %v932 = vrcp.pop 32.0
      %v933 = vmul.f32 %v838, %v932
      %v934 = vmul.f32 %v841, %v932
      %v935 = vmul.f32 %v844, %v932
      %v936 = vmul.f32 %v847, %v932
      %v937 = vmul.f32 %v850, %v932
      %v938 = vmul.f32 %v853, %v932
      %v939 = vmul.f32 %v856, %v932
      %v940 = vmul.f32 %v859, %v932
      %v941 = vmul.f32 %v862, %v932
      %v942 = vmul.f32 %v865, %v932
      %v943 = vmul.f32 %v868, %v932
      %v944 = vmul.f32 %v871, %v932
      %v945 = vmul.f32 %v874, %v932
      %v946 = vmul.f32 %v877, %v932
      %v947 = vmul.f32 %v880, %v932
      %v948 = vmul.f32 %v883, %v932
      %v949 = vmul.f32 %v886, %v932
      %v950 = vmul.f32 %v889, %v932
      %v951 = vmul.f32 %v892, %v932
      %v952 = vmul.f32 %v895, %v932
      %v953 = vmul.f32 %v898, %v932
      %v954 = vmul.f32 %v901, %v932
      %v955 = vmul.f32 %v904, %v932
      %v956 = vmul.f32 %v907, %v932
      %v957 = vmul.f32 %v910, %v932
      %v958 = vmul.f32 %v913, %v932
      %v959 = vmul.f32 %v916, %v932
      %v960 = vmul.f32 %v919, %v932
      %v961 = vmul.f32 %v922, %v932
      %v962 = vmul.f32 %v925, %v932
      %v963 = vmul.f32 %v928, %v932
      %v964 = vmul.f32 %v931, %v932
      %v965 = vsub.f32 %v801, %v933
      %v966 = vsub.f32 %v802, %v934
      %v967 = vsub.f32 %v803, %v935
      %v968 = vsub.f32 %v804, %v936
      %v969 = vsub.f32 %v805, %v937
      %v970 = vsub.f32 %v806, %v938
      %v971 = vsub.f32 %v807, %v939
      %v972 = vsub.f32 %v808, %v940
      %v973 = vsub.f32 %v809, %v941
      %v974 = vsub.f32 %v810, %v942
      %v975 = vsub.f32 %v811, %v943
      %v976 = vsub.f32 %v812, %v944
      %v977 = vsub.f32 %v813, %v945
      %v978 = vsub.f32 %v814, %v946
      %v979 = vsub.f32 %v815, %v947
      %v980 = vsub.f32 %v816, %v948
      %v981 = vsub.f32 %v817, %v949
      %v982 = vsub.f32 %v818, %v950
      %v983 = vsub.f32 %v819, %v951
      %v984 = vsub.f32 %v820, %v952
      %v985 = vsub.f32 %v821, %v953
      %v986 = vsub.f32 %v822, %v954
      %v987 = vsub.f32 %v823, %v955
      %v988 = vsub.f32 %v824, %v956
      %v989 = vsub.f32 %v825, %v957
      %v990 = vsub.f32 %v826, %v958
      %v991 = vsub.f32 %v827, %v959
      %v992 = vsub.f32 %v828, %v960
      %v993 = vsub.f32 %v829, %v961
      %v994 = vsub.f32 %v830, %v962
      %v995 = vsub.f32 %v831, %v963
      %v996 = vsub.f32 %v832, %v964
      %v997 = vmul.f32 %v965, %v965
      %v998 = vmul.f32 %v966, %v966
      %v999 = vmul.f32 %v967, %v967
      %v1000 = vmul.f32 %v968, %v968
      %v1001 = vmul.f32 %v969, %v969
      %v1002 = vmul.f32 %v970, %v970
      %v1003 = vmul.f32 %v971, %v971
      %v1004 = vmul.f32 %v972, %v972
      %v1005 = vmul.f32 %v973, %v973
      %v1006 = vmul.f32 %v974, %v974
      %v1007 = vmul.f32 %v975, %v975
      %v1008 = vmul.f32 %v976, %v976
      %v1009 = vmul.f32 %v977, %v977
      %v1010 = vmul.f32 %v978, %v978
      %v1011 = vmul.f32 %v979, %v979
      %v1012 = vmul.f32 %v980, %v980
      %v1013 = vmul.f32 %v981, %v981
      %v1014 = vmul.f32 %v982, %v982
      %v1015 = vmul.f32 %v983, %v983
      %v1016 = vmul.f32 %v984, %v984
      %v1017 = vmul.f32 %v985, %v985
      %v1018 = vmul.f32 %v986, %v986
      %v1019 = vmul.f32 %v987, %v987
      %v1020 = vmul.f32 %v988, %v988
      %v1021 = vmul.f32 %v989, %v989
      %v1022 = vmul.f32 %v990, %v990
      %v1023 = vmul.f32 %v991, %v991
      %v1024 = vmul.f32 %v992, %v992
      %v1025 = vmul.f32 %v993, %v993
      %v1026 = vmul.f32 %v994, %v994
      %v1027 = vmul.f32 %v995, %v995
      %v1028 = vmul.f32 %v996, %v996
      %v1029 = vsel %vm835, %v997, 0.0
      %1030 = vadd.xlane.f32.xlu0 %v1029
      %v1031 = vpop.xlane.xlu0 %1030
      %v1032 = vsel %vm835, %v998, 0.0
      %1033 = vadd.xlane.f32.xlu0 %v1032
      %v1034 = vpop.xlane.xlu0 %1033
      %v1035 = vsel %vm835, %v999, 0.0
      %1036 = vadd.xlane.f32.xlu0 %v1035
      %v1037 = vpop.xlane.xlu0 %1036
      %v1038 = vsel %vm835, %v1000, 0.0
      %1039 = vadd.xlane.f32.xlu0 %v1038
      %v1040 = vpop.xlane.xlu0 %1039
      %v1041 = vsel %vm835, %v1001, 0.0
      %1042 = vadd.xlane.f32.xlu0 %v1041
      %v1043 = vpop.xlane.xlu0 %1042
      %v1044 = vsel %vm835, %v1002, 0.0
      %1045 = vadd.xlane.f32.xlu0 %v1044
      %v1046 = vpop.xlane.xlu0 %1045
      %v1047 = vsel %vm835, %v1003, 0.0
      %1048 = vadd.xlane.f32.xlu0 %v1047
      %v1049 = vpop.xlane.xlu0 %1048
      %v1050 = vsel %vm835, %v1004, 0.0
      %1051 = vadd.xlane.f32.xlu0 %v1050
      %v1052 = vpop.xlane.xlu0 %1051
      %v1053 = vsel %vm835, %v1005, 0.0
      %1054 = vadd.xlane.f32.xlu0 %v1053
      %v1055 = vpop.xlane.xlu0 %1054
      %v1056 = vsel %vm835, %v1006, 0.0
      %1057 = vadd.xlane.f32.xlu0 %v1056
      %v1058 = vpop.xlane.xlu0 %1057
      %v1059 = vsel %vm835, %v1007, 0.0
      %1060 = vadd.xlane.f32.xlu0 %v1059
      %v1061 = vpop.xlane.xlu0 %1060
      %v1062 = vsel %vm835, %v1008, 0.0
      %1063 = vadd.xlane.f32.xlu0 %v1062
      %v1064 = vpop.xlane.xlu0 %1063
      %v1065 = vsel %vm835, %v1009, 0.0
      %1066 = vadd.xlane.f32.xlu0 %v1065
      %v1067 = vpop.xlane.xlu0 %1066
      %v1068 = vsel %vm835, %v1010, 0.0
      %1069 = vadd.xlane.f32.xlu0 %v1068
      %v1070 = vpop.xlane.xlu0 %1069
      %v1071 = vsel %vm835, %v1011, 0.0
      %1072 = vadd.xlane.f32.xlu0 %v1071
      %v1073 = vpop.xlane.xlu0 %1072
      %v1074 = vsel %vm835, %v1012, 0.0
      %1075 = vadd.xlane.f32.xlu0 %v1074
      %v1076 = vpop.xlane.xlu0 %1075
      %v1077 = vsel %vm835, %v1013, 0.0
      %1078 = vadd.xlane.f32.xlu0 %v1077
      %v1079 = vpop.xlane.xlu0 %1078
      %v1080 = vsel %vm835, %v1014, 0.0
      %1081 = vadd.xlane.f32.xlu0 %v1080
      %v1082 = vpop.xlane.xlu0 %1081
      %v1083 = vsel %vm835, %v1015, 0.0
      %1084 = vadd.xlane.f32.xlu0 %v1083
      %v1085 = vpop.xlane.xlu0 %1084
      %v1086 = vsel %vm835, %v1016, 0.0
      %1087 = vadd.xlane.f32.xlu0 %v1086
      %v1088 = vpop.xlane.xlu0 %1087
      %v1089 = vsel %vm835, %v1017, 0.0
      %1090 = vadd.xlane.f32.xlu0 %v1089
      %v1091 = vpop.xlane.xlu0 %1090
      %v1092 = vsel %vm835, %v1018, 0.0
      %1093 = vadd.xlane.f32.xlu0 %v1092
      %v1094 = vpop.xlane.xlu0 %1093
      %v1095 = vsel %vm835, %v1019, 0.0
      %1096 = vadd.xlane.f32.xlu0 %v1095
      %v1097 = vpop.xlane.xlu0 %1096
      %v1098 = vsel %vm835, %v1020, 0.0
      %1099 = vadd.xlane.f32.xlu0 %v1098
      %v1100 = vpop.xlane.xlu0 %1099
      %v1101 = vsel %vm835, %v1021, 0.0
      %1102 = vadd.xlane.f32.xlu0 %v1101
      %v1103 = vpop.xlane.xlu0 %1102
      %v1104 = vsel %vm835, %v1022, 0.0
      %1105 = vadd.xlane.f32.xlu0 %v1104
      %v1106 = vpop.xlane.xlu0 %1105
      %v1107 = vsel %vm835, %v1023, 0.0
      %1108 = vadd.xlane.f32.xlu0 %v1107
      %v1109 = vpop.xlane.xlu0 %1108
      %v1110 = vsel %vm835, %v1024, 0.0
      %1111 = vadd.xlane.f32.xlu0 %v1110
      %v1112 = vpop.xlane.xlu0 %1111
      %v1113 = vsel %vm835, %v1025, 0.0
      %1114 = vadd.xlane.f32.xlu0 %v1113
      %v1115 = vpop.xlane.xlu0 %1114
      %v1116 = vsel %vm835, %v1026, 0.0
      %1117 = vadd.xlane.f32.xlu0 %v1116
      %v1118 = vpop.xlane.xlu0 %1117
      %v1119 = vsel %vm835, %v1027, 0.0
      %1120 = vadd.xlane.f32.xlu0 %v1119
      %v1121 = vpop.xlane.xlu0 %1120
      %v1122 = vsel %vm835, %v1028, 0.0
      %1123 = vadd.xlane.f32.xlu0 %v1122
      %v1124 = vpop.xlane.xlu0 %1123
      %v1125 = vmul.f32 %v1031, %v932
      %v1126 = vmul.f32 %v1034, %v932
      %v1127 = vmul.f32 %v1037, %v932
      %v1128 = vmul.f32 %v1040, %v932
      %v1129 = vmul.f32 %v1043, %v932
      %v1130 = vmul.f32 %v1046, %v932
      %v1131 = vmul.f32 %v1049, %v932
      %v1132 = vmul.f32 %v1052, %v932
      %v1133 = vmul.f32 %v1055, %v932
      %v1134 = vmul.f32 %v1058, %v932
      %v1135 = vmul.f32 %v1061, %v932
      %v1136 = vmul.f32 %v1064, %v932
      %v1137 = vmul.f32 %v1067, %v932
      %v1138 = vmul.f32 %v1070, %v932
      %v1139 = vmul.f32 %v1073, %v932
      %v1140 = vmul.f32 %v1076, %v932
      %v1141 = vmul.f32 %v1079, %v932
      %v1142 = vmul.f32 %v1082, %v932
      %v1143 = vmul.f32 %v1085, %v932
      %v1144 = vmul.f32 %v1088, %v932
      %v1145 = vmul.f32 %v1091, %v932
      %v1146 = vmul.f32 %v1094, %v932
      %v1147 = vmul.f32 %v1097, %v932
      %v1148 = vmul.f32 %v1100, %v932
      %v1149 = vmul.f32 %v1103, %v932
      %v1150 = vmul.f32 %v1106, %v932
      %v1151 = vmul.f32 %v1109, %v932
      %v1152 = vmul.f32 %v1112, %v932
      %v1153 = vmul.f32 %v1115, %v932
      %v1154 = vmul.f32 %v1118, %v932
      %v1155 = vmul.f32 %v1121, %v932
      %v1156 = vmul.f32 %v1124, %v932
      %v1157 = vadd.f32 %v1125, 1e-05
      %v1158 = vadd.f32 %v1126, 1e-05
      %v1159 = vadd.f32 %v1127, 1e-05
      %v1160 = vadd.f32 %v1128, 1e-05
      %v1161 = vadd.f32 %v1129, 1e-05
      %v1162 = vadd.f32 %v1130, 1e-05
      %v1163 = vadd.f32 %v1131, 1e-05
      %v1164 = vadd.f32 %v1132, 1e-05
      %v1165 = vadd.f32 %v1133, 1e-05
      %v1166 = vadd.f32 %v1134, 1e-05
      %v1167 = vadd.f32 %v1135, 1e-05
      %v1168 = vadd.f32 %v1136, 1e-05
      %v1169 = vadd.f32 %v1137, 1e-05
      %v1170 = vadd.f32 %v1138, 1e-05
      %v1171 = vadd.f32 %v1139, 1e-05
      %v1172 = vadd.f32 %v1140, 1e-05
      %v1173 = vadd.f32 %v1141, 1e-05
      %v1174 = vadd.f32 %v1142, 1e-05
      %v1175 = vadd.f32 %v1143, 1e-05
      %v1176 = vadd.f32 %v1144, 1e-05
      %v1177 = vadd.f32 %v1145, 1e-05
      %v1178 = vadd.f32 %v1146, 1e-05
      %v1179 = vadd.f32 %v1147, 1e-05
      %v1180 = vadd.f32 %v1148, 1e-05
      %v1181 = vadd.f32 %v1149, 1e-05
      %v1182 = vadd.f32 %v1150, 1e-05
      %v1183 = vadd.f32 %v1151, 1e-05
      %v1184 = vadd.f32 %v1152, 1e-05
      %v1185 = vadd.f32 %v1153, 1e-05
      %v1186 = vadd.f32 %v1154, 1e-05
      %v1187 = vadd.f32 %v1155, 1e-05
      %v1188 = vadd.f32 %v1156, 1e-05
      %v1189 = vrsqrt.pop %v1157
      %v1190 = vrsqrt.pop %v1158
      %v1191 = vrsqrt.pop %v1159
      %v1192 = vrsqrt.pop %v1160
      %v1193 = vrsqrt.pop %v1161
      %v1194 = vrsqrt.pop %v1162
      %v1195 = vrsqrt.pop %v1163
      %v1196 = vrsqrt.pop %v1164
      %v1197 = vrsqrt.pop %v1165
      %v1198 = vrsqrt.pop %v1166
      %v1199 = vrsqrt.pop %v1167
      %v1200 = vrsqrt.pop %v1168
      %v1201 = vrsqrt.pop %v1169
      %v1202 = vrsqrt.pop %v1170
      %v1203 = vrsqrt.pop %v1171
      %v1204 = vrsqrt.pop %v1172
      %v1205 = vrsqrt.pop %v1173
      %v1206 = vrsqrt.pop %v1174
      %v1207 = vrsqrt.pop %v1175
      %v1208 = vrsqrt.pop %v1176
      %v1209 = vrsqrt.pop %v1177
      %v1210 = vrsqrt.pop %v1178
      %v1211 = vrsqrt.pop %v1179
      %v1212 = vrsqrt.pop %v1180
      %v1213 = vrsqrt.pop %v1181
      %v1214 = vrsqrt.pop %v1182
      %v1215 = vrsqrt.pop %v1183
      %v1216 = vrsqrt.pop %v1184
      %v1217 = vrsqrt.pop %v1185
      %v1218 = vrsqrt.pop %v1186
      %v1219 = vrsqrt.pop %v1187
      %v1220 = vrsqrt.pop %v1188
      %v1221 = vmul.f32 %v965, %v1189
      %v1222 = vmul.f32 %v966, %v1190
      %v1223 = vmul.f32 %v967, %v1191
      %v1224 = vmul.f32 %v968, %v1192
      %v1225 = vmul.f32 %v969, %v1193
      %v1226 = vmul.f32 %v970, %v1194
      %v1227 = vmul.f32 %v971, %v1195
      %v1228 = vmul.f32 %v972, %v1196
      %v1229 = vmul.f32 %v973, %v1197
      %v1230 = vmul.f32 %v974, %v1198
      %v1231 = vmul.f32 %v975, %v1199
      %v1232 = vmul.f32 %v976, %v1200
      %v1233 = vmul.f32 %v977, %v1201
      %v1234 = vmul.f32 %v978, %v1202
      %v1235 = vmul.f32 %v979, %v1203
      %v1236 = vmul.f32 %v980, %v1204
      %v1237 = vmul.f32 %v981, %v1205
      %v1238 = vmul.f32 %v982, %v1206
      %v1239 = vmul.f32 %v983, %v1207
      %v1240 = vmul.f32 %v984, %v1208
      %v1241 = vmul.f32 %v985, %v1209
      %v1242 = vmul.f32 %v986, %v1210
      %v1243 = vmul.f32 %v987, %v1211
      %v1244 = vmul.f32 %v988, %v1212
      %v1245 = vmul.f32 %v989, %v1213
      %v1246 = vmul.f32 %v990, %v1214
      %v1247 = vmul.f32 %v991, %v1215
      %v1248 = vmul.f32 %v992, %v1216
      %v1249 = vmul.f32 %v993, %v1217
      %v1250 = vmul.f32 %v994, %v1218
      %v1251 = vmul.f32 %v995, %v1219
      %v1252 = vmul.f32 %v996, %v1220
      %v1254 = vlaneseq
      %v1255 = vshrl.u32 %v1254, 7
      %v1256 = vsub.s32 0, %v1255
      %v1257 = vrot.slane %v833, %v1256
      %v1259 = vmul.f32 %v1221, %v1257
      %v1260 = vmul.f32 %v1222, %v1257
      %v1261 = vmul.f32 %v1223, %v1257
      %v1262 = vmul.f32 %v1224, %v1257
      %v1263 = vmul.f32 %v1225, %v1257
      %v1264 = vmul.f32 %v1226, %v1257
      %v1265 = vmul.f32 %v1227, %v1257
      %v1266 = vmul.f32 %v1228, %v1257
      %v1267 = vmul.f32 %v1229, %v1257
      %v1268 = vmul.f32 %v1230, %v1257
      %v1269 = vmul.f32 %v1231, %v1257
      %v1270 = vmul.f32 %v1232, %v1257
      %v1271 = vmul.f32 %v1233, %v1257
      %v1272 = vmul.f32 %v1234, %v1257
      %v1273 = vmul.f32 %v1235, %v1257
      %v1274 = vmul.f32 %v1236, %v1257
      %v1275 = vmul.f32 %v1237, %v1257
      %v1276 = vmul.f32 %v1238, %v1257
      %v1277 = vmul.f32 %v1239, %v1257
      %v1278 = vmul.f32 %v1240, %v1257
      %v1279 = vmul.f32 %v1241, %v1257
      %v1280 = vmul.f32 %v1242, %v1257
      %v1281 = vmul.f32 %v1243, %v1257
      %v1282 = vmul.f32 %v1244, %v1257
      %v1283 = vmul.f32 %v1245, %v1257
      %v1284 = vmul.f32 %v1246, %v1257
      %v1285 = vmul.f32 %v1247, %v1257
      %v1286 = vmul.f32 %v1248, %v1257
      %v1287 = vmul.f32 %v1249, %v1257
      %v1288 = vmul.f32 %v1250, %v1257
      %v1289 = vmul.f32 %v1251, %v1257
      %v1290 = vmul.f32 %v1252, %v1257
      %v1292 = vlaneseq
      %v1293 = vshrl.u32 %v1292, 7
      %v1294 = vsub.s32 0, %v1293
      %v1295 = vrot.slane %v834, %v1294
      %v1297 = vadd.f32 %v1259, %v1295
      %v1298 = vadd.f32 %v1260, %v1295
      %v1299 = vadd.f32 %v1261, %v1295
      %v1300 = vadd.f32 %v1262, %v1295
      %v1301 = vadd.f32 %v1263, %v1295
      %v1302 = vadd.f32 %v1264, %v1295
      %v1303 = vadd.f32 %v1265, %v1295
      %v1304 = vadd.f32 %v1266, %v1295
      %v1305 = vadd.f32 %v1267, %v1295
      %v1306 = vadd.f32 %v1268, %v1295
      %v1307 = vadd.f32 %v1269, %v1295
      %v1308 = vadd.f32 %v1270, %v1295
      %v1309 = vadd.f32 %v1271, %v1295
      %v1310 = vadd.f32 %v1272, %v1295
      %v1311 = vadd.f32 %v1273, %v1295
      %v1312 = vadd.f32 %v1274, %v1295
      %v1313 = vadd.f32 %v1275, %v1295
      %v1314 = vadd.f32 %v1276, %v1295
      %v1315 = vadd.f32 %v1277, %v1295
      %v1316 = vadd.f32 %v1278, %v1295
      %v1317 = vadd.f32 %v1279, %v1295
      %v1318 = vadd.f32 %v1280, %v1295
      %v1319 = vadd.f32 %v1281, %v1295
      %v1320 = vadd.f32 %v1282, %v1295
      %v1321 = vadd.f32 %v1283, %v1295
      %v1322 = vadd.f32 %v1284, %v1295
      %v1323 = vadd.f32 %v1285, %v1295
      %v1324 = vadd.f32 %v1286, %v1295
      %v1325 = vadd.f32 %v1287, %v1295
      %v1326 = vadd.f32 %v1288, %v1295
      %v1327 = vadd.f32 %v1289, %v1295
      %v1328 = vadd.f32 %v1290, %v1295
      %v1329 = vpack.c.bf16 %v1298, %v1297
      %v1330 = vpack.c.bf16 %v1300, %v1299
      %v1331 = vpack.c.bf16 %v1302, %v1301
      %v1332 = vpack.c.bf16 %v1304, %v1303
      %v1333 = vpack.c.bf16 %v1306, %v1305
      %v1334 = vpack.c.bf16 %v1308, %v1307
      %v1335 = vpack.c.bf16 %v1310, %v1309
      %v1336 = vpack.c.bf16 %v1312, %v1311
      %v1337 = vpack.c.bf16 %v1314, %v1313
      %v1338 = vpack.c.bf16 %v1316, %v1315
      %v1339 = vpack.c.bf16 %v1318, %v1317
      %v1340 = vpack.c.bf16 %v1320, %v1319
      %v1341 = vpack.c.bf16 %v1322, %v1321
      %v1342 = vpack.c.bf16 %v1324, %v1323
      %v1343 = vpack.c.bf16 %v1326, %v1325
      %v1344 = vpack.c.bf16 %v1328, %v1327
      %v1345 = vld [vmem:[%s681] sm:$0xf]
      %v1346 = vld [vmem:[%s681 + $0x4] sm:$0xf]
      %v1347 = vld [vmem:[%s681 + $0x8] sm:$0xf]
      %v1348 = vld [vmem:[%s681 + $0xc] sm:$0xf]
      %v1349 = vld [vmem:[%s684] sm:$0x1]
      %v1351 = vlaneseq
      %v1352 = vshrl.u32 %v1351, 7
      %v1353 = vsub.s32 0, %v1352
      %v1354 = vrot.slane %v1349, %v1353
      %v1360 = vunpack.c.l.b16 %v1345
      %v1361 = vunpack.c.l.b16 %v1346
      %v1362 = vunpack.c.l.b16 %v1347
      %v1363 = vunpack.c.l.b16 %v1348
      %v1364 = vpack.c.b16 %v1361, %v1360
      %v1365 = vpack.c.b16 %v1363, %v1362
      %v1369 = vsel %vm835, %v1329, 0
      %v1372 = vsel %vm835, %v1330, 0
      %v1375 = vsel %vm835, %v1331, 0
      %v1378 = vsel %vm835, %v1332, 0
      %v1381 = vsel %vm835, %v1333, 0
      %v1384 = vsel %vm835, %v1334, 0
      %v1387 = vsel %vm835, %v1335, 0
      %v1390 = vsel %vm835, %v1336, 0
      %v1393 = vsel %vm835, %v1337, 0
      %v1396 = vsel %vm835, %v1338, 0
      %v1399 = vsel %vm835, %v1339, 0
      %v1402 = vsel %vm835, %v1340, 0
      %v1405 = vsel %vm835, %v1341, 0
      %v1408 = vsel %vm835, %v1342, 0
      %v1411 = vsel %vm835, %v1343, 0
      %v1414 = vsel %vm835, %v1344, 0
      %1416 = vmatprep.subr.bf16.mxu0 0
      %1417 = vmatpush1.bf16.msra.mxu0 0
      %1418 = vmatprep.subr.bf16.mxu0 0
      %1419 = vmatpush1.bf16.msra.mxu0 0
      %1420 = vmatprep.subr.bf16.mxu0 0
      %1421 = vmatpush1.bf16.msra.mxu0 0
      %1422 = vmatprep.subr.bf16.mxu0 0
      %1423 = vmatpush1.bf16.msra.mxu0 0
      %1424 = vmatprep.subr.bf16.mxu0 0
      %1425 = vmatpush1.bf16.msra.mxu0 0
      %1426 = vmatprep.subr.bf16.mxu0 0
      %1427 = vmatpush1.bf16.msra.mxu0 0
      %1428 = vmatprep.subr.bf16.mxu0 0
      %1429 = vmatpush1.bf16.msra.mxu0 %v1365
      %1430 = vmatprep.subr.bf16.mxu0 0
      %1431 = vmatpush1.bf16.msra.mxu0 %v1364
      %1432 = vmatprep.subr.bf16.mxu0 0
      %1433 = vmatpush2.bf16.msra.mxu0 0
      %1434 = vmatprep.subr.bf16.mxu0 0
      %1435 = vmatpush2.bf16.msra.mxu0 0
      %1436 = vmatprep.subr.bf16.mxu0 0
      %1437 = vmatpush2.bf16.msra.mxu0 0
      %1438 = vmatprep.subr.bf16.mxu0 0
      %1439 = vmatpush2.bf16.msra.mxu0 0
      %1440 = vmatprep.subr.bf16.mxu0 0
      %1441 = vmatpush2.bf16.msra.mxu0 0
      %1442 = vmatprep.subr.bf16.mxu0 0
      %1443 = vmatpush2.bf16.msra.mxu0 0
      %1444 = vmatprep.subr.bf16.mxu0 0
      %1445 = vmatpush2.bf16.msra.mxu0 0
      %1446 = vmatprep.subr.bf16.mxu0 0
      %1447 = vmatpush2.bf16.msra.mxu0 0
      %1448 = vmatprep.mubr.bf16.mxu0 0
      %1449 = vmatmul.mubr.bf16.gmra.mxu0 %v1369
      %v1450 = vpop.f32.mrf.mxu0
      %v1451 = vadd.f32 %v1354, %v1450
      %v1452 = vpop.f32.mrf.mxu0
      %v1453 = vpop.f32.mrf.mxu0
      %v1454 = vadd.f32 %v1354, %v1453
      %v1455 = vpop.f32.mrf.mxu0
      %1456 = vmatprep.mubr.bf16.mxu0 0
      %1457 = vmatmul.mubr.bf16.gmra.mxu0 %v1372
      %v1458 = vpop.f32.mrf.mxu0
      %v1459 = vadd.f32 %v1354, %v1458
      %v1460 = vpop.f32.mrf.mxu0
      %v1461 = vpop.f32.mrf.mxu0
      %v1462 = vadd.f32 %v1354, %v1461
      %v1463 = vpop.f32.mrf.mxu0
      %1464 = vmatprep.mubr.bf16.mxu0 0
      %1465 = vmatmul.mubr.bf16.gmra.mxu0 %v1375
      %v1466 = vpop.f32.mrf.mxu0
      %v1467 = vadd.f32 %v1354, %v1466
      %v1468 = vpop.f32.mrf.mxu0
      %v1469 = vpop.f32.mrf.mxu0
      %v1470 = vadd.f32 %v1354, %v1469
      %v1471 = vpop.f32.mrf.mxu0
      %1472 = vmatprep.mubr.bf16.mxu0 0
      %1473 = vmatmul.mubr.bf16.gmra.mxu0 %v1378
      %v1474 = vpop.f32.mrf.mxu0
      %v1475 = vadd.f32 %v1354, %v1474
      %v1476 = vpop.f32.mrf.mxu0
      %v1477 = vpop.f32.mrf.mxu0
      %v1478 = vadd.f32 %v1354, %v1477
      %v1479 = vpop.f32.mrf.mxu0
      %1480 = vmatprep.mubr.bf16.mxu0 0
      %1481 = vmatmul.mubr.bf16.gmra.mxu0 %v1381
      %v1482 = vpop.f32.mrf.mxu0
      %v1483 = vadd.f32 %v1354, %v1482
      %v1484 = vpop.f32.mrf.mxu0
      %v1485 = vpop.f32.mrf.mxu0
      %v1486 = vadd.f32 %v1354, %v1485
      %v1487 = vpop.f32.mrf.mxu0
      %1488 = vmatprep.mubr.bf16.mxu0 0
      %1489 = vmatmul.mubr.bf16.gmra.mxu0 %v1384
      %v1490 = vpop.f32.mrf.mxu0
      %v1491 = vadd.f32 %v1354, %v1490
      %v1492 = vpop.f32.mrf.mxu0
      %v1493 = vpop.f32.mrf.mxu0
      %v1494 = vadd.f32 %v1354, %v1493
      %v1495 = vpop.f32.mrf.mxu0
      %1496 = vmatprep.mubr.bf16.mxu0 0
      %1497 = vmatmul.mubr.bf16.gmra.mxu0 %v1387
      %v1498 = vpop.f32.mrf.mxu0
      %v1499 = vadd.f32 %v1354, %v1498
      %v1500 = vpop.f32.mrf.mxu0
      %v1501 = vpop.f32.mrf.mxu0
      %v1502 = vadd.f32 %v1354, %v1501
      %v1503 = vpop.f32.mrf.mxu0
      %1504 = vmatprep.mubr.bf16.mxu0 0
      %1505 = vmatmul.mubr.bf16.gmra.mxu0 %v1390
      %v1506 = vpop.f32.mrf.mxu0
      %v1507 = vadd.f32 %v1354, %v1506
      %v1508 = vpop.f32.mrf.mxu0
      %v1509 = vpop.f32.mrf.mxu0
      %v1510 = vadd.f32 %v1354, %v1509
      %v1511 = vpop.f32.mrf.mxu0
      %1512 = vmatprep.mubr.bf16.mxu0 0
      %1513 = vmatmul.mubr.bf16.gmra.mxu0 %v1393
      %v1514 = vpop.f32.mrf.mxu0
      %v1515 = vadd.f32 %v1354, %v1514
      %v1516 = vpop.f32.mrf.mxu0
      %v1517 = vpop.f32.mrf.mxu0
      %v1518 = vadd.f32 %v1354, %v1517
      %v1519 = vpop.f32.mrf.mxu0
      %1520 = vmatprep.mubr.bf16.mxu0 0
      %1521 = vmatmul.mubr.bf16.gmra.mxu0 %v1396
      %v1522 = vpop.f32.mrf.mxu0
      %v1523 = vadd.f32 %v1354, %v1522
      %v1524 = vpop.f32.mrf.mxu0
      %v1525 = vpop.f32.mrf.mxu0
      %v1526 = vadd.f32 %v1354, %v1525
      %v1527 = vpop.f32.mrf.mxu0
      %1528 = vmatprep.mubr.bf16.mxu0 0
      %1529 = vmatmul.mubr.bf16.gmra.mxu0 %v1399
      %v1530 = vpop.f32.mrf.mxu0
      %v1531 = vadd.f32 %v1354, %v1530
      %v1532 = vpop.f32.mrf.mxu0
      %v1533 = vpop.f32.mrf.mxu0
      %v1534 = vadd.f32 %v1354, %v1533
      %v1535 = vpop.f32.mrf.mxu0
      %1536 = vmatprep.mubr.bf16.mxu0 0
      %1537 = vmatmul.mubr.bf16.gmra.mxu0 %v1402
      %v1538 = vpop.f32.mrf.mxu0
      %v1539 = vadd.f32 %v1354, %v1538
      %v1540 = vpop.f32.mrf.mxu0
      %v1541 = vpop.f32.mrf.mxu0
      %v1542 = vadd.f32 %v1354, %v1541
      %v1543 = vpop.f32.mrf.mxu0
      %1544 = vmatprep.mubr.bf16.mxu0 0
      %1545 = vmatmul.mubr.bf16.gmra.mxu0 %v1405
      %v1546 = vpop.f32.mrf.mxu0
      %v1547 = vadd.f32 %v1354, %v1546
      %v1548 = vpop.f32.mrf.mxu0
      %v1549 = vpop.f32.mrf.mxu0
      %v1550 = vadd.f32 %v1354, %v1549
      %v1551 = vpop.f32.mrf.mxu0
      %1552 = vmatprep.mubr.bf16.mxu0 0
      %1553 = vmatmul.mubr.bf16.gmra.mxu0 %v1408
      %v1554 = vpop.f32.mrf.mxu0
      %v1555 = vadd.f32 %v1354, %v1554
      %v1556 = vpop.f32.mrf.mxu0
      %v1557 = vpop.f32.mrf.mxu0
      %v1558 = vadd.f32 %v1354, %v1557
      %v1559 = vpop.f32.mrf.mxu0
      %1560 = vmatprep.mubr.bf16.mxu0 0
      %1561 = vmatmul.mubr.bf16.gmra.mxu0 %v1411
      %v1562 = vpop.f32.mrf.mxu0
      %v1563 = vadd.f32 %v1354, %v1562
      %v1564 = vpop.f32.mrf.mxu0
      %v1565 = vpop.f32.mrf.mxu0
      %v1566 = vadd.f32 %v1354, %v1565
      %v1567 = vpop.f32.mrf.mxu0
      %1568 = vmatprep.mubr.bf16.mxu0 0
      %1569 = vmatmul.mubr.bf16.gmra.mxu0 %v1414
      %v1570 = vpop.f32.mrf.mxu0
      %v1571 = vadd.f32 %v1354, %v1570
      %v1572 = vpop.f32.mrf.mxu0
      %v1573 = vpop.f32.mrf.mxu0
      %v1574 = vadd.f32 %v1354, %v1573
      %v1575 = vpop.f32.mrf.mxu0
      %1576 = vdwg.mxu0
      %v1577 = vpack.c.bf16 %v1454, %v1451
      %v1578 = vpack.c.bf16 %v1462, %v1459
      %v1579 = vpack.c.bf16 %v1470, %v1467
      %v1580 = vpack.c.bf16 %v1478, %v1475
      %v1581 = vpack.c.bf16 %v1486, %v1483
      %v1582 = vpack.c.bf16 %v1494, %v1491
      %v1583 = vpack.c.bf16 %v1502, %v1499
      %v1584 = vpack.c.bf16 %v1510, %v1507
      %v1585 = vpack.c.bf16 %v1518, %v1515
      %v1586 = vpack.c.bf16 %v1526, %v1523
      %v1587 = vpack.c.bf16 %v1534, %v1531
      %v1588 = vpack.c.bf16 %v1542, %v1539
      %v1589 = vpack.c.bf16 %v1550, %v1547
      %v1590 = vpack.c.bf16 %v1558, %v1555
      %v1591 = vpack.c.bf16 %v1566, %v1563
      %v1592 = vpack.c.bf16 %v1574, %v1571
      %v1593 = vld [vmem:[%s689] sm:$0xf]
      %v1594 = vld [vmem:[%s689 + $0x4] sm:$0xf]
      %v1595 = vld [vmem:[%s689 + $0x8] sm:$0xf]
      %v1596 = vld [vmem:[%s689 + $0xc] sm:$0xf]
      %v1597 = vld [vmem:[%s689 + $0x10] sm:$0xf]
      %v1598 = vld [vmem:[%s689 + $0x14] sm:$0xf]
      %v1599 = vld [vmem:[%s689 + $0x18] sm:$0xf]
      %v1600 = vld [vmem:[%s689 + $0x1c] sm:$0xf]
      %v1601 = vld [vmem:[%s689 + $0x20] sm:$0xf]
      %v1602 = vld [vmem:[%s689 + $0x24] sm:$0xf]
      %v1603 = vld [vmem:[%s689 + $0x28] sm:$0xf]
      %v1604 = vld [vmem:[%s689 + $0x2c] sm:$0xf]
      %v1605 = vld [vmem:[%s689 + $0x30] sm:$0xf]
      %v1606 = vld [vmem:[%s689 + $0x34] sm:$0xf]
      %v1607 = vld [vmem:[%s689 + $0x38] sm:$0xf]
      %v1608 = vld [vmem:[%s689 + $0x3c] sm:$0xf]
      %v1609 = vld [vmem:[%s689 + $0x40] sm:$0xf]
      %v1610 = vld [vmem:[%s689 + $0x44] sm:$0xf]
      %v1611 = vld [vmem:[%s689 + $0x48] sm:$0xf]
      %v1612 = vld [vmem:[%s689 + $0x4c] sm:$0xf]
      %v1613 = vld [vmem:[%s689 + $0x50] sm:$0xf]
      %v1614 = vld [vmem:[%s689 + $0x54] sm:$0xf]
      %v1615 = vld [vmem:[%s689 + $0x58] sm:$0xf]
      %v1616 = vld [vmem:[%s689 + $0x5c] sm:$0xf]
      %v1617 = vld [vmem:[%s689 + $0x60] sm:$0xf]
      %v1618 = vld [vmem:[%s689 + $0x64] sm:$0xf]
      %v1619 = vld [vmem:[%s689 + $0x68] sm:$0xf]
      %v1620 = vld [vmem:[%s689 + $0x6c] sm:$0xf]
      %v1621 = vld [vmem:[%s689 + $0x70] sm:$0xf]
      %v1622 = vld [vmem:[%s689 + $0x74] sm:$0xf]
      %v1623 = vld [vmem:[%s689 + $0x78] sm:$0xf]
      %v1624 = vld [vmem:[%s689 + $0x7c] sm:$0xf]
      %v1625 = vunpack.c.l.bf16 %v1593
      %v1626 = vunpack.c.l.bf16 %v1594
      %v1627 = vunpack.c.l.bf16 %v1595
      %v1628 = vunpack.c.l.bf16 %v1596
      %v1629 = vunpack.c.l.bf16 %v1597
      %v1630 = vunpack.c.l.bf16 %v1598
      %v1631 = vunpack.c.l.bf16 %v1599
      %v1632 = vunpack.c.l.bf16 %v1600
      %1637 = vrot.lane.b32.xlu0 %v1577, 96
      %v1638 = vpop.permute.xlu0 %1637
      %1639 = vrot.lane.b32.xlu0 %v1578, 96
      %v1640 = vpop.permute.xlu0 %1639
      %1641 = vrot.lane.b32.xlu0 %v1579, 96
      %v1642 = vpop.permute.xlu0 %1641
      %1643 = vrot.lane.b32.xlu0 %v1580, 96
      %v1644 = vpop.permute.xlu0 %1643
      %vm1645 = vcmask 64512
      %v1647 = vsel %vm1645, %v1577, 0
      %v1650 = vsel %vm1645, %v1578, 0
      %v1653 = vsel %vm1645, %v1579, 0
      %v1656 = vsel %vm1645, %v1580, 0
      %v1659 = vsel %vm1645, %v1638, 0
      %v1662 = vsel %vm1645, %v1640, 0
      %v1665 = vsel %vm1645, %v1642, 0
      %v1668 = vsel %vm1645, %v1644, 0
      %1670 = vmatprep.subr.bf16.mxu0 0
      %1671 = vmatpush1.bf16.xpose.msra.mxu0 0
      %1672 = vmatprep.subr.bf16.mxu0 0
      %1673 = vmatpush1.bf16.xpose.msra.mxu0 0
      %1674 = vmatprep.subr.bf16.mxu0 0
      %1675 = vmatpush1.bf16.xpose.msra.mxu0 0
      %1676 = vmatprep.subr.bf16.mxu0 0
      %1677 = vmatpush1.bf16.xpose.msra.mxu0 0
      %1678 = vmatprep.subr.bf16.mxu0 0
      %1679 = vmatpush1.bf16.xpose.msra.mxu0 %v1668
      %1680 = vmatprep.subr.bf16.mxu0 0
      %1681 = vmatpush1.bf16.xpose.msra.mxu0 %v1665
      %1682 = vmatprep.subr.bf16.mxu0 0
      %1683 = vmatpush1.bf16.xpose.msra.mxu0 %v1662
      %1684 = vmatprep.subr.bf16.mxu0 0
      %1685 = vmatpush1.bf16.xpose.msra.mxu0 %v1659
      %1686 = vmatprep.subr.bf16.mxu0 0
      %1687 = vmatpush2.bf16.xpose.msra.mxu0 0
      %1688 = vmatprep.subr.bf16.mxu0 0
      %1689 = vmatpush2.bf16.xpose.msra.mxu0 0
      %1690 = vmatprep.subr.bf16.mxu0 0
      %1691 = vmatpush2.bf16.xpose.msra.mxu0 0
      %1692 = vmatprep.subr.bf16.mxu0 0
      %1693 = vmatpush2.bf16.xpose.msra.mxu0 0
      %1694 = vmatprep.subr.bf16.mxu0 0
      %1695 = vmatpush2.bf16.xpose.msra.mxu0 0
      %1696 = vmatprep.subr.bf16.mxu0 0
      %1697 = vmatpush2.bf16.xpose.msra.mxu0 0
      %1698 = vmatprep.subr.bf16.mxu0 0
      %1699 = vmatpush2.bf16.xpose.msra.mxu0 0
      %1700 = vmatprep.subr.bf16.mxu0 0
      %1701 = vmatpush2.bf16.xpose.msra.mxu0 0
      %1702 = vmatprep.mubr.bf16.mxu0 0
      %1703 = vmatmul.mubr.bf16.gmra.mxu0 %v1647
      %v1704 = vpop.f32.mrf.mxu0
      %v1705 = vadd.f32 %v1625, %v1704
      %v1706 = vpop.f32.mrf.mxu0
      %v1707 = vpop.f32.mrf.mxu0
      %v1708 = vadd.f32 %v1626, %v1707
      %v1709 = vpop.f32.mrf.mxu0
      %1710 = vmatprep.mubr.bf16.mxu0 0
      %1711 = vmatmul.mubr.bf16.gmra.mxu0 %v1650
      %v1712 = vpop.f32.mrf.mxu0
      %v1713 = vadd.f32 %v1627, %v1712
      %v1714 = vpop.f32.mrf.mxu0
      %v1715 = vpop.f32.mrf.mxu0
      %v1716 = vadd.f32 %v1628, %v1715
      %v1717 = vpop.f32.mrf.mxu0
      %1718 = vmatprep.mubr.bf16.mxu0 0
      %1719 = vmatmul.mubr.bf16.gmra.mxu0 %v1653
      %v1720 = vpop.f32.mrf.mxu0
      %v1721 = vadd.f32 %v1629, %v1720
      %v1722 = vpop.f32.mrf.mxu0
      %v1723 = vpop.f32.mrf.mxu0
      %v1724 = vadd.f32 %v1630, %v1723
      %v1725 = vpop.f32.mrf.mxu0
      %1726 = vmatprep.mubr.bf16.mxu0 0
      %1727 = vmatmul.mubr.bf16.gmra.mxu0 %v1656
      %v1728 = vpop.f32.mrf.mxu0
      %v1729 = vadd.f32 %v1631, %v1728
      %v1730 = vpop.f32.mrf.mxu0
      %v1731 = vpop.f32.mrf.mxu0
      %v1732 = vadd.f32 %v1632, %v1731
      %v1733 = vpop.f32.mrf.mxu0
      %1734 = vdwg.mxu0
      %1739 = vrot.lane.b32.xlu0 %v1581, 96
      %v1740 = vpop.permute.xlu0 %1739
      %1741 = vrot.lane.b32.xlu0 %v1582, 96
      %v1742 = vpop.permute.xlu0 %1741
      %1743 = vrot.lane.b32.xlu0 %v1583, 96
      %v1744 = vpop.permute.xlu0 %1743
      %1745 = vrot.lane.b32.xlu0 %v1584, 96
      %v1746 = vpop.permute.xlu0 %1745
      %v1748 = vsel %vm1645, %v1581, 0
      %v1751 = vsel %vm1645, %v1582, 0
      %v1754 = vsel %vm1645, %v1583, 0
      %v1757 = vsel %vm1645, %v1584, 0
      %v1760 = vsel %vm1645, %v1740, 0
      %v1763 = vsel %vm1645, %v1742, 0
      %v1766 = vsel %vm1645, %v1744, 0
      %v1769 = vsel %vm1645, %v1746, 0
      %1771 = vmatprep.subr.bf16.mxu0 0
      %1772 = vmatpush1.bf16.xpose.msra.mxu0 0
      %1773 = vmatprep.subr.bf16.mxu0 0
      %1774 = vmatpush1.bf16.xpose.msra.mxu0 0
      %1775 = vmatprep.subr.bf16.mxu0 0
      %1776 = vmatpush1.bf16.xpose.msra.mxu0 0
      %1777 = vmatprep.subr.bf16.mxu0 0
      %1778 = vmatpush1.bf16.xpose.msra.mxu0 0
      %1779 = vmatprep.subr.bf16.mxu0 0
      %1780 = vmatpush1.bf16.xpose.msra.mxu0 %v1769
      %1781 = vmatprep.subr.bf16.mxu0 0
      %1782 = vmatpush1.bf16.xpose.msra.mxu0 %v1766
      %1783 = vmatprep.subr.bf16.mxu0 0
      %1784 = vmatpush1.bf16.xpose.msra.mxu0 %v1763
      %1785 = vmatprep.subr.bf16.mxu0 0
      %1786 = vmatpush1.bf16.xpose.msra.mxu0 %v1760
      %1787 = vmatprep.subr.bf16.mxu0 0
      %1788 = vmatpush2.bf16.xpose.msra.mxu0 0
      %1789 = vmatprep.subr.bf16.mxu0 0
      %1790 = vmatpush2.bf16.xpose.msra.mxu0 0
      %1791 = vmatprep.subr.bf16.mxu0 0
      %1792 = vmatpush2.bf16.xpose.msra.mxu0 0
      %1793 = vmatprep.subr.bf16.mxu0 0
      %1794 = vmatpush2.bf16.xpose.msra.mxu0 0
      %1795 = vmatprep.subr.bf16.mxu0 0
      %1796 = vmatpush2.bf16.xpose.msra.mxu0 0
      %1797 = vmatprep.subr.bf16.mxu0 0
      %1798 = vmatpush2.bf16.xpose.msra.mxu0 0
      %1799 = vmatprep.subr.bf16.mxu0 0
      %1800 = vmatpush2.bf16.xpose.msra.mxu0 0
      %1801 = vmatprep.subr.bf16.mxu0 0
      %1802 = vmatpush2.bf16.xpose.msra.mxu0 0
      %1803 = vmatprep.mubr.bf16.mxu0 0
      %1804 = vmatmul.mubr.bf16.gmra.mxu0 %v1748
      %v1805 = vpop.f32.mrf.mxu0
      %v1806 = vadd.f32 %v1625, %v1805
      %v1807 = vpop.f32.mrf.mxu0
      %v1808 = vpop.f32.mrf.mxu0
      %v1809 = vadd.f32 %v1626, %v1808
      %v1810 = vpop.f32.mrf.mxu0
      %1811 = vmatprep.mubr.bf16.mxu0 0
      %1812 = vmatmul.mubr.bf16.gmra.mxu0 %v1751
      %v1813 = vpop.f32.mrf.mxu0
      %v1814 = vadd.f32 %v1627, %v1813
      %v1815 = vpop.f32.mrf.mxu0
      %v1816 = vpop.f32.mrf.mxu0
      %v1817 = vadd.f32 %v1628, %v1816
      %v1818 = vpop.f32.mrf.mxu0
      %1819 = vmatprep.mubr.bf16.mxu0 0
      %1820 = vmatmul.mubr.bf16.gmra.mxu0 %v1754
      %v1821 = vpop.f32.mrf.mxu0
      %v1822 = vadd.f32 %v1629, %v1821
      %v1823 = vpop.f32.mrf.mxu0
      %v1824 = vpop.f32.mrf.mxu0
      %v1825 = vadd.f32 %v1630, %v1824
      %v1826 = vpop.f32.mrf.mxu0
      %1827 = vmatprep.mubr.bf16.mxu0 0
      %1828 = vmatmul.mubr.bf16.gmra.mxu0 %v1757
      %v1829 = vpop.f32.mrf.mxu0
      %v1830 = vadd.f32 %v1631, %v1829
      %v1831 = vpop.f32.mrf.mxu0
      %v1832 = vpop.f32.mrf.mxu0
      %v1833 = vadd.f32 %v1632, %v1832
      %v1834 = vpop.f32.mrf.mxu0
      %1835 = vdwg.mxu0
      %1840 = vrot.lane.b32.xlu0 %v1585, 96
      %v1841 = vpop.permute.xlu0 %1840
      %1842 = vrot.lane.b32.xlu0 %v1586, 96
      %v1843 = vpop.permute.xlu0 %1842
      %1844 = vrot.lane.b32.xlu0 %v1587, 96
      %v1845 = vpop.permute.xlu0 %1844
      %1846 = vrot.lane.b32.xlu0 %v1588, 96
      %v1847 = vpop.permute.xlu0 %1846
      %v1849 = vsel %vm1645, %v1585, 0
      %v1852 = vsel %vm1645, %v1586, 0
      %v1855 = vsel %vm1645, %v1587, 0
      %v1858 = vsel %vm1645, %v1588, 0
      %v1861 = vsel %vm1645, %v1841, 0
      %v1864 = vsel %vm1645, %v1843, 0
      %v1867 = vsel %vm1645, %v1845, 0
      %v1870 = vsel %vm1645, %v1847, 0
      %1872 = vmatprep.subr.bf16.mxu0 0
      %1873 = vmatpush1.bf16.xpose.msra.mxu0 0
      %1874 = vmatprep.subr.bf16.mxu0 0
      %1875 = vmatpush1.bf16.xpose.msra.mxu0 0
      %1876 = vmatprep.subr.bf16.mxu0 0
      %1877 = vmatpush1.bf16.xpose.msra.mxu0 0
      %1878 = vmatprep.subr.bf16.mxu0 0
      %1879 = vmatpush1.bf16.xpose.msra.mxu0 0
      %1880 = vmatprep.subr.bf16.mxu0 0
      %1881 = vmatpush1.bf16.xpose.msra.mxu0 %v1870
      %1882 = vmatprep.subr.bf16.mxu0 0
      %1883 = vmatpush1.bf16.xpose.msra.mxu0 %v1867
      %1884 = vmatprep.subr.bf16.mxu0 0
      %1885 = vmatpush1.bf16.xpose.msra.mxu0 %v1864
      %1886 = vmatprep.subr.bf16.mxu0 0
      %1887 = vmatpush1.bf16.xpose.msra.mxu0 %v1861
      %1888 = vmatprep.subr.bf16.mxu0 0
      %1889 = vmatpush2.bf16.xpose.msra.mxu0 0
      %1890 = vmatprep.subr.bf16.mxu0 0
      %1891 = vmatpush2.bf16.xpose.msra.mxu0 0
      %1892 = vmatprep.subr.bf16.mxu0 0
      %1893 = vmatpush2.bf16.xpose.msra.mxu0 0
      %1894 = vmatprep.subr.bf16.mxu0 0
      %1895 = vmatpush2.bf16.xpose.msra.mxu0 0
      %1896 = vmatprep.subr.bf16.mxu0 0
      %1897 = vmatpush2.bf16.xpose.msra.mxu0 0
      %1898 = vmatprep.subr.bf16.mxu0 0
      %1899 = vmatpush2.bf16.xpose.msra.mxu0 0
      %1900 = vmatprep.subr.bf16.mxu0 0
      %1901 = vmatpush2.bf16.xpose.msra.mxu0 0
      %1902 = vmatprep.subr.bf16.mxu0 0
      %1903 = vmatpush2.bf16.xpose.msra.mxu0 0
      %1904 = vmatprep.mubr.bf16.mxu0 0
      %1905 = vmatmul.mubr.bf16.gmra.mxu0 %v1849
      %v1906 = vpop.f32.mrf.mxu0
      %v1907 = vadd.f32 %v1625, %v1906
      %v1908 = vpop.f32.mrf.mxu0
      %v1909 = vpop.f32.mrf.mxu0
      %v1910 = vadd.f32 %v1626, %v1909
      %v1911 = vpop.f32.mrf.mxu0
      %1912 = vmatprep.mubr.bf16.mxu0 0
      %1913 = vmatmul.mubr.bf16.gmra.mxu0 %v1852
      %v1914 = vpop.f32.mrf.mxu0
      %v1915 = vadd.f32 %v1627, %v1914
      %v1916 = vpop.f32.mrf.mxu0
      %v1917 = vpop.f32.mrf.mxu0
      %v1918 = vadd.f32 %v1628, %v1917
      %v1919 = vpop.f32.mrf.mxu0
      %1920 = vmatprep.mubr.bf16.mxu0 0
      %1921 = vmatmul.mubr.bf16.gmra.mxu0 %v1855
      %v1922 = vpop.f32.mrf.mxu0
      %v1923 = vadd.f32 %v1629, %v1922
      %v1924 = vpop.f32.mrf.mxu0
      %v1925 = vpop.f32.mrf.mxu0
      %v1926 = vadd.f32 %v1630, %v1925
      %v1927 = vpop.f32.mrf.mxu0
      %1928 = vmatprep.mubr.bf16.mxu0 0
      %1929 = vmatmul.mubr.bf16.gmra.mxu0 %v1858
      %v1930 = vpop.f32.mrf.mxu0
      %v1931 = vadd.f32 %v1631, %v1930
      %v1932 = vpop.f32.mrf.mxu0
      %v1933 = vpop.f32.mrf.mxu0
      %v1934 = vadd.f32 %v1632, %v1933
      %v1935 = vpop.f32.mrf.mxu0
      %1936 = vdwg.mxu0
      %1941 = vrot.lane.b32.xlu0 %v1589, 96
      %v1942 = vpop.permute.xlu0 %1941
      %1943 = vrot.lane.b32.xlu0 %v1590, 96
      %v1944 = vpop.permute.xlu0 %1943
      %1945 = vrot.lane.b32.xlu0 %v1591, 96
      %v1946 = vpop.permute.xlu0 %1945
      %1947 = vrot.lane.b32.xlu0 %v1592, 96
      %v1948 = vpop.permute.xlu0 %1947
      %v1950 = vsel %vm1645, %v1589, 0
      %v1953 = vsel %vm1645, %v1590, 0
      %v1956 = vsel %vm1645, %v1591, 0
      %v1959 = vsel %vm1645, %v1592, 0
      %v1962 = vsel %vm1645, %v1942, 0
      %v1965 = vsel %vm1645, %v1944, 0
      %v1968 = vsel %vm1645, %v1946, 0
      %v1971 = vsel %vm1645, %v1948, 0
      %1973 = vmatprep.subr.bf16.mxu0 0
      %1974 = vmatpush1.bf16.xpose.msra.mxu0 0
      %1975 = vmatprep.subr.bf16.mxu0 0
      %1976 = vmatpush1.bf16.xpose.msra.mxu0 0
      %1977 = vmatprep.subr.bf16.mxu0 0
      %1978 = vmatpush1.bf16.xpose.msra.mxu0 0
      %1979 = vmatprep.subr.bf16.mxu0 0
      %1980 = vmatpush1.bf16.xpose.msra.mxu0 0
      %1981 = vmatprep.subr.bf16.mxu0 0
      %1982 = vmatpush1.bf16.xpose.msra.mxu0 %v1971
      %1983 = vmatprep.subr.bf16.mxu0 0
      %1984 = vmatpush1.bf16.xpose.msra.mxu0 %v1968
      %1985 = vmatprep.subr.bf16.mxu0 0
      %1986 = vmatpush1.bf16.xpose.msra.mxu0 %v1965
      %1987 = vmatprep.subr.bf16.mxu0 0
      %1988 = vmatpush1.bf16.xpose.msra.mxu0 %v1962
      %1989 = vmatprep.subr.bf16.mxu0 0
      %1990 = vmatpush2.bf16.xpose.msra.mxu0 0
      %1991 = vmatprep.subr.bf16.mxu0 0
      %1992 = vmatpush2.bf16.xpose.msra.mxu0 0
      %1993 = vmatprep.subr.bf16.mxu0 0
      %1994 = vmatpush2.bf16.xpose.msra.mxu0 0
      %1995 = vmatprep.subr.bf16.mxu0 0
      %1996 = vmatpush2.bf16.xpose.msra.mxu0 0
      %1997 = vmatprep.subr.bf16.mxu0 0
      %1998 = vmatpush2.bf16.xpose.msra.mxu0 0
      %1999 = vmatprep.subr.bf16.mxu0 0
      %2000 = vmatpush2.bf16.xpose.msra.mxu0 0
      %2001 = vmatprep.subr.bf16.mxu0 0
      %2002 = vmatpush2.bf16.xpose.msra.mxu0 0
      %2003 = vmatprep.subr.bf16.mxu0 0
      %2004 = vmatpush2.bf16.xpose.msra.mxu0 0
      %2005 = vmatprep.mubr.bf16.mxu0 0
      %2006 = vmatmul.mubr.bf16.gmra.mxu0 %v1950
      %v2007 = vpop.f32.mrf.mxu0
      %v2008 = vadd.f32 %v1625, %v2007
      %v2009 = vpop.f32.mrf.mxu0
      %v2010 = vpop.f32.mrf.mxu0
      %v2011 = vadd.f32 %v1626, %v2010
      %v2012 = vpop.f32.mrf.mxu0
      %2013 = vmatprep.mubr.bf16.mxu0 0
      %2014 = vmatmul.mubr.bf16.gmra.mxu0 %v1953
      %v2015 = vpop.f32.mrf.mxu0
      %v2016 = vadd.f32 %v1627, %v2015
      %v2017 = vpop.f32.mrf.mxu0
      %v2018 = vpop.f32.mrf.mxu0
      %v2019 = vadd.f32 %v1628, %v2018
      %v2020 = vpop.f32.mrf.mxu0
      %2021 = vmatprep.mubr.bf16.mxu0 0
      %2022 = vmatmul.mubr.bf16.gmra.mxu0 %v1956
      %v2023 = vpop.f32.mrf.mxu0
      %v2024 = vadd.f32 %v1629, %v2023
      %v2025 = vpop.f32.mrf.mxu0
      %v2026 = vpop.f32.mrf.mxu0
      %v2027 = vadd.f32 %v1630, %v2026
      %v2028 = vpop.f32.mrf.mxu0
      %2029 = vmatprep.mubr.bf16.mxu0 0
      %2030 = vmatmul.mubr.bf16.gmra.mxu0 %v1959
      %v2031 = vpop.f32.mrf.mxu0
      %v2032 = vadd.f32 %v1631, %v2031
      %v2033 = vpop.f32.mrf.mxu0
      %v2034 = vpop.f32.mrf.mxu0
      %v2035 = vadd.f32 %v1632, %v2034
      %v2036 = vpop.f32.mrf.mxu0
      %2037 = vdwg.mxu0
      %vm2038 = vcmask 523264
      %v2039 = vsel %vm2038, %v1705, -inf
      %2040 = vmax.xlane.f32.xlu0 %v2039
      %v2041 = vpop.xlane.xlu0 %2040
      %v2042 = vsel %vm2038, %v1708, -inf
      %2043 = vmax.xlane.f32.xlu0 %v2042
      %v2044 = vpop.xlane.xlu0 %2043
      %v2045 = vsel %vm2038, %v1713, -inf
      %2046 = vmax.xlane.f32.xlu0 %v2045
      %v2047 = vpop.xlane.xlu0 %2046
      %v2048 = vsel %vm2038, %v1716, -inf
      %2049 = vmax.xlane.f32.xlu0 %v2048
      %v2050 = vpop.xlane.xlu0 %2049
      %v2051 = vsel %vm2038, %v1721, -inf
      %2052 = vmax.xlane.f32.xlu0 %v2051
      %v2053 = vpop.xlane.xlu0 %2052
      %v2054 = vsel %vm2038, %v1724, -inf
      %2055 = vmax.xlane.f32.xlu0 %v2054
      %v2056 = vpop.xlane.xlu0 %2055
      %v2057 = vsel %vm2038, %v1729, -inf
      %2058 = vmax.xlane.f32.xlu0 %v2057
      %v2059 = vpop.xlane.xlu0 %2058
      %v2060 = vsel %vm2038, %v1732, -inf
      %2061 = vmax.xlane.f32.xlu0 %v2060
      %v2062 = vpop.xlane.xlu0 %2061
      %v2063 = vsel %vm2038, %v1806, -inf
      %2064 = vmax.xlane.f32.xlu0 %v2063
      %v2065 = vpop.xlane.xlu0 %2064
      %v2066 = vsel %vm2038, %v1809, -inf
      %2067 = vmax.xlane.f32.xlu0 %v2066
      %v2068 = vpop.xlane.xlu0 %2067
      %v2069 = vsel %vm2038, %v1814, -inf
      %2070 = vmax.xlane.f32.xlu0 %v2069
      %v2071 = vpop.xlane.xlu0 %2070
      %v2072 = vsel %vm2038, %v1817, -inf
      %2073 = vmax.xlane.f32.xlu0 %v2072
      %v2074 = vpop.xlane.xlu0 %2073
      %v2075 = vsel %vm2038, %v1822, -inf
      %2076 = vmax.xlane.f32.xlu0 %v2075
      %v2077 = vpop.xlane.xlu0 %2076
      %v2078 = vsel %vm2038, %v1825, -inf
      %2079 = vmax.xlane.f32.xlu0 %v2078
      %v2080 = vpop.xlane.xlu0 %2079
      %v2081 = vsel %vm2038, %v1830, -inf
      %2082 = vmax.xlane.f32.xlu0 %v2081
      %v2083 = vpop.xlane.xlu0 %2082
      %v2084 = vsel %vm2038, %v1833, -inf
      %2085 = vmax.xlane.f32.xlu0 %v2084
      %v2086 = vpop.xlane.xlu0 %2085
      %v2087 = vsel %vm2038, %v1907, -inf
      %2088 = vmax.xlane.f32.xlu0 %v2087
      %v2089 = vpop.xlane.xlu0 %2088
      %v2090 = vsel %vm2038, %v1910, -inf
      %2091 = vmax.xlane.f32.xlu0 %v2090
      %v2092 = vpop.xlane.xlu0 %2091
      %v2093 = vsel %vm2038, %v1915, -inf
      %2094 = vmax.xlane.f32.xlu0 %v2093
      %v2095 = vpop.xlane.xlu0 %2094
      %v2096 = vsel %vm2038, %v1918, -inf
      %2097 = vmax.xlane.f32.xlu0 %v2096
      %v2098 = vpop.xlane.xlu0 %2097
      %v2099 = vsel %vm2038, %v1923, -inf
      %2100 = vmax.xlane.f32.xlu0 %v2099
      %v2101 = vpop.xlane.xlu0 %2100
      %v2102 = vsel %vm2038, %v1926, -inf
      %2103 = vmax.xlane.f32.xlu0 %v2102
      %v2104 = vpop.xlane.xlu0 %2103
      %v2105 = vsel %vm2038, %v1931, -inf
      %2106 = vmax.xlane.f32.xlu0 %v2105
      %v2107 = vpop.xlane.xlu0 %2106
      %v2108 = vsel %vm2038, %v1934, -inf
      %2109 = vmax.xlane.f32.xlu0 %v2108
      %v2110 = vpop.xlane.xlu0 %2109
      %v2111 = vsel %vm2038, %v2008, -inf
      %2112 = vmax.xlane.f32.xlu0 %v2111
      %v2113 = vpop.xlane.xlu0 %2112
      %v2114 = vsel %vm2038, %v2011, -inf
      %2115 = vmax.xlane.f32.xlu0 %v2114
      %v2116 = vpop.xlane.xlu0 %2115
      %v2117 = vsel %vm2038, %v2016, -inf
      %2118 = vmax.xlane.f32.xlu0 %v2117
      %v2119 = vpop.xlane.xlu0 %2118
      %v2120 = vsel %vm2038, %v2019, -inf
      %2121 = vmax.xlane.f32.xlu0 %v2120
      %v2122 = vpop.xlane.xlu0 %2121
      %v2123 = vsel %vm2038, %v2024, -inf
      %2124 = vmax.xlane.f32.xlu0 %v2123
      %v2125 = vpop.xlane.xlu0 %2124
      %v2126 = vsel %vm2038, %v2027, -inf
      %2127 = vmax.xlane.f32.xlu0 %v2126
      %v2128 = vpop.xlane.xlu0 %2127
      %v2129 = vsel %vm2038, %v2032, -inf
      %2130 = vmax.xlane.f32.xlu0 %v2129
      %v2131 = vpop.xlane.xlu0 %2130
      %v2132 = vsel %vm2038, %v2035, -inf
      %2133 = vmax.xlane.f32.xlu0 %v2132
      %v2134 = vpop.xlane.xlu0 %2133
      %v2135 = vsub.f32 %v1705, %v2041
      %v2136 = vsub.f32 %v1708, %v2044
      %v2137 = vsub.f32 %v1713, %v2047
      %v2138 = vsub.f32 %v1716, %v2050
      %v2139 = vsub.f32 %v1721, %v2053
      %v2140 = vsub.f32 %v1724, %v2056
      %v2141 = vsub.f32 %v1729, %v2059
      %v2142 = vsub.f32 %v1732, %v2062
      %v2143 = vsub.f32 %v1806, %v2065
      %v2144 = vsub.f32 %v1809, %v2068
      %v2145 = vsub.f32 %v1814, %v2071
      %v2146 = vsub.f32 %v1817, %v2074
      %v2147 = vsub.f32 %v1822, %v2077
      %v2148 = vsub.f32 %v1825, %v2080
      %v2149 = vsub.f32 %v1830, %v2083
      %v2150 = vsub.f32 %v1833, %v2086
      %v2151 = vsub.f32 %v1907, %v2089
      %v2152 = vsub.f32 %v1910, %v2092
      %v2153 = vsub.f32 %v1915, %v2095
      %v2154 = vsub.f32 %v1918, %v2098
      %v2155 = vsub.f32 %v1923, %v2101
      %v2156 = vsub.f32 %v1926, %v2104
      %v2157 = vsub.f32 %v1931, %v2107
      %v2158 = vsub.f32 %v1934, %v2110
      %v2159 = vsub.f32 %v2008, %v2113
      %v2160 = vsub.f32 %v2011, %v2116
      %v2161 = vsub.f32 %v2016, %v2119
      %v2162 = vsub.f32 %v2019, %v2122
      %v2163 = vsub.f32 %v2024, %v2125
      %v2164 = vsub.f32 %v2027, %v2128
      %v2165 = vsub.f32 %v2032, %v2131
      %v2166 = vsub.f32 %v2035, %v2134
      %v2167 = vmul.f32 %v2135, 1.442695
      %v2168 = vpow.pop %v2167
      %v2169 = vmul.f32 %v2136, 1.442695
      %v2170 = vpow.pop %v2169
      %v2171 = vmul.f32 %v2137, 1.442695
      %v2172 = vpow.pop %v2171
      %v2173 = vmul.f32 %v2138, 1.442695
      %v2174 = vpow.pop %v2173
      %v2175 = vmul.f32 %v2139, 1.442695
      %v2176 = vpow.pop %v2175
      %v2177 = vmul.f32 %v2140, 1.442695
      %v2178 = vpow.pop %v2177
      %v2179 = vmul.f32 %v2141, 1.442695
      %v2180 = vpow.pop %v2179
      %v2181 = vmul.f32 %v2142, 1.442695
      %v2182 = vpow.pop %v2181
      %v2183 = vmul.f32 %v2143, 1.442695
      %v2184 = vpow.pop %v2183
      %v2185 = vmul.f32 %v2144, 1.442695
      %v2186 = vpow.pop %v2185
      %v2187 = vmul.f32 %v2145, 1.442695
      %v2188 = vpow.pop %v2187
      %v2189 = vmul.f32 %v2146, 1.442695
      %v2190 = vpow.pop %v2189
      %v2191 = vmul.f32 %v2147, 1.442695
      %v2192 = vpow.pop %v2191
      %v2193 = vmul.f32 %v2148, 1.442695
      %v2194 = vpow.pop %v2193
      %v2195 = vmul.f32 %v2149, 1.442695
      %v2196 = vpow.pop %v2195
      %v2197 = vmul.f32 %v2150, 1.442695
      %v2198 = vpow.pop %v2197
      %v2199 = vmul.f32 %v2151, 1.442695
      %v2200 = vpow.pop %v2199
      %v2201 = vmul.f32 %v2152, 1.442695
      %v2202 = vpow.pop %v2201
      %v2203 = vmul.f32 %v2153, 1.442695
      %v2204 = vpow.pop %v2203
      %v2205 = vmul.f32 %v2154, 1.442695
      %v2206 = vpow.pop %v2205
      %v2207 = vmul.f32 %v2155, 1.442695
      %v2208 = vpow.pop %v2207
      %v2209 = vmul.f32 %v2156, 1.442695
      %v2210 = vpow.pop %v2209
      %v2211 = vmul.f32 %v2157, 1.442695
      %v2212 = vpow.pop %v2211
      %v2213 = vmul.f32 %v2158, 1.442695
      %v2214 = vpow.pop %v2213
      %v2215 = vmul.f32 %v2159, 1.442695
      %v2216 = vpow.pop %v2215
      %v2217 = vmul.f32 %v2160, 1.442695
      %v2218 = vpow.pop %v2217
      %v2219 = vmul.f32 %v2161, 1.442695
      %v2220 = vpow.pop %v2219
      %v2221 = vmul.f32 %v2162, 1.442695
      %v2222 = vpow.pop %v2221
      %v2223 = vmul.f32 %v2163, 1.442695
      %v2224 = vpow.pop %v2223
      %v2225 = vmul.f32 %v2164, 1.442695
      %v2226 = vpow.pop %v2225
      %v2227 = vmul.f32 %v2165, 1.442695
      %v2228 = vpow.pop %v2227
      %v2229 = vmul.f32 %v2166, 1.442695
      %v2230 = vpow.pop %v2229
      %v2231 = vsel %vm2038, %v2168, 0.0
      %2232 = vadd.xlane.f32.xlu0 %v2231
      %v2233 = vpop.xlane.xlu0 %2232
      %v2234 = vsel %vm2038, %v2170, 0.0
      %2235 = vadd.xlane.f32.xlu0 %v2234
      %v2236 = vpop.xlane.xlu0 %2235
      %v2237 = vsel %vm2038, %v2172, 0.0
      %2238 = vadd.xlane.f32.xlu0 %v2237
      %v2239 = vpop.xlane.xlu0 %2238
      %v2240 = vsel %vm2038, %v2174, 0.0
      %2241 = vadd.xlane.f32.xlu0 %v2240
      %v2242 = vpop.xlane.xlu0 %2241
      %v2243 = vsel %vm2038, %v2176, 0.0
      %2244 = vadd.xlane.f32.xlu0 %v2243
      %v2245 = vpop.xlane.xlu0 %2244
      %v2246 = vsel %vm2038, %v2178, 0.0
      %2247 = vadd.xlane.f32.xlu0 %v2246
      %v2248 = vpop.xlane.xlu0 %2247
      %v2249 = vsel %vm2038, %v2180, 0.0
      %2250 = vadd.xlane.f32.xlu0 %v2249
      %v2251 = vpop.xlane.xlu0 %2250
      %v2252 = vsel %vm2038, %v2182, 0.0
      %2253 = vadd.xlane.f32.xlu0 %v2252
      %v2254 = vpop.xlane.xlu0 %2253
      %v2255 = vsel %vm2038, %v2184, 0.0
      %2256 = vadd.xlane.f32.xlu0 %v2255
      %v2257 = vpop.xlane.xlu0 %2256
      %v2258 = vsel %vm2038, %v2186, 0.0
      %2259 = vadd.xlane.f32.xlu0 %v2258
      %v2260 = vpop.xlane.xlu0 %2259
      %v2261 = vsel %vm2038, %v2188, 0.0
      %2262 = vadd.xlane.f32.xlu0 %v2261
      %v2263 = vpop.xlane.xlu0 %2262
      %v2264 = vsel %vm2038, %v2190, 0.0
      %2265 = vadd.xlane.f32.xlu0 %v2264
      %v2266 = vpop.xlane.xlu0 %2265
      %v2267 = vsel %vm2038, %v2192, 0.0
      %2268 = vadd.xlane.f32.xlu0 %v2267
      %v2269 = vpop.xlane.xlu0 %2268
      %v2270 = vsel %vm2038, %v2194, 0.0
      %2271 = vadd.xlane.f32.xlu0 %v2270
      %v2272 = vpop.xlane.xlu0 %2271
      %v2273 = vsel %vm2038, %v2196, 0.0
      %2274 = vadd.xlane.f32.xlu0 %v2273
      %v2275 = vpop.xlane.xlu0 %2274
      %v2276 = vsel %vm2038, %v2198, 0.0
      %2277 = vadd.xlane.f32.xlu0 %v2276
      %v2278 = vpop.xlane.xlu0 %2277
      %v2279 = vsel %vm2038, %v2200, 0.0
      %2280 = vadd.xlane.f32.xlu0 %v2279
      %v2281 = vpop.xlane.xlu0 %2280
      %v2282 = vsel %vm2038, %v2202, 0.0
      %2283 = vadd.xlane.f32.xlu0 %v2282
      %v2284 = vpop.xlane.xlu0 %2283
      %v2285 = vsel %vm2038, %v2204, 0.0
      %2286 = vadd.xlane.f32.xlu0 %v2285
      %v2287 = vpop.xlane.xlu0 %2286
      %v2288 = vsel %vm2038, %v2206, 0.0
      %2289 = vadd.xlane.f32.xlu0 %v2288
      %v2290 = vpop.xlane.xlu0 %2289
      %v2291 = vsel %vm2038, %v2208, 0.0
      %2292 = vadd.xlane.f32.xlu0 %v2291
      %v2293 = vpop.xlane.xlu0 %2292
      %v2294 = vsel %vm2038, %v2210, 0.0
      %2295 = vadd.xlane.f32.xlu0 %v2294
      %v2296 = vpop.xlane.xlu0 %2295
      %v2297 = vsel %vm2038, %v2212, 0.0
      %2298 = vadd.xlane.f32.xlu0 %v2297
      %v2299 = vpop.xlane.xlu0 %2298
      %v2300 = vsel %vm2038, %v2214, 0.0
      %2301 = vadd.xlane.f32.xlu0 %v2300
      %v2302 = vpop.xlane.xlu0 %2301
      %v2303 = vsel %vm2038, %v2216, 0.0
      %2304 = vadd.xlane.f32.xlu0 %v2303
      %v2305 = vpop.xlane.xlu0 %2304
      %v2306 = vsel %vm2038, %v2218, 0.0
      %2307 = vadd.xlane.f32.xlu0 %v2306
      %v2308 = vpop.xlane.xlu0 %2307
      %v2309 = vsel %vm2038, %v2220, 0.0
      %2310 = vadd.xlane.f32.xlu0 %v2309
      %v2311 = vpop.xlane.xlu0 %2310
      %v2312 = vsel %vm2038, %v2222, 0.0
      %2313 = vadd.xlane.f32.xlu0 %v2312
      %v2314 = vpop.xlane.xlu0 %2313
      %v2315 = vsel %vm2038, %v2224, 0.0
      %2316 = vadd.xlane.f32.xlu0 %v2315
      %v2317 = vpop.xlane.xlu0 %2316
      %v2318 = vsel %vm2038, %v2226, 0.0
      %2319 = vadd.xlane.f32.xlu0 %v2318
      %v2320 = vpop.xlane.xlu0 %2319
      %v2321 = vsel %vm2038, %v2228, 0.0
      %2322 = vadd.xlane.f32.xlu0 %v2321
      %v2323 = vpop.xlane.xlu0 %2322
      %v2324 = vsel %vm2038, %v2230, 0.0
      %2325 = vadd.xlane.f32.xlu0 %v2324
      %v2326 = vpop.xlane.xlu0 %2325
      %v2327 = vrcp.pop %v2233
      %v2328 = vrcp.pop %v2236
      %v2329 = vrcp.pop %v2239
      %v2330 = vrcp.pop %v2242
      %v2331 = vrcp.pop %v2245
      %v2332 = vrcp.pop %v2248
      %v2333 = vrcp.pop %v2251
      %v2334 = vrcp.pop %v2254
      %v2335 = vrcp.pop %v2257
      %v2336 = vrcp.pop %v2260
      %v2337 = vrcp.pop %v2263
      %v2338 = vrcp.pop %v2266
      %v2339 = vrcp.pop %v2269
      %v2340 = vrcp.pop %v2272
      %v2341 = vrcp.pop %v2275
      %v2342 = vrcp.pop %v2278
      %v2343 = vrcp.pop %v2281
      %v2344 = vrcp.pop %v2284
      %v2345 = vrcp.pop %v2287
      %v2346 = vrcp.pop %v2290
      %v2347 = vrcp.pop %v2293
      %v2348 = vrcp.pop %v2296
      %v2349 = vrcp.pop %v2299
      %v2350 = vrcp.pop %v2302
      %v2351 = vrcp.pop %v2305
      %v2352 = vrcp.pop %v2308
      %v2353 = vrcp.pop %v2311
      %v2354 = vrcp.pop %v2314
      %v2355 = vrcp.pop %v2317
      %v2356 = vrcp.pop %v2320
      %v2357 = vrcp.pop %v2323
      %v2358 = vrcp.pop %v2326
      %v2359 = vmul.f32 %v2168, %v2327
      %v2360 = vmul.f32 %v2170, %v2328
      %v2361 = vmul.f32 %v2172, %v2329
      %v2362 = vmul.f32 %v2174, %v2330
      %v2363 = vmul.f32 %v2176, %v2331
      %v2364 = vmul.f32 %v2178, %v2332
      %v2365 = vmul.f32 %v2180, %v2333
      %v2366 = vmul.f32 %v2182, %v2334
      %v2367 = vmul.f32 %v2184, %v2335
      %v2368 = vmul.f32 %v2186, %v2336
      %v2369 = vmul.f32 %v2188, %v2337
      %v2370 = vmul.f32 %v2190, %v2338
      %v2371 = vmul.f32 %v2192, %v2339
      %v2372 = vmul.f32 %v2194, %v2340
      %v2373 = vmul.f32 %v2196, %v2341
      %v2374 = vmul.f32 %v2198, %v2342
      %v2375 = vmul.f32 %v2200, %v2343
      %v2376 = vmul.f32 %v2202, %v2344
      %v2377 = vmul.f32 %v2204, %v2345
      %v2378 = vmul.f32 %v2206, %v2346
      %v2379 = vmul.f32 %v2208, %v2347
      %v2380 = vmul.f32 %v2210, %v2348
      %v2381 = vmul.f32 %v2212, %v2349
      %v2382 = vmul.f32 %v2214, %v2350
      %v2383 = vmul.f32 %v2216, %v2351
      %v2384 = vmul.f32 %v2218, %v2352
      %v2385 = vmul.f32 %v2220, %v2353
      %v2386 = vmul.f32 %v2222, %v2354
      %v2387 = vmul.f32 %v2224, %v2355
      %v2388 = vmul.f32 %v2226, %v2356
      %v2389 = vmul.f32 %v2228, %v2357
      %v2390 = vmul.f32 %v2230, %v2358
      %v2391 = vpack.c.bf16 %v2360, %v2359
      %v2392 = vpack.c.bf16 %v2362, %v2361
      %v2393 = vpack.c.bf16 %v2364, %v2363
      %v2394 = vpack.c.bf16 %v2366, %v2365
      %v2395 = vpack.c.bf16 %v2368, %v2367
      %v2396 = vpack.c.bf16 %v2370, %v2369
      %v2397 = vpack.c.bf16 %v2372, %v2371
      %v2398 = vpack.c.bf16 %v2374, %v2373
      %v2399 = vpack.c.bf16 %v2376, %v2375
      %v2400 = vpack.c.bf16 %v2378, %v2377
      %v2401 = vpack.c.bf16 %v2380, %v2379
      %v2402 = vpack.c.bf16 %v2382, %v2381
      %v2403 = vpack.c.bf16 %v2384, %v2383
      %v2404 = vpack.c.bf16 %v2386, %v2385
      %v2405 = vpack.c.bf16 %v2388, %v2387
      %v2406 = vpack.c.bf16 %v2390, %v2389
      %2407 = vrot.lane.b32.xlu0 %v1577, 64
      %v2408 = vpop.permute.xlu0 %2407
      %2409 = vrot.lane.b32.xlu0 %v1578, 64
      %v2410 = vpop.permute.xlu0 %2409
      %2411 = vrot.lane.b32.xlu0 %v1579, 64
      %v2412 = vpop.permute.xlu0 %2411
      %2413 = vrot.lane.b32.xlu0 %v1580, 64
      %v2414 = vpop.permute.xlu0 %2413
      %v2420 = vsel %vm2038, %v2391, 0
      %v2423 = vsel %vm2038, %v2392, 0
      %v2426 = vsel %vm2038, %v2393, 0
      %v2429 = vsel %vm2038, %v2394, 0
      %2431 = vmatprep.subr.bf16.mxu0 0
      %2432 = vmatpush1.bf16.msra.mxu0 0
      %2433 = vmatprep.subr.bf16.mxu0 0
      %2434 = vmatpush1.bf16.msra.mxu0 0
      %2435 = vmatprep.subr.bf16.mxu0 0
      %2436 = vmatpush1.bf16.msra.mxu0 0
      %2437 = vmatprep.subr.bf16.mxu0 0
      %2438 = vmatpush1.bf16.msra.mxu0 0
      %2439 = vmatprep.subr.bf16.mxu0 0
      %2440 = vmatpush1.bf16.msra.mxu0 %v2414
      %2441 = vmatprep.subr.bf16.mxu0 0
      %2442 = vmatpush1.bf16.msra.mxu0 %v2412
      %2443 = vmatprep.subr.bf16.mxu0 0
      %2444 = vmatpush1.bf16.msra.mxu0 %v2410
      %2445 = vmatprep.subr.bf16.mxu0 0
      %2446 = vmatpush1.bf16.msra.mxu0 %v2408
      %2447 = vmatprep.subr.bf16.mxu0 0
      %2448 = vmatpush2.bf16.msra.mxu0 0
      %2449 = vmatprep.subr.bf16.mxu0 0
      %2450 = vmatpush2.bf16.msra.mxu0 0
      %2451 = vmatprep.subr.bf16.mxu0 0
      %2452 = vmatpush2.bf16.msra.mxu0 0
      %2453 = vmatprep.subr.bf16.mxu0 0
      %2454 = vmatpush2.bf16.msra.mxu0 0
      %2455 = vmatprep.subr.bf16.mxu0 0
      %2456 = vmatpush2.bf16.msra.mxu0 0
      %2457 = vmatprep.subr.bf16.mxu0 0
      %2458 = vmatpush2.bf16.msra.mxu0 0
      %2459 = vmatprep.subr.bf16.mxu0 0
      %2460 = vmatpush2.bf16.msra.mxu0 0
      %2461 = vmatprep.subr.bf16.mxu0 0
      %2462 = vmatpush2.bf16.msra.mxu0 0
      %2463 = vmatprep.mubr.bf16.mxu0 0
      %2464 = vmatmul.mubr.bf16.gmra.mxu0 %v2420
      %v2465 = vpop.f32.mrf.mxu0
      %v2466 = vadd.f32 0.0, %v2465
      %v2467 = vpop.f32.mrf.mxu0
      %v2468 = vpop.f32.mrf.mxu0
      %v2469 = vadd.f32 0.0, %v2468
      %v2470 = vpop.f32.mrf.mxu0
      %2471 = vmatprep.mubr.bf16.mxu0 0
      %2472 = vmatmul.mubr.bf16.gmra.mxu0 %v2423
      %v2473 = vpop.f32.mrf.mxu0
      %v2474 = vadd.f32 0.0, %v2473
      %v2475 = vpop.f32.mrf.mxu0
      %v2476 = vpop.f32.mrf.mxu0
      %v2477 = vadd.f32 0.0, %v2476
      %v2478 = vpop.f32.mrf.mxu0
      %2479 = vmatprep.mubr.bf16.mxu0 0
      %2480 = vmatmul.mubr.bf16.gmra.mxu0 %v2426
      %v2481 = vpop.f32.mrf.mxu0
      %v2482 = vadd.f32 0.0, %v2481
      %v2483 = vpop.f32.mrf.mxu0
      %v2484 = vpop.f32.mrf.mxu0
      %v2485 = vadd.f32 0.0, %v2484
      %v2486 = vpop.f32.mrf.mxu0
      %2487 = vmatprep.mubr.bf16.mxu0 0
      %2488 = vmatmul.mubr.bf16.gmra.mxu0 %v2429
      %v2489 = vpop.f32.mrf.mxu0
      %v2490 = vadd.f32 0.0, %v2489
      %v2491 = vpop.f32.mrf.mxu0
      %v2492 = vpop.f32.mrf.mxu0
      %v2493 = vadd.f32 0.0, %v2492
      %v2494 = vpop.f32.mrf.mxu0
      %2495 = vdwg.mxu0
      %2496 = vrot.lane.b32.xlu0 %v1581, 64
      %v2497 = vpop.permute.xlu0 %2496
      %2498 = vrot.lane.b32.xlu0 %v1582, 64
      %v2499 = vpop.permute.xlu0 %2498
      %2500 = vrot.lane.b32.xlu0 %v1583, 64
      %v2501 = vpop.permute.xlu0 %2500
      %2502 = vrot.lane.b32.xlu0 %v1584, 64
      %v2503 = vpop.permute.xlu0 %2502
      %v2509 = vsel %vm2038, %v2395, 0
      %v2512 = vsel %vm2038, %v2396, 0
      %v2515 = vsel %vm2038, %v2397, 0
      %v2518 = vsel %vm2038, %v2398, 0
      %2520 = vmatprep.subr.bf16.mxu0 0
      %2521 = vmatpush1.bf16.msra.mxu0 0
      %2522 = vmatprep.subr.bf16.mxu0 0
      %2523 = vmatpush1.bf16.msra.mxu0 0
      %2524 = vmatprep.subr.bf16.mxu0 0
      %2525 = vmatpush1.bf16.msra.mxu0 0
      %2526 = vmatprep.subr.bf16.mxu0 0
      %2527 = vmatpush1.bf16.msra.mxu0 0
      %2528 = vmatprep.subr.bf16.mxu0 0
      %2529 = vmatpush1.bf16.msra.mxu0 %v2503
      %2530 = vmatprep.subr.bf16.mxu0 0
      %2531 = vmatpush1.bf16.msra.mxu0 %v2501
      %2532 = vmatprep.subr.bf16.mxu0 0
      %2533 = vmatpush1.bf16.msra.mxu0 %v2499
      %2534 = vmatprep.subr.bf16.mxu0 0
      %2535 = vmatpush1.bf16.msra.mxu0 %v2497
      %2536 = vmatprep.subr.bf16.mxu0 0
      %2537 = vmatpush2.bf16.msra.mxu0 0
      %2538 = vmatprep.subr.bf16.mxu0 0
      %2539 = vmatpush2.bf16.msra.mxu0 0
      %2540 = vmatprep.subr.bf16.mxu0 0
      %2541 = vmatpush2.bf16.msra.mxu0 0
      %2542 = vmatprep.subr.bf16.mxu0 0
      %2543 = vmatpush2.bf16.msra.mxu0 0
      %2544 = vmatprep.subr.bf16.mxu0 0
      %2545 = vmatpush2.bf16.msra.mxu0 0
      %2546 = vmatprep.subr.bf16.mxu0 0
      %2547 = vmatpush2.bf16.msra.mxu0 0
      %2548 = vmatprep.subr.bf16.mxu0 0
      %2549 = vmatpush2.bf16.msra.mxu0 0
      %2550 = vmatprep.subr.bf16.mxu0 0
      %2551 = vmatpush2.bf16.msra.mxu0 0
      %2552 = vmatprep.mubr.bf16.mxu0 0
      %2553 = vmatmul.mubr.bf16.gmra.mxu0 %v2509
      %v2554 = vpop.f32.mrf.mxu0
      %v2555 = vadd.f32 0.0, %v2554
      %v2556 = vpop.f32.mrf.mxu0
      %v2557 = vpop.f32.mrf.mxu0
      %v2558 = vadd.f32 0.0, %v2557
      %v2559 = vpop.f32.mrf.mxu0
      %2560 = vmatprep.mubr.bf16.mxu0 0
      %2561 = vmatmul.mubr.bf16.gmra.mxu0 %v2512
      %v2562 = vpop.f32.mrf.mxu0
      %v2563 = vadd.f32 0.0, %v2562
      %v2564 = vpop.f32.mrf.mxu0
      %v2565 = vpop.f32.mrf.mxu0
      %v2566 = vadd.f32 0.0, %v2565
      %v2567 = vpop.f32.mrf.mxu0
      %2568 = vmatprep.mubr.bf16.mxu0 0
      %2569 = vmatmul.mubr.bf16.gmra.mxu0 %v2515
      %v2570 = vpop.f32.mrf.mxu0
      %v2571 = vadd.f32 0.0, %v2570
      %v2572 = vpop.f32.mrf.mxu0
      %v2573 = vpop.f32.mrf.mxu0
      %v2574 = vadd.f32 0.0, %v2573
      %v2575 = vpop.f32.mrf.mxu0
      %2576 = vmatprep.mubr.bf16.mxu0 0
      %2577 = vmatmul.mubr.bf16.gmra.mxu0 %v2518
      %v2578 = vpop.f32.mrf.mxu0
      %v2579 = vadd.f32 0.0, %v2578
      %v2580 = vpop.f32.mrf.mxu0
      %v2581 = vpop.f32.mrf.mxu0
      %v2582 = vadd.f32 0.0, %v2581
      %v2583 = vpop.f32.mrf.mxu0
      %2584 = vdwg.mxu0
      %2585 = vrot.lane.b32.xlu0 %v1585, 64
      %v2586 = vpop.permute.xlu0 %2585
      %2587 = vrot.lane.b32.xlu0 %v1586, 64
      %v2588 = vpop.permute.xlu0 %2587
      %2589 = vrot.lane.b32.xlu0 %v1587, 64
      %v2590 = vpop.permute.xlu0 %2589
      %2591 = vrot.lane.b32.xlu0 %v1588, 64
      %v2592 = vpop.permute.xlu0 %2591
      %v2598 = vsel %vm2038, %v2399, 0
      %v2601 = vsel %vm2038, %v2400, 0
      %v2604 = vsel %vm2038, %v2401, 0
      %v2607 = vsel %vm2038, %v2402, 0
      %2609 = vmatprep.subr.bf16.mxu0 0
      %2610 = vmatpush1.bf16.msra.mxu0 0
      %2611 = vmatprep.subr.bf16.mxu0 0
      %2612 = vmatpush1.bf16.msra.mxu0 0
      %2613 = vmatprep.subr.bf16.mxu0 0
      %2614 = vmatpush1.bf16.msra.mxu0 0
      %2615 = vmatprep.subr.bf16.mxu0 0
      %2616 = vmatpush1.bf16.msra.mxu0 0
      %2617 = vmatprep.subr.bf16.mxu0 0
      %2618 = vmatpush1.bf16.msra.mxu0 %v2592
      %2619 = vmatprep.subr.bf16.mxu0 0
      %2620 = vmatpush1.bf16.msra.mxu0 %v2590
      %2621 = vmatprep.subr.bf16.mxu0 0
      %2622 = vmatpush1.bf16.msra.mxu0 %v2588
      %2623 = vmatprep.subr.bf16.mxu0 0
      %2624 = vmatpush1.bf16.msra.mxu0 %v2586
      %2625 = vmatprep.subr.bf16.mxu0 0
      %2626 = vmatpush2.bf16.msra.mxu0 0
      %2627 = vmatprep.subr.bf16.mxu0 0
      %2628 = vmatpush2.bf16.msra.mxu0 0
      %2629 = vmatprep.subr.bf16.mxu0 0
      %2630 = vmatpush2.bf16.msra.mxu0 0
      %2631 = vmatprep.subr.bf16.mxu0 0
      %2632 = vmatpush2.bf16.msra.mxu0 0
      %2633 = vmatprep.subr.bf16.mxu0 0
      %2634 = vmatpush2.bf16.msra.mxu0 0
      %2635 = vmatprep.subr.bf16.mxu0 0
      %2636 = vmatpush2.bf16.msra.mxu0 0
      %2637 = vmatprep.subr.bf16.mxu0 0
      %2638 = vmatpush2.bf16.msra.mxu0 0
      %2639 = vmatprep.subr.bf16.mxu0 0
      %2640 = vmatpush2.bf16.msra.mxu0 0
      %2641 = vmatprep.mubr.bf16.mxu0 0
      %2642 = vmatmul.mubr.bf16.gmra.mxu0 %v2598
      %v2643 = vpop.f32.mrf.mxu0
      %v2644 = vadd.f32 0.0, %v2643
      %v2645 = vpop.f32.mrf.mxu0
      %v2646 = vpop.f32.mrf.mxu0
      %v2647 = vadd.f32 0.0, %v2646
      %v2648 = vpop.f32.mrf.mxu0
      %2649 = vmatprep.mubr.bf16.mxu0 0
      %2650 = vmatmul.mubr.bf16.gmra.mxu0 %v2601
      %v2651 = vpop.f32.mrf.mxu0
      %v2652 = vadd.f32 0.0, %v2651
      %v2653 = vpop.f32.mrf.mxu0
      %v2654 = vpop.f32.mrf.mxu0
      %v2655 = vadd.f32 0.0, %v2654
      %v2656 = vpop.f32.mrf.mxu0
      %2657 = vmatprep.mubr.bf16.mxu0 0
      %2658 = vmatmul.mubr.bf16.gmra.mxu0 %v2604
      %v2659 = vpop.f32.mrf.mxu0
      %v2660 = vadd.f32 0.0, %v2659
      %v2661 = vpop.f32.mrf.mxu0
      %v2662 = vpop.f32.mrf.mxu0
      %v2663 = vadd.f32 0.0, %v2662
      %v2664 = vpop.f32.mrf.mxu0
      %2665 = vmatprep.mubr.bf16.mxu0 0
      %2666 = vmatmul.mubr.bf16.gmra.mxu0 %v2607
      %v2667 = vpop.f32.mrf.mxu0
      %v2668 = vadd.f32 0.0, %v2667
      %v2669 = vpop.f32.mrf.mxu0
      %v2670 = vpop.f32.mrf.mxu0
      %v2671 = vadd.f32 0.0, %v2670
      %v2672 = vpop.f32.mrf.mxu0
      %2673 = vdwg.mxu0
      %2674 = vrot.lane.b32.xlu0 %v1589, 64
      %v2675 = vpop.permute.xlu0 %2674
      %2676 = vrot.lane.b32.xlu0 %v1590, 64
      %v2677 = vpop.permute.xlu0 %2676
      %2678 = vrot.lane.b32.xlu0 %v1591, 64
      %v2679 = vpop.permute.xlu0 %2678
      %2680 = vrot.lane.b32.xlu0 %v1592, 64
      %v2681 = vpop.permute.xlu0 %2680
      %v2687 = vsel %vm2038, %v2403, 0
      %v2690 = vsel %vm2038, %v2404, 0
      %v2693 = vsel %vm2038, %v2405, 0
      %v2696 = vsel %vm2038, %v2406, 0
      %2698 = vmatprep.subr.bf16.mxu0 0
      %2699 = vmatpush1.bf16.msra.mxu0 0
      %2700 = vmatprep.subr.bf16.mxu0 0
      %2701 = vmatpush1.bf16.msra.mxu0 0
      %2702 = vmatprep.subr.bf16.mxu0 0
      %2703 = vmatpush1.bf16.msra.mxu0 0
      %2704 = vmatprep.subr.bf16.mxu0 0
      %2705 = vmatpush1.bf16.msra.mxu0 0
      %2706 = vmatprep.subr.bf16.mxu0 0
      %2707 = vmatpush1.bf16.msra.mxu0 %v2681
      %2708 = vmatprep.subr.bf16.mxu0 0
      %2709 = vmatpush1.bf16.msra.mxu0 %v2679
      %2710 = vmatprep.subr.bf16.mxu0 0
      %2711 = vmatpush1.bf16.msra.mxu0 %v2677
      %2712 = vmatprep.subr.bf16.mxu0 0
      %2713 = vmatpush1.bf16.msra.mxu0 %v2675
      %2714 = vmatprep.subr.bf16.mxu0 0
      %2715 = vmatpush2.bf16.msra.mxu0 0
      %2716 = vmatprep.subr.bf16.mxu0 0
      %2717 = vmatpush2.bf16.msra.mxu0 0
      %2718 = vmatprep.subr.bf16.mxu0 0
      %2719 = vmatpush2.bf16.msra.mxu0 0
      %2720 = vmatprep.subr.bf16.mxu0 0
      %2721 = vmatpush2.bf16.msra.mxu0 0
      %2722 = vmatprep.subr.bf16.mxu0 0
      %2723 = vmatpush2.bf16.msra.mxu0 0
      %2724 = vmatprep.subr.bf16.mxu0 0
      %2725 = vmatpush2.bf16.msra.mxu0 0
      %2726 = vmatprep.subr.bf16.mxu0 0
      %2727 = vmatpush2.bf16.msra.mxu0 0
      %2728 = vmatprep.subr.bf16.mxu0 0
      %2729 = vmatpush2.bf16.msra.mxu0 0
      %2730 = vmatprep.mubr.bf16.mxu0 0
      %2731 = vmatmul.mubr.bf16.gmra.mxu0 %v2687
      %v2732 = vpop.f32.mrf.mxu0
      %v2733 = vadd.f32 0.0, %v2732
      %v2734 = vpop.f32.mrf.mxu0
      %v2735 = vpop.f32.mrf.mxu0
      %v2736 = vadd.f32 0.0, %v2735
      %v2737 = vpop.f32.mrf.mxu0
      %2738 = vmatprep.mubr.bf16.mxu0 0
      %2739 = vmatmul.mubr.bf16.gmra.mxu0 %v2690
      %v2740 = vpop.f32.mrf.mxu0
      %v2741 = vadd.f32 0.0, %v2740
      %v2742 = vpop.f32.mrf.mxu0
      %v2743 = vpop.f32.mrf.mxu0
      %v2744 = vadd.f32 0.0, %v2743
      %v2745 = vpop.f32.mrf.mxu0
      %2746 = vmatprep.mubr.bf16.mxu0 0
      %2747 = vmatmul.mubr.bf16.gmra.mxu0 %v2693
      %v2748 = vpop.f32.mrf.mxu0
      %v2749 = vadd.f32 0.0, %v2748
      %v2750 = vpop.f32.mrf.mxu0
      %v2751 = vpop.f32.mrf.mxu0
      %v2752 = vadd.f32 0.0, %v2751
      %v2753 = vpop.f32.mrf.mxu0
      %2754 = vmatprep.mubr.bf16.mxu0 0
      %2755 = vmatmul.mubr.bf16.gmra.mxu0 %v2696
      %v2756 = vpop.f32.mrf.mxu0
      %v2757 = vadd.f32 0.0, %v2756
      %v2758 = vpop.f32.mrf.mxu0
      %v2759 = vpop.f32.mrf.mxu0
      %v2760 = vadd.f32 0.0, %v2759
      %v2761 = vpop.f32.mrf.mxu0
      %2762 = vdwg.mxu0
      %2763 = vst.msk [vmem:[#allocation2] sm:$0xff] %vm1645, %v2466
      %2764 = vst.msk [vmem:[#allocation2 + $0x8] sm:$0xff] %vm1645, %v2469
      %2765 = vst.msk [vmem:[#allocation2 + $0x10] sm:$0xff] %vm1645, %v2474
      %2766 = vst.msk [vmem:[#allocation2 + $0x18] sm:$0xff] %vm1645, %v2477
      %2767 = vst.msk [vmem:[#allocation2 + $0x20] sm:$0xff] %vm1645, %v2482
      %2768 = vst.msk [vmem:[#allocation2 + $0x28] sm:$0xff] %vm1645, %v2485
      %2769 = vst.msk [vmem:[#allocation2 + $0x30] sm:$0xff] %vm1645, %v2490
      %2770 = vst.msk [vmem:[#allocation2 + $0x38] sm:$0xff] %vm1645, %v2493
      %2771 = vst.msk [vmem:[#allocation2 + $0x40] sm:$0xff] %vm1645, %v2555
      %2772 = vst.msk [vmem:[#allocation2 + $0x48] sm:$0xff] %vm1645, %v2558
      %2773 = vst.msk [vmem:[#allocation2 + $0x50] sm:$0xff] %vm1645, %v2563
      %2774 = vst.msk [vmem:[#allocation2 + $0x58] sm:$0xff] %vm1645, %v2566
      %2775 = vst.msk [vmem:[#allocation2 + $0x60] sm:$0xff] %vm1645, %v2571
      %2776 = vst.msk [vmem:[#allocation2 + $0x68] sm:$0xff] %vm1645, %v2574
      %2777 = vst.msk [vmem:[#allocation2 + $0x70] sm:$0xff] %vm1645, %v2579
      %2778 = vst.msk [vmem:[#allocation2 + $0x78] sm:$0xff] %vm1645, %v2582
      %2779 = vst.msk [vmem:[#allocation2 + $0x80] sm:$0xff] %vm1645, %v2644
      %2780 = vst.msk [vmem:[#allocation2 + $0x88] sm:$0xff] %vm1645, %v2647
      %2781 = vst.msk [vmem:[#allocation2 + $0x90] sm:$0xff] %vm1645, %v2652
      %2782 = vst.msk [vmem:[#allocation2 + $0x98] sm:$0xff] %vm1645, %v2655
      %2783 = vst.msk [vmem:[#allocation2 + $0xa0] sm:$0xff] %vm1645, %v2660
      %2784 = vst.msk [vmem:[#allocation2 + $0xa8] sm:$0xff] %vm1645, %v2663
      %2785 = vst.msk [vmem:[#allocation2 + $0xb0] sm:$0xff] %vm1645, %v2668
      %2786 = vst.msk [vmem:[#allocation2 + $0xb8] sm:$0xff] %vm1645, %v2671
      %2787 = vst.msk [vmem:[#allocation2 + $0xc0] sm:$0xff] %vm1645, %v2733
      %2788 = vst.msk [vmem:[#allocation2 + $0xc8] sm:$0xff] %vm1645, %v2736
      %2789 = vst.msk [vmem:[#allocation2 + $0xd0] sm:$0xff] %vm1645, %v2741
      %2790 = vst.msk [vmem:[#allocation2 + $0xd8] sm:$0xff] %vm1645, %v2744
      %2791 = vst.msk [vmem:[#allocation2 + $0xe0] sm:$0xff] %vm1645, %v2749
      %2792 = vst.msk [vmem:[#allocation2 + $0xe8] sm:$0xff] %vm1645, %v2752
      %2793 = vst.msk [vmem:[#allocation2 + $0xf0] sm:$0xff] %vm1645, %v2757
      %2794 = vst.msk [vmem:[#allocation2 + $0xf8] sm:$0xff] %vm1645, %v2760
      %v2795 = vunpack.c.l.bf16 %v1601
      %v2796 = vunpack.c.l.bf16 %v1602
      %v2797 = vunpack.c.l.bf16 %v1603
      %v2798 = vunpack.c.l.bf16 %v1604
      %v2799 = vunpack.c.l.bf16 %v1605
      %v2800 = vunpack.c.l.bf16 %v1606
      %v2801 = vunpack.c.l.bf16 %v1607
      %v2802 = vunpack.c.l.bf16 %v1608
      %2803 = vrot.lane.b32.xlu0 %v1577, 120
      %v2804 = vpop.permute.xlu0 %2803
      %2805 = vrot.lane.b32.xlu0 %v1578, 120
      %v2806 = vpop.permute.xlu0 %2805
      %2807 = vrot.lane.b32.xlu0 %v1579, 120
      %v2808 = vpop.permute.xlu0 %2807
      %2809 = vrot.lane.b32.xlu0 %v1580, 120
      %v2810 = vpop.permute.xlu0 %2809
      %2811 = vrot.lane.b32.xlu0 %v1577, 88
      %v2812 = vpop.permute.xlu0 %2811
      %2813 = vrot.lane.b32.xlu0 %v1578, 88
      %v2814 = vpop.permute.xlu0 %2813
      %2815 = vrot.lane.b32.xlu0 %v1579, 88
      %v2816 = vpop.permute.xlu0 %2815
      %2817 = vrot.lane.b32.xlu0 %v1580, 88
      %v2818 = vpop.permute.xlu0 %2817
      %v2820 = vsel %vm1645, %v2804, 0
      %v2823 = vsel %vm1645, %v2806, 0
      %v2826 = vsel %vm1645, %v2808, 0
      %v2829 = vsel %vm1645, %v2810, 0
      %v2832 = vsel %vm1645, %v2812, 0
      %v2835 = vsel %vm1645, %v2814, 0
      %v2838 = vsel %vm1645, %v2816, 0
      %v2841 = vsel %vm1645, %v2818, 0
      %2843 = vmatprep.subr.bf16.mxu0 0
      %2844 = vmatpush1.bf16.xpose.msra.mxu0 0
      %2845 = vmatprep.subr.bf16.mxu0 0
      %2846 = vmatpush1.bf16.xpose.msra.mxu0 0
      %2847 = vmatprep.subr.bf16.mxu0 0
      %2848 = vmatpush1.bf16.xpose.msra.mxu0 0
      %2849 = vmatprep.subr.bf16.mxu0 0
      %2850 = vmatpush1.bf16.xpose.msra.mxu0 0
      %2851 = vmatprep.subr.bf16.mxu0 0
      %2852 = vmatpush1.bf16.xpose.msra.mxu0 %v2841
      %2853 = vmatprep.subr.bf16.mxu0 0
      %2854 = vmatpush1.bf16.xpose.msra.mxu0 %v2838
      %2855 = vmatprep.subr.bf16.mxu0 0
      %2856 = vmatpush1.bf16.xpose.msra.mxu0 %v2835
      %2857 = vmatprep.subr.bf16.mxu0 0
      %2858 = vmatpush1.bf16.xpose.msra.mxu0 %v2832
      %2859 = vmatprep.subr.bf16.mxu0 0
      %2860 = vmatpush2.bf16.xpose.msra.mxu0 0
      %2861 = vmatprep.subr.bf16.mxu0 0
      %2862 = vmatpush2.bf16.xpose.msra.mxu0 0
      %2863 = vmatprep.subr.bf16.mxu0 0
      %2864 = vmatpush2.bf16.xpose.msra.mxu0 0
      %2865 = vmatprep.subr.bf16.mxu0 0
      %2866 = vmatpush2.bf16.xpose.msra.mxu0 0
      %2867 = vmatprep.subr.bf16.mxu0 0
      %2868 = vmatpush2.bf16.xpose.msra.mxu0 0
      %2869 = vmatprep.subr.bf16.mxu0 0
      %2870 = vmatpush2.bf16.xpose.msra.mxu0 0
      %2871 = vmatprep.subr.bf16.mxu0 0
      %2872 = vmatpush2.bf16.xpose.msra.mxu0 0
      %2873 = vmatprep.subr.bf16.mxu0 0
      %2874 = vmatpush2.bf16.xpose.msra.mxu0 0
      %2875 = vmatprep.mubr.bf16.mxu0 0
      %2876 = vmatmul.mubr.bf16.gmra.mxu0 %v2820
      %v2877 = vpop.f32.mrf.mxu0
      %v2878 = vadd.f32 %v2795, %v2877
      %v2879 = vpop.f32.mrf.mxu0
      %v2880 = vpop.f32.mrf.mxu0
      %v2881 = vadd.f32 %v2796, %v2880
      %v2882 = vpop.f32.mrf.mxu0
      %2883 = vmatprep.mubr.bf16.mxu0 0
      %2884 = vmatmul.mubr.bf16.gmra.mxu0 %v2823
      %v2885 = vpop.f32.mrf.mxu0
      %v2886 = vadd.f32 %v2797, %v2885
      %v2887 = vpop.f32.mrf.mxu0
      %v2888 = vpop.f32.mrf.mxu0
      %v2889 = vadd.f32 %v2798, %v2888
      %v2890 = vpop.f32.mrf.mxu0
      %2891 = vmatprep.mubr.bf16.mxu0 0
      %2892 = vmatmul.mubr.bf16.gmra.mxu0 %v2826
      %v2893 = vpop.f32.mrf.mxu0
      %v2894 = vadd.f32 %v2799, %v2893
      %v2895 = vpop.f32.mrf.mxu0
      %v2896 = vpop.f32.mrf.mxu0
      %v2897 = vadd.f32 %v2800, %v2896
      %v2898 = vpop.f32.mrf.mxu0
      %2899 = vmatprep.mubr.bf16.mxu0 0
      %2900 = vmatmul.mubr.bf16.gmra.mxu0 %v2829
      %v2901 = vpop.f32.mrf.mxu0
      %v2902 = vadd.f32 %v2801, %v2901
      %v2903 = vpop.f32.mrf.mxu0
      %v2904 = vpop.f32.mrf.mxu0
      %v2905 = vadd.f32 %v2802, %v2904
      %v2906 = vpop.f32.mrf.mxu0
      %2907 = vdwg.mxu0
      %2908 = vrot.lane.b32.xlu0 %v1581, 120
      %v2909 = vpop.permute.xlu0 %2908
      %2910 = vrot.lane.b32.xlu0 %v1582, 120
      %v2911 = vpop.permute.xlu0 %2910
      %2912 = vrot.lane.b32.xlu0 %v1583, 120
      %v2913 = vpop.permute.xlu0 %2912
      %2914 = vrot.lane.b32.xlu0 %v1584, 120
      %v2915 = vpop.permute.xlu0 %2914
      %2916 = vrot.lane.b32.xlu0 %v1581, 88
      %v2917 = vpop.permute.xlu0 %2916
      %2918 = vrot.lane.b32.xlu0 %v1582, 88
      %v2919 = vpop.permute.xlu0 %2918
      %2920 = vrot.lane.b32.xlu0 %v1583, 88
      %v2921 = vpop.permute.xlu0 %2920
      %2922 = vrot.lane.b32.xlu0 %v1584, 88
      %v2923 = vpop.permute.xlu0 %2922
      %v2925 = vsel %vm1645, %v2909, 0
      %v2928 = vsel %vm1645, %v2911, 0
      %v2931 = vsel %vm1645, %v2913, 0
      %v2934 = vsel %vm1645, %v2915, 0
      %v2937 = vsel %vm1645, %v2917, 0
      %v2940 = vsel %vm1645, %v2919, 0
      %v2943 = vsel %vm1645, %v2921, 0
      %v2946 = vsel %vm1645, %v2923, 0
      %2948 = vmatprep.subr.bf16.mxu0 0
      %2949 = vmatpush1.bf16.xpose.msra.mxu0 0
      %2950 = vmatprep.subr.bf16.mxu0 0
      %2951 = vmatpush1.bf16.xpose.msra.mxu0 0
      %2952 = vmatprep.subr.bf16.mxu0 0
      %2953 = vmatpush1.bf16.xpose.msra.mxu0 0
      %2954 = vmatprep.subr.bf16.mxu0 0
      %2955 = vmatpush1.bf16.xpose.msra.mxu0 0
      %2956 = vmatprep.subr.bf16.mxu0 0
      %2957 = vmatpush1.bf16.xpose.msra.mxu0 %v2946
      %2958 = vmatprep.subr.bf16.mxu0 0
      %2959 = vmatpush1.bf16.xpose.msra.mxu0 %v2943
      %2960 = vmatprep.subr.bf16.mxu0 0
      %2961 = vmatpush1.bf16.xpose.msra.mxu0 %v2940
      %2962 = vmatprep.subr.bf16.mxu0 0
      %2963 = vmatpush1.bf16.xpose.msra.mxu0 %v2937
      %2964 = vmatprep.subr.bf16.mxu0 0
      %2965 = vmatpush2.bf16.xpose.msra.mxu0 0
      %2966 = vmatprep.subr.bf16.mxu0 0
      %2967 = vmatpush2.bf16.xpose.msra.mxu0 0
      %2968 = vmatprep.subr.bf16.mxu0 0
      %2969 = vmatpush2.bf16.xpose.msra.mxu0 0
      %2970 = vmatprep.subr.bf16.mxu0 0
      %2971 = vmatpush2.bf16.xpose.msra.mxu0 0
      %2972 = vmatprep.subr.bf16.mxu0 0
      %2973 = vmatpush2.bf16.xpose.msra.mxu0 0
      %2974 = vmatprep.subr.bf16.mxu0 0
      %2975 = vmatpush2.bf16.xpose.msra.mxu0 0
      %2976 = vmatprep.subr.bf16.mxu0 0
      %2977 = vmatpush2.bf16.xpose.msra.mxu0 0
      %2978 = vmatprep.subr.bf16.mxu0 0
      %2979 = vmatpush2.bf16.xpose.msra.mxu0 0
      %2980 = vmatprep.mubr.bf16.mxu0 0
      %2981 = vmatmul.mubr.bf16.gmra.mxu0 %v2925
      %v2982 = vpop.f32.mrf.mxu0
      %v2983 = vadd.f32 %v2795, %v2982
      %v2984 = vpop.f32.mrf.mxu0
      %v2985 = vpop.f32.mrf.mxu0
      %v2986 = vadd.f32 %v2796, %v2985
      %v2987 = vpop.f32.mrf.mxu0
      %2988 = vmatprep.mubr.bf16.mxu0 0
      %2989 = vmatmul.mubr.bf16.gmra.mxu0 %v2928
      %v2990 = vpop.f32.mrf.mxu0
      %v2991 = vadd.f32 %v2797, %v2990
      %v2992 = vpop.f32.mrf.mxu0
      %v2993 = vpop.f32.mrf.mxu0
      %v2994 = vadd.f32 %v2798, %v2993
      %v2995 = vpop.f32.mrf.mxu0
      %2996 = vmatprep.mubr.bf16.mxu0 0
      %2997 = vmatmul.mubr.bf16.gmra.mxu0 %v2931
      %v2998 = vpop.f32.mrf.mxu0
      %v2999 = vadd.f32 %v2799, %v2998
      %v3000 = vpop.f32.mrf.mxu0
      %v3001 = vpop.f32.mrf.mxu0
      %v3002 = vadd.f32 %v2800, %v3001
      %v3003 = vpop.f32.mrf.mxu0
      %3004 = vmatprep.mubr.bf16.mxu0 0
      %3005 = vmatmul.mubr.bf16.gmra.mxu0 %v2934
      %v3006 = vpop.f32.mrf.mxu0
      %v3007 = vadd.f32 %v2801, %v3006
      %v3008 = vpop.f32.mrf.mxu0
      %v3009 = vpop.f32.mrf.mxu0
      %v3010 = vadd.f32 %v2802, %v3009
      %v3011 = vpop.f32.mrf.mxu0
      %3012 = vdwg.mxu0
      %3013 = vrot.lane.b32.xlu0 %v1585, 120
      %v3014 = vpop.permute.xlu0 %3013
      %3015 = vrot.lane.b32.xlu0 %v1586, 120
      %v3016 = vpop.permute.xlu0 %3015
      %3017 = vrot.lane.b32.xlu0 %v1587, 120
      %v3018 = vpop.permute.xlu0 %3017
      %3019 = vrot.lane.b32.xlu0 %v1588, 120
      %v3020 = vpop.permute.xlu0 %3019
      %3021 = vrot.lane.b32.xlu0 %v1585, 88
      %v3022 = vpop.permute.xlu0 %3021
      %3023 = vrot.lane.b32.xlu0 %v1586, 88
      %v3024 = vpop.permute.xlu0 %3023
      %3025 = vrot.lane.b32.xlu0 %v1587, 88
      %v3026 = vpop.permute.xlu0 %3025
      %3027 = vrot.lane.b32.xlu0 %v1588, 88
      %v3028 = vpop.permute.xlu0 %3027
      %v3030 = vsel %vm1645, %v3014, 0
      %v3033 = vsel %vm1645, %v3016, 0
      %v3036 = vsel %vm1645, %v3018, 0
      %v3039 = vsel %vm1645, %v3020, 0
      %v3042 = vsel %vm1645, %v3022, 0
      %v3045 = vsel %vm1645, %v3024, 0
      %v3048 = vsel %vm1645, %v3026, 0
      %v3051 = vsel %vm1645, %v3028, 0
      %3053 = vmatprep.subr.bf16.mxu0 0
      %3054 = vmatpush1.bf16.xpose.msra.mxu0 0
      %3055 = vmatprep.subr.bf16.mxu0 0
      %3056 = vmatpush1.bf16.xpose.msra.mxu0 0
      %3057 = vmatprep.subr.bf16.mxu0 0
      %3058 = vmatpush1.bf16.xpose.msra.mxu0 0
      %3059 = vmatprep.subr.bf16.mxu0 0
      %3060 = vmatpush1.bf16.xpose.msra.mxu0 0
      %3061 = vmatprep.subr.bf16.mxu0 0
      %3062 = vmatpush1.bf16.xpose.msra.mxu0 %v3051
      %3063 = vmatprep.subr.bf16.mxu0 0
      %3064 = vmatpush1.bf16.xpose.msra.mxu0 %v3048
      %3065 = vmatprep.subr.bf16.mxu0 0
      %3066 = vmatpush1.bf16.xpose.msra.mxu0 %v3045
      %3067 = vmatprep.subr.bf16.mxu0 0
      %3068 = vmatpush1.bf16.xpose.msra.mxu0 %v3042
      %3069 = vmatprep.subr.bf16.mxu0 0
      %3070 = vmatpush2.bf16.xpose.msra.mxu0 0
      %3071 = vmatprep.subr.bf16.mxu0 0
      %3072 = vmatpush2.bf16.xpose.msra.mxu0 0
      %3073 = vmatprep.subr.bf16.mxu0 0
      %3074 = vmatpush2.bf16.xpose.msra.mxu0 0
      %3075 = vmatprep.subr.bf16.mxu0 0
      %3076 = vmatpush2.bf16.xpose.msra.mxu0 0
      %3077 = vmatprep.subr.bf16.mxu0 0
      %3078 = vmatpush2.bf16.xpose.msra.mxu0 0
      %3079 = vmatprep.subr.bf16.mxu0 0
      %3080 = vmatpush2.bf16.xpose.msra.mxu0 0
      %3081 = vmatprep.subr.bf16.mxu0 0
      %3082 = vmatpush2.bf16.xpose.msra.mxu0 0
      %3083 = vmatprep.subr.bf16.mxu0 0
      %3084 = vmatpush2.bf16.xpose.msra.mxu0 0
      %3085 = vmatprep.mubr.bf16.mxu0 0
      %3086 = vmatmul.mubr.bf16.gmra.mxu0 %v3030
      %v3087 = vpop.f32.mrf.mxu0
      %v3088 = vadd.f32 %v2795, %v3087
      %v3089 = vpop.f32.mrf.mxu0
      %v3090 = vpop.f32.mrf.mxu0
      %v3091 = vadd.f32 %v2796, %v3090
      %v3092 = vpop.f32.mrf.mxu0
      %3093 = vmatprep.mubr.bf16.mxu0 0
      %3094 = vmatmul.mubr.bf16.gmra.mxu0 %v3033
      %v3095 = vpop.f32.mrf.mxu0
      %v3096 = vadd.f32 %v2797, %v3095
      %v3097 = vpop.f32.mrf.mxu0
      %v3098 = vpop.f32.mrf.mxu0
      %v3099 = vadd.f32 %v2798, %v3098
      %v3100 = vpop.f32.mrf.mxu0
      %3101 = vmatprep.mubr.bf16.mxu0 0
      %3102 = vmatmul.mubr.bf16.gmra.mxu0 %v3036
      %v3103 = vpop.f32.mrf.mxu0
      %v3104 = vadd.f32 %v2799, %v3103
      %v3105 = vpop.f32.mrf.mxu0
      %v3106 = vpop.f32.mrf.mxu0
      %v3107 = vadd.f32 %v2800, %v3106
      %v3108 = vpop.f32.mrf.mxu0
      %3109 = vmatprep.mubr.bf16.mxu0 0
      %3110 = vmatmul.mubr.bf16.gmra.mxu0 %v3039
      %v3111 = vpop.f32.mrf.mxu0
      %v3112 = vadd.f32 %v2801, %v3111
      %v3113 = vpop.f32.mrf.mxu0
      %v3114 = vpop.f32.mrf.mxu0
      %v3115 = vadd.f32 %v2802, %v3114
      %v3116 = vpop.f32.mrf.mxu0
      %3117 = vdwg.mxu0
      %3118 = vrot.lane.b32.xlu0 %v1589, 120
      %v3119 = vpop.permute.xlu0 %3118
      %3120 = vrot.lane.b32.xlu0 %v1590, 120
      %v3121 = vpop.permute.xlu0 %3120
      %3122 = vrot.lane.b32.xlu0 %v1591, 120
      %v3123 = vpop.permute.xlu0 %3122
      %3124 = vrot.lane.b32.xlu0 %v1592, 120
      %v3125 = vpop.permute.xlu0 %3124
      %3126 = vrot.lane.b32.xlu0 %v1589, 88
      %v3127 = vpop.permute.xlu0 %3126
      %3128 = vrot.lane.b32.xlu0 %v1590, 88
      %v3129 = vpop.permute.xlu0 %3128
      %3130 = vrot.lane.b32.xlu0 %v1591, 88
      %v3131 = vpop.permute.xlu0 %3130
      %3132 = vrot.lane.b32.xlu0 %v1592, 88
      %v3133 = vpop.permute.xlu0 %3132
      %v3135 = vsel %vm1645, %v3119, 0
      %v3138 = vsel %vm1645, %v3121, 0
      %v3141 = vsel %vm1645, %v3123, 0
      %v3144 = vsel %vm1645, %v3125, 0
      %v3147 = vsel %vm1645, %v3127, 0
      %v3150 = vsel %vm1645, %v3129, 0
      %v3153 = vsel %vm1645, %v3131, 0
      %v3156 = vsel %vm1645, %v3133, 0
      %3158 = vmatprep.subr.bf16.mxu0 0
      %3159 = vmatpush1.bf16.xpose.msra.mxu0 0
      %3160 = vmatprep.subr.bf16.mxu0 0
      %3161 = vmatpush1.bf16.xpose.msra.mxu0 0
      %3162 = vmatprep.subr.bf16.mxu0 0
      %3163 = vmatpush1.bf16.xpose.msra.mxu0 0
      %3164 = vmatprep.subr.bf16.mxu0 0
      %3165 = vmatpush1.bf16.xpose.msra.mxu0 0
      %3166 = vmatprep.subr.bf16.mxu0 0
      %3167 = vmatpush1.bf16.xpose.msra.mxu0 %v3156
      %3168 = vmatprep.subr.bf16.mxu0 0
      %3169 = vmatpush1.bf16.xpose.msra.mxu0 %v3153
      %3170 = vmatprep.subr.bf16.mxu0 0
      %3171 = vmatpush1.bf16.xpose.msra.mxu0 %v3150
      %3172 = vmatprep.subr.bf16.mxu0 0
      %3173 = vmatpush1.bf16.xpose.msra.mxu0 %v3147
      %3174 = vmatprep.subr.bf16.mxu0 0
      %3175 = vmatpush2.bf16.xpose.msra.mxu0 0
      %3176 = vmatprep.subr.bf16.mxu0 0
      %3177 = vmatpush2.bf16.xpose.msra.mxu0 0
      %3178 = vmatprep.subr.bf16.mxu0 0
      %3179 = vmatpush2.bf16.xpose.msra.mxu0 0
      %3180 = vmatprep.subr.bf16.mxu0 0
      %3181 = vmatpush2.bf16.xpose.msra.mxu0 0
      %3182 = vmatprep.subr.bf16.mxu0 0
      %3183 = vmatpush2.bf16.xpose.msra.mxu0 0
      %3184 = vmatprep.subr.bf16.mxu0 0
      %3185 = vmatpush2.bf16.xpose.msra.mxu0 0
      %3186 = vmatprep.subr.bf16.mxu0 0
      %3187 = vmatpush2.bf16.xpose.msra.mxu0 0
      %3188 = vmatprep.subr.bf16.mxu0 0
      %3189 = vmatpush2.bf16.xpose.msra.mxu0 0
      %3190 = vmatprep.mubr.bf16.mxu0 0
      %3191 = vmatmul.mubr.bf16.gmra.mxu0 %v3135
      %v3192 = vpop.f32.mrf.mxu0
      %v3193 = vadd.f32 %v2795, %v3192
      %v3194 = vpop.f32.mrf.mxu0
      %v3195 = vpop.f32.mrf.mxu0
      %v3196 = vadd.f32 %v2796, %v3195
      %v3197 = vpop.f32.mrf.mxu0
      %3198 = vmatprep.mubr.bf16.mxu0 0
      %3199 = vmatmul.mubr.bf16.gmra.mxu0 %v3138
      %v3200 = vpop.f32.mrf.mxu0
      %v3201 = vadd.f32 %v2797, %v3200
      %v3202 = vpop.f32.mrf.mxu0
      %v3203 = vpop.f32.mrf.mxu0
      %v3204 = vadd.f32 %v2798, %v3203
      %v3205 = vpop.f32.mrf.mxu0
      %3206 = vmatprep.mubr.bf16.mxu0 0
      %3207 = vmatmul.mubr.bf16.gmra.mxu0 %v3141
      %v3208 = vpop.f32.mrf.mxu0
      %v3209 = vadd.f32 %v2799, %v3208
      %v3210 = vpop.f32.mrf.mxu0
      %v3211 = vpop.f32.mrf.mxu0
      %v3212 = vadd.f32 %v2800, %v3211
      %v3213 = vpop.f32.mrf.mxu0
      %3214 = vmatprep.mubr.bf16.mxu0 0
      %3215 = vmatmul.mubr.bf16.gmra.mxu0 %v3144
      %v3216 = vpop.f32.mrf.mxu0
      %v3217 = vadd.f32 %v2801, %v3216
      %v3218 = vpop.f32.mrf.mxu0
      %v3219 = vpop.f32.mrf.mxu0
      %v3220 = vadd.f32 %v2802, %v3219
      %v3221 = vpop.f32.mrf.mxu0
      %3222 = vdwg.mxu0
      %v3223 = vsel %vm2038, %v2878, -inf
      %3224 = vmax.xlane.f32.xlu0 %v3223
      %v3225 = vpop.xlane.xlu0 %3224
      %v3226 = vsel %vm2038, %v2881, -inf
      %3227 = vmax.xlane.f32.xlu0 %v3226
      %v3228 = vpop.xlane.xlu0 %3227
      %v3229 = vsel %vm2038, %v2886, -inf
      %3230 = vmax.xlane.f32.xlu0 %v3229
      %v3231 = vpop.xlane.xlu0 %3230
      %v3232 = vsel %vm2038, %v2889, -inf
      %3233 = vmax.xlane.f32.xlu0 %v3232
      %v3234 = vpop.xlane.xlu0 %3233
      %v3235 = vsel %vm2038, %v2894, -inf
      %3236 = vmax.xlane.f32.xlu0 %v3235
      %v3237 = vpop.xlane.xlu0 %3236
      %v3238 = vsel %vm2038, %v2897, -inf
      %3239 = vmax.xlane.f32.xlu0 %v3238
      %v3240 = vpop.xlane.xlu0 %3239
      %v3241 = vsel %vm2038, %v2902, -inf
      %3242 = vmax.xlane.f32.xlu0 %v3241
      %v3243 = vpop.xlane.xlu0 %3242
      %v3244 = vsel %vm2038, %v2905, -inf
      %3245 = vmax.xlane.f32.xlu0 %v3244
      %v3246 = vpop.xlane.xlu0 %3245
      %v3247 = vsel %vm2038, %v2983, -inf
      %3248 = vmax.xlane.f32.xlu0 %v3247
      %v3249 = vpop.xlane.xlu0 %3248
      %v3250 = vsel %vm2038, %v2986, -inf
      %3251 = vmax.xlane.f32.xlu0 %v3250
      %v3252 = vpop.xlane.xlu0 %3251
      %v3253 = vsel %vm2038, %v2991, -inf
      %3254 = vmax.xlane.f32.xlu0 %v3253
      %v3255 = vpop.xlane.xlu0 %3254
      %v3256 = vsel %vm2038, %v2994, -inf
      %3257 = vmax.xlane.f32.xlu0 %v3256
      %v3258 = vpop.xlane.xlu0 %3257
      %v3259 = vsel %vm2038, %v2999, -inf
      %3260 = vmax.xlane.f32.xlu0 %v3259
      %v3261 = vpop.xlane.xlu0 %3260
      %v3262 = vsel %vm2038, %v3002, -inf
      %3263 = vmax.xlane.f32.xlu0 %v3262
      %v3264 = vpop.xlane.xlu0 %3263
      %v3265 = vsel %vm2038, %v3007, -inf
      %3266 = vmax.xlane.f32.xlu0 %v3265
      %v3267 = vpop.xlane.xlu0 %3266
      %v3268 = vsel %vm2038, %v3010, -inf
      %3269 = vmax.xlane.f32.xlu0 %v3268
      %v3270 = vpop.xlane.xlu0 %3269
      %v3271 = vsel %vm2038, %v3088, -inf
      %3272 = vmax.xlane.f32.xlu0 %v3271
      %v3273 = vpop.xlane.xlu0 %3272
      %v3274 = vsel %vm2038, %v3091, -inf
      %3275 = vmax.xlane.f32.xlu0 %v3274
      %v3276 = vpop.xlane.xlu0 %3275
      %v3277 = vsel %vm2038, %v3096, -inf
      %3278 = vmax.xlane.f32.xlu0 %v3277
      %v3279 = vpop.xlane.xlu0 %3278
      %v3280 = vsel %vm2038, %v3099, -inf
      %3281 = vmax.xlane.f32.xlu0 %v3280
      %v3282 = vpop.xlane.xlu0 %3281
      %v3283 = vsel %vm2038, %v3104, -inf
      %3284 = vmax.xlane.f32.xlu0 %v3283
      %v3285 = vpop.xlane.xlu0 %3284
      %v3286 = vsel %vm2038, %v3107, -inf
      %3287 = vmax.xlane.f32.xlu0 %v3286
      %v3288 = vpop.xlane.xlu0 %3287
      %v3289 = vsel %vm2038, %v3112, -inf
      %3290 = vmax.xlane.f32.xlu0 %v3289
      %v3291 = vpop.xlane.xlu0 %3290
      %v3292 = vsel %vm2038, %v3115, -inf
      %3293 = vmax.xlane.f32.xlu0 %v3292
      %v3294 = vpop.xlane.xlu0 %3293
      %v3295 = vsel %vm2038, %v3193, -inf
      %3296 = vmax.xlane.f32.xlu0 %v3295
      %v3297 = vpop.xlane.xlu0 %3296
      %v3298 = vsel %vm2038, %v3196, -inf
      %3299 = vmax.xlane.f32.xlu0 %v3298
      %v3300 = vpop.xlane.xlu0 %3299
      %v3301 = vsel %vm2038, %v3201, -inf
      %3302 = vmax.xlane.f32.xlu0 %v3301
      %v3303 = vpop.xlane.xlu0 %3302
      %v3304 = vsel %vm2038, %v3204, -inf
      %3305 = vmax.xlane.f32.xlu0 %v3304
      %v3306 = vpop.xlane.xlu0 %3305
      %v3307 = vsel %vm2038, %v3209, -inf
      %3308 = vmax.xlane.f32.xlu0 %v3307
      %v3309 = vpop.xlane.xlu0 %3308
      %v3310 = vsel %vm2038, %v3212, -inf
      %3311 = vmax.xlane.f32.xlu0 %v3310
      %v3312 = vpop.xlane.xlu0 %3311
      %v3313 = vsel %vm2038, %v3217, -inf
      %3314 = vmax.xlane.f32.xlu0 %v3313
      %v3315 = vpop.xlane.xlu0 %3314
      %v3316 = vsel %vm2038, %v3220, -inf
      %3317 = vmax.xlane.f32.xlu0 %v3316
      %v3318 = vpop.xlane.xlu0 %3317
      %v3319 = vsub.f32 %v2878, %v3225
      %v3320 = vsub.f32 %v2881, %v3228
      %v3321 = vsub.f32 %v2886, %v3231
      %v3322 = vsub.f32 %v2889, %v3234
      %v3323 = vsub.f32 %v2894, %v3237
      %v3324 = vsub.f32 %v2897, %v3240
      %v3325 = vsub.f32 %v2902, %v3243
      %v3326 = vsub.f32 %v2905, %v3246
      %v3327 = vsub.f32 %v2983, %v3249
      %v3328 = vsub.f32 %v2986, %v3252
      %v3329 = vsub.f32 %v2991, %v3255
      %v3330 = vsub.f32 %v2994, %v3258
      %v3331 = vsub.f32 %v2999, %v3261
      %v3332 = vsub.f32 %v3002, %v3264
      %v3333 = vsub.f32 %v3007, %v3267
      %v3334 = vsub.f32 %v3010, %v3270
      %v3335 = vsub.f32 %v3088, %v3273
      %v3336 = vsub.f32 %v3091, %v3276
      %v3337 = vsub.f32 %v3096, %v3279
      %v3338 = vsub.f32 %v3099, %v3282
      %v3339 = vsub.f32 %v3104, %v3285
      %v3340 = vsub.f32 %v3107, %v3288
      %v3341 = vsub.f32 %v3112, %v3291
      %v3342 = vsub.f32 %v3115, %v3294
      %v3343 = vsub.f32 %v3193, %v3297
      %v3344 = vsub.f32 %v3196, %v3300
      %v3345 = vsub.f32 %v3201, %v3303
      %v3346 = vsub.f32 %v3204, %v3306
      %v3347 = vsub.f32 %v3209, %v3309
      %v3348 = vsub.f32 %v3212, %v3312
      %v3349 = vsub.f32 %v3217, %v3315
      %v3350 = vsub.f32 %v3220, %v3318
      %v3351 = vmul.f32 %v3319, 1.442695
      %v3352 = vpow.pop %v3351
      %v3353 = vmul.f32 %v3320, 1.442695
      %v3354 = vpow.pop %v3353
      %v3355 = vmul.f32 %v3321, 1.442695
      %v3356 = vpow.pop %v3355
      %v3357 = vmul.f32 %v3322, 1.442695
      %v3358 = vpow.pop %v3357
      %v3359 = vmul.f32 %v3323, 1.442695
      %v3360 = vpow.pop %v3359
      %v3361 = vmul.f32 %v3324, 1.442695
      %v3362 = vpow.pop %v3361
      %v3363 = vmul.f32 %v3325, 1.442695
      %v3364 = vpow.pop %v3363
      %v3365 = vmul.f32 %v3326, 1.442695
      %v3366 = vpow.pop %v3365
      %v3367 = vmul.f32 %v3327, 1.442695
      %v3368 = vpow.pop %v3367
      %v3369 = vmul.f32 %v3328, 1.442695
      %v3370 = vpow.pop %v3369
      %v3371 = vmul.f32 %v3329, 1.442695
      %v3372 = vpow.pop %v3371
      %v3373 = vmul.f32 %v3330, 1.442695
      %v3374 = vpow.pop %v3373
      %v3375 = vmul.f32 %v3331, 1.442695
      %v3376 = vpow.pop %v3375
      %v3377 = vmul.f32 %v3332, 1.442695
      %v3378 = vpow.pop %v3377
      %v3379 = vmul.f32 %v3333, 1.442695
      %v3380 = vpow.pop %v3379
      %v3381 = vmul.f32 %v3334, 1.442695
      %v3382 = vpow.pop %v3381
      %v3383 = vmul.f32 %v3335, 1.442695
      %v3384 = vpow.pop %v3383
      %v3385 = vmul.f32 %v3336, 1.442695
      %v3386 = vpow.pop %v3385
      %v3387 = vmul.f32 %v3337, 1.442695
      %v3388 = vpow.pop %v3387
      %v3389 = vmul.f32 %v3338, 1.442695
      %v3390 = vpow.pop %v3389
      %v3391 = vmul.f32 %v3339, 1.442695
      %v3392 = vpow.pop %v3391
      %v3393 = vmul.f32 %v3340, 1.442695
      %v3394 = vpow.pop %v3393
      %v3395 = vmul.f32 %v3341, 1.442695
      %v3396 = vpow.pop %v3395
      %v3397 = vmul.f32 %v3342, 1.442695
      %v3398 = vpow.pop %v3397
      %v3399 = vmul.f32 %v3343, 1.442695
      %v3400 = vpow.pop %v3399
      %v3401 = vmul.f32 %v3344, 1.442695
      %v3402 = vpow.pop %v3401
      %v3403 = vmul.f32 %v3345, 1.442695
      %v3404 = vpow.pop %v3403
      %v3405 = vmul.f32 %v3346, 1.442695
      %v3406 = vpow.pop %v3405
      %v3407 = vmul.f32 %v3347, 1.442695
      %v3408 = vpow.pop %v3407
      %v3409 = vmul.f32 %v3348, 1.442695
      %v3410 = vpow.pop %v3409
      %v3411 = vmul.f32 %v3349, 1.442695
      %v3412 = vpow.pop %v3411
      %v3413 = vmul.f32 %v3350, 1.442695
      %v3414 = vpow.pop %v3413
      %v3415 = vsel %vm2038, %v3352, 0.0
      %3416 = vadd.xlane.f32.xlu0 %v3415
      %v3417 = vpop.xlane.xlu0 %3416
      %v3418 = vsel %vm2038, %v3354, 0.0
      %3419 = vadd.xlane.f32.xlu0 %v3418
      %v3420 = vpop.xlane.xlu0 %3419
      %v3421 = vsel %vm2038, %v3356, 0.0
      %3422 = vadd.xlane.f32.xlu0 %v3421
      %v3423 = vpop.xlane.xlu0 %3422
      %v3424 = vsel %vm2038, %v3358, 0.0
      %3425 = vadd.xlane.f32.xlu0 %v3424
      %v3426 = vpop.xlane.xlu0 %3425
      %v3427 = vsel %vm2038, %v3360, 0.0
      %3428 = vadd.xlane.f32.xlu0 %v3427
      %v3429 = vpop.xlane.xlu0 %3428
      %v3430 = vsel %vm2038, %v3362, 0.0
      %3431 = vadd.xlane.f32.xlu0 %v3430
      %v3432 = vpop.xlane.xlu0 %3431
      %v3433 = vsel %vm2038, %v3364, 0.0
      %3434 = vadd.xlane.f32.xlu0 %v3433
      %v3435 = vpop.xlane.xlu0 %3434
      %v3436 = vsel %vm2038, %v3366, 0.0
      %3437 = vadd.xlane.f32.xlu0 %v3436
      %v3438 = vpop.xlane.xlu0 %3437
      %v3439 = vsel %vm2038, %v3368, 0.0
      %3440 = vadd.xlane.f32.xlu0 %v3439
      %v3441 = vpop.xlane.xlu0 %3440
      %v3442 = vsel %vm2038, %v3370, 0.0
      %3443 = vadd.xlane.f32.xlu0 %v3442
      %v3444 = vpop.xlane.xlu0 %3443
      %v3445 = vsel %vm2038, %v3372, 0.0
      %3446 = vadd.xlane.f32.xlu0 %v3445
      %v3447 = vpop.xlane.xlu0 %3446
      %v3448 = vsel %vm2038, %v3374, 0.0
      %3449 = vadd.xlane.f32.xlu0 %v3448
      %v3450 = vpop.xlane.xlu0 %3449
      %v3451 = vsel %vm2038, %v3376, 0.0
      %3452 = vadd.xlane.f32.xlu0 %v3451
      %v3453 = vpop.xlane.xlu0 %3452
      %v3454 = vsel %vm2038, %v3378, 0.0
      %3455 = vadd.xlane.f32.xlu0 %v3454
      %v3456 = vpop.xlane.xlu0 %3455
      %v3457 = vsel %vm2038, %v3380, 0.0
      %3458 = vadd.xlane.f32.xlu0 %v3457
      %v3459 = vpop.xlane.xlu0 %3458
      %v3460 = vsel %vm2038, %v3382, 0.0
      %3461 = vadd.xlane.f32.xlu0 %v3460
      %v3462 = vpop.xlane.xlu0 %3461
      %v3463 = vsel %vm2038, %v3384, 0.0
      %3464 = vadd.xlane.f32.xlu0 %v3463
      %v3465 = vpop.xlane.xlu0 %3464
      %v3466 = vsel %vm2038, %v3386, 0.0
      %3467 = vadd.xlane.f32.xlu0 %v3466
      %v3468 = vpop.xlane.xlu0 %3467
      %v3469 = vsel %vm2038, %v3388, 0.0
      %3470 = vadd.xlane.f32.xlu0 %v3469
      %v3471 = vpop.xlane.xlu0 %3470
      %v3472 = vsel %vm2038, %v3390, 0.0
      %3473 = vadd.xlane.f32.xlu0 %v3472
      %v3474 = vpop.xlane.xlu0 %3473
      %v3475 = vsel %vm2038, %v3392, 0.0
      %3476 = vadd.xlane.f32.xlu0 %v3475
      %v3477 = vpop.xlane.xlu0 %3476
      %v3478 = vsel %vm2038, %v3394, 0.0
      %3479 = vadd.xlane.f32.xlu0 %v3478
      %v3480 = vpop.xlane.xlu0 %3479
      %v3481 = vsel %vm2038, %v3396, 0.0
      %3482 = vadd.xlane.f32.xlu0 %v3481
      %v3483 = vpop.xlane.xlu0 %3482
      %v3484 = vsel %vm2038, %v3398, 0.0
      %3485 = vadd.xlane.f32.xlu0 %v3484
      %v3486 = vpop.xlane.xlu0 %3485
      %v3487 = vsel %vm2038, %v3400, 0.0
      %3488 = vadd.xlane.f32.xlu0 %v3487
      %v3489 = vpop.xlane.xlu0 %3488
      %v3490 = vsel %vm2038, %v3402, 0.0
      %3491 = vadd.xlane.f32.xlu0 %v3490
      %v3492 = vpop.xlane.xlu0 %3491
      %v3493 = vsel %vm2038, %v3404, 0.0
      %3494 = vadd.xlane.f32.xlu0 %v3493
      %v3495 = vpop.xlane.xlu0 %3494
      %v3496 = vsel %vm2038, %v3406, 0.0
      %3497 = vadd.xlane.f32.xlu0 %v3496
      %v3498 = vpop.xlane.xlu0 %3497
      %v3499 = vsel %vm2038, %v3408, 0.0
      %3500 = vadd.xlane.f32.xlu0 %v3499
      %v3501 = vpop.xlane.xlu0 %3500
      %v3502 = vsel %vm2038, %v3410, 0.0
      %3503 = vadd.xlane.f32.xlu0 %v3502
      %v3504 = vpop.xlane.xlu0 %3503
      %v3505 = vsel %vm2038, %v3412, 0.0
      %3506 = vadd.xlane.f32.xlu0 %v3505
      %v3507 = vpop.xlane.xlu0 %3506
      %v3508 = vsel %vm2038, %v3414, 0.0
      %3509 = vadd.xlane.f32.xlu0 %v3508
      %v3510 = vpop.xlane.xlu0 %3509
      %v3511 = vrcp.pop %v3417
      %v3512 = vrcp.pop %v3420
      %v3513 = vrcp.pop %v3423
      %v3514 = vrcp.pop %v3426
      %v3515 = vrcp.pop %v3429
      %v3516 = vrcp.pop %v3432
      %v3517 = vrcp.pop %v3435
      %v3518 = vrcp.pop %v3438
      %v3519 = vrcp.pop %v3441
      %v3520 = vrcp.pop %v3444
      %v3521 = vrcp.pop %v3447
      %v3522 = vrcp.pop %v3450
      %v3523 = vrcp.pop %v3453
      %v3524 = vrcp.pop %v3456
      %v3525 = vrcp.pop %v3459
      %v3526 = vrcp.pop %v3462
      %v3527 = vrcp.pop %v3465
      %v3528 = vrcp.pop %v3468
      %v3529 = vrcp.pop %v3471
      %v3530 = vrcp.pop %v3474
      %v3531 = vrcp.pop %v3477
      %v3532 = vrcp.pop %v3480
      %v3533 = vrcp.pop %v3483
      %v3534 = vrcp.pop %v3486
      %v3535 = vrcp.pop %v3489
      %v3536 = vrcp.pop %v3492
      %v3537 = vrcp.pop %v3495
      %v3538 = vrcp.pop %v3498
      %v3539 = vrcp.pop %v3501
      %v3540 = vrcp.pop %v3504
      %v3541 = vrcp.pop %v3507
      %v3542 = vrcp.pop %v3510
      %v3543 = vmul.f32 %v3352, %v3511
      %v3544 = vmul.f32 %v3354, %v3512
      %v3545 = vmul.f32 %v3356, %v3513
      %v3546 = vmul.f32 %v3358, %v3514
      %v3547 = vmul.f32 %v3360, %v3515
      %v3548 = vmul.f32 %v3362, %v3516
      %v3549 = vmul.f32 %v3364, %v3517
      %v3550 = vmul.f32 %v3366, %v3518
      %v3551 = vmul.f32 %v3368, %v3519
      %v3552 = vmul.f32 %v3370, %v3520
      %v3553 = vmul.f32 %v3372, %v3521
      %v3554 = vmul.f32 %v3374, %v3522
      %v3555 = vmul.f32 %v3376, %v3523
      %v3556 = vmul.f32 %v3378, %v3524
      %v3557 = vmul.f32 %v3380, %v3525
      %v3558 = vmul.f32 %v3382, %v3526
      %v3559 = vmul.f32 %v3384, %v3527
      %v3560 = vmul.f32 %v3386, %v3528
      %v3561 = vmul.f32 %v3388, %v3529
      %v3562 = vmul.f32 %v3390, %v3530
      %v3563 = vmul.f32 %v3392, %v3531
      %v3564 = vmul.f32 %v3394, %v3532
      %v3565 = vmul.f32 %v3396, %v3533
      %v3566 = vmul.f32 %v3398, %v3534
      %v3567 = vmul.f32 %v3400, %v3535
      %v3568 = vmul.f32 %v3402, %v3536
      %v3569 = vmul.f32 %v3404, %v3537
      %v3570 = vmul.f32 %v3406, %v3538
      %v3571 = vmul.f32 %v3408, %v3539
      %v3572 = vmul.f32 %v3410, %v3540
      %v3573 = vmul.f32 %v3412, %v3541
      %v3574 = vmul.f32 %v3414, %v3542
      %v3575 = vpack.c.bf16 %v3544, %v3543
      %v3576 = vpack.c.bf16 %v3546, %v3545
      %v3577 = vpack.c.bf16 %v3548, %v3547
      %v3578 = vpack.c.bf16 %v3550, %v3549
      %v3579 = vpack.c.bf16 %v3552, %v3551
      %v3580 = vpack.c.bf16 %v3554, %v3553
      %v3581 = vpack.c.bf16 %v3556, %v3555
      %v3582 = vpack.c.bf16 %v3558, %v3557
      %v3583 = vpack.c.bf16 %v3560, %v3559
      %v3584 = vpack.c.bf16 %v3562, %v3561
      %v3585 = vpack.c.bf16 %v3564, %v3563
      %v3586 = vpack.c.bf16 %v3566, %v3565
      %v3587 = vpack.c.bf16 %v3568, %v3567
      %v3588 = vpack.c.bf16 %v3570, %v3569
      %v3589 = vpack.c.bf16 %v3572, %v3571
      %v3590 = vpack.c.bf16 %v3574, %v3573
      %3591 = vrot.lane.b32.xlu0 %v1577, 56
      %v3592 = vpop.permute.xlu0 %3591
      %3593 = vrot.lane.b32.xlu0 %v1578, 56
      %v3594 = vpop.permute.xlu0 %3593
      %3595 = vrot.lane.b32.xlu0 %v1579, 56
      %v3596 = vpop.permute.xlu0 %3595
      %3597 = vrot.lane.b32.xlu0 %v1580, 56
      %v3598 = vpop.permute.xlu0 %3597
      %v3604 = vsel %vm2038, %v3575, 0
      %v3607 = vsel %vm2038, %v3576, 0
      %v3610 = vsel %vm2038, %v3577, 0
      %v3613 = vsel %vm2038, %v3578, 0
      %3615 = vmatprep.subr.bf16.mxu0 0
      %3616 = vmatpush1.bf16.msra.mxu0 0
      %3617 = vmatprep.subr.bf16.mxu0 0
      %3618 = vmatpush1.bf16.msra.mxu0 0
      %3619 = vmatprep.subr.bf16.mxu0 0
      %3620 = vmatpush1.bf16.msra.mxu0 0
      %3621 = vmatprep.subr.bf16.mxu0 0
      %3622 = vmatpush1.bf16.msra.mxu0 0
      %3623 = vmatprep.subr.bf16.mxu0 0
      %3624 = vmatpush1.bf16.msra.mxu0 %v3598
      %3625 = vmatprep.subr.bf16.mxu0 0
      %3626 = vmatpush1.bf16.msra.mxu0 %v3596
      %3627 = vmatprep.subr.bf16.mxu0 0
      %3628 = vmatpush1.bf16.msra.mxu0 %v3594
      %3629 = vmatprep.subr.bf16.mxu0 0
      %3630 = vmatpush1.bf16.msra.mxu0 %v3592
      %3631 = vmatprep.subr.bf16.mxu0 0
      %3632 = vmatpush2.bf16.msra.mxu0 0
      %3633 = vmatprep.subr.bf16.mxu0 0
      %3634 = vmatpush2.bf16.msra.mxu0 0
      %3635 = vmatprep.subr.bf16.mxu0 0
      %3636 = vmatpush2.bf16.msra.mxu0 0
      %3637 = vmatprep.subr.bf16.mxu0 0
      %3638 = vmatpush2.bf16.msra.mxu0 0
      %3639 = vmatprep.subr.bf16.mxu0 0
      %3640 = vmatpush2.bf16.msra.mxu0 0
      %3641 = vmatprep.subr.bf16.mxu0 0
      %3642 = vmatpush2.bf16.msra.mxu0 0
      %3643 = vmatprep.subr.bf16.mxu0 0
      %3644 = vmatpush2.bf16.msra.mxu0 0
      %3645 = vmatprep.subr.bf16.mxu0 0
      %3646 = vmatpush2.bf16.msra.mxu0 0
      %3647 = vmatprep.mubr.bf16.mxu0 0
      %3648 = vmatmul.mubr.bf16.gmra.mxu0 %v3604
      %v3649 = vpop.f32.mrf.mxu0
      %v3650 = vadd.f32 0.0, %v3649
      %v3651 = vpop.f32.mrf.mxu0
      %v3652 = vpop.f32.mrf.mxu0
      %v3653 = vadd.f32 0.0, %v3652
      %v3654 = vpop.f32.mrf.mxu0
      %3655 = vmatprep.mubr.bf16.mxu0 0
      %3656 = vmatmul.mubr.bf16.gmra.mxu0 %v3607
      %v3657 = vpop.f32.mrf.mxu0
      %v3658 = vadd.f32 0.0, %v3657
      %v3659 = vpop.f32.mrf.mxu0
      %v3660 = vpop.f32.mrf.mxu0
      %v3661 = vadd.f32 0.0, %v3660
      %v3662 = vpop.f32.mrf.mxu0
      %3663 = vmatprep.mubr.bf16.mxu0 0
      %3664 = vmatmul.mubr.bf16.gmra.mxu0 %v3610
      %v3665 = vpop.f32.mrf.mxu0
      %v3666 = vadd.f32 0.0, %v3665
      %v3667 = vpop.f32.mrf.mxu0
      %v3668 = vpop.f32.mrf.mxu0
      %v3669 = vadd.f32 0.0, %v3668
      %v3670 = vpop.f32.mrf.mxu0
      %3671 = vmatprep.mubr.bf16.mxu0 0
      %3672 = vmatmul.mubr.bf16.gmra.mxu0 %v3613
      %v3673 = vpop.f32.mrf.mxu0
      %v3674 = vadd.f32 0.0, %v3673
      %v3675 = vpop.f32.mrf.mxu0
      %v3676 = vpop.f32.mrf.mxu0
      %v3677 = vadd.f32 0.0, %v3676
      %v3678 = vpop.f32.mrf.mxu0
      %3679 = vdwg.mxu0
      %3680 = vrot.lane.b32.xlu0 %v1581, 56
      %v3681 = vpop.permute.xlu0 %3680
      %3682 = vrot.lane.b32.xlu0 %v1582, 56
      %v3683 = vpop.permute.xlu0 %3682
      %3684 = vrot.lane.b32.xlu0 %v1583, 56
      %v3685 = vpop.permute.xlu0 %3684
      %3686 = vrot.lane.b32.xlu0 %v1584, 56
      %v3687 = vpop.permute.xlu0 %3686
      %v3693 = vsel %vm2038, %v3579, 0
      %v3696 = vsel %vm2038, %v3580, 0
      %v3699 = vsel %vm2038, %v3581, 0
      %v3702 = vsel %vm2038, %v3582, 0
      %3704 = vmatprep.subr.bf16.mxu0 0
      %3705 = vmatpush1.bf16.msra.mxu0 0
      %3706 = vmatprep.subr.bf16.mxu0 0
      %3707 = vmatpush1.bf16.msra.mxu0 0
      %3708 = vmatprep.subr.bf16.mxu0 0
      %3709 = vmatpush1.bf16.msra.mxu0 0
      %3710 = vmatprep.subr.bf16.mxu0 0
      %3711 = vmatpush1.bf16.msra.mxu0 0
      %3712 = vmatprep.subr.bf16.mxu0 0
      %3713 = vmatpush1.bf16.msra.mxu0 %v3687
      %3714 = vmatprep.subr.bf16.mxu0 0
      %3715 = vmatpush1.bf16.msra.mxu0 %v3685
      %3716 = vmatprep.subr.bf16.mxu0 0
      %3717 = vmatpush1.bf16.msra.mxu0 %v3683
      %3718 = vmatprep.subr.bf16.mxu0 0
      %3719 = vmatpush1.bf16.msra.mxu0 %v3681
      %3720 = vmatprep.subr.bf16.mxu0 0
      %3721 = vmatpush2.bf16.msra.mxu0 0
      %3722 = vmatprep.subr.bf16.mxu0 0
      %3723 = vmatpush2.bf16.msra.mxu0 0
      %3724 = vmatprep.subr.bf16.mxu0 0
      %3725 = vmatpush2.bf16.msra.mxu0 0
      %3726 = vmatprep.subr.bf16.mxu0 0
      %3727 = vmatpush2.bf16.msra.mxu0 0
      %3728 = vmatprep.subr.bf16.mxu0 0
      %3729 = vmatpush2.bf16.msra.mxu0 0
      %3730 = vmatprep.subr.bf16.mxu0 0
      %3731 = vmatpush2.bf16.msra.mxu0 0
      %3732 = vmatprep.subr.bf16.mxu0 0
      %3733 = vmatpush2.bf16.msra.mxu0 0
      %3734 = vmatprep.subr.bf16.mxu0 0
      %3735 = vmatpush2.bf16.msra.mxu0 0
      %3736 = vmatprep.mubr.bf16.mxu0 0
      %3737 = vmatmul.mubr.bf16.gmra.mxu0 %v3693
      %v3738 = vpop.f32.mrf.mxu0
      %v3739 = vadd.f32 0.0, %v3738
      %v3740 = vpop.f32.mrf.mxu0
      %v3741 = vpop.f32.mrf.mxu0
      %v3742 = vadd.f32 0.0, %v3741
      %v3743 = vpop.f32.mrf.mxu0
      %3744 = vmatprep.mubr.bf16.mxu0 0
      %3745 = vmatmul.mubr.bf16.gmra.mxu0 %v3696
      %v3746 = vpop.f32.mrf.mxu0
      %v3747 = vadd.f32 0.0, %v3746
      %v3748 = vpop.f32.mrf.mxu0
      %v3749 = vpop.f32.mrf.mxu0
      %v3750 = vadd.f32 0.0, %v3749
      %v3751 = vpop.f32.mrf.mxu0
      %3752 = vmatprep.mubr.bf16.mxu0 0
      %3753 = vmatmul.mubr.bf16.gmra.mxu0 %v3699
      %v3754 = vpop.f32.mrf.mxu0
      %v3755 = vadd.f32 0.0, %v3754
      %v3756 = vpop.f32.mrf.mxu0
      %v3757 = vpop.f32.mrf.mxu0
      %v3758 = vadd.f32 0.0, %v3757
      %v3759 = vpop.f32.mrf.mxu0
      %3760 = vmatprep.mubr.bf16.mxu0 0
      %3761 = vmatmul.mubr.bf16.gmra.mxu0 %v3702
      %v3762 = vpop.f32.mrf.mxu0
      %v3763 = vadd.f32 0.0, %v3762
      %v3764 = vpop.f32.mrf.mxu0
      %v3765 = vpop.f32.mrf.mxu0
      %v3766 = vadd.f32 0.0, %v3765
      %v3767 = vpop.f32.mrf.mxu0
      %3768 = vdwg.mxu0
      %3769 = vrot.lane.b32.xlu0 %v1585, 56
      %v3770 = vpop.permute.xlu0 %3769
      %3771 = vrot.lane.b32.xlu0 %v1586, 56
      %v3772 = vpop.permute.xlu0 %3771
      %3773 = vrot.lane.b32.xlu0 %v1587, 56
      %v3774 = vpop.permute.xlu0 %3773
      %3775 = vrot.lane.b32.xlu0 %v1588, 56
      %v3776 = vpop.permute.xlu0 %3775
      %v3782 = vsel %vm2038, %v3583, 0
      %v3785 = vsel %vm2038, %v3584, 0
      %v3788 = vsel %vm2038, %v3585, 0
      %v3791 = vsel %vm2038, %v3586, 0
      %3793 = vmatprep.subr.bf16.mxu0 0
      %3794 = vmatpush1.bf16.msra.mxu0 0
      %3795 = vmatprep.subr.bf16.mxu0 0
      %3796 = vmatpush1.bf16.msra.mxu0 0
      %3797 = vmatprep.subr.bf16.mxu0 0
      %3798 = vmatpush1.bf16.msra.mxu0 0
      %3799 = vmatprep.subr.bf16.mxu0 0
      %3800 = vmatpush1.bf16.msra.mxu0 0
      %3801 = vmatprep.subr.bf16.mxu0 0
      %3802 = vmatpush1.bf16.msra.mxu0 %v3776
      %3803 = vmatprep.subr.bf16.mxu0 0
      %3804 = vmatpush1.bf16.msra.mxu0 %v3774
      %3805 = vmatprep.subr.bf16.mxu0 0
      %3806 = vmatpush1.bf16.msra.mxu0 %v3772
      %3807 = vmatprep.subr.bf16.mxu0 0
      %3808 = vmatpush1.bf16.msra.mxu0 %v3770
      %3809 = vmatprep.subr.bf16.mxu0 0
      %3810 = vmatpush2.bf16.msra.mxu0 0
      %3811 = vmatprep.subr.bf16.mxu0 0
      %3812 = vmatpush2.bf16.msra.mxu0 0
      %3813 = vmatprep.subr.bf16.mxu0 0
      %3814 = vmatpush2.bf16.msra.mxu0 0
      %3815 = vmatprep.subr.bf16.mxu0 0
      %3816 = vmatpush2.bf16.msra.mxu0 0
      %3817 = vmatprep.subr.bf16.mxu0 0
      %3818 = vmatpush2.bf16.msra.mxu0 0
      %3819 = vmatprep.subr.bf16.mxu0 0
      %3820 = vmatpush2.bf16.msra.mxu0 0
      %3821 = vmatprep.subr.bf16.mxu0 0
      %3822 = vmatpush2.bf16.msra.mxu0 0
      %3823 = vmatprep.subr.bf16.mxu0 0
      %3824 = vmatpush2.bf16.msra.mxu0 0
      %3825 = vmatprep.mubr.bf16.mxu0 0
      %3826 = vmatmul.mubr.bf16.gmra.mxu0 %v3782
      %v3827 = vpop.f32.mrf.mxu0
      %v3828 = vadd.f32 0.0, %v3827
      %v3829 = vpop.f32.mrf.mxu0
      %v3830 = vpop.f32.mrf.mxu0
      %v3831 = vadd.f32 0.0, %v3830
      %v3832 = vpop.f32.mrf.mxu0
      %3833 = vmatprep.mubr.bf16.mxu0 0
      %3834 = vmatmul.mubr.bf16.gmra.mxu0 %v3785
      %v3835 = vpop.f32.mrf.mxu0
      %v3836 = vadd.f32 0.0, %v3835
      %v3837 = vpop.f32.mrf.mxu0
      %v3838 = vpop.f32.mrf.mxu0
      %v3839 = vadd.f32 0.0, %v3838
      %v3840 = vpop.f32.mrf.mxu0
      %3841 = vmatprep.mubr.bf16.mxu0 0
      %3842 = vmatmul.mubr.bf16.gmra.mxu0 %v3788
      %v3843 = vpop.f32.mrf.mxu0
      %v3844 = vadd.f32 0.0, %v3843
      %v3845 = vpop.f32.mrf.mxu0
      %v3846 = vpop.f32.mrf.mxu0
      %v3847 = vadd.f32 0.0, %v3846
      %v3848 = vpop.f32.mrf.mxu0
      %3849 = vmatprep.mubr.bf16.mxu0 0
      %3850 = vmatmul.mubr.bf16.gmra.mxu0 %v3791
      %v3851 = vpop.f32.mrf.mxu0
      %v3852 = vadd.f32 0.0, %v3851
      %v3853 = vpop.f32.mrf.mxu0
      %v3854 = vpop.f32.mrf.mxu0
      %v3855 = vadd.f32 0.0, %v3854
      %v3856 = vpop.f32.mrf.mxu0
      %3857 = vdwg.mxu0
      %3858 = vrot.lane.b32.xlu0 %v1589, 56
      %v3859 = vpop.permute.xlu0 %3858
      %3860 = vrot.lane.b32.xlu0 %v1590, 56
      %v3861 = vpop.permute.xlu0 %3860
      %3862 = vrot.lane.b32.xlu0 %v1591, 56
      %v3863 = vpop.permute.xlu0 %3862
      %3864 = vrot.lane.b32.xlu0 %v1592, 56
      %v3865 = vpop.permute.xlu0 %3864
      %v3871 = vsel %vm2038, %v3587, 0
      %v3874 = vsel %vm2038, %v3588, 0
      %v3877 = vsel %vm2038, %v3589, 0
      %v3880 = vsel %vm2038, %v3590, 0
      %3882 = vmatprep.subr.bf16.mxu0 0
      %3883 = vmatpush1.bf16.msra.mxu0 0
      %3884 = vmatprep.subr.bf16.mxu0 0
      %3885 = vmatpush1.bf16.msra.mxu0 0
      %3886 = vmatprep.subr.bf16.mxu0 0
      %3887 = vmatpush1.bf16.msra.mxu0 0
      %3888 = vmatprep.subr.bf16.mxu0 0
      %3889 = vmatpush1.bf16.msra.mxu0 0
      %3890 = vmatprep.subr.bf16.mxu0 0
      %3891 = vmatpush1.bf16.msra.mxu0 %v3865
      %3892 = vmatprep.subr.bf16.mxu0 0
      %3893 = vmatpush1.bf16.msra.mxu0 %v3863
      %3894 = vmatprep.subr.bf16.mxu0 0
      %3895 = vmatpush1.bf16.msra.mxu0 %v3861
      %3896 = vmatprep.subr.bf16.mxu0 0
      %3897 = vmatpush1.bf16.msra.mxu0 %v3859
      %3898 = vmatprep.subr.bf16.mxu0 0
      %3899 = vmatpush2.bf16.msra.mxu0 0
      %3900 = vmatprep.subr.bf16.mxu0 0
      %3901 = vmatpush2.bf16.msra.mxu0 0
      %3902 = vmatprep.subr.bf16.mxu0 0
      %3903 = vmatpush2.bf16.msra.mxu0 0
      %3904 = vmatprep.subr.bf16.mxu0 0
      %3905 = vmatpush2.bf16.msra.mxu0 0
      %3906 = vmatprep.subr.bf16.mxu0 0
      %3907 = vmatpush2.bf16.msra.mxu0 0
      %3908 = vmatprep.subr.bf16.mxu0 0
      %3909 = vmatpush2.bf16.msra.mxu0 0
      %3910 = vmatprep.subr.bf16.mxu0 0
      %3911 = vmatpush2.bf16.msra.mxu0 0
      %3912 = vmatprep.subr.bf16.mxu0 0
      %3913 = vmatpush2.bf16.msra.mxu0 0
      %3914 = vmatprep.mubr.bf16.mxu0 0
      %3915 = vmatmul.mubr.bf16.gmra.mxu0 %v3871
      %v3916 = vpop.f32.mrf.mxu0
      %v3917 = vadd.f32 0.0, %v3916
      %v3918 = vpop.f32.mrf.mxu0
      %v3919 = vpop.f32.mrf.mxu0
      %v3920 = vadd.f32 0.0, %v3919
      %v3921 = vpop.f32.mrf.mxu0
      %3922 = vmatprep.mubr.bf16.mxu0 0
      %3923 = vmatmul.mubr.bf16.gmra.mxu0 %v3874
      %v3924 = vpop.f32.mrf.mxu0
      %v3925 = vadd.f32 0.0, %v3924
      %v3926 = vpop.f32.mrf.mxu0
      %v3927 = vpop.f32.mrf.mxu0
      %v3928 = vadd.f32 0.0, %v3927
      %v3929 = vpop.f32.mrf.mxu0
      %3930 = vmatprep.mubr.bf16.mxu0 0
      %3931 = vmatmul.mubr.bf16.gmra.mxu0 %v3877
      %v3932 = vpop.f32.mrf.mxu0
      %v3933 = vadd.f32 0.0, %v3932
      %v3934 = vpop.f32.mrf.mxu0
      %v3935 = vpop.f32.mrf.mxu0
      %v3936 = vadd.f32 0.0, %v3935
      %v3937 = vpop.f32.mrf.mxu0
      %3938 = vmatprep.mubr.bf16.mxu0 0
      %3939 = vmatmul.mubr.bf16.gmra.mxu0 %v3880
      %v3940 = vpop.f32.mrf.mxu0
      %v3941 = vadd.f32 0.0, %v3940
      %v3942 = vpop.f32.mrf.mxu0
      %v3943 = vpop.f32.mrf.mxu0
      %v3944 = vadd.f32 0.0, %v3943
      %v3945 = vpop.f32.mrf.mxu0
      %3946 = vdwg.mxu0
      %3979 = vrot.lane.b32.xlu0 %v3650, 8
      %v3980 = vpop.permute.xlu0 %3979
      %3981 = vrot.lane.b32.xlu0 %v3653, 8
      %v3982 = vpop.permute.xlu0 %3981
      %3983 = vrot.lane.b32.xlu0 %v3658, 8
      %v3984 = vpop.permute.xlu0 %3983
      %3985 = vrot.lane.b32.xlu0 %v3661, 8
      %v3986 = vpop.permute.xlu0 %3985
      %3987 = vrot.lane.b32.xlu0 %v3666, 8
      %v3988 = vpop.permute.xlu0 %3987
      %3989 = vrot.lane.b32.xlu0 %v3669, 8
      %v3990 = vpop.permute.xlu0 %3989
      %3991 = vrot.lane.b32.xlu0 %v3674, 8
      %v3992 = vpop.permute.xlu0 %3991
      %3993 = vrot.lane.b32.xlu0 %v3677, 8
      %v3994 = vpop.permute.xlu0 %3993
      %3995 = vrot.lane.b32.xlu0 %v3739, 8
      %v3996 = vpop.permute.xlu0 %3995
      %3997 = vrot.lane.b32.xlu0 %v3742, 8
      %v3998 = vpop.permute.xlu0 %3997
      %3999 = vrot.lane.b32.xlu0 %v3747, 8
      %v4000 = vpop.permute.xlu0 %3999
      %4001 = vrot.lane.b32.xlu0 %v3750, 8
      %v4002 = vpop.permute.xlu0 %4001
      %4003 = vrot.lane.b32.xlu0 %v3755, 8
      %v4004 = vpop.permute.xlu0 %4003
      %4005 = vrot.lane.b32.xlu0 %v3758, 8
      %v4006 = vpop.permute.xlu0 %4005
      %4007 = vrot.lane.b32.xlu0 %v3763, 8
      %v4008 = vpop.permute.xlu0 %4007
      %4009 = vrot.lane.b32.xlu0 %v3766, 8
      %v4010 = vpop.permute.xlu0 %4009
      %4011 = vrot.lane.b32.xlu0 %v3828, 8
      %v4012 = vpop.permute.xlu0 %4011
      %4013 = vrot.lane.b32.xlu0 %v3831, 8
      %v4014 = vpop.permute.xlu0 %4013
      %4015 = vrot.lane.b32.xlu0 %v3836, 8
      %v4016 = vpop.permute.xlu0 %4015
      %4017 = vrot.lane.b32.xlu0 %v3839, 8
      %v4018 = vpop.permute.xlu0 %4017
      %4019 = vrot.lane.b32.xlu0 %v3844, 8
      %v4020 = vpop.permute.xlu0 %4019
      %4021 = vrot.lane.b32.xlu0 %v3847, 8
      %v4022 = vpop.permute.xlu0 %4021
      %4023 = vrot.lane.b32.xlu0 %v3852, 8
      %v4024 = vpop.permute.xlu0 %4023
      %4025 = vrot.lane.b32.xlu0 %v3855, 8
      %v4026 = vpop.permute.xlu0 %4025
      %4027 = vrot.lane.b32.xlu0 %v3917, 8
      %v4028 = vpop.permute.xlu0 %4027
      %4029 = vrot.lane.b32.xlu0 %v3920, 8
      %v4030 = vpop.permute.xlu0 %4029
      %4031 = vrot.lane.b32.xlu0 %v3925, 8
      %v4032 = vpop.permute.xlu0 %4031
      %4033 = vrot.lane.b32.xlu0 %v3928, 8
      %v4034 = vpop.permute.xlu0 %4033
      %4035 = vrot.lane.b32.xlu0 %v3933, 8
      %v4036 = vpop.permute.xlu0 %4035
      %4037 = vrot.lane.b32.xlu0 %v3936, 8
      %v4038 = vpop.permute.xlu0 %4037
      %4039 = vrot.lane.b32.xlu0 %v3941, 8
      %v4040 = vpop.permute.xlu0 %4039
      %4041 = vrot.lane.b32.xlu0 %v3944, 8
      %v4042 = vpop.permute.xlu0 %4041
      %vm4075 = vcmask 130112
      %4076 = vst.msk [vmem:[#allocation2] sm:$0xff] %vm4075, %v3980
      %4077 = vst.msk [vmem:[#allocation2 + $0x8] sm:$0xff] %vm4075, %v3982
      %4078 = vst.msk [vmem:[#allocation2 + $0x10] sm:$0xff] %vm4075, %v3984
      %4079 = vst.msk [vmem:[#allocation2 + $0x18] sm:$0xff] %vm4075, %v3986
      %4080 = vst.msk [vmem:[#allocation2 + $0x20] sm:$0xff] %vm4075, %v3988
      %4081 = vst.msk [vmem:[#allocation2 + $0x28] sm:$0xff] %vm4075, %v3990
      %4082 = vst.msk [vmem:[#allocation2 + $0x30] sm:$0xff] %vm4075, %v3992
      %4083 = vst.msk [vmem:[#allocation2 + $0x38] sm:$0xff] %vm4075, %v3994
      %4084 = vst.msk [vmem:[#allocation2 + $0x40] sm:$0xff] %vm4075, %v3996
      %4085 = vst.msk [vmem:[#allocation2 + $0x48] sm:$0xff] %vm4075, %v3998
      %4086 = vst.msk [vmem:[#allocation2 + $0x50] sm:$0xff] %vm4075, %v4000
      %4087 = vst.msk [vmem:[#allocation2 + $0x58] sm:$0xff] %vm4075, %v4002
      %4088 = vst.msk [vmem:[#allocation2 + $0x60] sm:$0xff] %vm4075, %v4004
      %4089 = vst.msk [vmem:[#allocation2 + $0x68] sm:$0xff] %vm4075, %v4006
      %4090 = vst.msk [vmem:[#allocation2 + $0x70] sm:$0xff] %vm4075, %v4008
      %4091 = vst.msk [vmem:[#allocation2 + $0x78] sm:$0xff] %vm4075, %v4010
      %4092 = vst.msk [vmem:[#allocation2 + $0x80] sm:$0xff] %vm4075, %v4012
      %4093 = vst.msk [vmem:[#allocation2 + $0x88] sm:$0xff] %vm4075, %v4014
      %4094 = vst.msk [vmem:[#allocation2 + $0x90] sm:$0xff] %vm4075, %v4016
      %4095 = vst.msk [vmem:[#allocation2 + $0x98] sm:$0xff] %vm4075, %v4018
      %4096 = vst.msk [vmem:[#allocation2 + $0xa0] sm:$0xff] %vm4075, %v4020
      %4097 = vst.msk [vmem:[#allocation2 + $0xa8] sm:$0xff] %vm4075, %v4022
      %4098 = vst.msk [vmem:[#allocation2 + $0xb0] sm:$0xff] %vm4075, %v4024
      %4099 = vst.msk [vmem:[#allocation2 + $0xb8] sm:$0xff] %vm4075, %v4026
      %4100 = vst.msk [vmem:[#allocation2 + $0xc0] sm:$0xff] %vm4075, %v4028
      %4101 = vst.msk [vmem:[#allocation2 + $0xc8] sm:$0xff] %vm4075, %v4030
      %4102 = vst.msk [vmem:[#allocation2 + $0xd0] sm:$0xff] %vm4075, %v4032
      %4103 = vst.msk [vmem:[#allocation2 + $0xd8] sm:$0xff] %vm4075, %v4034
      %4104 = vst.msk [vmem:[#allocation2 + $0xe0] sm:$0xff] %vm4075, %v4036
      %4105 = vst.msk [vmem:[#allocation2 + $0xe8] sm:$0xff] %vm4075, %v4038
      %4106 = vst.msk [vmem:[#allocation2 + $0xf0] sm:$0xff] %vm4075, %v4040
      %4107 = vst.msk [vmem:[#allocation2 + $0xf8] sm:$0xff] %vm4075, %v4042
      %v4108 = vunpack.c.l.bf16 %v1609
      %v4109 = vunpack.c.l.bf16 %v1610
      %v4110 = vunpack.c.l.bf16 %v1611
      %v4111 = vunpack.c.l.bf16 %v1612
      %v4112 = vunpack.c.l.bf16 %v1613
      %v4113 = vunpack.c.l.bf16 %v1614
      %v4114 = vunpack.c.l.bf16 %v1615
      %v4115 = vunpack.c.l.bf16 %v1616
      %4116 = vrot.lane.b32.xlu0 %v1577, 112
      %v4117 = vpop.permute.xlu0 %4116
      %4118 = vrot.lane.b32.xlu0 %v1578, 112
      %v4119 = vpop.permute.xlu0 %4118
      %4120 = vrot.lane.b32.xlu0 %v1579, 112
      %v4121 = vpop.permute.xlu0 %4120
      %4122 = vrot.lane.b32.xlu0 %v1580, 112
      %v4123 = vpop.permute.xlu0 %4122
      %4124 = vrot.lane.b32.xlu0 %v1577, 80
      %v4125 = vpop.permute.xlu0 %4124
      %4126 = vrot.lane.b32.xlu0 %v1578, 80
      %v4127 = vpop.permute.xlu0 %4126
      %4128 = vrot.lane.b32.xlu0 %v1579, 80
      %v4129 = vpop.permute.xlu0 %4128
      %4130 = vrot.lane.b32.xlu0 %v1580, 80
      %v4131 = vpop.permute.xlu0 %4130
      %v4133 = vsel %vm1645, %v4117, 0
      %v4136 = vsel %vm1645, %v4119, 0
      %v4139 = vsel %vm1645, %v4121, 0
      %v4142 = vsel %vm1645, %v4123, 0
      %v4145 = vsel %vm1645, %v4125, 0
      %v4148 = vsel %vm1645, %v4127, 0
      %v4151 = vsel %vm1645, %v4129, 0
      %v4154 = vsel %vm1645, %v4131, 0
      %4156 = vmatprep.subr.bf16.mxu0 0
      %4157 = vmatpush1.bf16.xpose.msra.mxu0 0
      %4158 = vmatprep.subr.bf16.mxu0 0
      %4159 = vmatpush1.bf16.xpose.msra.mxu0 0
      %4160 = vmatprep.subr.bf16.mxu0 0
      %4161 = vmatpush1.bf16.xpose.msra.mxu0 0
      %4162 = vmatprep.subr.bf16.mxu0 0
      %4163 = vmatpush1.bf16.xpose.msra.mxu0 0
      %4164 = vmatprep.subr.bf16.mxu0 0
      %4165 = vmatpush1.bf16.xpose.msra.mxu0 %v4154
      %4166 = vmatprep.subr.bf16.mxu0 0
      %4167 = vmatpush1.bf16.xpose.msra.mxu0 %v4151
      %4168 = vmatprep.subr.bf16.mxu0 0
      %4169 = vmatpush1.bf16.xpose.msra.mxu0 %v4148
      %4170 = vmatprep.subr.bf16.mxu0 0
      %4171 = vmatpush1.bf16.xpose.msra.mxu0 %v4145
      %4172 = vmatprep.subr.bf16.mxu0 0
      %4173 = vmatpush2.bf16.xpose.msra.mxu0 0
      %4174 = vmatprep.subr.bf16.mxu0 0
      %4175 = vmatpush2.bf16.xpose.msra.mxu0 0
      %4176 = vmatprep.subr.bf16.mxu0 0
      %4177 = vmatpush2.bf16.xpose.msra.mxu0 0
      %4178 = vmatprep.subr.bf16.mxu0 0
      %4179 = vmatpush2.bf16.xpose.msra.mxu0 0
      %4180 = vmatprep.subr.bf16.mxu0 0
      %4181 = vmatpush2.bf16.xpose.msra.mxu0 0
      %4182 = vmatprep.subr.bf16.mxu0 0
      %4183 = vmatpush2.bf16.xpose.msra.mxu0 0
      %4184 = vmatprep.subr.bf16.mxu0 0
      %4185 = vmatpush2.bf16.xpose.msra.mxu0 0
      %4186 = vmatprep.subr.bf16.mxu0 0
      %4187 = vmatpush2.bf16.xpose.msra.mxu0 0
      %4188 = vmatprep.mubr.bf16.mxu0 0
      %4189 = vmatmul.mubr.bf16.gmra.mxu0 %v4133
      %v4190 = vpop.f32.mrf.mxu0
      %v4191 = vadd.f32 %v4108, %v4190
      %v4192 = vpop.f32.mrf.mxu0
      %v4193 = vpop.f32.mrf.mxu0
      %v4194 = vadd.f32 %v4109, %v4193
      %v4195 = vpop.f32.mrf.mxu0
      %4196 = vmatprep.mubr.bf16.mxu0 0
      %4197 = vmatmul.mubr.bf16.gmra.mxu0 %v4136
      %v4198 = vpop.f32.mrf.mxu0
      %v4199 = vadd.f32 %v4110, %v4198
      %v4200 = vpop.f32.mrf.mxu0
      %v4201 = vpop.f32.mrf.mxu0
      %v4202 = vadd.f32 %v4111, %v4201
      %v4203 = vpop.f32.mrf.mxu0
      %4204 = vmatprep.mubr.bf16.mxu0 0
      %4205 = vmatmul.mubr.bf16.gmra.mxu0 %v4139
      %v4206 = vpop.f32.mrf.mxu0
      %v4207 = vadd.f32 %v4112, %v4206
      %v4208 = vpop.f32.mrf.mxu0
      %v4209 = vpop.f32.mrf.mxu0
      %v4210 = vadd.f32 %v4113, %v4209
      %v4211 = vpop.f32.mrf.mxu0
      %4212 = vmatprep.mubr.bf16.mxu0 0
      %4213 = vmatmul.mubr.bf16.gmra.mxu0 %v4142
      %v4214 = vpop.f32.mrf.mxu0
      %v4215 = vadd.f32 %v4114, %v4214
      %v4216 = vpop.f32.mrf.mxu0
      %v4217 = vpop.f32.mrf.mxu0
      %v4218 = vadd.f32 %v4115, %v4217
      %v4219 = vpop.f32.mrf.mxu0
      %4220 = vdwg.mxu0
      %4221 = vrot.lane.b32.xlu0 %v1581, 112
      %v4222 = vpop.permute.xlu0 %4221
      %4223 = vrot.lane.b32.xlu0 %v1582, 112
      %v4224 = vpop.permute.xlu0 %4223
      %4225 = vrot.lane.b32.xlu0 %v1583, 112
      %v4226 = vpop.permute.xlu0 %4225
      %4227 = vrot.lane.b32.xlu0 %v1584, 112
      %v4228 = vpop.permute.xlu0 %4227
      %4229 = vrot.lane.b32.xlu0 %v1581, 80
      %v4230 = vpop.permute.xlu0 %4229
      %4231 = vrot.lane.b32.xlu0 %v1582, 80
      %v4232 = vpop.permute.xlu0 %4231
      %4233 = vrot.lane.b32.xlu0 %v1583, 80
      %v4234 = vpop.permute.xlu0 %4233
      %4235 = vrot.lane.b32.xlu0 %v1584, 80
      %v4236 = vpop.permute.xlu0 %4235
      %v4238 = vsel %vm1645, %v4222, 0
      %v4241 = vsel %vm1645, %v4224, 0
      %v4244 = vsel %vm1645, %v4226, 0
      %v4247 = vsel %vm1645, %v4228, 0
      %v4250 = vsel %vm1645, %v4230, 0
      %v4253 = vsel %vm1645, %v4232, 0
      %v4256 = vsel %vm1645, %v4234, 0
      %v4259 = vsel %vm1645, %v4236, 0
      %4261 = vmatprep.subr.bf16.mxu0 0
      %4262 = vmatpush1.bf16.xpose.msra.mxu0 0
      %4263 = vmatprep.subr.bf16.mxu0 0
      %4264 = vmatpush1.bf16.xpose.msra.mxu0 0
      %4265 = vmatprep.subr.bf16.mxu0 0
      %4266 = vmatpush1.bf16.xpose.msra.mxu0 0
      %4267 = vmatprep.subr.bf16.mxu0 0
      %4268 = vmatpush1.bf16.xpose.msra.mxu0 0
      %4269 = vmatprep.subr.bf16.mxu0 0
      %4270 = vmatpush1.bf16.xpose.msra.mxu0 %v4259
      %4271 = vmatprep.subr.bf16.mxu0 0
      %4272 = vmatpush1.bf16.xpose.msra.mxu0 %v4256
      %4273 = vmatprep.subr.bf16.mxu0 0
      %4274 = vmatpush1.bf16.xpose.msra.mxu0 %v4253
      %4275 = vmatprep.subr.bf16.mxu0 0
      %4276 = vmatpush1.bf16.xpose.msra.mxu0 %v4250
      %4277 = vmatprep.subr.bf16.mxu0 0
      %4278 = vmatpush2.bf16.xpose.msra.mxu0 0
      %4279 = vmatprep.subr.bf16.mxu0 0
      %4280 = vmatpush2.bf16.xpose.msra.mxu0 0
      %4281 = vmatprep.subr.bf16.mxu0 0
      %4282 = vmatpush2.bf16.xpose.msra.mxu0 0
      %4283 = vmatprep.subr.bf16.mxu0 0
      %4284 = vmatpush2.bf16.xpose.msra.mxu0 0
      %4285 = vmatprep.subr.bf16.mxu0 0
      %4286 = vmatpush2.bf16.xpose.msra.mxu0 0
      %4287 = vmatprep.subr.bf16.mxu0 0
      %4288 = vmatpush2.bf16.xpose.msra.mxu0 0
      %4289 = vmatprep.subr.bf16.mxu0 0
      %4290 = vmatpush2.bf16.xpose.msra.mxu0 0
      %4291 = vmatprep.subr.bf16.mxu0 0
      %4292 = vmatpush2.bf16.xpose.msra.mxu0 0
      %4293 = vmatprep.mubr.bf16.mxu0 0
      %4294 = vmatmul.mubr.bf16.gmra.mxu0 %v4238
      %v4295 = vpop.f32.mrf.mxu0
      %v4296 = vadd.f32 %v4108, %v4295
      %v4297 = vpop.f32.mrf.mxu0
      %v4298 = vpop.f32.mrf.mxu0
      %v4299 = vadd.f32 %v4109, %v4298
      %v4300 = vpop.f32.mrf.mxu0
      %4301 = vmatprep.mubr.bf16.mxu0 0
      %4302 = vmatmul.mubr.bf16.gmra.mxu0 %v4241
      %v4303 = vpop.f32.mrf.mxu0
      %v4304 = vadd.f32 %v4110, %v4303
      %v4305 = vpop.f32.mrf.mxu0
      %v4306 = vpop.f32.mrf.mxu0
      %v4307 = vadd.f32 %v4111, %v4306
      %v4308 = vpop.f32.mrf.mxu0
      %4309 = vmatprep.mubr.bf16.mxu0 0
      %4310 = vmatmul.mubr.bf16.gmra.mxu0 %v4244
      %v4311 = vpop.f32.mrf.mxu0
      %v4312 = vadd.f32 %v4112, %v4311
      %v4313 = vpop.f32.mrf.mxu0
      %v4314 = vpop.f32.mrf.mxu0
      %v4315 = vadd.f32 %v4113, %v4314
      %v4316 = vpop.f32.mrf.mxu0
      %4317 = vmatprep.mubr.bf16.mxu0 0
      %4318 = vmatmul.mubr.bf16.gmra.mxu0 %v4247
      %v4319 = vpop.f32.mrf.mxu0
      %v4320 = vadd.f32 %v4114, %v4319
      %v4321 = vpop.f32.mrf.mxu0
      %v4322 = vpop.f32.mrf.mxu0
      %v4323 = vadd.f32 %v4115, %v4322
      %v4324 = vpop.f32.mrf.mxu0
      %4325 = vdwg.mxu0
      %4326 = vrot.lane.b32.xlu0 %v1585, 112
      %v4327 = vpop.permute.xlu0 %4326
      %4328 = vrot.lane.b32.xlu0 %v1586, 112
      %v4329 = vpop.permute.xlu0 %4328
      %4330 = vrot.lane.b32.xlu0 %v1587, 112
      %v4331 = vpop.permute.xlu0 %4330
      %4332 = vrot.lane.b32.xlu0 %v1588, 112
      %v4333 = vpop.permute.xlu0 %4332
      %4334 = vrot.lane.b32.xlu0 %v1585, 80
      %v4335 = vpop.permute.xlu0 %4334
      %4336 = vrot.lane.b32.xlu0 %v1586, 80
      %v4337 = vpop.permute.xlu0 %4336
      %4338 = vrot.lane.b32.xlu0 %v1587, 80
      %v4339 = vpop.permute.xlu0 %4338
      %4340 = vrot.lane.b32.xlu0 %v1588, 80
      %v4341 = vpop.permute.xlu0 %4340
      %v4343 = vsel %vm1645, %v4327, 0
      %v4346 = vsel %vm1645, %v4329, 0
      %v4349 = vsel %vm1645, %v4331, 0
      %v4352 = vsel %vm1645, %v4333, 0
      %v4355 = vsel %vm1645, %v4335, 0
      %v4358 = vsel %vm1645, %v4337, 0
      %v4361 = vsel %vm1645, %v4339, 0
      %v4364 = vsel %vm1645, %v4341, 0
      %4366 = vmatprep.subr.bf16.mxu0 0
      %4367 = vmatpush1.bf16.xpose.msra.mxu0 0
      %4368 = vmatprep.subr.bf16.mxu0 0
      %4369 = vmatpush1.bf16.xpose.msra.mxu0 0
      %4370 = vmatprep.subr.bf16.mxu0 0
      %4371 = vmatpush1.bf16.xpose.msra.mxu0 0
      %4372 = vmatprep.subr.bf16.mxu0 0
      %4373 = vmatpush1.bf16.xpose.msra.mxu0 0
      %4374 = vmatprep.subr.bf16.mxu0 0
      %4375 = vmatpush1.bf16.xpose.msra.mxu0 %v4364
      %4376 = vmatprep.subr.bf16.mxu0 0
      %4377 = vmatpush1.bf16.xpose.msra.mxu0 %v4361
      %4378 = vmatprep.subr.bf16.mxu0 0
      %4379 = vmatpush1.bf16.xpose.msra.mxu0 %v4358
      %4380 = vmatprep.subr.bf16.mxu0 0
      %4381 = vmatpush1.bf16.xpose.msra.mxu0 %v4355
      %4382 = vmatprep.subr.bf16.mxu0 0
      %4383 = vmatpush2.bf16.xpose.msra.mxu0 0
      %4384 = vmatprep.subr.bf16.mxu0 0
      %4385 = vmatpush2.bf16.xpose.msra.mxu0 0
      %4386 = vmatprep.subr.bf16.mxu0 0
      %4387 = vmatpush2.bf16.xpose.msra.mxu0 0
      %4388 = vmatprep.subr.bf16.mxu0 0
      %4389 = vmatpush2.bf16.xpose.msra.mxu0 0
      %4390 = vmatprep.subr.bf16.mxu0 0
      %4391 = vmatpush2.bf16.xpose.msra.mxu0 0
      %4392 = vmatprep.subr.bf16.mxu0 0
      %4393 = vmatpush2.bf16.xpose.msra.mxu0 0
      %4394 = vmatprep.subr.bf16.mxu0 0
      %4395 = vmatpush2.bf16.xpose.msra.mxu0 0
      %4396 = vmatprep.subr.bf16.mxu0 0
      %4397 = vmatpush2.bf16.xpose.msra.mxu0 0
      %4398 = vmatprep.mubr.bf16.mxu0 0
      %4399 = vmatmul.mubr.bf16.gmra.mxu0 %v4343
      %v4400 = vpop.f32.mrf.mxu0
      %v4401 = vadd.f32 %v4108, %v4400
      %v4402 = vpop.f32.mrf.mxu0
      %v4403 = vpop.f32.mrf.mxu0
      %v4404 = vadd.f32 %v4109, %v4403
      %v4405 = vpop.f32.mrf.mxu0
      %4406 = vmatprep.mubr.bf16.mxu0 0
      %4407 = vmatmul.mubr.bf16.gmra.mxu0 %v4346
      %v4408 = vpop.f32.mrf.mxu0
      %v4409 = vadd.f32 %v4110, %v4408
      %v4410 = vpop.f32.mrf.mxu0
      %v4411 = vpop.f32.mrf.mxu0
      %v4412 = vadd.f32 %v4111, %v4411
      %v4413 = vpop.f32.mrf.mxu0
      %4414 = vmatprep.mubr.bf16.mxu0 0
      %4415 = vmatmul.mubr.bf16.gmra.mxu0 %v4349
      %v4416 = vpop.f32.mrf.mxu0
      %v4417 = vadd.f32 %v4112, %v4416
      %v4418 = vpop.f32.mrf.mxu0
      %v4419 = vpop.f32.mrf.mxu0
      %v4420 = vadd.f32 %v4113, %v4419
      %v4421 = vpop.f32.mrf.mxu0
      %4422 = vmatprep.mubr.bf16.mxu0 0
      %4423 = vmatmul.mubr.bf16.gmra.mxu0 %v4352
      %v4424 = vpop.f32.mrf.mxu0
      %v4425 = vadd.f32 %v4114, %v4424
      %v4426 = vpop.f32.mrf.mxu0
      %v4427 = vpop.f32.mrf.mxu0
      %v4428 = vadd.f32 %v4115, %v4427
      %v4429 = vpop.f32.mrf.mxu0
      %4430 = vdwg.mxu0
      %4431 = vrot.lane.b32.xlu0 %v1589, 112
      %v4432 = vpop.permute.xlu0 %4431
      %4433 = vrot.lane.b32.xlu0 %v1590, 112
      %v4434 = vpop.permute.xlu0 %4433
      %4435 = vrot.lane.b32.xlu0 %v1591, 112
      %v4436 = vpop.permute.xlu0 %4435
      %4437 = vrot.lane.b32.xlu0 %v1592, 112
      %v4438 = vpop.permute.xlu0 %4437
      %4439 = vrot.lane.b32.xlu0 %v1589, 80
      %v4440 = vpop.permute.xlu0 %4439
      %4441 = vrot.lane.b32.xlu0 %v1590, 80
      %v4442 = vpop.permute.xlu0 %4441
      %4443 = vrot.lane.b32.xlu0 %v1591, 80
      %v4444 = vpop.permute.xlu0 %4443
      %4445 = vrot.lane.b32.xlu0 %v1592, 80
      %v4446 = vpop.permute.xlu0 %4445
      %v4448 = vsel %vm1645, %v4432, 0
      %v4451 = vsel %vm1645, %v4434, 0
      %v4454 = vsel %vm1645, %v4436, 0
      %v4457 = vsel %vm1645, %v4438, 0
      %v4460 = vsel %vm1645, %v4440, 0
      %v4463 = vsel %vm1645, %v4442, 0
      %v4466 = vsel %vm1645, %v4444, 0
      %v4469 = vsel %vm1645, %v4446, 0
      %4471 = vmatprep.subr.bf16.mxu0 0
      %4472 = vmatpush1.bf16.xpose.msra.mxu0 0
      %4473 = vmatprep.subr.bf16.mxu0 0
      %4474 = vmatpush1.bf16.xpose.msra.mxu0 0
      %4475 = vmatprep.subr.bf16.mxu0 0
      %4476 = vmatpush1.bf16.xpose.msra.mxu0 0
      %4477 = vmatprep.subr.bf16.mxu0 0
      %4478 = vmatpush1.bf16.xpose.msra.mxu0 0
      %4479 = vmatprep.subr.bf16.mxu0 0
      %4480 = vmatpush1.bf16.xpose.msra.mxu0 %v4469
      %4481 = vmatprep.subr.bf16.mxu0 0
      %4482 = vmatpush1.bf16.xpose.msra.mxu0 %v4466
      %4483 = vmatprep.subr.bf16.mxu0 0
      %4484 = vmatpush1.bf16.xpose.msra.mxu0 %v4463
      %4485 = vmatprep.subr.bf16.mxu0 0
      %4486 = vmatpush1.bf16.xpose.msra.mxu0 %v4460
      %4487 = vmatprep.subr.bf16.mxu0 0
      %4488 = vmatpush2.bf16.xpose.msra.mxu0 0
      %4489 = vmatprep.subr.bf16.mxu0 0
      %4490 = vmatpush2.bf16.xpose.msra.mxu0 0
      %4491 = vmatprep.subr.bf16.mxu0 0
      %4492 = vmatpush2.bf16.xpose.msra.mxu0 0
      %4493 = vmatprep.subr.bf16.mxu0 0
      %4494 = vmatpush2.bf16.xpose.msra.mxu0 0
      %4495 = vmatprep.subr.bf16.mxu0 0
      %4496 = vmatpush2.bf16.xpose.msra.mxu0 0
      %4497 = vmatprep.subr.bf16.mxu0 0
      %4498 = vmatpush2.bf16.xpose.msra.mxu0 0
      %4499 = vmatprep.subr.bf16.mxu0 0
      %4500 = vmatpush2.bf16.xpose.msra.mxu0 0
      %4501 = vmatprep.subr.bf16.mxu0 0
      %4502 = vmatpush2.bf16.xpose.msra.mxu0 0
      %4503 = vmatprep.mubr.bf16.mxu0 0
      %4504 = vmatmul.mubr.bf16.gmra.mxu0 %v4448
      %v4505 = vpop.f32.mrf.mxu0
      %v4506 = vadd.f32 %v4108, %v4505
      %v4507 = vpop.f32.mrf.mxu0
      %v4508 = vpop.f32.mrf.mxu0
      %v4509 = vadd.f32 %v4109, %v4508
      %v4510 = vpop.f32.mrf.mxu0
      %4511 = vmatprep.mubr.bf16.mxu0 0
      %4512 = vmatmul.mubr.bf16.gmra.mxu0 %v4451
      %v4513 = vpop.f32.mrf.mxu0
      %v4514 = vadd.f32 %v4110, %v4513
      %v4515 = vpop.f32.mrf.mxu0
      %v4516 = vpop.f32.mrf.mxu0
      %v4517 = vadd.f32 %v4111, %v4516
      %v4518 = vpop.f32.mrf.mxu0
      %4519 = vmatprep.mubr.bf16.mxu0 0
      %4520 = vmatmul.mubr.bf16.gmra.mxu0 %v4454
      %v4521 = vpop.f32.mrf.mxu0
      %v4522 = vadd.f32 %v4112, %v4521
      %v4523 = vpop.f32.mrf.mxu0
      %v4524 = vpop.f32.mrf.mxu0
      %v4525 = vadd.f32 %v4113, %v4524
      %v4526 = vpop.f32.mrf.mxu0
      %4527 = vmatprep.mubr.bf16.mxu0 0
      %4528 = vmatmul.mubr.bf16.gmra.mxu0 %v4457
      %v4529 = vpop.f32.mrf.mxu0
      %v4530 = vadd.f32 %v4114, %v4529
      %v4531 = vpop.f32.mrf.mxu0
      %v4532 = vpop.f32.mrf.mxu0
      %v4533 = vadd.f32 %v4115, %v4532
      %v4534 = vpop.f32.mrf.mxu0
      %4535 = vdwg.mxu0
      %v4536 = vsel %vm2038, %v4191, -inf
      %4537 = vmax.xlane.f32.xlu0 %v4536
      %v4538 = vpop.xlane.xlu0 %4537
      %v4539 = vsel %vm2038, %v4194, -inf
      %4540 = vmax.xlane.f32.xlu0 %v4539
      %v4541 = vpop.xlane.xlu0 %4540
      %v4542 = vsel %vm2038, %v4199, -inf
      %4543 = vmax.xlane.f32.xlu0 %v4542
      %v4544 = vpop.xlane.xlu0 %4543
      %v4545 = vsel %vm2038, %v4202, -inf
      %4546 = vmax.xlane.f32.xlu0 %v4545
      %v4547 = vpop.xlane.xlu0 %4546
      %v4548 = vsel %vm2038, %v4207, -inf
      %4549 = vmax.xlane.f32.xlu0 %v4548
      %v4550 = vpop.xlane.xlu0 %4549
      %v4551 = vsel %vm2038, %v4210, -inf
      %4552 = vmax.xlane.f32.xlu0 %v4551
      %v4553 = vpop.xlane.xlu0 %4552
      %v4554 = vsel %vm2038, %v4215, -inf
      %4555 = vmax.xlane.f32.xlu0 %v4554
      %v4556 = vpop.xlane.xlu0 %4555
      %v4557 = vsel %vm2038, %v4218, -inf
      %4558 = vmax.xlane.f32.xlu0 %v4557
      %v4559 = vpop.xlane.xlu0 %4558
      %v4560 = vsel %vm2038, %v4296, -inf
      %4561 = vmax.xlane.f32.xlu0 %v4560
      %v4562 = vpop.xlane.xlu0 %4561
      %v4563 = vsel %vm2038, %v4299, -inf
      %4564 = vmax.xlane.f32.xlu0 %v4563
      %v4565 = vpop.xlane.xlu0 %4564
      %v4566 = vsel %vm2038, %v4304, -inf
      %4567 = vmax.xlane.f32.xlu0 %v4566
      %v4568 = vpop.xlane.xlu0 %4567
      %v4569 = vsel %vm2038, %v4307, -inf
      %4570 = vmax.xlane.f32.xlu0 %v4569
      %v4571 = vpop.xlane.xlu0 %4570
      %v4572 = vsel %vm2038, %v4312, -inf
      %4573 = vmax.xlane.f32.xlu0 %v4572
      %v4574 = vpop.xlane.xlu0 %4573
      %v4575 = vsel %vm2038, %v4315, -inf
      %4576 = vmax.xlane.f32.xlu0 %v4575
      %v4577 = vpop.xlane.xlu0 %4576
      %v4578 = vsel %vm2038, %v4320, -inf
      %4579 = vmax.xlane.f32.xlu0 %v4578
      %v4580 = vpop.xlane.xlu0 %4579
      %v4581 = vsel %vm2038, %v4323, -inf
      %4582 = vmax.xlane.f32.xlu0 %v4581
      %v4583 = vpop.xlane.xlu0 %4582
      %v4584 = vsel %vm2038, %v4401, -inf
      %4585 = vmax.xlane.f32.xlu0 %v4584
      %v4586 = vpop.xlane.xlu0 %4585
      %v4587 = vsel %vm2038, %v4404, -inf
      %4588 = vmax.xlane.f32.xlu0 %v4587
      %v4589 = vpop.xlane.xlu0 %4588
      %v4590 = vsel %vm2038, %v4409, -inf
      %4591 = vmax.xlane.f32.xlu0 %v4590
      %v4592 = vpop.xlane.xlu0 %4591
      %v4593 = vsel %vm2038, %v4412, -inf
      %4594 = vmax.xlane.f32.xlu0 %v4593
      %v4595 = vpop.xlane.xlu0 %4594
      %v4596 = vsel %vm2038, %v4417, -inf
      %4597 = vmax.xlane.f32.xlu0 %v4596
      %v4598 = vpop.xlane.xlu0 %4597
      %v4599 = vsel %vm2038, %v4420, -inf
      %4600 = vmax.xlane.f32.xlu0 %v4599
      %v4601 = vpop.xlane.xlu0 %4600
      %v4602 = vsel %vm2038, %v4425, -inf
      %4603 = vmax.xlane.f32.xlu0 %v4602
      %v4604 = vpop.xlane.xlu0 %4603
      %v4605 = vsel %vm2038, %v4428, -inf
      %4606 = vmax.xlane.f32.xlu0 %v4605
      %v4607 = vpop.xlane.xlu0 %4606
      %v4608 = vsel %vm2038, %v4506, -inf
      %4609 = vmax.xlane.f32.xlu0 %v4608
      %v4610 = vpop.xlane.xlu0 %4609
      %v4611 = vsel %vm2038, %v4509, -inf
      %4612 = vmax.xlane.f32.xlu0 %v4611
      %v4613 = vpop.xlane.xlu0 %4612
      %v4614 = vsel %vm2038, %v4514, -inf
      %4615 = vmax.xlane.f32.xlu0 %v4614
      %v4616 = vpop.xlane.xlu0 %4615
      %v4617 = vsel %vm2038, %v4517, -inf
      %4618 = vmax.xlane.f32.xlu0 %v4617
      %v4619 = vpop.xlane.xlu0 %4618
      %v4620 = vsel %vm2038, %v4522, -inf
      %4621 = vmax.xlane.f32.xlu0 %v4620
      %v4622 = vpop.xlane.xlu0 %4621
      %v4623 = vsel %vm2038, %v4525, -inf
      %4624 = vmax.xlane.f32.xlu0 %v4623
      %v4625 = vpop.xlane.xlu0 %4624
      %v4626 = vsel %vm2038, %v4530, -inf
      %4627 = vmax.xlane.f32.xlu0 %v4626
      %v4628 = vpop.xlane.xlu0 %4627
      %v4629 = vsel %vm2038, %v4533, -inf
      %4630 = vmax.xlane.f32.xlu0 %v4629
      %v4631 = vpop.xlane.xlu0 %4630
      %v4632 = vsub.f32 %v4191, %v4538
      %v4633 = vsub.f32 %v4194, %v4541
      %v4634 = vsub.f32 %v4199, %v4544
      %v4635 = vsub.f32 %v4202, %v4547
      %v4636 = vsub.f32 %v4207, %v4550
      %v4637 = vsub.f32 %v4210, %v4553
      %v4638 = vsub.f32 %v4215, %v4556
      %v4639 = vsub.f32 %v4218, %v4559
      %v4640 = vsub.f32 %v4296, %v4562
      %v4641 = vsub.f32 %v4299, %v4565
      %v4642 = vsub.f32 %v4304, %v4568
      %v4643 = vsub.f32 %v4307, %v4571
      %v4644 = vsub.f32 %v4312, %v4574
      %v4645 = vsub.f32 %v4315, %v4577
      %v4646 = vsub.f32 %v4320, %v4580
      %v4647 = vsub.f32 %v4323, %v4583
      %v4648 = vsub.f32 %v4401, %v4586
      %v4649 = vsub.f32 %v4404, %v4589
      %v4650 = vsub.f32 %v4409, %v4592
      %v4651 = vsub.f32 %v4412, %v4595
      %v4652 = vsub.f32 %v4417, %v4598
      %v4653 = vsub.f32 %v4420, %v4601
      %v4654 = vsub.f32 %v4425, %v4604
      %v4655 = vsub.f32 %v4428, %v4607
      %v4656 = vsub.f32 %v4506, %v4610
      %v4657 = vsub.f32 %v4509, %v4613
      %v4658 = vsub.f32 %v4514, %v4616
      %v4659 = vsub.f32 %v4517, %v4619
      %v4660 = vsub.f32 %v4522, %v4622
      %v4661 = vsub.f32 %v4525, %v4625
      %v4662 = vsub.f32 %v4530, %v4628
      %v4663 = vsub.f32 %v4533, %v4631
      %v4664 = vmul.f32 %v4632, 1.442695
      %v4665 = vpow.pop %v4664
      %v4666 = vmul.f32 %v4633, 1.442695
      %v4667 = vpow.pop %v4666
      %v4668 = vmul.f32 %v4634, 1.442695
      %v4669 = vpow.pop %v4668
      %v4670 = vmul.f32 %v4635, 1.442695
      %v4671 = vpow.pop %v4670
      %v4672 = vmul.f32 %v4636, 1.442695
      %v4673 = vpow.pop %v4672
      %v4674 = vmul.f32 %v4637, 1.442695
      %v4675 = vpow.pop %v4674
      %v4676 = vmul.f32 %v4638, 1.442695
      %v4677 = vpow.pop %v4676
      %v4678 = vmul.f32 %v4639, 1.442695
      %v4679 = vpow.pop %v4678
      %v4680 = vmul.f32 %v4640, 1.442695
      %v4681 = vpow.pop %v4680
      %v4682 = vmul.f32 %v4641, 1.442695
      %v4683 = vpow.pop %v4682
      %v4684 = vmul.f32 %v4642, 1.442695
      %v4685 = vpow.pop %v4684
      %v4686 = vmul.f32 %v4643, 1.442695
      %v4687 = vpow.pop %v4686
      %v4688 = vmul.f32 %v4644, 1.442695
      %v4689 = vpow.pop %v4688
      %v4690 = vmul.f32 %v4645, 1.442695
      %v4691 = vpow.pop %v4690
      %v4692 = vmul.f32 %v4646, 1.442695
      %v4693 = vpow.pop %v4692
      %v4694 = vmul.f32 %v4647, 1.442695
      %v4695 = vpow.pop %v4694
      %v4696 = vmul.f32 %v4648, 1.442695
      %v4697 = vpow.pop %v4696
      %v4698 = vmul.f32 %v4649, 1.442695
      %v4699 = vpow.pop %v4698
      %v4700 = vmul.f32 %v4650, 1.442695
      %v4701 = vpow.pop %v4700
      %v4702 = vmul.f32 %v4651, 1.442695
      %v4703 = vpow.pop %v4702
      %v4704 = vmul.f32 %v4652, 1.442695
      %v4705 = vpow.pop %v4704
      %v4706 = vmul.f32 %v4653, 1.442695
      %v4707 = vpow.pop %v4706
      %v4708 = vmul.f32 %v4654, 1.442695
      %v4709 = vpow.pop %v4708
      %v4710 = vmul.f32 %v4655, 1.442695
      %v4711 = vpow.pop %v4710
      %v4712 = vmul.f32 %v4656, 1.442695
      %v4713 = vpow.pop %v4712
      %v4714 = vmul.f32 %v4657, 1.442695
      %v4715 = vpow.pop %v4714
      %v4716 = vmul.f32 %v4658, 1.442695
      %v4717 = vpow.pop %v4716
      %v4718 = vmul.f32 %v4659, 1.442695
      %v4719 = vpow.pop %v4718
      %v4720 = vmul.f32 %v4660, 1.442695
      %v4721 = vpow.pop %v4720
      %v4722 = vmul.f32 %v4661, 1.442695
      %v4723 = vpow.pop %v4722
      %v4724 = vmul.f32 %v4662, 1.442695
      %v4725 = vpow.pop %v4724
      %v4726 = vmul.f32 %v4663, 1.442695
      %v4727 = vpow.pop %v4726
      %v4728 = vsel %vm2038, %v4665, 0.0
      %4729 = vadd.xlane.f32.xlu0 %v4728
      %v4730 = vpop.xlane.xlu0 %4729
      %v4731 = vsel %vm2038, %v4667, 0.0
      %4732 = vadd.xlane.f32.xlu0 %v4731
      %v4733 = vpop.xlane.xlu0 %4732
      %v4734 = vsel %vm2038, %v4669, 0.0
      %4735 = vadd.xlane.f32.xlu0 %v4734
      %v4736 = vpop.xlane.xlu0 %4735
      %v4737 = vsel %vm2038, %v4671, 0.0
      %4738 = vadd.xlane.f32.xlu0 %v4737
      %v4739 = vpop.xlane.xlu0 %4738
      %v4740 = vsel %vm2038, %v4673, 0.0
      %4741 = vadd.xlane.f32.xlu0 %v4740
      %v4742 = vpop.xlane.xlu0 %4741
      %v4743 = vsel %vm2038, %v4675, 0.0
      %4744 = vadd.xlane.f32.xlu0 %v4743
      %v4745 = vpop.xlane.xlu0 %4744
      %v4746 = vsel %vm2038, %v4677, 0.0
      %4747 = vadd.xlane.f32.xlu0 %v4746
      %v4748 = vpop.xlane.xlu0 %4747
      %v4749 = vsel %vm2038, %v4679, 0.0
      %4750 = vadd.xlane.f32.xlu0 %v4749
      %v4751 = vpop.xlane.xlu0 %4750
      %v4752 = vsel %vm2038, %v4681, 0.0
      %4753 = vadd.xlane.f32.xlu0 %v4752
      %v4754 = vpop.xlane.xlu0 %4753
      %v4755 = vsel %vm2038, %v4683, 0.0
      %4756 = vadd.xlane.f32.xlu0 %v4755
      %v4757 = vpop.xlane.xlu0 %4756
      %v4758 = vsel %vm2038, %v4685, 0.0
      %4759 = vadd.xlane.f32.xlu0 %v4758
      %v4760 = vpop.xlane.xlu0 %4759
      %v4761 = vsel %vm2038, %v4687, 0.0
      %4762 = vadd.xlane.f32.xlu0 %v4761
      %v4763 = vpop.xlane.xlu0 %4762
      %v4764 = vsel %vm2038, %v4689, 0.0
      %4765 = vadd.xlane.f32.xlu0 %v4764
      %v4766 = vpop.xlane.xlu0 %4765
      %v4767 = vsel %vm2038, %v4691, 0.0
      %4768 = vadd.xlane.f32.xlu0 %v4767
      %v4769 = vpop.xlane.xlu0 %4768
      %v4770 = vsel %vm2038, %v4693, 0.0
      %4771 = vadd.xlane.f32.xlu0 %v4770
      %v4772 = vpop.xlane.xlu0 %4771
      %v4773 = vsel %vm2038, %v4695, 0.0
      %4774 = vadd.xlane.f32.xlu0 %v4773
      %v4775 = vpop.xlane.xlu0 %4774
      %v4776 = vsel %vm2038, %v4697, 0.0
      %4777 = vadd.xlane.f32.xlu0 %v4776
      %v4778 = vpop.xlane.xlu0 %4777
      %v4779 = vsel %vm2038, %v4699, 0.0
      %4780 = vadd.xlane.f32.xlu0 %v4779
      %v4781 = vpop.xlane.xlu0 %4780
      %v4782 = vsel %vm2038, %v4701, 0.0
      %4783 = vadd.xlane.f32.xlu0 %v4782
      %v4784 = vpop.xlane.xlu0 %4783
      %v4785 = vsel %vm2038, %v4703, 0.0
      %4786 = vadd.xlane.f32.xlu0 %v4785
      %v4787 = vpop.xlane.xlu0 %4786
      %v4788 = vsel %vm2038, %v4705, 0.0
      %4789 = vadd.xlane.f32.xlu0 %v4788
      %v4790 = vpop.xlane.xlu0 %4789
      %v4791 = vsel %vm2038, %v4707, 0.0
      %4792 = vadd.xlane.f32.xlu0 %v4791
      %v4793 = vpop.xlane.xlu0 %4792
      %v4794 = vsel %vm2038, %v4709, 0.0
      %4795 = vadd.xlane.f32.xlu0 %v4794
      %v4796 = vpop.xlane.xlu0 %4795
      %v4797 = vsel %vm2038, %v4711, 0.0
      %4798 = vadd.xlane.f32.xlu0 %v4797
      %v4799 = vpop.xlane.xlu0 %4798
      %v4800 = vsel %vm2038, %v4713, 0.0
      %4801 = vadd.xlane.f32.xlu0 %v4800
      %v4802 = vpop.xlane.xlu0 %4801
      %v4803 = vsel %vm2038, %v4715, 0.0
      %4804 = vadd.xlane.f32.xlu0 %v4803
      %v4805 = vpop.xlane.xlu0 %4804
      %v4806 = vsel %vm2038, %v4717, 0.0
      %4807 = vadd.xlane.f32.xlu0 %v4806
      %v4808 = vpop.xlane.xlu0 %4807
      %v4809 = vsel %vm2038, %v4719, 0.0
      %4810 = vadd.xlane.f32.xlu0 %v4809
      %v4811 = vpop.xlane.xlu0 %4810
      %v4812 = vsel %vm2038, %v4721, 0.0
      %4813 = vadd.xlane.f32.xlu0 %v4812
      %v4814 = vpop.xlane.xlu0 %4813
      %v4815 = vsel %vm2038, %v4723, 0.0
      %4816 = vadd.xlane.f32.xlu0 %v4815
      %v4817 = vpop.xlane.xlu0 %4816
      %v4818 = vsel %vm2038, %v4725, 0.0
      %4819 = vadd.xlane.f32.xlu0 %v4818
      %v4820 = vpop.xlane.xlu0 %4819
      %v4821 = vsel %vm2038, %v4727, 0.0
      %4822 = vadd.xlane.f32.xlu0 %v4821
      %v4823 = vpop.xlane.xlu0 %4822
      %v4824 = vrcp.pop %v4730
      %v4825 = vrcp.pop %v4733
      %v4826 = vrcp.pop %v4736
      %v4827 = vrcp.pop %v4739
      %v4828 = vrcp.pop %v4742
      %v4829 = vrcp.pop %v4745
      %v4830 = vrcp.pop %v4748
      %v4831 = vrcp.pop %v4751
      %v4832 = vrcp.pop %v4754
      %v4833 = vrcp.pop %v4757
      %v4834 = vrcp.pop %v4760
      %v4835 = vrcp.pop %v4763
      %v4836 = vrcp.pop %v4766
      %v4837 = vrcp.pop %v4769
      %v4838 = vrcp.pop %v4772
      %v4839 = vrcp.pop %v4775
      %v4840 = vrcp.pop %v4778
      %v4841 = vrcp.pop %v4781
      %v4842 = vrcp.pop %v4784
      %v4843 = vrcp.pop %v4787
      %v4844 = vrcp.pop %v4790
      %v4845 = vrcp.pop %v4793
      %v4846 = vrcp.pop %v4796
      %v4847 = vrcp.pop %v4799
      %v4848 = vrcp.pop %v4802
      %v4849 = vrcp.pop %v4805
      %v4850 = vrcp.pop %v4808
      %v4851 = vrcp.pop %v4811
      %v4852 = vrcp.pop %v4814
      %v4853 = vrcp.pop %v4817
      %v4854 = vrcp.pop %v4820
      %v4855 = vrcp.pop %v4823
      %v4856 = vmul.f32 %v4665, %v4824
      %v4857 = vmul.f32 %v4667, %v4825
      %v4858 = vmul.f32 %v4669, %v4826
      %v4859 = vmul.f32 %v4671, %v4827
      %v4860 = vmul.f32 %v4673, %v4828
      %v4861 = vmul.f32 %v4675, %v4829
      %v4862 = vmul.f32 %v4677, %v4830
      %v4863 = vmul.f32 %v4679, %v4831
      %v4864 = vmul.f32 %v4681, %v4832
      %v4865 = vmul.f32 %v4683, %v4833
      %v4866 = vmul.f32 %v4685, %v4834
      %v4867 = vmul.f32 %v4687, %v4835
      %v4868 = vmul.f32 %v4689, %v4836
      %v4869 = vmul.f32 %v4691, %v4837
      %v4870 = vmul.f32 %v4693, %v4838
      %v4871 = vmul.f32 %v4695, %v4839
      %v4872 = vmul.f32 %v4697, %v4840
      %v4873 = vmul.f32 %v4699, %v4841
      %v4874 = vmul.f32 %v4701, %v4842
      %v4875 = vmul.f32 %v4703, %v4843
      %v4876 = vmul.f32 %v4705, %v4844
      %v4877 = vmul.f32 %v4707, %v4845
      %v4878 = vmul.f32 %v4709, %v4846
      %v4879 = vmul.f32 %v4711, %v4847
      %v4880 = vmul.f32 %v4713, %v4848
      %v4881 = vmul.f32 %v4715, %v4849
      %v4882 = vmul.f32 %v4717, %v4850
      %v4883 = vmul.f32 %v4719, %v4851
      %v4884 = vmul.f32 %v4721, %v4852
      %v4885 = vmul.f32 %v4723, %v4853
      %v4886 = vmul.f32 %v4725, %v4854
      %v4887 = vmul.f32 %v4727, %v4855
      %v4888 = vpack.c.bf16 %v4857, %v4856
      %v4889 = vpack.c.bf16 %v4859, %v4858
      %v4890 = vpack.c.bf16 %v4861, %v4860
      %v4891 = vpack.c.bf16 %v4863, %v4862
      %v4892 = vpack.c.bf16 %v4865, %v4864
      %v4893 = vpack.c.bf16 %v4867, %v4866
      %v4894 = vpack.c.bf16 %v4869, %v4868
      %v4895 = vpack.c.bf16 %v4871, %v4870
      %v4896 = vpack.c.bf16 %v4873, %v4872
      %v4897 = vpack.c.bf16 %v4875, %v4874
      %v4898 = vpack.c.bf16 %v4877, %v4876
      %v4899 = vpack.c.bf16 %v4879, %v4878
      %v4900 = vpack.c.bf16 %v4881, %v4880
      %v4901 = vpack.c.bf16 %v4883, %v4882
      %v4902 = vpack.c.bf16 %v4885, %v4884
      %v4903 = vpack.c.bf16 %v4887, %v4886
      %4904 = vrot.lane.b32.xlu0 %v1577, 48
      %v4905 = vpop.permute.xlu0 %4904
      %4906 = vrot.lane.b32.xlu0 %v1578, 48
      %v4907 = vpop.permute.xlu0 %4906
      %4908 = vrot.lane.b32.xlu0 %v1579, 48
      %v4909 = vpop.permute.xlu0 %4908
      %4910 = vrot.lane.b32.xlu0 %v1580, 48
      %v4911 = vpop.permute.xlu0 %4910
      %v4917 = vsel %vm2038, %v4888, 0
      %v4920 = vsel %vm2038, %v4889, 0
      %v4923 = vsel %vm2038, %v4890, 0
      %v4926 = vsel %vm2038, %v4891, 0
      %4928 = vmatprep.subr.bf16.mxu0 0
      %4929 = vmatpush1.bf16.msra.mxu0 0
      %4930 = vmatprep.subr.bf16.mxu0 0
      %4931 = vmatpush1.bf16.msra.mxu0 0
      %4932 = vmatprep.subr.bf16.mxu0 0
      %4933 = vmatpush1.bf16.msra.mxu0 0
      %4934 = vmatprep.subr.bf16.mxu0 0
      %4935 = vmatpush1.bf16.msra.mxu0 0
      %4936 = vmatprep.subr.bf16.mxu0 0
      %4937 = vmatpush1.bf16.msra.mxu0 %v4911
      %4938 = vmatprep.subr.bf16.mxu0 0
      %4939 = vmatpush1.bf16.msra.mxu0 %v4909
      %4940 = vmatprep.subr.bf16.mxu0 0
      %4941 = vmatpush1.bf16.msra.mxu0 %v4907
      %4942 = vmatprep.subr.bf16.mxu0 0
      %4943 = vmatpush1.bf16.msra.mxu0 %v4905
      %4944 = vmatprep.subr.bf16.mxu0 0
      %4945 = vmatpush2.bf16.msra.mxu0 0
      %4946 = vmatprep.subr.bf16.mxu0 0
      %4947 = vmatpush2.bf16.msra.mxu0 0
      %4948 = vmatprep.subr.bf16.mxu0 0
      %4949 = vmatpush2.bf16.msra.mxu0 0
      %4950 = vmatprep.subr.bf16.mxu0 0
      %4951 = vmatpush2.bf16.msra.mxu0 0
      %4952 = vmatprep.subr.bf16.mxu0 0
      %4953 = vmatpush2.bf16.msra.mxu0 0
      %4954 = vmatprep.subr.bf16.mxu0 0
      %4955 = vmatpush2.bf16.msra.mxu0 0
      %4956 = vmatprep.subr.bf16.mxu0 0
      %4957 = vmatpush2.bf16.msra.mxu0 0
      %4958 = vmatprep.subr.bf16.mxu0 0
      %4959 = vmatpush2.bf16.msra.mxu0 0
      %4960 = vmatprep.mubr.bf16.mxu0 0
      %4961 = vmatmul.mubr.bf16.gmra.mxu0 %v4917
      %v4962 = vpop.f32.mrf.mxu0
      %v4963 = vadd.f32 0.0, %v4962
      %v4964 = vpop.f32.mrf.mxu0
      %v4965 = vpop.f32.mrf.mxu0
      %v4966 = vadd.f32 0.0, %v4965
      %v4967 = vpop.f32.mrf.mxu0
      %4968 = vmatprep.mubr.bf16.mxu0 0
      %4969 = vmatmul.mubr.bf16.gmra.mxu0 %v4920
      %v4970 = vpop.f32.mrf.mxu0
      %v4971 = vadd.f32 0.0, %v4970
      %v4972 = vpop.f32.mrf.mxu0
      %v4973 = vpop.f32.mrf.mxu0
      %v4974 = vadd.f32 0.0, %v4973
      %v4975 = vpop.f32.mrf.mxu0
      %4976 = vmatprep.mubr.bf16.mxu0 0
      %4977 = vmatmul.mubr.bf16.gmra.mxu0 %v4923
      %v4978 = vpop.f32.mrf.mxu0
      %v4979 = vadd.f32 0.0, %v4978
      %v4980 = vpop.f32.mrf.mxu0
      %v4981 = vpop.f32.mrf.mxu0
      %v4982 = vadd.f32 0.0, %v4981
      %v4983 = vpop.f32.mrf.mxu0
      %4984 = vmatprep.mubr.bf16.mxu0 0
      %4985 = vmatmul.mubr.bf16.gmra.mxu0 %v4926
      %v4986 = vpop.f32.mrf.mxu0
      %v4987 = vadd.f32 0.0, %v4986
      %v4988 = vpop.f32.mrf.mxu0
      %v4989 = vpop.f32.mrf.mxu0
      %v4990 = vadd.f32 0.0, %v4989
      %v4991 = vpop.f32.mrf.mxu0
      %4992 = vdwg.mxu0
      %4993 = vrot.lane.b32.xlu0 %v1581, 48
      %v4994 = vpop.permute.xlu0 %4993
      %4995 = vrot.lane.b32.xlu0 %v1582, 48
      %v4996 = vpop.permute.xlu0 %4995
      %4997 = vrot.lane.b32.xlu0 %v1583, 48
      %v4998 = vpop.permute.xlu0 %4997
      %4999 = vrot.lane.b32.xlu0 %v1584, 48
      %v5000 = vpop.permute.xlu0 %4999
      %v5006 = vsel %vm2038, %v4892, 0
      %v5009 = vsel %vm2038, %v4893, 0
      %v5012 = vsel %vm2038, %v4894, 0
      %v5015 = vsel %vm2038, %v4895, 0
      %5017 = vmatprep.subr.bf16.mxu0 0
      %5018 = vmatpush1.bf16.msra.mxu0 0
      %5019 = vmatprep.subr.bf16.mxu0 0
      %5020 = vmatpush1.bf16.msra.mxu0 0
      %5021 = vmatprep.subr.bf16.mxu0 0
      %5022 = vmatpush1.bf16.msra.mxu0 0
      %5023 = vmatprep.subr.bf16.mxu0 0
      %5024 = vmatpush1.bf16.msra.mxu0 0
      %5025 = vmatprep.subr.bf16.mxu0 0
      %5026 = vmatpush1.bf16.msra.mxu0 %v5000
      %5027 = vmatprep.subr.bf16.mxu0 0
      %5028 = vmatpush1.bf16.msra.mxu0 %v4998
      %5029 = vmatprep.subr.bf16.mxu0 0
      %5030 = vmatpush1.bf16.msra.mxu0 %v4996
      %5031 = vmatprep.subr.bf16.mxu0 0
      %5032 = vmatpush1.bf16.msra.mxu0 %v4994
      %5033 = vmatprep.subr.bf16.mxu0 0
      %5034 = vmatpush2.bf16.msra.mxu0 0
      %5035 = vmatprep.subr.bf16.mxu0 0
      %5036 = vmatpush2.bf16.msra.mxu0 0
      %5037 = vmatprep.subr.bf16.mxu0 0
      %5038 = vmatpush2.bf16.msra.mxu0 0
      %5039 = vmatprep.subr.bf16.mxu0 0
      %5040 = vmatpush2.bf16.msra.mxu0 0
      %5041 = vmatprep.subr.bf16.mxu0 0
      %5042 = vmatpush2.bf16.msra.mxu0 0
      %5043 = vmatprep.subr.bf16.mxu0 0
      %5044 = vmatpush2.bf16.msra.mxu0 0
      %5045 = vmatprep.subr.bf16.mxu0 0
      %5046 = vmatpush2.bf16.msra.mxu0 0
      %5047 = vmatprep.subr.bf16.mxu0 0
      %5048 = vmatpush2.bf16.msra.mxu0 0
      %5049 = vmatprep.mubr.bf16.mxu0 0
      %5050 = vmatmul.mubr.bf16.gmra.mxu0 %v5006
      %v5051 = vpop.f32.mrf.mxu0
      %v5052 = vadd.f32 0.0, %v5051
      %v5053 = vpop.f32.mrf.mxu0
      %v5054 = vpop.f32.mrf.mxu0
      %v5055 = vadd.f32 0.0, %v5054
      %v5056 = vpop.f32.mrf.mxu0
      %5057 = vmatprep.mubr.bf16.mxu0 0
      %5058 = vmatmul.mubr.bf16.gmra.mxu0 %v5009
      %v5059 = vpop.f32.mrf.mxu0
      %v5060 = vadd.f32 0.0, %v5059
      %v5061 = vpop.f32.mrf.mxu0
      %v5062 = vpop.f32.mrf.mxu0
      %v5063 = vadd.f32 0.0, %v5062
      %v5064 = vpop.f32.mrf.mxu0
      %5065 = vmatprep.mubr.bf16.mxu0 0
      %5066 = vmatmul.mubr.bf16.gmra.mxu0 %v5012
      %v5067 = vpop.f32.mrf.mxu0
      %v5068 = vadd.f32 0.0, %v5067
      %v5069 = vpop.f32.mrf.mxu0
      %v5070 = vpop.f32.mrf.mxu0
      %v5071 = vadd.f32 0.0, %v5070
      %v5072 = vpop.f32.mrf.mxu0
      %5073 = vmatprep.mubr.bf16.mxu0 0
      %5074 = vmatmul.mubr.bf16.gmra.mxu0 %v5015
      %v5075 = vpop.f32.mrf.mxu0
      %v5076 = vadd.f32 0.0, %v5075
      %v5077 = vpop.f32.mrf.mxu0
      %v5078 = vpop.f32.mrf.mxu0
      %v5079 = vadd.f32 0.0, %v5078
      %v5080 = vpop.f32.mrf.mxu0
      %5081 = vdwg.mxu0
      %5082 = vrot.lane.b32.xlu0 %v1585, 48
      %v5083 = vpop.permute.xlu0 %5082
      %5084 = vrot.lane.b32.xlu0 %v1586, 48
      %v5085 = vpop.permute.xlu0 %5084
      %5086 = vrot.lane.b32.xlu0 %v1587, 48
      %v5087 = vpop.permute.xlu0 %5086
      %5088 = vrot.lane.b32.xlu0 %v1588, 48
      %v5089 = vpop.permute.xlu0 %5088
      %v5095 = vsel %vm2038, %v4896, 0
      %v5098 = vsel %vm2038, %v4897, 0
      %v5101 = vsel %vm2038, %v4898, 0
      %v5104 = vsel %vm2038, %v4899, 0
      %5106 = vmatprep.subr.bf16.mxu0 0
      %5107 = vmatpush1.bf16.msra.mxu0 0
      %5108 = vmatprep.subr.bf16.mxu0 0
      %5109 = vmatpush1.bf16.msra.mxu0 0
      %5110 = vmatprep.subr.bf16.mxu0 0
      %5111 = vmatpush1.bf16.msra.mxu0 0
      %5112 = vmatprep.subr.bf16.mxu0 0
      %5113 = vmatpush1.bf16.msra.mxu0 0
      %5114 = vmatprep.subr.bf16.mxu0 0
      %5115 = vmatpush1.bf16.msra.mxu0 %v5089
      %5116 = vmatprep.subr.bf16.mxu0 0
      %5117 = vmatpush1.bf16.msra.mxu0 %v5087
      %5118 = vmatprep.subr.bf16.mxu0 0
      %5119 = vmatpush1.bf16.msra.mxu0 %v5085
      %5120 = vmatprep.subr.bf16.mxu0 0
      %5121 = vmatpush1.bf16.msra.mxu0 %v5083
      %5122 = vmatprep.subr.bf16.mxu0 0
      %5123 = vmatpush2.bf16.msra.mxu0 0
      %5124 = vmatprep.subr.bf16.mxu0 0
      %5125 = vmatpush2.bf16.msra.mxu0 0
      %5126 = vmatprep.subr.bf16.mxu0 0
      %5127 = vmatpush2.bf16.msra.mxu0 0
      %5128 = vmatprep.subr.bf16.mxu0 0
      %5129 = vmatpush2.bf16.msra.mxu0 0
      %5130 = vmatprep.subr.bf16.mxu0 0
      %5131 = vmatpush2.bf16.msra.mxu0 0
      %5132 = vmatprep.subr.bf16.mxu0 0
      %5133 = vmatpush2.bf16.msra.mxu0 0
      %5134 = vmatprep.subr.bf16.mxu0 0
      %5135 = vmatpush2.bf16.msra.mxu0 0
      %5136 = vmatprep.subr.bf16.mxu0 0
      %5137 = vmatpush2.bf16.msra.mxu0 0
      %5138 = vmatprep.mubr.bf16.mxu0 0
      %5139 = vmatmul.mubr.bf16.gmra.mxu0 %v5095
      %v5140 = vpop.f32.mrf.mxu0
      %v5141 = vadd.f32 0.0, %v5140
      %v5142 = vpop.f32.mrf.mxu0
      %v5143 = vpop.f32.mrf.mxu0
      %v5144 = vadd.f32 0.0, %v5143
      %v5145 = vpop.f32.mrf.mxu0
      %5146 = vmatprep.mubr.bf16.mxu0 0
      %5147 = vmatmul.mubr.bf16.gmra.mxu0 %v5098
      %v5148 = vpop.f32.mrf.mxu0
      %v5149 = vadd.f32 0.0, %v5148
      %v5150 = vpop.f32.mrf.mxu0
      %v5151 = vpop.f32.mrf.mxu0
      %v5152 = vadd.f32 0.0, %v5151
      %v5153 = vpop.f32.mrf.mxu0
      %5154 = vmatprep.mubr.bf16.mxu0 0
      %5155 = vmatmul.mubr.bf16.gmra.mxu0 %v5101
      %v5156 = vpop.f32.mrf.mxu0
      %v5157 = vadd.f32 0.0, %v5156
      %v5158 = vpop.f32.mrf.mxu0
      %v5159 = vpop.f32.mrf.mxu0
      %v5160 = vadd.f32 0.0, %v5159
      %v5161 = vpop.f32.mrf.mxu0
      %5162 = vmatprep.mubr.bf16.mxu0 0
      %5163 = vmatmul.mubr.bf16.gmra.mxu0 %v5104
      %v5164 = vpop.f32.mrf.mxu0
      %v5165 = vadd.f32 0.0, %v5164
      %v5166 = vpop.f32.mrf.mxu0
      %v5167 = vpop.f32.mrf.mxu0
      %v5168 = vadd.f32 0.0, %v5167
      %v5169 = vpop.f32.mrf.mxu0
      %5170 = vdwg.mxu0
      %5171 = vrot.lane.b32.xlu0 %v1589, 48
      %v5172 = vpop.permute.xlu0 %5171
      %5173 = vrot.lane.b32.xlu0 %v1590, 48
      %v5174 = vpop.permute.xlu0 %5173
      %5175 = vrot.lane.b32.xlu0 %v1591, 48
      %v5176 = vpop.permute.xlu0 %5175
      %5177 = vrot.lane.b32.xlu0 %v1592, 48
      %v5178 = vpop.permute.xlu0 %5177
      %v5184 = vsel %vm2038, %v4900, 0
      %v5187 = vsel %vm2038, %v4901, 0
      %v5190 = vsel %vm2038, %v4902, 0
      %v5193 = vsel %vm2038, %v4903, 0
      %5195 = vmatprep.subr.bf16.mxu0 0
      %5196 = vmatpush1.bf16.msra.mxu0 0
      %5197 = vmatprep.subr.bf16.mxu0 0
      %5198 = vmatpush1.bf16.msra.mxu0 0
      %5199 = vmatprep.subr.bf16.mxu0 0
      %5200 = vmatpush1.bf16.msra.mxu0 0
      %5201 = vmatprep.subr.bf16.mxu0 0
      %5202 = vmatpush1.bf16.msra.mxu0 0
      %5203 = vmatprep.subr.bf16.mxu0 0
      %5204 = vmatpush1.bf16.msra.mxu0 %v5178
      %5205 = vmatprep.subr.bf16.mxu0 0
      %5206 = vmatpush1.bf16.msra.mxu0 %v5176
      %5207 = vmatprep.subr.bf16.mxu0 0
      %5208 = vmatpush1.bf16.msra.mxu0 %v5174
      %5209 = vmatprep.subr.bf16.mxu0 0
      %5210 = vmatpush1.bf16.msra.mxu0 %v5172
      %5211 = vmatprep.subr.bf16.mxu0 0
      %5212 = vmatpush2.bf16.msra.mxu0 0
      %5213 = vmatprep.subr.bf16.mxu0 0
      %5214 = vmatpush2.bf16.msra.mxu0 0
      %5215 = vmatprep.subr.bf16.mxu0 0
      %5216 = vmatpush2.bf16.msra.mxu0 0
      %5217 = vmatprep.subr.bf16.mxu0 0
      %5218 = vmatpush2.bf16.msra.mxu0 0
      %5219 = vmatprep.subr.bf16.mxu0 0
      %5220 = vmatpush2.bf16.msra.mxu0 0
      %5221 = vmatprep.subr.bf16.mxu0 0
      %5222 = vmatpush2.bf16.msra.mxu0 0
      %5223 = vmatprep.subr.bf16.mxu0 0
      %5224 = vmatpush2.bf16.msra.mxu0 0
      %5225 = vmatprep.subr.bf16.mxu0 0
      %5226 = vmatpush2.bf16.msra.mxu0 0
      %5227 = vmatprep.mubr.bf16.mxu0 0
      %5228 = vmatmul.mubr.bf16.gmra.mxu0 %v5184
      %v5229 = vpop.f32.mrf.mxu0
      %v5230 = vadd.f32 0.0, %v5229
      %v5231 = vpop.f32.mrf.mxu0
      %v5232 = vpop.f32.mrf.mxu0
      %v5233 = vadd.f32 0.0, %v5232
      %v5234 = vpop.f32.mrf.mxu0
      %5235 = vmatprep.mubr.bf16.mxu0 0
      %5236 = vmatmul.mubr.bf16.gmra.mxu0 %v5187
      %v5237 = vpop.f32.mrf.mxu0
      %v5238 = vadd.f32 0.0, %v5237
      %v5239 = vpop.f32.mrf.mxu0
      %v5240 = vpop.f32.mrf.mxu0
      %v5241 = vadd.f32 0.0, %v5240
      %v5242 = vpop.f32.mrf.mxu0
      %5243 = vmatprep.mubr.bf16.mxu0 0
      %5244 = vmatmul.mubr.bf16.gmra.mxu0 %v5190
      %v5245 = vpop.f32.mrf.mxu0
      %v5246 = vadd.f32 0.0, %v5245
      %v5247 = vpop.f32.mrf.mxu0
      %v5248 = vpop.f32.mrf.mxu0
      %v5249 = vadd.f32 0.0, %v5248
      %v5250 = vpop.f32.mrf.mxu0
      %5251 = vmatprep.mubr.bf16.mxu0 0
      %5252 = vmatmul.mubr.bf16.gmra.mxu0 %v5193
      %v5253 = vpop.f32.mrf.mxu0
      %v5254 = vadd.f32 0.0, %v5253
      %v5255 = vpop.f32.mrf.mxu0
      %v5256 = vpop.f32.mrf.mxu0
      %v5257 = vadd.f32 0.0, %v5256
      %v5258 = vpop.f32.mrf.mxu0
      %5259 = vdwg.mxu0
      %5292 = vrot.lane.b32.xlu0 %v4963, 16
      %v5293 = vpop.permute.xlu0 %5292
      %5294 = vrot.lane.b32.xlu0 %v4966, 16
      %v5295 = vpop.permute.xlu0 %5294
      %5296 = vrot.lane.b32.xlu0 %v4971, 16
      %v5297 = vpop.permute.xlu0 %5296
      %5298 = vrot.lane.b32.xlu0 %v4974, 16
      %v5299 = vpop.permute.xlu0 %5298
      %5300 = vrot.lane.b32.xlu0 %v4979, 16
      %v5301 = vpop.permute.xlu0 %5300
      %5302 = vrot.lane.b32.xlu0 %v4982, 16
      %v5303 = vpop.permute.xlu0 %5302
      %5304 = vrot.lane.b32.xlu0 %v4987, 16
      %v5305 = vpop.permute.xlu0 %5304
      %5306 = vrot.lane.b32.xlu0 %v4990, 16
      %v5307 = vpop.permute.xlu0 %5306
      %5308 = vrot.lane.b32.xlu0 %v5052, 16
      %v5309 = vpop.permute.xlu0 %5308
      %5310 = vrot.lane.b32.xlu0 %v5055, 16
      %v5311 = vpop.permute.xlu0 %5310
      %5312 = vrot.lane.b32.xlu0 %v5060, 16
      %v5313 = vpop.permute.xlu0 %5312
      %5314 = vrot.lane.b32.xlu0 %v5063, 16
      %v5315 = vpop.permute.xlu0 %5314
      %5316 = vrot.lane.b32.xlu0 %v5068, 16
      %v5317 = vpop.permute.xlu0 %5316
      %5318 = vrot.lane.b32.xlu0 %v5071, 16
      %v5319 = vpop.permute.xlu0 %5318
      %5320 = vrot.lane.b32.xlu0 %v5076, 16
      %v5321 = vpop.permute.xlu0 %5320
      %5322 = vrot.lane.b32.xlu0 %v5079, 16
      %v5323 = vpop.permute.xlu0 %5322
      %5324 = vrot.lane.b32.xlu0 %v5141, 16
      %v5325 = vpop.permute.xlu0 %5324
      %5326 = vrot.lane.b32.xlu0 %v5144, 16
      %v5327 = vpop.permute.xlu0 %5326
      %5328 = vrot.lane.b32.xlu0 %v5149, 16
      %v5329 = vpop.permute.xlu0 %5328
      %5330 = vrot.lane.b32.xlu0 %v5152, 16
      %v5331 = vpop.permute.xlu0 %5330
      %5332 = vrot.lane.b32.xlu0 %v5157, 16
      %v5333 = vpop.permute.xlu0 %5332
      %5334 = vrot.lane.b32.xlu0 %v5160, 16
      %v5335 = vpop.permute.xlu0 %5334
      %5336 = vrot.lane.b32.xlu0 %v5165, 16
      %v5337 = vpop.permute.xlu0 %5336
      %5338 = vrot.lane.b32.xlu0 %v5168, 16
      %v5339 = vpop.permute.xlu0 %5338
      %5340 = vrot.lane.b32.xlu0 %v5230, 16
      %v5341 = vpop.permute.xlu0 %5340
      %5342 = vrot.lane.b32.xlu0 %v5233, 16
      %v5343 = vpop.permute.xlu0 %5342
      %5344 = vrot.lane.b32.xlu0 %v5238, 16
      %v5345 = vpop.permute.xlu0 %5344
      %5346 = vrot.lane.b32.xlu0 %v5241, 16
      %v5347 = vpop.permute.xlu0 %5346
      %5348 = vrot.lane.b32.xlu0 %v5246, 16
      %v5349 = vpop.permute.xlu0 %5348
      %5350 = vrot.lane.b32.xlu0 %v5249, 16
      %v5351 = vpop.permute.xlu0 %5350
      %5352 = vrot.lane.b32.xlu0 %v5254, 16
      %v5353 = vpop.permute.xlu0 %5352
      %5354 = vrot.lane.b32.xlu0 %v5257, 16
      %v5355 = vpop.permute.xlu0 %5354
      %vm5388 = vcmask 195712
      %5389 = vst.msk [vmem:[#allocation2] sm:$0xff] %vm5388, %v5293
      %5390 = vst.msk [vmem:[#allocation2 + $0x8] sm:$0xff] %vm5388, %v5295
      %5391 = vst.msk [vmem:[#allocation2 + $0x10] sm:$0xff] %vm5388, %v5297
      %5392 = vst.msk [vmem:[#allocation2 + $0x18] sm:$0xff] %vm5388, %v5299
      %5393 = vst.msk [vmem:[#allocation2 + $0x20] sm:$0xff] %vm5388, %v5301
      %5394 = vst.msk [vmem:[#allocation2 + $0x28] sm:$0xff] %vm5388, %v5303
      %5395 = vst.msk [vmem:[#allocation2 + $0x30] sm:$0xff] %vm5388, %v5305
      %5396 = vst.msk [vmem:[#allocation2 + $0x38] sm:$0xff] %vm5388, %v5307
      %5397 = vst.msk [vmem:[#allocation2 + $0x40] sm:$0xff] %vm5388, %v5309
      %5398 = vst.msk [vmem:[#allocation2 + $0x48] sm:$0xff] %vm5388, %v5311
      %5399 = vst.msk [vmem:[#allocation2 + $0x50] sm:$0xff] %vm5388, %v5313
      %5400 = vst.msk [vmem:[#allocation2 + $0x58] sm:$0xff] %vm5388, %v5315
      %5401 = vst.msk [vmem:[#allocation2 + $0x60] sm:$0xff] %vm5388, %v5317
      %5402 = vst.msk [vmem:[#allocation2 + $0x68] sm:$0xff] %vm5388, %v5319
      %5403 = vst.msk [vmem:[#allocation2 + $0x70] sm:$0xff] %vm5388, %v5321
      %5404 = vst.msk [vmem:[#allocation2 + $0x78] sm:$0xff] %vm5388, %v5323
      %5405 = vst.msk [vmem:[#allocation2 + $0x80] sm:$0xff] %vm5388, %v5325
      %5406 = vst.msk [vmem:[#allocation2 + $0x88] sm:$0xff] %vm5388, %v5327
      %5407 = vst.msk [vmem:[#allocation2 + $0x90] sm:$0xff] %vm5388, %v5329
      %5408 = vst.msk [vmem:[#allocation2 + $0x98] sm:$0xff] %vm5388, %v5331
      %5409 = vst.msk [vmem:[#allocation2 + $0xa0] sm:$0xff] %vm5388, %v5333
      %5410 = vst.msk [vmem:[#allocation2 + $0xa8] sm:$0xff] %vm5388, %v5335
      %5411 = vst.msk [vmem:[#allocation2 + $0xb0] sm:$0xff] %vm5388, %v5337
      %5412 = vst.msk [vmem:[#allocation2 + $0xb8] sm:$0xff] %vm5388, %v5339
      %5413 = vst.msk [vmem:[#allocation2 + $0xc0] sm:$0xff] %vm5388, %v5341
      %5414 = vst.msk [vmem:[#allocation2 + $0xc8] sm:$0xff] %vm5388, %v5343
      %5415 = vst.msk [vmem:[#allocation2 + $0xd0] sm:$0xff] %vm5388, %v5345
      %5416 = vst.msk [vmem:[#allocation2 + $0xd8] sm:$0xff] %vm5388, %v5347
      %5417 = vst.msk [vmem:[#allocation2 + $0xe0] sm:$0xff] %vm5388, %v5349
      %5418 = vst.msk [vmem:[#allocation2 + $0xe8] sm:$0xff] %vm5388, %v5351
      %5419 = vst.msk [vmem:[#allocation2 + $0xf0] sm:$0xff] %vm5388, %v5353
      %5420 = vst.msk [vmem:[#allocation2 + $0xf8] sm:$0xff] %vm5388, %v5355
      %v5421 = vunpack.c.l.bf16 %v1617
      %v5422 = vunpack.c.l.bf16 %v1618
      %v5423 = vunpack.c.l.bf16 %v1619
      %v5424 = vunpack.c.l.bf16 %v1620
      %v5425 = vunpack.c.l.bf16 %v1621
      %v5426 = vunpack.c.l.bf16 %v1622
      %v5427 = vunpack.c.l.bf16 %v1623
      %v5428 = vunpack.c.l.bf16 %v1624
      %5429 = vrot.lane.b32.xlu0 %v1577, 104
      %v5430 = vpop.permute.xlu0 %5429
      %5431 = vrot.lane.b32.xlu0 %v1578, 104
      %v5432 = vpop.permute.xlu0 %5431
      %5433 = vrot.lane.b32.xlu0 %v1579, 104
      %v5434 = vpop.permute.xlu0 %5433
      %5435 = vrot.lane.b32.xlu0 %v1580, 104
      %v5436 = vpop.permute.xlu0 %5435
      %5437 = vrot.lane.b32.xlu0 %v1577, 72
      %v5438 = vpop.permute.xlu0 %5437
      %5439 = vrot.lane.b32.xlu0 %v1578, 72
      %v5440 = vpop.permute.xlu0 %5439
      %5441 = vrot.lane.b32.xlu0 %v1579, 72
      %v5442 = vpop.permute.xlu0 %5441
      %5443 = vrot.lane.b32.xlu0 %v1580, 72
      %v5444 = vpop.permute.xlu0 %5443
      %v5446 = vsel %vm1645, %v5430, 0
      %v5449 = vsel %vm1645, %v5432, 0
      %v5452 = vsel %vm1645, %v5434, 0
      %v5455 = vsel %vm1645, %v5436, 0
      %v5458 = vsel %vm1645, %v5438, 0
      %v5461 = vsel %vm1645, %v5440, 0
      %v5464 = vsel %vm1645, %v5442, 0
      %v5467 = vsel %vm1645, %v5444, 0
      %5469 = vmatprep.subr.bf16.mxu0 0
      %5470 = vmatpush1.bf16.xpose.msra.mxu0 0
      %5471 = vmatprep.subr.bf16.mxu0 0
      %5472 = vmatpush1.bf16.xpose.msra.mxu0 0
      %5473 = vmatprep.subr.bf16.mxu0 0
      %5474 = vmatpush1.bf16.xpose.msra.mxu0 0
      %5475 = vmatprep.subr.bf16.mxu0 0
      %5476 = vmatpush1.bf16.xpose.msra.mxu0 0
      %5477 = vmatprep.subr.bf16.mxu0 0
      %5478 = vmatpush1.bf16.xpose.msra.mxu0 %v5467
      %5479 = vmatprep.subr.bf16.mxu0 0
      %5480 = vmatpush1.bf16.xpose.msra.mxu0 %v5464
      %5481 = vmatprep.subr.bf16.mxu0 0
      %5482 = vmatpush1.bf16.xpose.msra.mxu0 %v5461
      %5483 = vmatprep.subr.bf16.mxu0 0
      %5484 = vmatpush1.bf16.xpose.msra.mxu0 %v5458
      %5485 = vmatprep.subr.bf16.mxu0 0
      %5486 = vmatpush2.bf16.xpose.msra.mxu0 0
      %5487 = vmatprep.subr.bf16.mxu0 0
      %5488 = vmatpush2.bf16.xpose.msra.mxu0 0
      %5489 = vmatprep.subr.bf16.mxu0 0
      %5490 = vmatpush2.bf16.xpose.msra.mxu0 0
      %5491 = vmatprep.subr.bf16.mxu0 0
      %5492 = vmatpush2.bf16.xpose.msra.mxu0 0
      %5493 = vmatprep.subr.bf16.mxu0 0
      %5494 = vmatpush2.bf16.xpose.msra.mxu0 0
      %5495 = vmatprep.subr.bf16.mxu0 0
      %5496 = vmatpush2.bf16.xpose.msra.mxu0 0
      %5497 = vmatprep.subr.bf16.mxu0 0
      %5498 = vmatpush2.bf16.xpose.msra.mxu0 0
      %5499 = vmatprep.subr.bf16.mxu0 0
      %5500 = vmatpush2.bf16.xpose.msra.mxu0 0
      %5501 = vmatprep.mubr.bf16.mxu0 0
      %5502 = vmatmul.mubr.bf16.gmra.mxu0 %v5446
      %v5503 = vpop.f32.mrf.mxu0
      %v5504 = vadd.f32 %v5421, %v5503
      %v5505 = vpop.f32.mrf.mxu0
      %v5506 = vpop.f32.mrf.mxu0
      %v5507 = vadd.f32 %v5422, %v5506
      %v5508 = vpop.f32.mrf.mxu0
      %5509 = vmatprep.mubr.bf16.mxu0 0
      %5510 = vmatmul.mubr.bf16.gmra.mxu0 %v5449
      %v5511 = vpop.f32.mrf.mxu0
      %v5512 = vadd.f32 %v5423, %v5511
      %v5513 = vpop.f32.mrf.mxu0
      %v5514 = vpop.f32.mrf.mxu0
      %v5515 = vadd.f32 %v5424, %v5514
      %v5516 = vpop.f32.mrf.mxu0
      %5517 = vmatprep.mubr.bf16.mxu0 0
      %5518 = vmatmul.mubr.bf16.gmra.mxu0 %v5452
      %v5519 = vpop.f32.mrf.mxu0
      %v5520 = vadd.f32 %v5425, %v5519
      %v5521 = vpop.f32.mrf.mxu0
      %v5522 = vpop.f32.mrf.mxu0
      %v5523 = vadd.f32 %v5426, %v5522
      %v5524 = vpop.f32.mrf.mxu0
      %5525 = vmatprep.mubr.bf16.mxu0 0
      %5526 = vmatmul.mubr.bf16.gmra.mxu0 %v5455
      %v5527 = vpop.f32.mrf.mxu0
      %v5528 = vadd.f32 %v5427, %v5527
      %v5529 = vpop.f32.mrf.mxu0
      %v5530 = vpop.f32.mrf.mxu0
      %v5531 = vadd.f32 %v5428, %v5530
      %v5532 = vpop.f32.mrf.mxu0
      %5533 = vdwg.mxu0
      %5534 = vrot.lane.b32.xlu0 %v1581, 104
      %v5535 = vpop.permute.xlu0 %5534
      %5536 = vrot.lane.b32.xlu0 %v1582, 104
      %v5537 = vpop.permute.xlu0 %5536
      %5538 = vrot.lane.b32.xlu0 %v1583, 104
      %v5539 = vpop.permute.xlu0 %5538
      %5540 = vrot.lane.b32.xlu0 %v1584, 104
      %v5541 = vpop.permute.xlu0 %5540
      %5542 = vrot.lane.b32.xlu0 %v1581, 72
      %v5543 = vpop.permute.xlu0 %5542
      %5544 = vrot.lane.b32.xlu0 %v1582, 72
      %v5545 = vpop.permute.xlu0 %5544
      %5546 = vrot.lane.b32.xlu0 %v1583, 72
      %v5547 = vpop.permute.xlu0 %5546
      %5548 = vrot.lane.b32.xlu0 %v1584, 72
      %v5549 = vpop.permute.xlu0 %5548
      %v5551 = vsel %vm1645, %v5535, 0
      %v5554 = vsel %vm1645, %v5537, 0
      %v5557 = vsel %vm1645, %v5539, 0
      %v5560 = vsel %vm1645, %v5541, 0
      %v5563 = vsel %vm1645, %v5543, 0
      %v5566 = vsel %vm1645, %v5545, 0
      %v5569 = vsel %vm1645, %v5547, 0
      %v5572 = vsel %vm1645, %v5549, 0
      %5574 = vmatprep.subr.bf16.mxu0 0
      %5575 = vmatpush1.bf16.xpose.msra.mxu0 0
      %5576 = vmatprep.subr.bf16.mxu0 0
      %5577 = vmatpush1.bf16.xpose.msra.mxu0 0
      %5578 = vmatprep.subr.bf16.mxu0 0
      %5579 = vmatpush1.bf16.xpose.msra.mxu0 0
      %5580 = vmatprep.subr.bf16.mxu0 0
      %5581 = vmatpush1.bf16.xpose.msra.mxu0 0
      %5582 = vmatprep.subr.bf16.mxu0 0
      %5583 = vmatpush1.bf16.xpose.msra.mxu0 %v5572
      %5584 = vmatprep.subr.bf16.mxu0 0
      %5585 = vmatpush1.bf16.xpose.msra.mxu0 %v5569
      %5586 = vmatprep.subr.bf16.mxu0 0
      %5587 = vmatpush1.bf16.xpose.msra.mxu0 %v5566
      %5588 = vmatprep.subr.bf16.mxu0 0
      %5589 = vmatpush1.bf16.xpose.msra.mxu0 %v5563
      %5590 = vmatprep.subr.bf16.mxu0 0
      %5591 = vmatpush2.bf16.xpose.msra.mxu0 0
      %5592 = vmatprep.subr.bf16.mxu0 0
      %5593 = vmatpush2.bf16.xpose.msra.mxu0 0
      %5594 = vmatprep.subr.bf16.mxu0 0
      %5595 = vmatpush2.bf16.xpose.msra.mxu0 0
      %5596 = vmatprep.subr.bf16.mxu0 0
      %5597 = vmatpush2.bf16.xpose.msra.mxu0 0
      %5598 = vmatprep.subr.bf16.mxu0 0
      %5599 = vmatpush2.bf16.xpose.msra.mxu0 0
      %5600 = vmatprep.subr.bf16.mxu0 0
      %5601 = vmatpush2.bf16.xpose.msra.mxu0 0
      %5602 = vmatprep.subr.bf16.mxu0 0
      %5603 = vmatpush2.bf16.xpose.msra.mxu0 0
      %5604 = vmatprep.subr.bf16.mxu0 0
      %5605 = vmatpush2.bf16.xpose.msra.mxu0 0
      %5606 = vmatprep.mubr.bf16.mxu0 0
      %5607 = vmatmul.mubr.bf16.gmra.mxu0 %v5551
      %v5608 = vpop.f32.mrf.mxu0
      %v5609 = vadd.f32 %v5421, %v5608
      %v5610 = vpop.f32.mrf.mxu0
      %v5611 = vpop.f32.mrf.mxu0
      %v5612 = vadd.f32 %v5422, %v5611
      %v5613 = vpop.f32.mrf.mxu0
      %5614 = vmatprep.mubr.bf16.mxu0 0
      %5615 = vmatmul.mubr.bf16.gmra.mxu0 %v5554
      %v5616 = vpop.f32.mrf.mxu0
      %v5617 = vadd.f32 %v5423, %v5616
      %v5618 = vpop.f32.mrf.mxu0
      %v5619 = vpop.f32.mrf.mxu0
      %v5620 = vadd.f32 %v5424, %v5619
      %v5621 = vpop.f32.mrf.mxu0
      %5622 = vmatprep.mubr.bf16.mxu0 0
      %5623 = vmatmul.mubr.bf16.gmra.mxu0 %v5557
      %v5624 = vpop.f32.mrf.mxu0
      %v5625 = vadd.f32 %v5425, %v5624
      %v5626 = vpop.f32.mrf.mxu0
      %v5627 = vpop.f32.mrf.mxu0
      %v5628 = vadd.f32 %v5426, %v5627
      %v5629 = vpop.f32.mrf.mxu0
      %5630 = vmatprep.mubr.bf16.mxu0 0
      %5631 = vmatmul.mubr.bf16.gmra.mxu0 %v5560
      %v5632 = vpop.f32.mrf.mxu0
      %v5633 = vadd.f32 %v5427, %v5632
      %v5634 = vpop.f32.mrf.mxu0
      %v5635 = vpop.f32.mrf.mxu0
      %v5636 = vadd.f32 %v5428, %v5635
      %v5637 = vpop.f32.mrf.mxu0
      %5638 = vdwg.mxu0
      %5639 = vrot.lane.b32.xlu0 %v1585, 104
      %v5640 = vpop.permute.xlu0 %5639
      %5641 = vrot.lane.b32.xlu0 %v1586, 104
      %v5642 = vpop.permute.xlu0 %5641
      %5643 = vrot.lane.b32.xlu0 %v1587, 104
      %v5644 = vpop.permute.xlu0 %5643
      %5645 = vrot.lane.b32.xlu0 %v1588, 104
      %v5646 = vpop.permute.xlu0 %5645
      %5647 = vrot.lane.b32.xlu0 %v1585, 72
      %v5648 = vpop.permute.xlu0 %5647
      %5649 = vrot.lane.b32.xlu0 %v1586, 72
      %v5650 = vpop.permute.xlu0 %5649
      %5651 = vrot.lane.b32.xlu0 %v1587, 72
      %v5652 = vpop.permute.xlu0 %5651
      %5653 = vrot.lane.b32.xlu0 %v1588, 72
      %v5654 = vpop.permute.xlu0 %5653
      %v5656 = vsel %vm1645, %v5640, 0
      %v5659 = vsel %vm1645, %v5642, 0
      %v5662 = vsel %vm1645, %v5644, 0
      %v5665 = vsel %vm1645, %v5646, 0
      %v5668 = vsel %vm1645, %v5648, 0
      %v5671 = vsel %vm1645, %v5650, 0
      %v5674 = vsel %vm1645, %v5652, 0
      %v5677 = vsel %vm1645, %v5654, 0
      %5679 = vmatprep.subr.bf16.mxu0 0
      %5680 = vmatpush1.bf16.xpose.msra.mxu0 0
      %5681 = vmatprep.subr.bf16.mxu0 0
      %5682 = vmatpush1.bf16.xpose.msra.mxu0 0
      %5683 = vmatprep.subr.bf16.mxu0 0
      %5684 = vmatpush1.bf16.xpose.msra.mxu0 0
      %5685 = vmatprep.subr.bf16.mxu0 0
      %5686 = vmatpush1.bf16.xpose.msra.mxu0 0
      %5687 = vmatprep.subr.bf16.mxu0 0
      %5688 = vmatpush1.bf16.xpose.msra.mxu0 %v5677
      %5689 = vmatprep.subr.bf16.mxu0 0
      %5690 = vmatpush1.bf16.xpose.msra.mxu0 %v5674
      %5691 = vmatprep.subr.bf16.mxu0 0
      %5692 = vmatpush1.bf16.xpose.msra.mxu0 %v5671
      %5693 = vmatprep.subr.bf16.mxu0 0
      %5694 = vmatpush1.bf16.xpose.msra.mxu0 %v5668
      %5695 = vmatprep.subr.bf16.mxu0 0
      %5696 = vmatpush2.bf16.xpose.msra.mxu0 0
      %5697 = vmatprep.subr.bf16.mxu0 0
      %5698 = vmatpush2.bf16.xpose.msra.mxu0 0
      %5699 = vmatprep.subr.bf16.mxu0 0
      %5700 = vmatpush2.bf16.xpose.msra.mxu0 0
      %5701 = vmatprep.subr.bf16.mxu0 0
      %5702 = vmatpush2.bf16.xpose.msra.mxu0 0
      %5703 = vmatprep.subr.bf16.mxu0 0
      %5704 = vmatpush2.bf16.xpose.msra.mxu0 0
      %5705 = vmatprep.subr.bf16.mxu0 0
      %5706 = vmatpush2.bf16.xpose.msra.mxu0 0
      %5707 = vmatprep.subr.bf16.mxu0 0
      %5708 = vmatpush2.bf16.xpose.msra.mxu0 0
      %5709 = vmatprep.subr.bf16.mxu0 0
      %5710 = vmatpush2.bf16.xpose.msra.mxu0 0
      %5711 = vmatprep.mubr.bf16.mxu0 0
      %5712 = vmatmul.mubr.bf16.gmra.mxu0 %v5656
      %v5713 = vpop.f32.mrf.mxu0
      %v5714 = vadd.f32 %v5421, %v5713
      %v5715 = vpop.f32.mrf.mxu0
      %v5716 = vpop.f32.mrf.mxu0
      %v5717 = vadd.f32 %v5422, %v5716
      %v5718 = vpop.f32.mrf.mxu0
      %5719 = vmatprep.mubr.bf16.mxu0 0
      %5720 = vmatmul.mubr.bf16.gmra.mxu0 %v5659
      %v5721 = vpop.f32.mrf.mxu0
      %v5722 = vadd.f32 %v5423, %v5721
      %v5723 = vpop.f32.mrf.mxu0
      %v5724 = vpop.f32.mrf.mxu0
      %v5725 = vadd.f32 %v5424, %v5724
      %v5726 = vpop.f32.mrf.mxu0
      %5727 = vmatprep.mubr.bf16.mxu0 0
      %5728 = vmatmul.mubr.bf16.gmra.mxu0 %v5662
      %v5729 = vpop.f32.mrf.mxu0
      %v5730 = vadd.f32 %v5425, %v5729
      %v5731 = vpop.f32.mrf.mxu0
      %v5732 = vpop.f32.mrf.mxu0
      %v5733 = vadd.f32 %v5426, %v5732
      %v5734 = vpop.f32.mrf.mxu0
      %5735 = vmatprep.mubr.bf16.mxu0 0
      %5736 = vmatmul.mubr.bf16.gmra.mxu0 %v5665
      %v5737 = vpop.f32.mrf.mxu0
      %v5738 = vadd.f32 %v5427, %v5737
      %v5739 = vpop.f32.mrf.mxu0
      %v5740 = vpop.f32.mrf.mxu0
      %v5741 = vadd.f32 %v5428, %v5740
      %v5742 = vpop.f32.mrf.mxu0
      %5743 = vdwg.mxu0
      %5744 = vrot.lane.b32.xlu0 %v1589, 104
      %v5745 = vpop.permute.xlu0 %5744
      %5746 = vrot.lane.b32.xlu0 %v1590, 104
      %v5747 = vpop.permute.xlu0 %5746
      %5748 = vrot.lane.b32.xlu0 %v1591, 104
      %v5749 = vpop.permute.xlu0 %5748
      %5750 = vrot.lane.b32.xlu0 %v1592, 104
      %v5751 = vpop.permute.xlu0 %5750
      %5752 = vrot.lane.b32.xlu0 %v1589, 72
      %v5753 = vpop.permute.xlu0 %5752
      %5754 = vrot.lane.b32.xlu0 %v1590, 72
      %v5755 = vpop.permute.xlu0 %5754
      %5756 = vrot.lane.b32.xlu0 %v1591, 72
      %v5757 = vpop.permute.xlu0 %5756
      %5758 = vrot.lane.b32.xlu0 %v1592, 72
      %v5759 = vpop.permute.xlu0 %5758
      %v5761 = vsel %vm1645, %v5745, 0
      %v5764 = vsel %vm1645, %v5747, 0
      %v5767 = vsel %vm1645, %v5749, 0
      %v5770 = vsel %vm1645, %v5751, 0
      %v5773 = vsel %vm1645, %v5753, 0
      %v5776 = vsel %vm1645, %v5755, 0
      %v5779 = vsel %vm1645, %v5757, 0
      %v5782 = vsel %vm1645, %v5759, 0
      %5784 = vmatprep.subr.bf16.mxu0 0
      %5785 = vmatpush1.bf16.xpose.msra.mxu0 0
      %5786 = vmatprep.subr.bf16.mxu0 0
      %5787 = vmatpush1.bf16.xpose.msra.mxu0 0
      %5788 = vmatprep.subr.bf16.mxu0 0
      %5789 = vmatpush1.bf16.xpose.msra.mxu0 0
      %5790 = vmatprep.subr.bf16.mxu0 0
      %5791 = vmatpush1.bf16.xpose.msra.mxu0 0
      %5792 = vmatprep.subr.bf16.mxu0 0
      %5793 = vmatpush1.bf16.xpose.msra.mxu0 %v5782
      %5794 = vmatprep.subr.bf16.mxu0 0
      %5795 = vmatpush1.bf16.xpose.msra.mxu0 %v5779
      %5796 = vmatprep.subr.bf16.mxu0 0
      %5797 = vmatpush1.bf16.xpose.msra.mxu0 %v5776
      %5798 = vmatprep.subr.bf16.mxu0 0
      %5799 = vmatpush1.bf16.xpose.msra.mxu0 %v5773
      %5800 = vmatprep.subr.bf16.mxu0 0
      %5801 = vmatpush2.bf16.xpose.msra.mxu0 0
      %5802 = vmatprep.subr.bf16.mxu0 0
      %5803 = vmatpush2.bf16.xpose.msra.mxu0 0
      %5804 = vmatprep.subr.bf16.mxu0 0
      %5805 = vmatpush2.bf16.xpose.msra.mxu0 0
      %5806 = vmatprep.subr.bf16.mxu0 0
      %5807 = vmatpush2.bf16.xpose.msra.mxu0 0
      %5808 = vmatprep.subr.bf16.mxu0 0
      %5809 = vmatpush2.bf16.xpose.msra.mxu0 0
      %5810 = vmatprep.subr.bf16.mxu0 0
      %5811 = vmatpush2.bf16.xpose.msra.mxu0 0
      %5812 = vmatprep.subr.bf16.mxu0 0
      %5813 = vmatpush2.bf16.xpose.msra.mxu0 0
      %5814 = vmatprep.subr.bf16.mxu0 0
      %5815 = vmatpush2.bf16.xpose.msra.mxu0 0
      %5816 = vmatprep.mubr.bf16.mxu0 0
      %5817 = vmatmul.mubr.bf16.gmra.mxu0 %v5761
      %v5818 = vpop.f32.mrf.mxu0
      %v5819 = vadd.f32 %v5421, %v5818
      %v5820 = vpop.f32.mrf.mxu0
      %v5821 = vpop.f32.mrf.mxu0
      %v5822 = vadd.f32 %v5422, %v5821
      %v5823 = vpop.f32.mrf.mxu0
      %5824 = vmatprep.mubr.bf16.mxu0 0
      %5825 = vmatmul.mubr.bf16.gmra.mxu0 %v5764
      %v5826 = vpop.f32.mrf.mxu0
      %v5827 = vadd.f32 %v5423, %v5826
      %v5828 = vpop.f32.mrf.mxu0
      %v5829 = vpop.f32.mrf.mxu0
      %v5830 = vadd.f32 %v5424, %v5829
      %v5831 = vpop.f32.mrf.mxu0
      %5832 = vmatprep.mubr.bf16.mxu0 0
      %5833 = vmatmul.mubr.bf16.gmra.mxu0 %v5767
      %v5834 = vpop.f32.mrf.mxu0
      %v5835 = vadd.f32 %v5425, %v5834
      %v5836 = vpop.f32.mrf.mxu0
      %v5837 = vpop.f32.mrf.mxu0
      %v5838 = vadd.f32 %v5426, %v5837
      %v5839 = vpop.f32.mrf.mxu0
      %5840 = vmatprep.mubr.bf16.mxu0 0
      %5841 = vmatmul.mubr.bf16.gmra.mxu0 %v5770
      %v5842 = vpop.f32.mrf.mxu0
      %v5843 = vadd.f32 %v5427, %v5842
      %v5844 = vpop.f32.mrf.mxu0
      %v5845 = vpop.f32.mrf.mxu0
      %v5846 = vadd.f32 %v5428, %v5845
      %v5847 = vpop.f32.mrf.mxu0
      %5848 = vdwg.mxu0
      %v5849 = vsel %vm2038, %v5504, -inf
      %5850 = vmax.xlane.f32.xlu0 %v5849
      %v5851 = vpop.xlane.xlu0 %5850
      %v5852 = vsel %vm2038, %v5507, -inf
      %5853 = vmax.xlane.f32.xlu0 %v5852
      %v5854 = vpop.xlane.xlu0 %5853
      %v5855 = vsel %vm2038, %v5512, -inf
      %5856 = vmax.xlane.f32.xlu0 %v5855
      %v5857 = vpop.xlane.xlu0 %5856
      %v5858 = vsel %vm2038, %v5515, -inf
      %5859 = vmax.xlane.f32.xlu0 %v5858
      %v5860 = vpop.xlane.xlu0 %5859
      %v5861 = vsel %vm2038, %v5520, -inf
      %5862 = vmax.xlane.f32.xlu0 %v5861
      %v5863 = vpop.xlane.xlu0 %5862
      %v5864 = vsel %vm2038, %v5523, -inf
      %5865 = vmax.xlane.f32.xlu0 %v5864
      %v5866 = vpop.xlane.xlu0 %5865
      %v5867 = vsel %vm2038, %v5528, -inf
      %5868 = vmax.xlane.f32.xlu0 %v5867
      %v5869 = vpop.xlane.xlu0 %5868
      %v5870 = vsel %vm2038, %v5531, -inf
      %5871 = vmax.xlane.f32.xlu0 %v5870
      %v5872 = vpop.xlane.xlu0 %5871
      %v5873 = vsel %vm2038, %v5609, -inf
      %5874 = vmax.xlane.f32.xlu0 %v5873
      %v5875 = vpop.xlane.xlu0 %5874
      %v5876 = vsel %vm2038, %v5612, -inf
      %5877 = vmax.xlane.f32.xlu0 %v5876
      %v5878 = vpop.xlane.xlu0 %5877
      %v5879 = vsel %vm2038, %v5617, -inf
      %5880 = vmax.xlane.f32.xlu0 %v5879
      %v5881 = vpop.xlane.xlu0 %5880
      %v5882 = vsel %vm2038, %v5620, -inf
      %5883 = vmax.xlane.f32.xlu0 %v5882
      %v5884 = vpop.xlane.xlu0 %5883
      %v5885 = vsel %vm2038, %v5625, -inf
      %5886 = vmax.xlane.f32.xlu0 %v5885
      %v5887 = vpop.xlane.xlu0 %5886
      %v5888 = vsel %vm2038, %v5628, -inf
      %5889 = vmax.xlane.f32.xlu0 %v5888
      %v5890 = vpop.xlane.xlu0 %5889
      %v5891 = vsel %vm2038, %v5633, -inf
      %5892 = vmax.xlane.f32.xlu0 %v5891
      %v5893 = vpop.xlane.xlu0 %5892
      %v5894 = vsel %vm2038, %v5636, -inf
      %5895 = vmax.xlane.f32.xlu0 %v5894
      %v5896 = vpop.xlane.xlu0 %5895
      %v5897 = vsel %vm2038, %v5714, -inf
      %5898 = vmax.xlane.f32.xlu0 %v5897
      %v5899 = vpop.xlane.xlu0 %5898
      %v5900 = vsel %vm2038, %v5717, -inf
      %5901 = vmax.xlane.f32.xlu0 %v5900
      %v5902 = vpop.xlane.xlu0 %5901
      %v5903 = vsel %vm2038, %v5722, -inf
      %5904 = vmax.xlane.f32.xlu0 %v5903
      %v5905 = vpop.xlane.xlu0 %5904
      %v5906 = vsel %vm2038, %v5725, -inf
      %5907 = vmax.xlane.f32.xlu0 %v5906
      %v5908 = vpop.xlane.xlu0 %5907
      %v5909 = vsel %vm2038, %v5730, -inf
      %5910 = vmax.xlane.f32.xlu0 %v5909
      %v5911 = vpop.xlane.xlu0 %5910
      %v5912 = vsel %vm2038, %v5733, -inf
      %5913 = vmax.xlane.f32.xlu0 %v5912
      %v5914 = vpop.xlane.xlu0 %5913
      %v5915 = vsel %vm2038, %v5738, -inf
      %5916 = vmax.xlane.f32.xlu0 %v5915
      %v5917 = vpop.xlane.xlu0 %5916
      %v5918 = vsel %vm2038, %v5741, -inf
      %5919 = vmax.xlane.f32.xlu0 %v5918
      %v5920 = vpop.xlane.xlu0 %5919
      %v5921 = vsel %vm2038, %v5819, -inf
      %5922 = vmax.xlane.f32.xlu0 %v5921
      %v5923 = vpop.xlane.xlu0 %5922
      %v5924 = vsel %vm2038, %v5822, -inf
      %5925 = vmax.xlane.f32.xlu0 %v5924
      %v5926 = vpop.xlane.xlu0 %5925
      %v5927 = vsel %vm2038, %v5827, -inf
      %5928 = vmax.xlane.f32.xlu0 %v5927
      %v5929 = vpop.xlane.xlu0 %5928
      %v5930 = vsel %vm2038, %v5830, -inf
      %5931 = vmax.xlane.f32.xlu0 %v5930
      %v5932 = vpop.xlane.xlu0 %5931
      %v5933 = vsel %vm2038, %v5835, -inf
      %5934 = vmax.xlane.f32.xlu0 %v5933
      %v5935 = vpop.xlane.xlu0 %5934
      %v5936 = vsel %vm2038, %v5838, -inf
      %5937 = vmax.xlane.f32.xlu0 %v5936
      %v5938 = vpop.xlane.xlu0 %5937
      %v5939 = vsel %vm2038, %v5843, -inf
      %5940 = vmax.xlane.f32.xlu0 %v5939
      %v5941 = vpop.xlane.xlu0 %5940
      %v5942 = vsel %vm2038, %v5846, -inf
      %5943 = vmax.xlane.f32.xlu0 %v5942
      %v5944 = vpop.xlane.xlu0 %5943
      %v5945 = vsub.f32 %v5504, %v5851
      %v5946 = vsub.f32 %v5507, %v5854
      %v5947 = vsub.f32 %v5512, %v5857
      %v5948 = vsub.f32 %v5515, %v5860
      %v5949 = vsub.f32 %v5520, %v5863
      %v5950 = vsub.f32 %v5523, %v5866
      %v5951 = vsub.f32 %v5528, %v5869
      %v5952 = vsub.f32 %v5531, %v5872
      %v5953 = vsub.f32 %v5609, %v5875
      %v5954 = vsub.f32 %v5612, %v5878
      %v5955 = vsub.f32 %v5617, %v5881
      %v5956 = vsub.f32 %v5620, %v5884
      %v5957 = vsub.f32 %v5625, %v5887
      %v5958 = vsub.f32 %v5628, %v5890
      %v5959 = vsub.f32 %v5633, %v5893
      %v5960 = vsub.f32 %v5636, %v5896
      %v5961 = vsub.f32 %v5714, %v5899
      %v5962 = vsub.f32 %v5717, %v5902
      %v5963 = vsub.f32 %v5722, %v5905
      %v5964 = vsub.f32 %v5725, %v5908
      %v5965 = vsub.f32 %v5730, %v5911
      %v5966 = vsub.f32 %v5733, %v5914
      %v5967 = vsub.f32 %v5738, %v5917
      %v5968 = vsub.f32 %v5741, %v5920
      %v5969 = vsub.f32 %v5819, %v5923
      %v5970 = vsub.f32 %v5822, %v5926
      %v5971 = vsub.f32 %v5827, %v5929
      %v5972 = vsub.f32 %v5830, %v5932
      %v5973 = vsub.f32 %v5835, %v5935
      %v5974 = vsub.f32 %v5838, %v5938
      %v5975 = vsub.f32 %v5843, %v5941
      %v5976 = vsub.f32 %v5846, %v5944
      %v5977 = vmul.f32 %v5945, 1.442695
      %v5978 = vpow.pop %v5977
      %v5979 = vmul.f32 %v5946, 1.442695
      %v5980 = vpow.pop %v5979
      %v5981 = vmul.f32 %v5947, 1.442695
      %v5982 = vpow.pop %v5981
      %v5983 = vmul.f32 %v5948, 1.442695
      %v5984 = vpow.pop %v5983
      %v5985 = vmul.f32 %v5949, 1.442695
      %v5986 = vpow.pop %v5985
      %v5987 = vmul.f32 %v5950, 1.442695
      %v5988 = vpow.pop %v5987
      %v5989 = vmul.f32 %v5951, 1.442695
      %v5990 = vpow.pop %v5989
      %v5991 = vmul.f32 %v5952, 1.442695
      %v5992 = vpow.pop %v5991
      %v5993 = vmul.f32 %v5953, 1.442695
      %v5994 = vpow.pop %v5993
      %v5995 = vmul.f32 %v5954, 1.442695
      %v5996 = vpow.pop %v5995
      %v5997 = vmul.f32 %v5955, 1.442695
      %v5998 = vpow.pop %v5997
      %v5999 = vmul.f32 %v5956, 1.442695
      %v6000 = vpow.pop %v5999
      %v6001 = vmul.f32 %v5957, 1.442695
      %v6002 = vpow.pop %v6001
      %v6003 = vmul.f32 %v5958, 1.442695
      %v6004 = vpow.pop %v6003
      %v6005 = vmul.f32 %v5959, 1.442695
      %v6006 = vpow.pop %v6005
      %v6007 = vmul.f32 %v5960, 1.442695
      %v6008 = vpow.pop %v6007
      %v6009 = vmul.f32 %v5961, 1.442695
      %v6010 = vpow.pop %v6009
      %v6011 = vmul.f32 %v5962, 1.442695
      %v6012 = vpow.pop %v6011
      %v6013 = vmul.f32 %v5963, 1.442695
      %v6014 = vpow.pop %v6013
      %v6015 = vmul.f32 %v5964, 1.442695
      %v6016 = vpow.pop %v6015
      %v6017 = vmul.f32 %v5965, 1.442695
      %v6018 = vpow.pop %v6017
      %v6019 = vmul.f32 %v5966, 1.442695
      %v6020 = vpow.pop %v6019
      %v6021 = vmul.f32 %v5967, 1.442695
      %v6022 = vpow.pop %v6021
      %v6023 = vmul.f32 %v5968, 1.442695
      %v6024 = vpow.pop %v6023
      %v6025 = vmul.f32 %v5969, 1.442695
      %v6026 = vpow.pop %v6025
      %v6027 = vmul.f32 %v5970, 1.442695
      %v6028 = vpow.pop %v6027
      %v6029 = vmul.f32 %v5971, 1.442695
      %v6030 = vpow.pop %v6029
      %v6031 = vmul.f32 %v5972, 1.442695
      %v6032 = vpow.pop %v6031
      %v6033 = vmul.f32 %v5973, 1.442695
      %v6034 = vpow.pop %v6033
      %v6035 = vmul.f32 %v5974, 1.442695
      %v6036 = vpow.pop %v6035
      %v6037 = vmul.f32 %v5975, 1.442695
      %v6038 = vpow.pop %v6037
      %v6039 = vmul.f32 %v5976, 1.442695
      %v6040 = vpow.pop %v6039
      %v6041 = vsel %vm2038, %v5978, 0.0
      %6042 = vadd.xlane.f32.xlu0 %v6041
      %v6043 = vpop.xlane.xlu0 %6042
      %v6044 = vsel %vm2038, %v5980, 0.0
      %6045 = vadd.xlane.f32.xlu0 %v6044
      %v6046 = vpop.xlane.xlu0 %6045
      %v6047 = vsel %vm2038, %v5982, 0.0
      %6048 = vadd.xlane.f32.xlu0 %v6047
      %v6049 = vpop.xlane.xlu0 %6048
      %v6050 = vsel %vm2038, %v5984, 0.0
      %6051 = vadd.xlane.f32.xlu0 %v6050
      %v6052 = vpop.xlane.xlu0 %6051
      %v6053 = vsel %vm2038, %v5986, 0.0
      %6054 = vadd.xlane.f32.xlu0 %v6053
      %v6055 = vpop.xlane.xlu0 %6054
      %v6056 = vsel %vm2038, %v5988, 0.0
      %6057 = vadd.xlane.f32.xlu0 %v6056
      %v6058 = vpop.xlane.xlu0 %6057
      %v6059 = vsel %vm2038, %v5990, 0.0
      %6060 = vadd.xlane.f32.xlu0 %v6059
      %v6061 = vpop.xlane.xlu0 %6060
      %v6062 = vsel %vm2038, %v5992, 0.0
      %6063 = vadd.xlane.f32.xlu0 %v6062
      %v6064 = vpop.xlane.xlu0 %6063
      %v6065 = vsel %vm2038, %v5994, 0.0
      %6066 = vadd.xlane.f32.xlu0 %v6065
      %v6067 = vpop.xlane.xlu0 %6066
      %v6068 = vsel %vm2038, %v5996, 0.0
      %6069 = vadd.xlane.f32.xlu0 %v6068
      %v6070 = vpop.xlane.xlu0 %6069
      %v6071 = vsel %vm2038, %v5998, 0.0
      %6072 = vadd.xlane.f32.xlu0 %v6071
      %v6073 = vpop.xlane.xlu0 %6072
      %v6074 = vsel %vm2038, %v6000, 0.0
      %6075 = vadd.xlane.f32.xlu0 %v6074
      %v6076 = vpop.xlane.xlu0 %6075
      %v6077 = vsel %vm2038, %v6002, 0.0
      %6078 = vadd.xlane.f32.xlu0 %v6077
      %v6079 = vpop.xlane.xlu0 %6078
      %v6080 = vsel %vm2038, %v6004, 0.0
      %6081 = vadd.xlane.f32.xlu0 %v6080
      %v6082 = vpop.xlane.xlu0 %6081
      %v6083 = vsel %vm2038, %v6006, 0.0
      %6084 = vadd.xlane.f32.xlu0 %v6083
      %v6085 = vpop.xlane.xlu0 %6084
      %v6086 = vsel %vm2038, %v6008, 0.0
      %6087 = vadd.xlane.f32.xlu0 %v6086
      %v6088 = vpop.xlane.xlu0 %6087
      %v6089 = vsel %vm2038, %v6010, 0.0
      %6090 = vadd.xlane.f32.xlu0 %v6089
      %v6091 = vpop.xlane.xlu0 %6090
      %v6092 = vsel %vm2038, %v6012, 0.0
      %6093 = vadd.xlane.f32.xlu0 %v6092
      %v6094 = vpop.xlane.xlu0 %6093
      %v6095 = vsel %vm2038, %v6014, 0.0
      %6096 = vadd.xlane.f32.xlu0 %v6095
      %v6097 = vpop.xlane.xlu0 %6096
      %v6098 = vsel %vm2038, %v6016, 0.0
      %6099 = vadd.xlane.f32.xlu0 %v6098
      %v6100 = vpop.xlane.xlu0 %6099
      %v6101 = vsel %vm2038, %v6018, 0.0
      %6102 = vadd.xlane.f32.xlu0 %v6101
      %v6103 = vpop.xlane.xlu0 %6102
      %v6104 = vsel %vm2038, %v6020, 0.0
      %6105 = vadd.xlane.f32.xlu0 %v6104
      %v6106 = vpop.xlane.xlu0 %6105
      %v6107 = vsel %vm2038, %v6022, 0.0
      %6108 = vadd.xlane.f32.xlu0 %v6107
      %v6109 = vpop.xlane.xlu0 %6108
      %v6110 = vsel %vm2038, %v6024, 0.0
      %6111 = vadd.xlane.f32.xlu0 %v6110
      %v6112 = vpop.xlane.xlu0 %6111
      %v6113 = vsel %vm2038, %v6026, 0.0
      %6114 = vadd.xlane.f32.xlu0 %v6113
      %v6115 = vpop.xlane.xlu0 %6114
      %v6116 = vsel %vm2038, %v6028, 0.0
      %6117 = vadd.xlane.f32.xlu0 %v6116
      %v6118 = vpop.xlane.xlu0 %6117
      %v6119 = vsel %vm2038, %v6030, 0.0
      %6120 = vadd.xlane.f32.xlu0 %v6119
      %v6121 = vpop.xlane.xlu0 %6120
      %v6122 = vsel %vm2038, %v6032, 0.0
      %6123 = vadd.xlane.f32.xlu0 %v6122
      %v6124 = vpop.xlane.xlu0 %6123
      %v6125 = vsel %vm2038, %v6034, 0.0
      %6126 = vadd.xlane.f32.xlu0 %v6125
      %v6127 = vpop.xlane.xlu0 %6126
      %v6128 = vsel %vm2038, %v6036, 0.0
      %6129 = vadd.xlane.f32.xlu0 %v6128
      %v6130 = vpop.xlane.xlu0 %6129
      %v6131 = vsel %vm2038, %v6038, 0.0
      %6132 = vadd.xlane.f32.xlu0 %v6131
      %v6133 = vpop.xlane.xlu0 %6132
      %v6134 = vsel %vm2038, %v6040, 0.0
      %6135 = vadd.xlane.f32.xlu0 %v6134
      %v6136 = vpop.xlane.xlu0 %6135
      %v6137 = vrcp.pop %v6043
      %v6138 = vrcp.pop %v6046
      %v6139 = vrcp.pop %v6049
      %v6140 = vrcp.pop %v6052
      %v6141 = vrcp.pop %v6055
      %v6142 = vrcp.pop %v6058
      %v6143 = vrcp.pop %v6061
      %v6144 = vrcp.pop %v6064
      %v6145 = vrcp.pop %v6067
      %v6146 = vrcp.pop %v6070
      %v6147 = vrcp.pop %v6073
      %v6148 = vrcp.pop %v6076
      %v6149 = vrcp.pop %v6079
      %v6150 = vrcp.pop %v6082
      %v6151 = vrcp.pop %v6085
      %v6152 = vrcp.pop %v6088
      %v6153 = vrcp.pop %v6091
      %v6154 = vrcp.pop %v6094
      %v6155 = vrcp.pop %v6097
      %v6156 = vrcp.pop %v6100
      %v6157 = vrcp.pop %v6103
      %v6158 = vrcp.pop %v6106
      %v6159 = vrcp.pop %v6109
      %v6160 = vrcp.pop %v6112
      %v6161 = vrcp.pop %v6115
      %v6162 = vrcp.pop %v6118
      %v6163 = vrcp.pop %v6121
      %v6164 = vrcp.pop %v6124
      %v6165 = vrcp.pop %v6127
      %v6166 = vrcp.pop %v6130
      %v6167 = vrcp.pop %v6133
      %v6168 = vrcp.pop %v6136
      %v6169 = vmul.f32 %v5978, %v6137
      %v6170 = vmul.f32 %v5980, %v6138
      %v6171 = vmul.f32 %v5982, %v6139
      %v6172 = vmul.f32 %v5984, %v6140
      %v6173 = vmul.f32 %v5986, %v6141
      %v6174 = vmul.f32 %v5988, %v6142
      %v6175 = vmul.f32 %v5990, %v6143
      %v6176 = vmul.f32 %v5992, %v6144
      %v6177 = vmul.f32 %v5994, %v6145
      %v6178 = vmul.f32 %v5996, %v6146
      %v6179 = vmul.f32 %v5998, %v6147
      %v6180 = vmul.f32 %v6000, %v6148
      %v6181 = vmul.f32 %v6002, %v6149
      %v6182 = vmul.f32 %v6004, %v6150
      %v6183 = vmul.f32 %v6006, %v6151
      %v6184 = vmul.f32 %v6008, %v6152
      %v6185 = vmul.f32 %v6010, %v6153
      %v6186 = vmul.f32 %v6012, %v6154
      %v6187 = vmul.f32 %v6014, %v6155
      %v6188 = vmul.f32 %v6016, %v6156
      %v6189 = vmul.f32 %v6018, %v6157
      %v6190 = vmul.f32 %v6020, %v6158
      %v6191 = vmul.f32 %v6022, %v6159
      %v6192 = vmul.f32 %v6024, %v6160
      %v6193 = vmul.f32 %v6026, %v6161
      %v6194 = vmul.f32 %v6028, %v6162
      %v6195 = vmul.f32 %v6030, %v6163
      %v6196 = vmul.f32 %v6032, %v6164
      %v6197 = vmul.f32 %v6034, %v6165
      %v6198 = vmul.f32 %v6036, %v6166
      %v6199 = vmul.f32 %v6038, %v6167
      %v6200 = vmul.f32 %v6040, %v6168
      %v6201 = vpack.c.bf16 %v6170, %v6169
      %v6202 = vpack.c.bf16 %v6172, %v6171
      %v6203 = vpack.c.bf16 %v6174, %v6173
      %v6204 = vpack.c.bf16 %v6176, %v6175
      %v6205 = vpack.c.bf16 %v6178, %v6177
      %v6206 = vpack.c.bf16 %v6180, %v6179
      %v6207 = vpack.c.bf16 %v6182, %v6181
      %v6208 = vpack.c.bf16 %v6184, %v6183
      %v6209 = vpack.c.bf16 %v6186, %v6185
      %v6210 = vpack.c.bf16 %v6188, %v6187
      %v6211 = vpack.c.bf16 %v6190, %v6189
      %v6212 = vpack.c.bf16 %v6192, %v6191
      %v6213 = vpack.c.bf16 %v6194, %v6193
      %v6214 = vpack.c.bf16 %v6196, %v6195
      %v6215 = vpack.c.bf16 %v6198, %v6197
      %v6216 = vpack.c.bf16 %v6200, %v6199
      %6217 = vrot.lane.b32.xlu0 %v1577, 40
      %v6218 = vpop.permute.xlu0 %6217
      %6219 = vrot.lane.b32.xlu0 %v1578, 40
      %v6220 = vpop.permute.xlu0 %6219
      %6221 = vrot.lane.b32.xlu0 %v1579, 40
      %v6222 = vpop.permute.xlu0 %6221
      %6223 = vrot.lane.b32.xlu0 %v1580, 40
      %v6224 = vpop.permute.xlu0 %6223
      %v6230 = vsel %vm2038, %v6201, 0
      %v6233 = vsel %vm2038, %v6202, 0
      %v6236 = vsel %vm2038, %v6203, 0
      %v6239 = vsel %vm2038, %v6204, 0
      %6241 = vmatprep.subr.bf16.mxu0 0
      %6242 = vmatpush1.bf16.msra.mxu0 0
      %6243 = vmatprep.subr.bf16.mxu0 0
      %6244 = vmatpush1.bf16.msra.mxu0 0
      %6245 = vmatprep.subr.bf16.mxu0 0
      %6246 = vmatpush1.bf16.msra.mxu0 0
      %6247 = vmatprep.subr.bf16.mxu0 0
      %6248 = vmatpush1.bf16.msra.mxu0 0
      %6249 = vmatprep.subr.bf16.mxu0 0
      %6250 = vmatpush1.bf16.msra.mxu0 %v6224
      %6251 = vmatprep.subr.bf16.mxu0 0
      %6252 = vmatpush1.bf16.msra.mxu0 %v6222
      %6253 = vmatprep.subr.bf16.mxu0 0
      %6254 = vmatpush1.bf16.msra.mxu0 %v6220
      %6255 = vmatprep.subr.bf16.mxu0 0
      %6256 = vmatpush1.bf16.msra.mxu0 %v6218
      %6257 = vmatprep.subr.bf16.mxu0 0
      %6258 = vmatpush2.bf16.msra.mxu0 0
      %6259 = vmatprep.subr.bf16.mxu0 0
      %6260 = vmatpush2.bf16.msra.mxu0 0
      %6261 = vmatprep.subr.bf16.mxu0 0
      %6262 = vmatpush2.bf16.msra.mxu0 0
      %6263 = vmatprep.subr.bf16.mxu0 0
      %6264 = vmatpush2.bf16.msra.mxu0 0
      %6265 = vmatprep.subr.bf16.mxu0 0
      %6266 = vmatpush2.bf16.msra.mxu0 0
      %6267 = vmatprep.subr.bf16.mxu0 0
      %6268 = vmatpush2.bf16.msra.mxu0 0
      %6269 = vmatprep.subr.bf16.mxu0 0
      %6270 = vmatpush2.bf16.msra.mxu0 0
      %6271 = vmatprep.subr.bf16.mxu0 0
      %6272 = vmatpush2.bf16.msra.mxu0 0
      %6273 = vmatprep.mubr.bf16.mxu0 0
      %6274 = vmatmul.mubr.bf16.gmra.mxu0 %v6230
      %v6275 = vpop.f32.mrf.mxu0
      %v6276 = vadd.f32 0.0, %v6275
      %v6277 = vpop.f32.mrf.mxu0
      %v6278 = vpop.f32.mrf.mxu0
      %v6279 = vadd.f32 0.0, %v6278
      %v6280 = vpop.f32.mrf.mxu0
      %6281 = vmatprep.mubr.bf16.mxu0 0
      %6282 = vmatmul.mubr.bf16.gmra.mxu0 %v6233
      %v6283 = vpop.f32.mrf.mxu0
      %v6284 = vadd.f32 0.0, %v6283
      %v6285 = vpop.f32.mrf.mxu0
      %v6286 = vpop.f32.mrf.mxu0
      %v6287 = vadd.f32 0.0, %v6286
      %v6288 = vpop.f32.mrf.mxu0
      %6289 = vmatprep.mubr.bf16.mxu0 0
      %6290 = vmatmul.mubr.bf16.gmra.mxu0 %v6236
      %v6291 = vpop.f32.mrf.mxu0
      %v6292 = vadd.f32 0.0, %v6291
      %v6293 = vpop.f32.mrf.mxu0
      %v6294 = vpop.f32.mrf.mxu0
      %v6295 = vadd.f32 0.0, %v6294
      %v6296 = vpop.f32.mrf.mxu0
      %6297 = vmatprep.mubr.bf16.mxu0 0
      %6298 = vmatmul.mubr.bf16.gmra.mxu0 %v6239
      %v6299 = vpop.f32.mrf.mxu0
      %v6300 = vadd.f32 0.0, %v6299
      %v6301 = vpop.f32.mrf.mxu0
      %v6302 = vpop.f32.mrf.mxu0
      %v6303 = vadd.f32 0.0, %v6302
      %v6304 = vpop.f32.mrf.mxu0
      %6305 = vdwg.mxu0
      %6306 = vrot.lane.b32.xlu0 %v1581, 40
      %v6307 = vpop.permute.xlu0 %6306
      %6308 = vrot.lane.b32.xlu0 %v1582, 40
      %v6309 = vpop.permute.xlu0 %6308
      %6310 = vrot.lane.b32.xlu0 %v1583, 40
      %v6311 = vpop.permute.xlu0 %6310
      %6312 = vrot.lane.b32.xlu0 %v1584, 40
      %v6313 = vpop.permute.xlu0 %6312
      %v6319 = vsel %vm2038, %v6205, 0
      %v6322 = vsel %vm2038, %v6206, 0
      %v6325 = vsel %vm2038, %v6207, 0
      %v6328 = vsel %vm2038, %v6208, 0
      %6330 = vmatprep.subr.bf16.mxu0 0
      %6331 = vmatpush1.bf16.msra.mxu0 0
      %6332 = vmatprep.subr.bf16.mxu0 0
      %6333 = vmatpush1.bf16.msra.mxu0 0
      %6334 = vmatprep.subr.bf16.mxu0 0
      %6335 = vmatpush1.bf16.msra.mxu0 0
      %6336 = vmatprep.subr.bf16.mxu0 0
      %6337 = vmatpush1.bf16.msra.mxu0 0
      %6338 = vmatprep.subr.bf16.mxu0 0
      %6339 = vmatpush1.bf16.msra.mxu0 %v6313
      %6340 = vmatprep.subr.bf16.mxu0 0
      %6341 = vmatpush1.bf16.msra.mxu0 %v6311
      %6342 = vmatprep.subr.bf16.mxu0 0
      %6343 = vmatpush1.bf16.msra.mxu0 %v6309
      %6344 = vmatprep.subr.bf16.mxu0 0
      %6345 = vmatpush1.bf16.msra.mxu0 %v6307
      %6346 = vmatprep.subr.bf16.mxu0 0
      %6347 = vmatpush2.bf16.msra.mxu0 0
      %6348 = vmatprep.subr.bf16.mxu0 0
      %6349 = vmatpush2.bf16.msra.mxu0 0
      %6350 = vmatprep.subr.bf16.mxu0 0
      %6351 = vmatpush2.bf16.msra.mxu0 0
      %6352 = vmatprep.subr.bf16.mxu0 0
      %6353 = vmatpush2.bf16.msra.mxu0 0
      %6354 = vmatprep.subr.bf16.mxu0 0
      %6355 = vmatpush2.bf16.msra.mxu0 0
      %6356 = vmatprep.subr.bf16.mxu0 0
      %6357 = vmatpush2.bf16.msra.mxu0 0
      %6358 = vmatprep.subr.bf16.mxu0 0
      %6359 = vmatpush2.bf16.msra.mxu0 0
      %6360 = vmatprep.subr.bf16.mxu0 0
      %6361 = vmatpush2.bf16.msra.mxu0 0
      %6362 = vmatprep.mubr.bf16.mxu0 0
      %6363 = vmatmul.mubr.bf16.gmra.mxu0 %v6319
      %v6364 = vpop.f32.mrf.mxu0
      %v6365 = vadd.f32 0.0, %v6364
      %v6366 = vpop.f32.mrf.mxu0
      %v6367 = vpop.f32.mrf.mxu0
      %v6368 = vadd.f32 0.0, %v6367
      %v6369 = vpop.f32.mrf.mxu0
      %6370 = vmatprep.mubr.bf16.mxu0 0
      %6371 = vmatmul.mubr.bf16.gmra.mxu0 %v6322
      %v6372 = vpop.f32.mrf.mxu0
      %v6373 = vadd.f32 0.0, %v6372
      %v6374 = vpop.f32.mrf.mxu0
      %v6375 = vpop.f32.mrf.mxu0
      %v6376 = vadd.f32 0.0, %v6375
      %v6377 = vpop.f32.mrf.mxu0
      %6378 = vmatprep.mubr.bf16.mxu0 0
      %6379 = vmatmul.mubr.bf16.gmra.mxu0 %v6325
      %v6380 = vpop.f32.mrf.mxu0
      %v6381 = vadd.f32 0.0, %v6380
      %v6382 = vpop.f32.mrf.mxu0
      %v6383 = vpop.f32.mrf.mxu0
      %v6384 = vadd.f32 0.0, %v6383
      %v6385 = vpop.f32.mrf.mxu0
      %6386 = vmatprep.mubr.bf16.mxu0 0
      %6387 = vmatmul.mubr.bf16.gmra.mxu0 %v6328
      %v6388 = vpop.f32.mrf.mxu0
      %v6389 = vadd.f32 0.0, %v6388
      %v6390 = vpop.f32.mrf.mxu0
      %v6391 = vpop.f32.mrf.mxu0
      %v6392 = vadd.f32 0.0, %v6391
      %v6393 = vpop.f32.mrf.mxu0
      %6394 = vdwg.mxu0
      %6395 = vrot.lane.b32.xlu0 %v1585, 40
      %v6396 = vpop.permute.xlu0 %6395
      %6397 = vrot.lane.b32.xlu0 %v1586, 40
      %v6398 = vpop.permute.xlu0 %6397
      %6399 = vrot.lane.b32.xlu0 %v1587, 40
      %v6400 = vpop.permute.xlu0 %6399
      %6401 = vrot.lane.b32.xlu0 %v1588, 40
      %v6402 = vpop.permute.xlu0 %6401
      %v6408 = vsel %vm2038, %v6209, 0
      %v6411 = vsel %vm2038, %v6210, 0
      %v6414 = vsel %vm2038, %v6211, 0
      %v6417 = vsel %vm2038, %v6212, 0
      %6419 = vmatprep.subr.bf16.mxu0 0
      %6420 = vmatpush1.bf16.msra.mxu0 0
      %6421 = vmatprep.subr.bf16.mxu0 0
      %6422 = vmatpush1.bf16.msra.mxu0 0
      %6423 = vmatprep.subr.bf16.mxu0 0
      %6424 = vmatpush1.bf16.msra.mxu0 0
      %6425 = vmatprep.subr.bf16.mxu0 0
      %6426 = vmatpush1.bf16.msra.mxu0 0
      %6427 = vmatprep.subr.bf16.mxu0 0
      %6428 = vmatpush1.bf16.msra.mxu0 %v6402
      %6429 = vmatprep.subr.bf16.mxu0 0
      %6430 = vmatpush1.bf16.msra.mxu0 %v6400
      %6431 = vmatprep.subr.bf16.mxu0 0
      %6432 = vmatpush1.bf16.msra.mxu0 %v6398
      %6433 = vmatprep.subr.bf16.mxu0 0
      %6434 = vmatpush1.bf16.msra.mxu0 %v6396
      %6435 = vmatprep.subr.bf16.mxu0 0
      %6436 = vmatpush2.bf16.msra.mxu0 0
      %6437 = vmatprep.subr.bf16.mxu0 0
      %6438 = vmatpush2.bf16.msra.mxu0 0
      %6439 = vmatprep.subr.bf16.mxu0 0
      %6440 = vmatpush2.bf16.msra.mxu0 0
      %6441 = vmatprep.subr.bf16.mxu0 0
      %6442 = vmatpush2.bf16.msra.mxu0 0
      %6443 = vmatprep.subr.bf16.mxu0 0
      %6444 = vmatpush2.bf16.msra.mxu0 0
      %6445 = vmatprep.subr.bf16.mxu0 0
      %6446 = vmatpush2.bf16.msra.mxu0 0
      %6447 = vmatprep.subr.bf16.mxu0 0
      %6448 = vmatpush2.bf16.msra.mxu0 0
      %6449 = vmatprep.subr.bf16.mxu0 0
      %6450 = vmatpush2.bf16.msra.mxu0 0
      %6451 = vmatprep.mubr.bf16.mxu0 0
      %6452 = vmatmul.mubr.bf16.gmra.mxu0 %v6408
      %v6453 = vpop.f32.mrf.mxu0
      %v6454 = vadd.f32 0.0, %v6453
      %v6455 = vpop.f32.mrf.mxu0
      %v6456 = vpop.f32.mrf.mxu0
      %v6457 = vadd.f32 0.0, %v6456
      %v6458 = vpop.f32.mrf.mxu0
      %6459 = vmatprep.mubr.bf16.mxu0 0
      %6460 = vmatmul.mubr.bf16.gmra.mxu0 %v6411
      %v6461 = vpop.f32.mrf.mxu0
      %v6462 = vadd.f32 0.0, %v6461
      %v6463 = vpop.f32.mrf.mxu0
      %v6464 = vpop.f32.mrf.mxu0
      %v6465 = vadd.f32 0.0, %v6464
      %v6466 = vpop.f32.mrf.mxu0
      %6467 = vmatprep.mubr.bf16.mxu0 0
      %6468 = vmatmul.mubr.bf16.gmra.mxu0 %v6414
      %v6469 = vpop.f32.mrf.mxu0
      %v6470 = vadd.f32 0.0, %v6469
      %v6471 = vpop.f32.mrf.mxu0
      %v6472 = vpop.f32.mrf.mxu0
      %v6473 = vadd.f32 0.0, %v6472
      %v6474 = vpop.f32.mrf.mxu0
      %6475 = vmatprep.mubr.bf16.mxu0 0
      %6476 = vmatmul.mubr.bf16.gmra.mxu0 %v6417
      %v6477 = vpop.f32.mrf.mxu0
      %v6478 = vadd.f32 0.0, %v6477
      %v6479 = vpop.f32.mrf.mxu0
      %v6480 = vpop.f32.mrf.mxu0
      %v6481 = vadd.f32 0.0, %v6480
      %v6482 = vpop.f32.mrf.mxu0
      %6483 = vdwg.mxu0
      %6484 = vrot.lane.b32.xlu0 %v1589, 40
      %v6485 = vpop.permute.xlu0 %6484
      %6486 = vrot.lane.b32.xlu0 %v1590, 40
      %v6487 = vpop.permute.xlu0 %6486
      %6488 = vrot.lane.b32.xlu0 %v1591, 40
      %v6489 = vpop.permute.xlu0 %6488
      %6490 = vrot.lane.b32.xlu0 %v1592, 40
      %v6491 = vpop.permute.xlu0 %6490
      %v6497 = vsel %vm2038, %v6213, 0
      %v6500 = vsel %vm2038, %v6214, 0
      %v6503 = vsel %vm2038, %v6215, 0
      %v6506 = vsel %vm2038, %v6216, 0
      %6508 = vmatprep.subr.bf16.mxu0 0
      %6509 = vmatpush1.bf16.msra.mxu0 0
      %6510 = vmatprep.subr.bf16.mxu0 0
      %6511 = vmatpush1.bf16.msra.mxu0 0
      %6512 = vmatprep.subr.bf16.mxu0 0
      %6513 = vmatpush1.bf16.msra.mxu0 0
      %6514 = vmatprep.subr.bf16.mxu0 0
      %6515 = vmatpush1.bf16.msra.mxu0 0
      %6516 = vmatprep.subr.bf16.mxu0 0
      %6517 = vmatpush1.bf16.msra.mxu0 %v6491
      %6518 = vmatprep.subr.bf16.mxu0 0
      %6519 = vmatpush1.bf16.msra.mxu0 %v6489
      %6520 = vmatprep.subr.bf16.mxu0 0
      %6521 = vmatpush1.bf16.msra.mxu0 %v6487
      %6522 = vmatprep.subr.bf16.mxu0 0
      %6523 = vmatpush1.bf16.msra.mxu0 %v6485
      %6524 = vmatprep.subr.bf16.mxu0 0
      %6525 = vmatpush2.bf16.msra.mxu0 0
      %6526 = vmatprep.subr.bf16.mxu0 0
      %6527 = vmatpush2.bf16.msra.mxu0 0
      %6528 = vmatprep.subr.bf16.mxu0 0
      %6529 = vmatpush2.bf16.msra.mxu0 0
      %6530 = vmatprep.subr.bf16.mxu0 0
      %6531 = vmatpush2.bf16.msra.mxu0 0
      %6532 = vmatprep.subr.bf16.mxu0 0
      %6533 = vmatpush2.bf16.msra.mxu0 0
      %6534 = vmatprep.subr.bf16.mxu0 0
      %6535 = vmatpush2.bf16.msra.mxu0 0
      %6536 = vmatprep.subr.bf16.mxu0 0
      %6537 = vmatpush2.bf16.msra.mxu0 0
      %6538 = vmatprep.subr.bf16.mxu0 0
      %6539 = vmatpush2.bf16.msra.mxu0 0
      %6540 = vmatprep.mubr.bf16.mxu0 0
      %6541 = vmatmul.mubr.bf16.gmra.mxu0 %v6497
      %v6542 = vpop.f32.mrf.mxu0
      %v6543 = vadd.f32 0.0, %v6542
      %v6544 = vpop.f32.mrf.mxu0
      %v6545 = vpop.f32.mrf.mxu0
      %v6546 = vadd.f32 0.0, %v6545
      %v6547 = vpop.f32.mrf.mxu0
      %6548 = vmatprep.mubr.bf16.mxu0 0
      %6549 = vmatmul.mubr.bf16.gmra.mxu0 %v6500
      %v6550 = vpop.f32.mrf.mxu0
      %v6551 = vadd.f32 0.0, %v6550
      %v6552 = vpop.f32.mrf.mxu0
      %v6553 = vpop.f32.mrf.mxu0
      %v6554 = vadd.f32 0.0, %v6553
      %v6555 = vpop.f32.mrf.mxu0
      %6556 = vmatprep.mubr.bf16.mxu0 0
      %6557 = vmatmul.mubr.bf16.gmra.mxu0 %v6503
      %v6558 = vpop.f32.mrf.mxu0
      %v6559 = vadd.f32 0.0, %v6558
      %v6560 = vpop.f32.mrf.mxu0
      %v6561 = vpop.f32.mrf.mxu0
      %v6562 = vadd.f32 0.0, %v6561
      %v6563 = vpop.f32.mrf.mxu0
      %6564 = vmatprep.mubr.bf16.mxu0 0
      %6565 = vmatmul.mubr.bf16.gmra.mxu0 %v6506
      %v6566 = vpop.f32.mrf.mxu0
      %v6567 = vadd.f32 0.0, %v6566
      %v6568 = vpop.f32.mrf.mxu0
      %v6569 = vpop.f32.mrf.mxu0
      %v6570 = vadd.f32 0.0, %v6569
      %v6571 = vpop.f32.mrf.mxu0
      %6572 = vdwg.mxu0
      %6605 = vrot.lane.b32.xlu0 %v6276, 24
      %v6606 = vpop.permute.xlu0 %6605
      %6607 = vrot.lane.b32.xlu0 %v6279, 24
      %v6608 = vpop.permute.xlu0 %6607
      %6609 = vrot.lane.b32.xlu0 %v6284, 24
      %v6610 = vpop.permute.xlu0 %6609
      %6611 = vrot.lane.b32.xlu0 %v6287, 24
      %v6612 = vpop.permute.xlu0 %6611
      %6613 = vrot.lane.b32.xlu0 %v6292, 24
      %v6614 = vpop.permute.xlu0 %6613
      %6615 = vrot.lane.b32.xlu0 %v6295, 24
      %v6616 = vpop.permute.xlu0 %6615
      %6617 = vrot.lane.b32.xlu0 %v6300, 24
      %v6618 = vpop.permute.xlu0 %6617
      %6619 = vrot.lane.b32.xlu0 %v6303, 24
      %v6620 = vpop.permute.xlu0 %6619
      %6621 = vrot.lane.b32.xlu0 %v6365, 24
      %v6622 = vpop.permute.xlu0 %6621
      %6623 = vrot.lane.b32.xlu0 %v6368, 24
      %v6624 = vpop.permute.xlu0 %6623
      %6625 = vrot.lane.b32.xlu0 %v6373, 24
      %v6626 = vpop.permute.xlu0 %6625
      %6627 = vrot.lane.b32.xlu0 %v6376, 24
      %v6628 = vpop.permute.xlu0 %6627
      %6629 = vrot.lane.b32.xlu0 %v6381, 24
      %v6630 = vpop.permute.xlu0 %6629
      %6631 = vrot.lane.b32.xlu0 %v6384, 24
      %v6632 = vpop.permute.xlu0 %6631
      %6633 = vrot.lane.b32.xlu0 %v6389, 24
      %v6634 = vpop.permute.xlu0 %6633
      %6635 = vrot.lane.b32.xlu0 %v6392, 24
      %v6636 = vpop.permute.xlu0 %6635
      %6637 = vrot.lane.b32.xlu0 %v6454, 24
      %v6638 = vpop.permute.xlu0 %6637
      %6639 = vrot.lane.b32.xlu0 %v6457, 24
      %v6640 = vpop.permute.xlu0 %6639
      %6641 = vrot.lane.b32.xlu0 %v6462, 24
      %v6642 = vpop.permute.xlu0 %6641
      %6643 = vrot.lane.b32.xlu0 %v6465, 24
      %v6644 = vpop.permute.xlu0 %6643
      %6645 = vrot.lane.b32.xlu0 %v6470, 24
      %v6646 = vpop.permute.xlu0 %6645
      %6647 = vrot.lane.b32.xlu0 %v6473, 24
      %v6648 = vpop.permute.xlu0 %6647
      %6649 = vrot.lane.b32.xlu0 %v6478, 24
      %v6650 = vpop.permute.xlu0 %6649
      %6651 = vrot.lane.b32.xlu0 %v6481, 24
      %v6652 = vpop.permute.xlu0 %6651
      %6653 = vrot.lane.b32.xlu0 %v6543, 24
      %v6654 = vpop.permute.xlu0 %6653
      %6655 = vrot.lane.b32.xlu0 %v6546, 24
      %v6656 = vpop.permute.xlu0 %6655
      %6657 = vrot.lane.b32.xlu0 %v6551, 24
      %v6658 = vpop.permute.xlu0 %6657
      %6659 = vrot.lane.b32.xlu0 %v6554, 24
      %v6660 = vpop.permute.xlu0 %6659
      %6661 = vrot.lane.b32.xlu0 %v6559, 24
      %v6662 = vpop.permute.xlu0 %6661
      %6663 = vrot.lane.b32.xlu0 %v6562, 24
      %v6664 = vpop.permute.xlu0 %6663
      %6665 = vrot.lane.b32.xlu0 %v6567, 24
      %v6666 = vpop.permute.xlu0 %6665
      %6667 = vrot.lane.b32.xlu0 %v6570, 24
      %v6668 = vpop.permute.xlu0 %6667
      %vm6701 = vcmask 261312
      %6702 = vst.msk [vmem:[#allocation2] sm:$0xff] %vm6701, %v6606
      %6703 = vst.msk [vmem:[#allocation2 + $0x8] sm:$0xff] %vm6701, %v6608
      %6704 = vst.msk [vmem:[#allocation2 + $0x10] sm:$0xff] %vm6701, %v6610
      %6705 = vst.msk [vmem:[#allocation2 + $0x18] sm:$0xff] %vm6701, %v6612
      %6706 = vst.msk [vmem:[#allocation2 + $0x20] sm:$0xff] %vm6701, %v6614
      %6707 = vst.msk [vmem:[#allocation2 + $0x28] sm:$0xff] %vm6701, %v6616
      %6708 = vst.msk [vmem:[#allocation2 + $0x30] sm:$0xff] %vm6701, %v6618
      %6709 = vst.msk [vmem:[#allocation2 + $0x38] sm:$0xff] %vm6701, %v6620
      %6710 = vst.msk [vmem:[#allocation2 + $0x40] sm:$0xff] %vm6701, %v6622
      %6711 = vst.msk [vmem:[#allocation2 + $0x48] sm:$0xff] %vm6701, %v6624
      %6712 = vst.msk [vmem:[#allocation2 + $0x50] sm:$0xff] %vm6701, %v6626
      %6713 = vst.msk [vmem:[#allocation2 + $0x58] sm:$0xff] %vm6701, %v6628
      %6714 = vst.msk [vmem:[#allocation2 + $0x60] sm:$0xff] %vm6701, %v6630
      %6715 = vst.msk [vmem:[#allocation2 + $0x68] sm:$0xff] %vm6701, %v6632
      %6716 = vst.msk [vmem:[#allocation2 + $0x70] sm:$0xff] %vm6701, %v6634
      %6717 = vst.msk [vmem:[#allocation2 + $0x78] sm:$0xff] %vm6701, %v6636
      %6718 = vst.msk [vmem:[#allocation2 + $0x80] sm:$0xff] %vm6701, %v6638
      %6719 = vst.msk [vmem:[#allocation2 + $0x88] sm:$0xff] %vm6701, %v6640
      %6720 = vst.msk [vmem:[#allocation2 + $0x90] sm:$0xff] %vm6701, %v6642
      %6721 = vst.msk [vmem:[#allocation2 + $0x98] sm:$0xff] %vm6701, %v6644
      %6722 = vst.msk [vmem:[#allocation2 + $0xa0] sm:$0xff] %vm6701, %v6646
      %6723 = vst.msk [vmem:[#allocation2 + $0xa8] sm:$0xff] %vm6701, %v6648
      %6724 = vst.msk [vmem:[#allocation2 + $0xb0] sm:$0xff] %vm6701, %v6650
      %6725 = vst.msk [vmem:[#allocation2 + $0xb8] sm:$0xff] %vm6701, %v6652
      %6726 = vst.msk [vmem:[#allocation2 + $0xc0] sm:$0xff] %vm6701, %v6654
      %6727 = vst.msk [vmem:[#allocation2 + $0xc8] sm:$0xff] %vm6701, %v6656
      %6728 = vst.msk [vmem:[#allocation2 + $0xd0] sm:$0xff] %vm6701, %v6658
      %6729 = vst.msk [vmem:[#allocation2 + $0xd8] sm:$0xff] %vm6701, %v6660
      %6730 = vst.msk [vmem:[#allocation2 + $0xe0] sm:$0xff] %vm6701, %v6662
      %6731 = vst.msk [vmem:[#allocation2 + $0xe8] sm:$0xff] %vm6701, %v6664
      %6732 = vst.msk [vmem:[#allocation2 + $0xf0] sm:$0xff] %vm6701, %v6666
      %6733 = vst.msk [vmem:[#allocation2 + $0xf8] sm:$0xff] %vm6701, %v6668
      %v6734 = vld [vmem:[#allocation2] sm:$0xff]
      %v6735 = vld [vmem:[#allocation2 + $0x8] sm:$0xff]
      %v6736 = vld [vmem:[#allocation2 + $0x10] sm:$0xff]
      %v6737 = vld [vmem:[#allocation2 + $0x18] sm:$0xff]
      %v6738 = vld [vmem:[#allocation2 + $0x20] sm:$0xff]
      %v6739 = vld [vmem:[#allocation2 + $0x28] sm:$0xff]
      %v6740 = vld [vmem:[#allocation2 + $0x30] sm:$0xff]
      %v6741 = vld [vmem:[#allocation2 + $0x38] sm:$0xff]
      %v6742 = vld [vmem:[#allocation2 + $0x40] sm:$0xff]
      %v6743 = vld [vmem:[#allocation2 + $0x48] sm:$0xff]
      %v6744 = vld [vmem:[#allocation2 + $0x50] sm:$0xff]
      %v6745 = vld [vmem:[#allocation2 + $0x58] sm:$0xff]
      %v6746 = vld [vmem:[#allocation2 + $0x60] sm:$0xff]
      %v6747 = vld [vmem:[#allocation2 + $0x68] sm:$0xff]
      %v6748 = vld [vmem:[#allocation2 + $0x70] sm:$0xff]
      %v6749 = vld [vmem:[#allocation2 + $0x78] sm:$0xff]
      %v6750 = vld [vmem:[#allocation2 + $0x80] sm:$0xff]
      %v6751 = vld [vmem:[#allocation2 + $0x88] sm:$0xff]
      %v6752 = vld [vmem:[#allocation2 + $0x90] sm:$0xff]
      %v6753 = vld [vmem:[#allocation2 + $0x98] sm:$0xff]
      %v6754 = vld [vmem:[#allocation2 + $0xa0] sm:$0xff]
      %v6755 = vld [vmem:[#allocation2 + $0xa8] sm:$0xff]
      %v6756 = vld [vmem:[#allocation2 + $0xb0] sm:$0xff]
      %v6757 = vld [vmem:[#allocation2 + $0xb8] sm:$0xff]
      %v6758 = vld [vmem:[#allocation2 + $0xc0] sm:$0xff]
      %v6759 = vld [vmem:[#allocation2 + $0xc8] sm:$0xff]
      %v6760 = vld [vmem:[#allocation2 + $0xd0] sm:$0xff]
      %v6761 = vld [vmem:[#allocation2 + $0xd8] sm:$0xff]
      %v6762 = vld [vmem:[#allocation2 + $0xe0] sm:$0xff]
      %v6763 = vld [vmem:[#allocation2 + $0xe8] sm:$0xff]
      %v6764 = vld [vmem:[#allocation2 + $0xf0] sm:$0xff]
      %v6765 = vld [vmem:[#allocation2 + $0xf8] sm:$0xff]
      %v6766 = vpack.c.bf16 %v6735, %v6734
      %v6767 = vpack.c.bf16 %v6737, %v6736
      %v6768 = vpack.c.bf16 %v6739, %v6738
      %v6769 = vpack.c.bf16 %v6741, %v6740
      %v6770 = vpack.c.bf16 %v6743, %v6742
      %v6771 = vpack.c.bf16 %v6745, %v6744
      %v6772 = vpack.c.bf16 %v6747, %v6746
      %v6773 = vpack.c.bf16 %v6749, %v6748
      %v6774 = vpack.c.bf16 %v6751, %v6750
      %v6775 = vpack.c.bf16 %v6753, %v6752
      %v6776 = vpack.c.bf16 %v6755, %v6754
      %v6777 = vpack.c.bf16 %v6757, %v6756
      %v6778 = vpack.c.bf16 %v6759, %v6758
      %v6779 = vpack.c.bf16 %v6761, %v6760
      %v6780 = vpack.c.bf16 %v6763, %v6762
      %v6781 = vpack.c.bf16 %v6765, %v6764
      %v6782 = vld [vmem:[%s694] sm:$0xf]
      %v6783 = vld [vmem:[%s694 + $0x4] sm:$0xf]
      %v6784 = vld [vmem:[%s694 + $0x8] sm:$0xf]
      %v6785 = vld [vmem:[%s694 + $0xc] sm:$0xf]
      %v6786 = vld [vmem:[%s697] sm:$0x1]
      %v6788 = vlaneseq
      %v6789 = vshrl.u32 %v6788, 7
      %v6790 = vsub.s32 0, %v6789
      %v6791 = vrot.slane %v6786, %v6790
      %v6797 = vunpack.c.l.b16 %v6782
      %v6798 = vunpack.c.l.b16 %v6783
      %v6799 = vunpack.c.l.b16 %v6784
      %v6800 = vunpack.c.l.b16 %v6785
      %v6801 = vpack.c.b16 %v6798, %v6797
      %v6802 = vpack.c.b16 %v6800, %v6799
      %v6806 = vsel %vm835, %v6766, 0
      %v6809 = vsel %vm835, %v6767, 0
      %v6812 = vsel %vm835, %v6768, 0
      %v6815 = vsel %vm835, %v6769, 0
      %v6818 = vsel %vm835, %v6770, 0
      %v6821 = vsel %vm835, %v6771, 0
      %v6824 = vsel %vm835, %v6772, 0
      %v6827 = vsel %vm835, %v6773, 0
      %v6830 = vsel %vm835, %v6774, 0
      %v6833 = vsel %vm835, %v6775, 0
      %v6836 = vsel %vm835, %v6776, 0
      %v6839 = vsel %vm835, %v6777, 0
      %v6842 = vsel %vm835, %v6778, 0
      %v6845 = vsel %vm835, %v6779, 0
      %v6848 = vsel %vm835, %v6780, 0
      %v6851 = vsel %vm835, %v6781, 0
      %6853 = vmatprep.subr.bf16.mxu0 0
      %6854 = vmatpush1.bf16.msra.mxu0 0
      %6855 = vmatprep.subr.bf16.mxu0 0
      %6856 = vmatpush1.bf16.msra.mxu0 0
      %6857 = vmatprep.subr.bf16.mxu0 0
      %6858 = vmatpush1.bf16.msra.mxu0 0
      %6859 = vmatprep.subr.bf16.mxu0 0
      %6860 = vmatpush1.bf16.msra.mxu0 0
      %6861 = vmatprep.subr.bf16.mxu0 0
      %6862 = vmatpush1.bf16.msra.mxu0 0
      %6863 = vmatprep.subr.bf16.mxu0 0
      %6864 = vmatpush1.bf16.msra.mxu0 0
      %6865 = vmatprep.subr.bf16.mxu0 0
      %6866 = vmatpush1.bf16.msra.mxu0 %v6802
      %6867 = vmatprep.subr.bf16.mxu0 0
      %6868 = vmatpush1.bf16.msra.mxu0 %v6801
      %6869 = vmatprep.subr.bf16.mxu0 0
      %6870 = vmatpush2.bf16.msra.mxu0 0
      %6871 = vmatprep.subr.bf16.mxu0 0
      %6872 = vmatpush2.bf16.msra.mxu0 0
      %6873 = vmatprep.subr.bf16.mxu0 0
      %6874 = vmatpush2.bf16.msra.mxu0 0
      %6875 = vmatprep.subr.bf16.mxu0 0
      %6876 = vmatpush2.bf16.msra.mxu0 0
      %6877 = vmatprep.subr.bf16.mxu0 0
      %6878 = vmatpush2.bf16.msra.mxu0 0
      %6879 = vmatprep.subr.bf16.mxu0 0
      %6880 = vmatpush2.bf16.msra.mxu0 0
      %6881 = vmatprep.subr.bf16.mxu0 0
      %6882 = vmatpush2.bf16.msra.mxu0 0
      %6883 = vmatprep.subr.bf16.mxu0 0
      %6884 = vmatpush2.bf16.msra.mxu0 0
      %6885 = vmatprep.mubr.bf16.mxu0 0
      %6886 = vmatmul.mubr.bf16.gmra.mxu0 %v6806
      %v6887 = vpop.f32.mrf.mxu0
      %v6888 = vadd.f32 %v6791, %v6887
      %v6889 = vpop.f32.mrf.mxu0
      %v6890 = vpop.f32.mrf.mxu0
      %v6891 = vadd.f32 %v6791, %v6890
      %v6892 = vpop.f32.mrf.mxu0
      %6893 = vmatprep.mubr.bf16.mxu0 0
      %6894 = vmatmul.mubr.bf16.gmra.mxu0 %v6809
      %v6895 = vpop.f32.mrf.mxu0
      %v6896 = vadd.f32 %v6791, %v6895
      %v6897 = vpop.f32.mrf.mxu0
      %v6898 = vpop.f32.mrf.mxu0
      %v6899 = vadd.f32 %v6791, %v6898
      %v6900 = vpop.f32.mrf.mxu0
      %6901 = vmatprep.mubr.bf16.mxu0 0
      %6902 = vmatmul.mubr.bf16.gmra.mxu0 %v6812
      %v6903 = vpop.f32.mrf.mxu0
      %v6904 = vadd.f32 %v6791, %v6903
      %v6905 = vpop.f32.mrf.mxu0
      %v6906 = vpop.f32.mrf.mxu0
      %v6907 = vadd.f32 %v6791, %v6906
      %v6908 = vpop.f32.mrf.mxu0
      %6909 = vmatprep.mubr.bf16.mxu0 0
      %6910 = vmatmul.mubr.bf16.gmra.mxu0 %v6815
      %v6911 = vpop.f32.mrf.mxu0
      %v6912 = vadd.f32 %v6791, %v6911
      %v6913 = vpop.f32.mrf.mxu0
      %v6914 = vpop.f32.mrf.mxu0
      %v6915 = vadd.f32 %v6791, %v6914
      %v6916 = vpop.f32.mrf.mxu0
      %6917 = vmatprep.mubr.bf16.mxu0 0
      %6918 = vmatmul.mubr.bf16.gmra.mxu0 %v6818
      %v6919 = vpop.f32.mrf.mxu0
      %v6920 = vadd.f32 %v6791, %v6919
      %v6921 = vpop.f32.mrf.mxu0
      %v6922 = vpop.f32.mrf.mxu0
      %v6923 = vadd.f32 %v6791, %v6922
      %v6924 = vpop.f32.mrf.mxu0
      %6925 = vmatprep.mubr.bf16.mxu0 0
      %6926 = vmatmul.mubr.bf16.gmra.mxu0 %v6821
      %v6927 = vpop.f32.mrf.mxu0
      %v6928 = vadd.f32 %v6791, %v6927
      %v6929 = vpop.f32.mrf.mxu0
      %v6930 = vpop.f32.mrf.mxu0
      %v6931 = vadd.f32 %v6791, %v6930
      %v6932 = vpop.f32.mrf.mxu0
      %6933 = vmatprep.mubr.bf16.mxu0 0
      %6934 = vmatmul.mubr.bf16.gmra.mxu0 %v6824
      %v6935 = vpop.f32.mrf.mxu0
      %v6936 = vadd.f32 %v6791, %v6935
      %v6937 = vpop.f32.mrf.mxu0
      %v6938 = vpop.f32.mrf.mxu0
      %v6939 = vadd.f32 %v6791, %v6938
      %v6940 = vpop.f32.mrf.mxu0
      %6941 = vmatprep.mubr.bf16.mxu0 0
      %6942 = vmatmul.mubr.bf16.gmra.mxu0 %v6827
      %v6943 = vpop.f32.mrf.mxu0
      %v6944 = vadd.f32 %v6791, %v6943
      %v6945 = vpop.f32.mrf.mxu0
      %v6946 = vpop.f32.mrf.mxu0
      %v6947 = vadd.f32 %v6791, %v6946
      %v6948 = vpop.f32.mrf.mxu0
      %6949 = vmatprep.mubr.bf16.mxu0 0
      %6950 = vmatmul.mubr.bf16.gmra.mxu0 %v6830
      %v6951 = vpop.f32.mrf.mxu0
      %v6952 = vadd.f32 %v6791, %v6951
      %v6953 = vpop.f32.mrf.mxu0
      %v6954 = vpop.f32.mrf.mxu0
      %v6955 = vadd.f32 %v6791, %v6954
      %v6956 = vpop.f32.mrf.mxu0
      %6957 = vmatprep.mubr.bf16.mxu0 0
      %6958 = vmatmul.mubr.bf16.gmra.mxu0 %v6833
      %v6959 = vpop.f32.mrf.mxu0
      %v6960 = vadd.f32 %v6791, %v6959
      %v6961 = vpop.f32.mrf.mxu0
      %v6962 = vpop.f32.mrf.mxu0
      %v6963 = vadd.f32 %v6791, %v6962
      %v6964 = vpop.f32.mrf.mxu0
      %6965 = vmatprep.mubr.bf16.mxu0 0
      %6966 = vmatmul.mubr.bf16.gmra.mxu0 %v6836
      %v6967 = vpop.f32.mrf.mxu0
      %v6968 = vadd.f32 %v6791, %v6967
      %v6969 = vpop.f32.mrf.mxu0
      %v6970 = vpop.f32.mrf.mxu0
      %v6971 = vadd.f32 %v6791, %v6970
      %v6972 = vpop.f32.mrf.mxu0
      %6973 = vmatprep.mubr.bf16.mxu0 0
      %6974 = vmatmul.mubr.bf16.gmra.mxu0 %v6839
      %v6975 = vpop.f32.mrf.mxu0
      %v6976 = vadd.f32 %v6791, %v6975
      %v6977 = vpop.f32.mrf.mxu0
      %v6978 = vpop.f32.mrf.mxu0
      %v6979 = vadd.f32 %v6791, %v6978
      %v6980 = vpop.f32.mrf.mxu0
      %6981 = vmatprep.mubr.bf16.mxu0 0
      %6982 = vmatmul.mubr.bf16.gmra.mxu0 %v6842
      %v6983 = vpop.f32.mrf.mxu0
      %v6984 = vadd.f32 %v6791, %v6983
      %v6985 = vpop.f32.mrf.mxu0
      %v6986 = vpop.f32.mrf.mxu0
      %v6987 = vadd.f32 %v6791, %v6986
      %v6988 = vpop.f32.mrf.mxu0
      %6989 = vmatprep.mubr.bf16.mxu0 0
      %6990 = vmatmul.mubr.bf16.gmra.mxu0 %v6845
      %v6991 = vpop.f32.mrf.mxu0
      %v6992 = vadd.f32 %v6791, %v6991
      %v6993 = vpop.f32.mrf.mxu0
      %v6994 = vpop.f32.mrf.mxu0
      %v6995 = vadd.f32 %v6791, %v6994
      %v6996 = vpop.f32.mrf.mxu0
      %6997 = vmatprep.mubr.bf16.mxu0 0
      %6998 = vmatmul.mubr.bf16.gmra.mxu0 %v6848
      %v6999 = vpop.f32.mrf.mxu0
      %v7000 = vadd.f32 %v6791, %v6999
      %v7001 = vpop.f32.mrf.mxu0
      %v7002 = vpop.f32.mrf.mxu0
      %v7003 = vadd.f32 %v6791, %v7002
      %v7004 = vpop.f32.mrf.mxu0
      %7005 = vmatprep.mubr.bf16.mxu0 0
      %7006 = vmatmul.mubr.bf16.gmra.mxu0 %v6851
      %v7007 = vpop.f32.mrf.mxu0
      %v7008 = vadd.f32 %v6791, %v7007
      %v7009 = vpop.f32.mrf.mxu0
      %v7010 = vpop.f32.mrf.mxu0
      %v7011 = vadd.f32 %v6791, %v7010
      %v7012 = vpop.f32.mrf.mxu0
      %7013 = vdwg.mxu0
      %v7014 = vadd.f32 %v801, %v6888
      %v7015 = vadd.f32 %v802, %v6891
      %v7016 = vadd.f32 %v803, %v6896
      %v7017 = vadd.f32 %v804, %v6899
      %v7018 = vadd.f32 %v805, %v6904
      %v7019 = vadd.f32 %v806, %v6907
      %v7020 = vadd.f32 %v807, %v6912
      %v7021 = vadd.f32 %v808, %v6915
      %v7022 = vadd.f32 %v809, %v6920
      %v7023 = vadd.f32 %v810, %v6923
      %v7024 = vadd.f32 %v811, %v6928
      %v7025 = vadd.f32 %v812, %v6931
      %v7026 = vadd.f32 %v813, %v6936
      %v7027 = vadd.f32 %v814, %v6939
      %v7028 = vadd.f32 %v815, %v6944
      %v7029 = vadd.f32 %v816, %v6947
      %v7030 = vadd.f32 %v817, %v6952
      %v7031 = vadd.f32 %v818, %v6955
      %v7032 = vadd.f32 %v819, %v6960
      %v7033 = vadd.f32 %v820, %v6963
      %v7034 = vadd.f32 %v821, %v6968
      %v7035 = vadd.f32 %v822, %v6971
      %v7036 = vadd.f32 %v823, %v6976
      %v7037 = vadd.f32 %v824, %v6979
      %v7038 = vadd.f32 %v825, %v6984
      %v7039 = vadd.f32 %v826, %v6987
      %v7040 = vadd.f32 %v827, %v6992
      %v7041 = vadd.f32 %v828, %v6995
      %v7042 = vadd.f32 %v829, %v7000
      %v7043 = vadd.f32 %v830, %v7003
      %v7044 = vadd.f32 %v831, %v7008
      %v7045 = vadd.f32 %v832, %v7011
      %v7046 = vld [vmem:[%s700] sm:$0x1]
      %v7047 = vld [vmem:[%s703] sm:$0x1]
      %v7048 = vsel %vm835, %v7014, 0.0
      %7049 = vadd.xlane.f32.xlu0 %v7048
      %v7050 = vpop.xlane.xlu0 %7049
      %v7051 = vsel %vm835, %v7015, 0.0
      %7052 = vadd.xlane.f32.xlu0 %v7051
      %v7053 = vpop.xlane.xlu0 %7052
      %v7054 = vsel %vm835, %v7016, 0.0
      %7055 = vadd.xlane.f32.xlu0 %v7054
      %v7056 = vpop.xlane.xlu0 %7055
      %v7057 = vsel %vm835, %v7017, 0.0
      %7058 = vadd.xlane.f32.xlu0 %v7057
      %v7059 = vpop.xlane.xlu0 %7058
      %v7060 = vsel %vm835, %v7018, 0.0
      %7061 = vadd.xlane.f32.xlu0 %v7060
      %v7062 = vpop.xlane.xlu0 %7061
      %v7063 = vsel %vm835, %v7019, 0.0
      %7064 = vadd.xlane.f32.xlu0 %v7063
      %v7065 = vpop.xlane.xlu0 %7064
      %v7066 = vsel %vm835, %v7020, 0.0
      %7067 = vadd.xlane.f32.xlu0 %v7066
      %v7068 = vpop.xlane.xlu0 %7067
      %v7069 = vsel %vm835, %v7021, 0.0
      %7070 = vadd.xlane.f32.xlu0 %v7069
      %v7071 = vpop.xlane.xlu0 %7070
      %v7072 = vsel %vm835, %v7022, 0.0
      %7073 = vadd.xlane.f32.xlu0 %v7072
      %v7074 = vpop.xlane.xlu0 %7073
      %v7075 = vsel %vm835, %v7023, 0.0
      %7076 = vadd.xlane.f32.xlu0 %v7075
      %v7077 = vpop.xlane.xlu0 %7076
      %v7078 = vsel %vm835, %v7024, 0.0
      %7079 = vadd.xlane.f32.xlu0 %v7078
      %v7080 = vpop.xlane.xlu0 %7079
      %v7081 = vsel %vm835, %v7025, 0.0
      %7082 = vadd.xlane.f32.xlu0 %v7081
      %v7083 = vpop.xlane.xlu0 %7082
      %v7084 = vsel %vm835, %v7026, 0.0
      %7085 = vadd.xlane.f32.xlu0 %v7084
      %v7086 = vpop.xlane.xlu0 %7085
      %v7087 = vsel %vm835, %v7027, 0.0
      %7088 = vadd.xlane.f32.xlu0 %v7087
      %v7089 = vpop.xlane.xlu0 %7088
      %v7090 = vsel %vm835, %v7028, 0.0
      %7091 = vadd.xlane.f32.xlu0 %v7090
      %v7092 = vpop.xlane.xlu0 %7091
      %v7093 = vsel %vm835, %v7029, 0.0
      %7094 = vadd.xlane.f32.xlu0 %v7093
      %v7095 = vpop.xlane.xlu0 %7094
      %v7096 = vsel %vm835, %v7030, 0.0
      %7097 = vadd.xlane.f32.xlu0 %v7096
      %v7098 = vpop.xlane.xlu0 %7097
      %v7099 = vsel %vm835, %v7031, 0.0
      %7100 = vadd.xlane.f32.xlu0 %v7099
      %v7101 = vpop.xlane.xlu0 %7100
      %v7102 = vsel %vm835, %v7032, 0.0
      %7103 = vadd.xlane.f32.xlu0 %v7102
      %v7104 = vpop.xlane.xlu0 %7103
      %v7105 = vsel %vm835, %v7033, 0.0
      %7106 = vadd.xlane.f32.xlu0 %v7105
      %v7107 = vpop.xlane.xlu0 %7106
      %v7108 = vsel %vm835, %v7034, 0.0
      %7109 = vadd.xlane.f32.xlu0 %v7108
      %v7110 = vpop.xlane.xlu0 %7109
      %v7111 = vsel %vm835, %v7035, 0.0
      %7112 = vadd.xlane.f32.xlu0 %v7111
      %v7113 = vpop.xlane.xlu0 %7112
      %v7114 = vsel %vm835, %v7036, 0.0
      %7115 = vadd.xlane.f32.xlu0 %v7114
      %v7116 = vpop.xlane.xlu0 %7115
      %v7117 = vsel %vm835, %v7037, 0.0
      %7118 = vadd.xlane.f32.xlu0 %v7117
      %v7119 = vpop.xlane.xlu0 %7118
      %v7120 = vsel %vm835, %v7038, 0.0
      %7121 = vadd.xlane.f32.xlu0 %v7120
      %v7122 = vpop.xlane.xlu0 %7121
      %v7123 = vsel %vm835, %v7039, 0.0
      %7124 = vadd.xlane.f32.xlu0 %v7123
      %v7125 = vpop.xlane.xlu0 %7124
      %v7126 = vsel %vm835, %v7040, 0.0
      %7127 = vadd.xlane.f32.xlu0 %v7126
      %v7128 = vpop.xlane.xlu0 %7127
      %v7129 = vsel %vm835, %v7041, 0.0
      %7130 = vadd.xlane.f32.xlu0 %v7129
      %v7131 = vpop.xlane.xlu0 %7130
      %v7132 = vsel %vm835, %v7042, 0.0
      %7133 = vadd.xlane.f32.xlu0 %v7132
      %v7134 = vpop.xlane.xlu0 %7133
      %v7135 = vsel %vm835, %v7043, 0.0
      %7136 = vadd.xlane.f32.xlu0 %v7135
      %v7137 = vpop.xlane.xlu0 %7136
      %v7138 = vsel %vm835, %v7044, 0.0
      %7139 = vadd.xlane.f32.xlu0 %v7138
      %v7140 = vpop.xlane.xlu0 %7139
      %v7141 = vsel %vm835, %v7045, 0.0
      %7142 = vadd.xlane.f32.xlu0 %v7141
      %v7143 = vpop.xlane.xlu0 %7142
      %v7144 = vmul.f32 %v7050, %v932
      %v7145 = vmul.f32 %v7053, %v932
      %v7146 = vmul.f32 %v7056, %v932
      %v7147 = vmul.f32 %v7059, %v932
      %v7148 = vmul.f32 %v7062, %v932
      %v7149 = vmul.f32 %v7065, %v932
      %v7150 = vmul.f32 %v7068, %v932
      %v7151 = vmul.f32 %v7071, %v932
      %v7152 = vmul.f32 %v7074, %v932
      %v7153 = vmul.f32 %v7077, %v932
      %v7154 = vmul.f32 %v7080, %v932
      %v7155 = vmul.f32 %v7083, %v932
      %v7156 = vmul.f32 %v7086, %v932
      %v7157 = vmul.f32 %v7089, %v932
      %v7158 = vmul.f32 %v7092, %v932
      %v7159 = vmul.f32 %v7095, %v932
      %v7160 = vmul.f32 %v7098, %v932
      %v7161 = vmul.f32 %v7101, %v932
      %v7162 = vmul.f32 %v7104, %v932
      %v7163 = vmul.f32 %v7107, %v932
      %v7164 = vmul.f32 %v7110, %v932
      %v7165 = vmul.f32 %v7113, %v932
      %v7166 = vmul.f32 %v7116, %v932
      %v7167 = vmul.f32 %v7119, %v932
      %v7168 = vmul.f32 %v7122, %v932
      %v7169 = vmul.f32 %v7125, %v932
      %v7170 = vmul.f32 %v7128, %v932
      %v7171 = vmul.f32 %v7131, %v932
      %v7172 = vmul.f32 %v7134, %v932
      %v7173 = vmul.f32 %v7137, %v932
      %v7174 = vmul.f32 %v7140, %v932
      %v7175 = vmul.f32 %v7143, %v932
      %v7176 = vsub.f32 %v7014, %v7144
      %v7177 = vsub.f32 %v7015, %v7145
      %v7178 = vsub.f32 %v7016, %v7146
      %v7179 = vsub.f32 %v7017, %v7147
      %v7180 = vsub.f32 %v7018, %v7148
      %v7181 = vsub.f32 %v7019, %v7149
      %v7182 = vsub.f32 %v7020, %v7150
      %v7183 = vsub.f32 %v7021, %v7151
      %v7184 = vsub.f32 %v7022, %v7152
      %v7185 = vsub.f32 %v7023, %v7153
      %v7186 = vsub.f32 %v7024, %v7154
      %v7187 = vsub.f32 %v7025, %v7155
      %v7188 = vsub.f32 %v7026, %v7156
      %v7189 = vsub.f32 %v7027, %v7157
      %v7190 = vsub.f32 %v7028, %v7158
      %v7191 = vsub.f32 %v7029, %v7159
      %v7192 = vsub.f32 %v7030, %v7160
      %v7193 = vsub.f32 %v7031, %v7161
      %v7194 = vsub.f32 %v7032, %v7162
      %v7195 = vsub.f32 %v7033, %v7163
      %v7196 = vsub.f32 %v7034, %v7164
      %v7197 = vsub.f32 %v7035, %v7165
      %v7198 = vsub.f32 %v7036, %v7166
      %v7199 = vsub.f32 %v7037, %v7167
      %v7200 = vsub.f32 %v7038, %v7168
      %v7201 = vsub.f32 %v7039, %v7169
      %v7202 = vsub.f32 %v7040, %v7170
      %v7203 = vsub.f32 %v7041, %v7171
      %v7204 = vsub.f32 %v7042, %v7172
      %v7205 = vsub.f32 %v7043, %v7173
      %v7206 = vsub.f32 %v7044, %v7174
      %v7207 = vsub.f32 %v7045, %v7175
      %v7208 = vmul.f32 %v7176, %v7176
      %v7209 = vmul.f32 %v7177, %v7177
      %v7210 = vmul.f32 %v7178, %v7178
      %v7211 = vmul.f32 %v7179, %v7179
      %v7212 = vmul.f32 %v7180, %v7180
      %v7213 = vmul.f32 %v7181, %v7181
      %v7214 = vmul.f32 %v7182, %v7182
      %v7215 = vmul.f32 %v7183, %v7183
      %v7216 = vmul.f32 %v7184, %v7184
      %v7217 = vmul.f32 %v7185, %v7185
      %v7218 = vmul.f32 %v7186, %v7186
      %v7219 = vmul.f32 %v7187, %v7187
      %v7220 = vmul.f32 %v7188, %v7188
      %v7221 = vmul.f32 %v7189, %v7189
      %v7222 = vmul.f32 %v7190, %v7190
      %v7223 = vmul.f32 %v7191, %v7191
      %v7224 = vmul.f32 %v7192, %v7192
      %v7225 = vmul.f32 %v7193, %v7193
      %v7226 = vmul.f32 %v7194, %v7194
      %v7227 = vmul.f32 %v7195, %v7195
      %v7228 = vmul.f32 %v7196, %v7196
      %v7229 = vmul.f32 %v7197, %v7197
      %v7230 = vmul.f32 %v7198, %v7198
      %v7231 = vmul.f32 %v7199, %v7199
      %v7232 = vmul.f32 %v7200, %v7200
      %v7233 = vmul.f32 %v7201, %v7201
      %v7234 = vmul.f32 %v7202, %v7202
      %v7235 = vmul.f32 %v7203, %v7203
      %v7236 = vmul.f32 %v7204, %v7204
      %v7237 = vmul.f32 %v7205, %v7205
      %v7238 = vmul.f32 %v7206, %v7206
      %v7239 = vmul.f32 %v7207, %v7207
      %v7240 = vsel %vm835, %v7208, 0.0
      %7241 = vadd.xlane.f32.xlu0 %v7240
      %v7242 = vpop.xlane.xlu0 %7241
      %v7243 = vsel %vm835, %v7209, 0.0
      %7244 = vadd.xlane.f32.xlu0 %v7243
      %v7245 = vpop.xlane.xlu0 %7244
      %v7246 = vsel %vm835, %v7210, 0.0
      %7247 = vadd.xlane.f32.xlu0 %v7246
      %v7248 = vpop.xlane.xlu0 %7247
      %v7249 = vsel %vm835, %v7211, 0.0
      %7250 = vadd.xlane.f32.xlu0 %v7249
      %v7251 = vpop.xlane.xlu0 %7250
      %v7252 = vsel %vm835, %v7212, 0.0
      %7253 = vadd.xlane.f32.xlu0 %v7252
      %v7254 = vpop.xlane.xlu0 %7253
      %v7255 = vsel %vm835, %v7213, 0.0
      %7256 = vadd.xlane.f32.xlu0 %v7255
      %v7257 = vpop.xlane.xlu0 %7256
      %v7258 = vsel %vm835, %v7214, 0.0
      %7259 = vadd.xlane.f32.xlu0 %v7258
      %v7260 = vpop.xlane.xlu0 %7259
      %v7261 = vsel %vm835, %v7215, 0.0
      %7262 = vadd.xlane.f32.xlu0 %v7261
      %v7263 = vpop.xlane.xlu0 %7262
      %v7264 = vsel %vm835, %v7216, 0.0
      %7265 = vadd.xlane.f32.xlu0 %v7264
      %v7266 = vpop.xlane.xlu0 %7265
      %v7267 = vsel %vm835, %v7217, 0.0
      %7268 = vadd.xlane.f32.xlu0 %v7267
      %v7269 = vpop.xlane.xlu0 %7268
      %v7270 = vsel %vm835, %v7218, 0.0
      %7271 = vadd.xlane.f32.xlu0 %v7270
      %v7272 = vpop.xlane.xlu0 %7271
      %v7273 = vsel %vm835, %v7219, 0.0
      %7274 = vadd.xlane.f32.xlu0 %v7273
      %v7275 = vpop.xlane.xlu0 %7274
      %v7276 = vsel %vm835, %v7220, 0.0
      %7277 = vadd.xlane.f32.xlu0 %v7276
      %v7278 = vpop.xlane.xlu0 %7277
      %v7279 = vsel %vm835, %v7221, 0.0
      %7280 = vadd.xlane.f32.xlu0 %v7279
      %v7281 = vpop.xlane.xlu0 %7280
      %v7282 = vsel %vm835, %v7222, 0.0
      %7283 = vadd.xlane.f32.xlu0 %v7282
      %v7284 = vpop.xlane.xlu0 %7283
      %v7285 = vsel %vm835, %v7223, 0.0
      %7286 = vadd.xlane.f32.xlu0 %v7285
      %v7287 = vpop.xlane.xlu0 %7286
      %v7288 = vsel %vm835, %v7224, 0.0
      %7289 = vadd.xlane.f32.xlu0 %v7288
      %v7290 = vpop.xlane.xlu0 %7289
      %v7291 = vsel %vm835, %v7225, 0.0
      %7292 = vadd.xlane.f32.xlu0 %v7291
      %v7293 = vpop.xlane.xlu0 %7292
      %v7294 = vsel %vm835, %v7226, 0.0
      %7295 = vadd.xlane.f32.xlu0 %v7294
      %v7296 = vpop.xlane.xlu0 %7295
      %v7297 = vsel %vm835, %v7227, 0.0
      %7298 = vadd.xlane.f32.xlu0 %v7297
      %v7299 = vpop.xlane.xlu0 %7298
      %v7300 = vsel %vm835, %v7228, 0.0
      %7301 = vadd.xlane.f32.xlu0 %v7300
      %v7302 = vpop.xlane.xlu0 %7301
      %v7303 = vsel %vm835, %v7229, 0.0
      %7304 = vadd.xlane.f32.xlu0 %v7303
      %v7305 = vpop.xlane.xlu0 %7304
      %v7306 = vsel %vm835, %v7230, 0.0
      %7307 = vadd.xlane.f32.xlu0 %v7306
      %v7308 = vpop.xlane.xlu0 %7307
      %v7309 = vsel %vm835, %v7231, 0.0
      %7310 = vadd.xlane.f32.xlu0 %v7309
      %v7311 = vpop.xlane.xlu0 %7310
      %v7312 = vsel %vm835, %v7232, 0.0
      %7313 = vadd.xlane.f32.xlu0 %v7312
      %v7314 = vpop.xlane.xlu0 %7313
      %v7315 = vsel %vm835, %v7233, 0.0
      %7316 = vadd.xlane.f32.xlu0 %v7315
      %v7317 = vpop.xlane.xlu0 %7316
      %v7318 = vsel %vm835, %v7234, 0.0
      %7319 = vadd.xlane.f32.xlu0 %v7318
      %v7320 = vpop.xlane.xlu0 %7319
      %v7321 = vsel %vm835, %v7235, 0.0
      %7322 = vadd.xlane.f32.xlu0 %v7321
      %v7323 = vpop.xlane.xlu0 %7322
      %v7324 = vsel %vm835, %v7236, 0.0
      %7325 = vadd.xlane.f32.xlu0 %v7324
      %v7326 = vpop.xlane.xlu0 %7325
      %v7327 = vsel %vm835, %v7237, 0.0
      %7328 = vadd.xlane.f32.xlu0 %v7327
      %v7329 = vpop.xlane.xlu0 %7328
      %v7330 = vsel %vm835, %v7238, 0.0
      %7331 = vadd.xlane.f32.xlu0 %v7330
      %v7332 = vpop.xlane.xlu0 %7331
      %v7333 = vsel %vm835, %v7239, 0.0
      %7334 = vadd.xlane.f32.xlu0 %v7333
      %v7335 = vpop.xlane.xlu0 %7334
      %v7336 = vmul.f32 %v7242, %v932
      %v7337 = vmul.f32 %v7245, %v932
      %v7338 = vmul.f32 %v7248, %v932
      %v7339 = vmul.f32 %v7251, %v932
      %v7340 = vmul.f32 %v7254, %v932
      %v7341 = vmul.f32 %v7257, %v932
      %v7342 = vmul.f32 %v7260, %v932
      %v7343 = vmul.f32 %v7263, %v932
      %v7344 = vmul.f32 %v7266, %v932
      %v7345 = vmul.f32 %v7269, %v932
      %v7346 = vmul.f32 %v7272, %v932
      %v7347 = vmul.f32 %v7275, %v932
      %v7348 = vmul.f32 %v7278, %v932
      %v7349 = vmul.f32 %v7281, %v932
      %v7350 = vmul.f32 %v7284, %v932
      %v7351 = vmul.f32 %v7287, %v932
      %v7352 = vmul.f32 %v7290, %v932
      %v7353 = vmul.f32 %v7293, %v932
      %v7354 = vmul.f32 %v7296, %v932
      %v7355 = vmul.f32 %v7299, %v932
      %v7356 = vmul.f32 %v7302, %v932
      %v7357 = vmul.f32 %v7305, %v932
      %v7358 = vmul.f32 %v7308, %v932
      %v7359 = vmul.f32 %v7311, %v932
      %v7360 = vmul.f32 %v7314, %v932
      %v7361 = vmul.f32 %v7317, %v932
      %v7362 = vmul.f32 %v7320, %v932
      %v7363 = vmul.f32 %v7323, %v932
      %v7364 = vmul.f32 %v7326, %v932
      %v7365 = vmul.f32 %v7329, %v932
      %v7366 = vmul.f32 %v7332, %v932
      %v7367 = vmul.f32 %v7335, %v932
      %v7368 = vadd.f32 %v7336, 1e-05
      %v7369 = vadd.f32 %v7337, 1e-05
      %v7370 = vadd.f32 %v7338, 1e-05
      %v7371 = vadd.f32 %v7339, 1e-05
      %v7372 = vadd.f32 %v7340, 1e-05
      %v7373 = vadd.f32 %v7341, 1e-05
      %v7374 = vadd.f32 %v7342, 1e-05
      %v7375 = vadd.f32 %v7343, 1e-05
      %v7376 = vadd.f32 %v7344, 1e-05
      %v7377 = vadd.f32 %v7345, 1e-05
      %v7378 = vadd.f32 %v7346, 1e-05
      %v7379 = vadd.f32 %v7347, 1e-05
      %v7380 = vadd.f32 %v7348, 1e-05
      %v7381 = vadd.f32 %v7349, 1e-05
      %v7382 = vadd.f32 %v7350, 1e-05
      %v7383 = vadd.f32 %v7351, 1e-05
      %v7384 = vadd.f32 %v7352, 1e-05
      %v7385 = vadd.f32 %v7353, 1e-05
      %v7386 = vadd.f32 %v7354, 1e-05
      %v7387 = vadd.f32 %v7355, 1e-05
      %v7388 = vadd.f32 %v7356, 1e-05
      %v7389 = vadd.f32 %v7357, 1e-05
      %v7390 = vadd.f32 %v7358, 1e-05
      %v7391 = vadd.f32 %v7359, 1e-05
      %v7392 = vadd.f32 %v7360, 1e-05
      %v7393 = vadd.f32 %v7361, 1e-05
      %v7394 = vadd.f32 %v7362, 1e-05
      %v7395 = vadd.f32 %v7363, 1e-05
      %v7396 = vadd.f32 %v7364, 1e-05
      %v7397 = vadd.f32 %v7365, 1e-05
      %v7398 = vadd.f32 %v7366, 1e-05
      %v7399 = vadd.f32 %v7367, 1e-05
      %v7400 = vrsqrt.pop %v7368
      %v7401 = vrsqrt.pop %v7369
      %v7402 = vrsqrt.pop %v7370
      %v7403 = vrsqrt.pop %v7371
      %v7404 = vrsqrt.pop %v7372
      %v7405 = vrsqrt.pop %v7373
      %v7406 = vrsqrt.pop %v7374
      %v7407 = vrsqrt.pop %v7375
      %v7408 = vrsqrt.pop %v7376
      %v7409 = vrsqrt.pop %v7377
      %v7410 = vrsqrt.pop %v7378
      %v7411 = vrsqrt.pop %v7379
      %v7412 = vrsqrt.pop %v7380
      %v7413 = vrsqrt.pop %v7381
      %v7414 = vrsqrt.pop %v7382
      %v7415 = vrsqrt.pop %v7383
      %v7416 = vrsqrt.pop %v7384
      %v7417 = vrsqrt.pop %v7385
      %v7418 = vrsqrt.pop %v7386
      %v7419 = vrsqrt.pop %v7387
      %v7420 = vrsqrt.pop %v7388
      %v7421 = vrsqrt.pop %v7389
      %v7422 = vrsqrt.pop %v7390
      %v7423 = vrsqrt.pop %v7391
      %v7424 = vrsqrt.pop %v7392
      %v7425 = vrsqrt.pop %v7393
      %v7426 = vrsqrt.pop %v7394
      %v7427 = vrsqrt.pop %v7395
      %v7428 = vrsqrt.pop %v7396
      %v7429 = vrsqrt.pop %v7397
      %v7430 = vrsqrt.pop %v7398
      %v7431 = vrsqrt.pop %v7399
      %v7432 = vmul.f32 %v7176, %v7400
      %v7433 = vmul.f32 %v7177, %v7401
      %v7434 = vmul.f32 %v7178, %v7402
      %v7435 = vmul.f32 %v7179, %v7403
      %v7436 = vmul.f32 %v7180, %v7404
      %v7437 = vmul.f32 %v7181, %v7405
      %v7438 = vmul.f32 %v7182, %v7406
      %v7439 = vmul.f32 %v7183, %v7407
      %v7440 = vmul.f32 %v7184, %v7408
      %v7441 = vmul.f32 %v7185, %v7409
      %v7442 = vmul.f32 %v7186, %v7410
      %v7443 = vmul.f32 %v7187, %v7411
      %v7444 = vmul.f32 %v7188, %v7412
      %v7445 = vmul.f32 %v7189, %v7413
      %v7446 = vmul.f32 %v7190, %v7414
      %v7447 = vmul.f32 %v7191, %v7415
      %v7448 = vmul.f32 %v7192, %v7416
      %v7449 = vmul.f32 %v7193, %v7417
      %v7450 = vmul.f32 %v7194, %v7418
      %v7451 = vmul.f32 %v7195, %v7419
      %v7452 = vmul.f32 %v7196, %v7420
      %v7453 = vmul.f32 %v7197, %v7421
      %v7454 = vmul.f32 %v7198, %v7422
      %v7455 = vmul.f32 %v7199, %v7423
      %v7456 = vmul.f32 %v7200, %v7424
      %v7457 = vmul.f32 %v7201, %v7425
      %v7458 = vmul.f32 %v7202, %v7426
      %v7459 = vmul.f32 %v7203, %v7427
      %v7460 = vmul.f32 %v7204, %v7428
      %v7461 = vmul.f32 %v7205, %v7429
      %v7462 = vmul.f32 %v7206, %v7430
      %v7463 = vmul.f32 %v7207, %v7431
      %v7465 = vlaneseq
      %v7466 = vshrl.u32 %v7465, 7
      %v7467 = vsub.s32 0, %v7466
      %v7468 = vrot.slane %v7046, %v7467
      %v7470 = vmul.f32 %v7432, %v7468
      %v7471 = vmul.f32 %v7433, %v7468
      %v7472 = vmul.f32 %v7434, %v7468
      %v7473 = vmul.f32 %v7435, %v7468
      %v7474 = vmul.f32 %v7436, %v7468
      %v7475 = vmul.f32 %v7437, %v7468
      %v7476 = vmul.f32 %v7438, %v7468
      %v7477 = vmul.f32 %v7439, %v7468
      %v7478 = vmul.f32 %v7440, %v7468
      %v7479 = vmul.f32 %v7441, %v7468
      %v7480 = vmul.f32 %v7442, %v7468
      %v7481 = vmul.f32 %v7443, %v7468
      %v7482 = vmul.f32 %v7444, %v7468
      %v7483 = vmul.f32 %v7445, %v7468
      %v7484 = vmul.f32 %v7446, %v7468
      %v7485 = vmul.f32 %v7447, %v7468
      %v7486 = vmul.f32 %v7448, %v7468
      %v7487 = vmul.f32 %v7449, %v7468
      %v7488 = vmul.f32 %v7450, %v7468
      %v7489 = vmul.f32 %v7451, %v7468
      %v7490 = vmul.f32 %v7452, %v7468
      %v7491 = vmul.f32 %v7453, %v7468
      %v7492 = vmul.f32 %v7454, %v7468
      %v7493 = vmul.f32 %v7455, %v7468
      %v7494 = vmul.f32 %v7456, %v7468
      %v7495 = vmul.f32 %v7457, %v7468
      %v7496 = vmul.f32 %v7458, %v7468
      %v7497 = vmul.f32 %v7459, %v7468
      %v7498 = vmul.f32 %v7460, %v7468
      %v7499 = vmul.f32 %v7461, %v7468
      %v7500 = vmul.f32 %v7462, %v7468
      %v7501 = vmul.f32 %v7463, %v7468
      %v7503 = vlaneseq
      %v7504 = vshrl.u32 %v7503, 7
      %v7505 = vsub.s32 0, %v7504
      %v7506 = vrot.slane %v7047, %v7505
      %v7508 = vadd.f32 %v7470, %v7506
      %v7509 = vadd.f32 %v7471, %v7506
      %v7510 = vadd.f32 %v7472, %v7506
      %v7511 = vadd.f32 %v7473, %v7506
      %v7512 = vadd.f32 %v7474, %v7506
      %v7513 = vadd.f32 %v7475, %v7506
      %v7514 = vadd.f32 %v7476, %v7506
      %v7515 = vadd.f32 %v7477, %v7506
      %v7516 = vadd.f32 %v7478, %v7506
      %v7517 = vadd.f32 %v7479, %v7506
      %v7518 = vadd.f32 %v7480, %v7506
      %v7519 = vadd.f32 %v7481, %v7506
      %v7520 = vadd.f32 %v7482, %v7506
      %v7521 = vadd.f32 %v7483, %v7506
      %v7522 = vadd.f32 %v7484, %v7506
      %v7523 = vadd.f32 %v7485, %v7506
      %v7524 = vadd.f32 %v7486, %v7506
      %v7525 = vadd.f32 %v7487, %v7506
      %v7526 = vadd.f32 %v7488, %v7506
      %v7527 = vadd.f32 %v7489, %v7506
      %v7528 = vadd.f32 %v7490, %v7506
      %v7529 = vadd.f32 %v7491, %v7506
      %v7530 = vadd.f32 %v7492, %v7506
      %v7531 = vadd.f32 %v7493, %v7506
      %v7532 = vadd.f32 %v7494, %v7506
      %v7533 = vadd.f32 %v7495, %v7506
      %v7534 = vadd.f32 %v7496, %v7506
      %v7535 = vadd.f32 %v7497, %v7506
      %v7536 = vadd.f32 %v7498, %v7506
      %v7537 = vadd.f32 %v7499, %v7506
      %v7538 = vadd.f32 %v7500, %v7506
      %v7539 = vadd.f32 %v7501, %v7506
      %v7540 = vpack.c.bf16 %v7509, %v7508
      %v7541 = vpack.c.bf16 %v7511, %v7510
      %v7542 = vpack.c.bf16 %v7513, %v7512
      %v7543 = vpack.c.bf16 %v7515, %v7514
      %v7544 = vpack.c.bf16 %v7517, %v7516
      %v7545 = vpack.c.bf16 %v7519, %v7518
      %v7546 = vpack.c.bf16 %v7521, %v7520
      %v7547 = vpack.c.bf16 %v7523, %v7522
      %v7548 = vpack.c.bf16 %v7525, %v7524
      %v7549 = vpack.c.bf16 %v7527, %v7526
      %v7550 = vpack.c.bf16 %v7529, %v7528
      %v7551 = vpack.c.bf16 %v7531, %v7530
      %v7552 = vpack.c.bf16 %v7533, %v7532
      %v7553 = vpack.c.bf16 %v7535, %v7534
      %v7554 = vpack.c.bf16 %v7537, %v7536
      %v7555 = vpack.c.bf16 %v7539, %v7538
      %v7556 = vld [vmem:[%s708] sm:$0xf]
      %v7557 = vld [vmem:[%s708 + $0x4] sm:$0xf]
      %v7558 = vld [vmem:[%s708 + $0x8] sm:$0xf]
      %v7559 = vld [vmem:[%s708 + $0xc] sm:$0xf]
      %v7560 = vld [vmem:[%s711] sm:$0x1]
      %v7562 = vlaneseq
      %v7563 = vshrl.u32 %v7562, 7
      %v7564 = vsub.s32 0, %v7563
      %v7565 = vrot.slane %v7560, %v7564
      %v7571 = vunpack.c.l.b16 %v7556
      %v7572 = vunpack.c.l.b16 %v7557
      %v7573 = vunpack.c.l.b16 %v7558
      %v7574 = vunpack.c.l.b16 %v7559
      %v7575 = vpack.c.b16 %v7572, %v7571
      %v7576 = vpack.c.b16 %v7574, %v7573
      %v7580 = vsel %vm835, %v7540, 0
      %v7583 = vsel %vm835, %v7541, 0
      %v7586 = vsel %vm835, %v7542, 0
      %v7589 = vsel %vm835, %v7543, 0
      %v7592 = vsel %vm835, %v7544, 0
      %v7595 = vsel %vm835, %v7545, 0
      %v7598 = vsel %vm835, %v7546, 0
      %v7601 = vsel %vm835, %v7547, 0
      %v7604 = vsel %vm835, %v7548, 0
      %v7607 = vsel %vm835, %v7549, 0
      %v7610 = vsel %vm835, %v7550, 0
      %v7613 = vsel %vm835, %v7551, 0
      %v7616 = vsel %vm835, %v7552, 0
      %v7619 = vsel %vm835, %v7553, 0
      %v7622 = vsel %vm835, %v7554, 0
      %v7625 = vsel %vm835, %v7555, 0
      %7627 = vmatprep.subr.bf16.mxu0 0
      %7628 = vmatpush1.bf16.msra.mxu0 0
      %7629 = vmatprep.subr.bf16.mxu0 0
      %7630 = vmatpush1.bf16.msra.mxu0 0
      %7631 = vmatprep.subr.bf16.mxu0 0
      %7632 = vmatpush1.bf16.msra.mxu0 0
      %7633 = vmatprep.subr.bf16.mxu0 0
      %7634 = vmatpush1.bf16.msra.mxu0 0
      %7635 = vmatprep.subr.bf16.mxu0 0
      %7636 = vmatpush1.bf16.msra.mxu0 0
      %7637 = vmatprep.subr.bf16.mxu0 0
      %7638 = vmatpush1.bf16.msra.mxu0 0
      %7639 = vmatprep.subr.bf16.mxu0 0
      %7640 = vmatpush1.bf16.msra.mxu0 %v7576
      %7641 = vmatprep.subr.bf16.mxu0 0
      %7642 = vmatpush1.bf16.msra.mxu0 %v7575
      %7643 = vmatprep.subr.bf16.mxu0 0
      %7644 = vmatpush2.bf16.msra.mxu0 0
      %7645 = vmatprep.subr.bf16.mxu0 0
      %7646 = vmatpush2.bf16.msra.mxu0 0
      %7647 = vmatprep.subr.bf16.mxu0 0
      %7648 = vmatpush2.bf16.msra.mxu0 0
      %7649 = vmatprep.subr.bf16.mxu0 0
      %7650 = vmatpush2.bf16.msra.mxu0 0
      %7651 = vmatprep.subr.bf16.mxu0 0
      %7652 = vmatpush2.bf16.msra.mxu0 0
      %7653 = vmatprep.subr.bf16.mxu0 0
      %7654 = vmatpush2.bf16.msra.mxu0 0
      %7655 = vmatprep.subr.bf16.mxu0 0
      %7656 = vmatpush2.bf16.msra.mxu0 0
      %7657 = vmatprep.subr.bf16.mxu0 0
      %7658 = vmatpush2.bf16.msra.mxu0 0
      %7659 = vmatprep.mubr.bf16.mxu0 0
      %7660 = vmatmul.mubr.bf16.gmra.mxu0 %v7580
      %v7661 = vpop.f32.mrf.mxu0
      %v7662 = vadd.f32 %v7565, %v7661
      %v7663 = vpop.f32.mrf.mxu0
      %v7664 = vpop.f32.mrf.mxu0
      %v7665 = vadd.f32 %v7565, %v7664
      %v7666 = vpop.f32.mrf.mxu0
      %7667 = vmatprep.mubr.bf16.mxu0 0
      %7668 = vmatmul.mubr.bf16.gmra.mxu0 %v7583
      %v7669 = vpop.f32.mrf.mxu0
      %v7670 = vadd.f32 %v7565, %v7669
      %v7671 = vpop.f32.mrf.mxu0
      %v7672 = vpop.f32.mrf.mxu0
      %v7673 = vadd.f32 %v7565, %v7672
      %v7674 = vpop.f32.mrf.mxu0
      %7675 = vmatprep.mubr.bf16.mxu0 0
      %7676 = vmatmul.mubr.bf16.gmra.mxu0 %v7586
      %v7677 = vpop.f32.mrf.mxu0
      %v7678 = vadd.f32 %v7565, %v7677
      %v7679 = vpop.f32.mrf.mxu0
      %v7680 = vpop.f32.mrf.mxu0
      %v7681 = vadd.f32 %v7565, %v7680
      %v7682 = vpop.f32.mrf.mxu0
      %7683 = vmatprep.mubr.bf16.mxu0 0
      %7684 = vmatmul.mubr.bf16.gmra.mxu0 %v7589
      %v7685 = vpop.f32.mrf.mxu0
      %v7686 = vadd.f32 %v7565, %v7685
      %v7687 = vpop.f32.mrf.mxu0
      %v7688 = vpop.f32.mrf.mxu0
      %v7689 = vadd.f32 %v7565, %v7688
      %v7690 = vpop.f32.mrf.mxu0
      %7691 = vmatprep.mubr.bf16.mxu0 0
      %7692 = vmatmul.mubr.bf16.gmra.mxu0 %v7592
      %v7693 = vpop.f32.mrf.mxu0
      %v7694 = vadd.f32 %v7565, %v7693
      %v7695 = vpop.f32.mrf.mxu0
      %v7696 = vpop.f32.mrf.mxu0
      %v7697 = vadd.f32 %v7565, %v7696
      %v7698 = vpop.f32.mrf.mxu0
      %7699 = vmatprep.mubr.bf16.mxu0 0
      %7700 = vmatmul.mubr.bf16.gmra.mxu0 %v7595
      %v7701 = vpop.f32.mrf.mxu0
      %v7702 = vadd.f32 %v7565, %v7701
      %v7703 = vpop.f32.mrf.mxu0
      %v7704 = vpop.f32.mrf.mxu0
      %v7705 = vadd.f32 %v7565, %v7704
      %v7706 = vpop.f32.mrf.mxu0
      %7707 = vmatprep.mubr.bf16.mxu0 0
      %7708 = vmatmul.mubr.bf16.gmra.mxu0 %v7598
      %v7709 = vpop.f32.mrf.mxu0
      %v7710 = vadd.f32 %v7565, %v7709
      %v7711 = vpop.f32.mrf.mxu0
      %v7712 = vpop.f32.mrf.mxu0
      %v7713 = vadd.f32 %v7565, %v7712
      %v7714 = vpop.f32.mrf.mxu0
      %7715 = vmatprep.mubr.bf16.mxu0 0
      %7716 = vmatmul.mubr.bf16.gmra.mxu0 %v7601
      %v7717 = vpop.f32.mrf.mxu0
      %v7718 = vadd.f32 %v7565, %v7717
      %v7719 = vpop.f32.mrf.mxu0
      %v7720 = vpop.f32.mrf.mxu0
      %v7721 = vadd.f32 %v7565, %v7720
      %v7722 = vpop.f32.mrf.mxu0
      %7723 = vmatprep.mubr.bf16.mxu0 0
      %7724 = vmatmul.mubr.bf16.gmra.mxu0 %v7604
      %v7725 = vpop.f32.mrf.mxu0
      %v7726 = vadd.f32 %v7565, %v7725
      %v7727 = vpop.f32.mrf.mxu0
      %v7728 = vpop.f32.mrf.mxu0
      %v7729 = vadd.f32 %v7565, %v7728
      %v7730 = vpop.f32.mrf.mxu0
      %7731 = vmatprep.mubr.bf16.mxu0 0
      %7732 = vmatmul.mubr.bf16.gmra.mxu0 %v7607
      %v7733 = vpop.f32.mrf.mxu0
      %v7734 = vadd.f32 %v7565, %v7733
      %v7735 = vpop.f32.mrf.mxu0
      %v7736 = vpop.f32.mrf.mxu0
      %v7737 = vadd.f32 %v7565, %v7736
      %v7738 = vpop.f32.mrf.mxu0
      %7739 = vmatprep.mubr.bf16.mxu0 0
      %7740 = vmatmul.mubr.bf16.gmra.mxu0 %v7610
      %v7741 = vpop.f32.mrf.mxu0
      %v7742 = vadd.f32 %v7565, %v7741
      %v7743 = vpop.f32.mrf.mxu0
      %v7744 = vpop.f32.mrf.mxu0
      %v7745 = vadd.f32 %v7565, %v7744
      %v7746 = vpop.f32.mrf.mxu0
      %7747 = vmatprep.mubr.bf16.mxu0 0
      %7748 = vmatmul.mubr.bf16.gmra.mxu0 %v7613
      %v7749 = vpop.f32.mrf.mxu0
      %v7750 = vadd.f32 %v7565, %v7749
      %v7751 = vpop.f32.mrf.mxu0
      %v7752 = vpop.f32.mrf.mxu0
      %v7753 = vadd.f32 %v7565, %v7752
      %v7754 = vpop.f32.mrf.mxu0
      %7755 = vmatprep.mubr.bf16.mxu0 0
      %7756 = vmatmul.mubr.bf16.gmra.mxu0 %v7616
      %v7757 = vpop.f32.mrf.mxu0
      %v7758 = vadd.f32 %v7565, %v7757
      %v7759 = vpop.f32.mrf.mxu0
      %v7760 = vpop.f32.mrf.mxu0
      %v7761 = vadd.f32 %v7565, %v7760
      %v7762 = vpop.f32.mrf.mxu0
      %7763 = vmatprep.mubr.bf16.mxu0 0
      %7764 = vmatmul.mubr.bf16.gmra.mxu0 %v7619
      %v7765 = vpop.f32.mrf.mxu0
      %v7766 = vadd.f32 %v7565, %v7765
      %v7767 = vpop.f32.mrf.mxu0
      %v7768 = vpop.f32.mrf.mxu0
      %v7769 = vadd.f32 %v7565, %v7768
      %v7770 = vpop.f32.mrf.mxu0
      %7771 = vmatprep.mubr.bf16.mxu0 0
      %7772 = vmatmul.mubr.bf16.gmra.mxu0 %v7622
      %v7773 = vpop.f32.mrf.mxu0
      %v7774 = vadd.f32 %v7565, %v7773
      %v7775 = vpop.f32.mrf.mxu0
      %v7776 = vpop.f32.mrf.mxu0
      %v7777 = vadd.f32 %v7565, %v7776
      %v7778 = vpop.f32.mrf.mxu0
      %7779 = vmatprep.mubr.bf16.mxu0 0
      %7780 = vmatmul.mubr.bf16.gmra.mxu0 %v7625
      %v7781 = vpop.f32.mrf.mxu0
      %v7782 = vadd.f32 %v7565, %v7781
      %v7783 = vpop.f32.mrf.mxu0
      %v7784 = vpop.f32.mrf.mxu0
      %v7785 = vadd.f32 %v7565, %v7784
      %v7786 = vpop.f32.mrf.mxu0
      %7787 = vdwg.mxu0
      %v7788 = vmul.f32 %v7662, 0.5
      %v7789 = vmul.f32 %v7665, 0.5
      %v7790 = vmul.f32 %v7670, 0.5
      %v7791 = vmul.f32 %v7673, 0.5
      %v7792 = vmul.f32 %v7678, 0.5
      %v7793 = vmul.f32 %v7681, 0.5
      %v7794 = vmul.f32 %v7686, 0.5
      %v7795 = vmul.f32 %v7689, 0.5
      %v7796 = vmul.f32 %v7694, 0.5
      %v7797 = vmul.f32 %v7697, 0.5
      %v7798 = vmul.f32 %v7702, 0.5
      %v7799 = vmul.f32 %v7705, 0.5
      %v7800 = vmul.f32 %v7710, 0.5
      %v7801 = vmul.f32 %v7713, 0.5
      %v7802 = vmul.f32 %v7718, 0.5
      %v7803 = vmul.f32 %v7721, 0.5
      %v7804 = vmul.f32 %v7726, 0.5
      %v7805 = vmul.f32 %v7729, 0.5
      %v7806 = vmul.f32 %v7734, 0.5
      %v7807 = vmul.f32 %v7737, 0.5
      %v7808 = vmul.f32 %v7742, 0.5
      %v7809 = vmul.f32 %v7745, 0.5
      %v7810 = vmul.f32 %v7750, 0.5
      %v7811 = vmul.f32 %v7753, 0.5
      %v7812 = vmul.f32 %v7758, 0.5
      %v7813 = vmul.f32 %v7761, 0.5
      %v7814 = vmul.f32 %v7766, 0.5
      %v7815 = vmul.f32 %v7769, 0.5
      %v7816 = vmul.f32 %v7774, 0.5
      %v7817 = vmul.f32 %v7777, 0.5
      %v7818 = vmul.f32 %v7782, 0.5
      %v7819 = vmul.f32 %v7785, 0.5
      %v7820 = vmul.f32 %v7662, %v7662
      %v7821 = vmul.f32 %v7665, %v7665
      %v7822 = vmul.f32 %v7670, %v7670
      %v7823 = vmul.f32 %v7673, %v7673
      %v7824 = vmul.f32 %v7678, %v7678
      %v7825 = vmul.f32 %v7681, %v7681
      %v7826 = vmul.f32 %v7686, %v7686
      %v7827 = vmul.f32 %v7689, %v7689
      %v7828 = vmul.f32 %v7694, %v7694
      %v7829 = vmul.f32 %v7697, %v7697
      %v7830 = vmul.f32 %v7702, %v7702
      %v7831 = vmul.f32 %v7705, %v7705
      %v7832 = vmul.f32 %v7710, %v7710
      %v7833 = vmul.f32 %v7713, %v7713
      %v7834 = vmul.f32 %v7718, %v7718
      %v7835 = vmul.f32 %v7721, %v7721
      %v7836 = vmul.f32 %v7726, %v7726
      %v7837 = vmul.f32 %v7729, %v7729
      %v7838 = vmul.f32 %v7734, %v7734
      %v7839 = vmul.f32 %v7737, %v7737
      %v7840 = vmul.f32 %v7742, %v7742
      %v7841 = vmul.f32 %v7745, %v7745
      %v7842 = vmul.f32 %v7750, %v7750
      %v7843 = vmul.f32 %v7753, %v7753
      %v7844 = vmul.f32 %v7758, %v7758
      %v7845 = vmul.f32 %v7761, %v7761
      %v7846 = vmul.f32 %v7766, %v7766
      %v7847 = vmul.f32 %v7769, %v7769
      %v7848 = vmul.f32 %v7774, %v7774
      %v7849 = vmul.f32 %v7777, %v7777
      %v7850 = vmul.f32 %v7782, %v7782
      %v7851 = vmul.f32 %v7785, %v7785
      %v7852 = vmul.f32 %v7820, %v7662
      %v7853 = vmul.f32 %v7821, %v7665
      %v7854 = vmul.f32 %v7822, %v7670
      %v7855 = vmul.f32 %v7823, %v7673
      %v7856 = vmul.f32 %v7824, %v7678
      %v7857 = vmul.f32 %v7825, %v7681
      %v7858 = vmul.f32 %v7826, %v7686
      %v7859 = vmul.f32 %v7827, %v7689
      %v7860 = vmul.f32 %v7828, %v7694
      %v7861 = vmul.f32 %v7829, %v7697
      %v7862 = vmul.f32 %v7830, %v7702
      %v7863 = vmul.f32 %v7831, %v7705
      %v7864 = vmul.f32 %v7832, %v7710
      %v7865 = vmul.f32 %v7833, %v7713
      %v7866 = vmul.f32 %v7834, %v7718
      %v7867 = vmul.f32 %v7835, %v7721
      %v7868 = vmul.f32 %v7836, %v7726
      %v7869 = vmul.f32 %v7837, %v7729
      %v7870 = vmul.f32 %v7838, %v7734
      %v7871 = vmul.f32 %v7839, %v7737
      %v7872 = vmul.f32 %v7840, %v7742
      %v7873 = vmul.f32 %v7841, %v7745
      %v7874 = vmul.f32 %v7842, %v7750
      %v7875 = vmul.f32 %v7843, %v7753
      %v7876 = vmul.f32 %v7844, %v7758
      %v7877 = vmul.f32 %v7845, %v7761
      %v7878 = vmul.f32 %v7846, %v7766
      %v7879 = vmul.f32 %v7847, %v7769
      %v7880 = vmul.f32 %v7848, %v7774
      %v7881 = vmul.f32 %v7849, %v7777
      %v7882 = vmul.f32 %v7850, %v7782
      %v7883 = vmul.f32 %v7851, %v7785
      %v7884 = vmul.f32 %v7852, 0.044715
      %v7885 = vmul.f32 %v7853, 0.044715
      %v7886 = vmul.f32 %v7854, 0.044715
      %v7887 = vmul.f32 %v7855, 0.044715
      %v7888 = vmul.f32 %v7856, 0.044715
      %v7889 = vmul.f32 %v7857, 0.044715
      %v7890 = vmul.f32 %v7858, 0.044715
      %v7891 = vmul.f32 %v7859, 0.044715
      %v7892 = vmul.f32 %v7860, 0.044715
      %v7893 = vmul.f32 %v7861, 0.044715
      %v7894 = vmul.f32 %v7862, 0.044715
      %v7895 = vmul.f32 %v7863, 0.044715
      %v7896 = vmul.f32 %v7864, 0.044715
      %v7897 = vmul.f32 %v7865, 0.044715
      %v7898 = vmul.f32 %v7866, 0.044715
      %v7899 = vmul.f32 %v7867, 0.044715
      %v7900 = vmul.f32 %v7868, 0.044715
      %v7901 = vmul.f32 %v7869, 0.044715
      %v7902 = vmul.f32 %v7870, 0.044715
      %v7903 = vmul.f32 %v7871, 0.044715
      %v7904 = vmul.f32 %v7872, 0.044715
      %v7905 = vmul.f32 %v7873, 0.044715
      %v7906 = vmul.f32 %v7874, 0.044715
      %v7907 = vmul.f32 %v7875, 0.044715
      %v7908 = vmul.f32 %v7876, 0.044715
      %v7909 = vmul.f32 %v7877, 0.044715
      %v7910 = vmul.f32 %v7878, 0.044715
      %v7911 = vmul.f32 %v7879, 0.044715
      %v7912 = vmul.f32 %v7880, 0.044715
      %v7913 = vmul.f32 %v7881, 0.044715
      %v7914 = vmul.f32 %v7882, 0.044715
      %v7915 = vmul.f32 %v7883, 0.044715
      %v7916 = vadd.f32 %v7662, %v7884
      %v7917 = vadd.f32 %v7665, %v7885
      %v7918 = vadd.f32 %v7670, %v7886
      %v7919 = vadd.f32 %v7673, %v7887
      %v7920 = vadd.f32 %v7678, %v7888
      %v7921 = vadd.f32 %v7681, %v7889
      %v7922 = vadd.f32 %v7686, %v7890
      %v7923 = vadd.f32 %v7689, %v7891
      %v7924 = vadd.f32 %v7694, %v7892
      %v7925 = vadd.f32 %v7697, %v7893
      %v7926 = vadd.f32 %v7702, %v7894
      %v7927 = vadd.f32 %v7705, %v7895
      %v7928 = vadd.f32 %v7710, %v7896
      %v7929 = vadd.f32 %v7713, %v7897
      %v7930 = vadd.f32 %v7718, %v7898
      %v7931 = vadd.f32 %v7721, %v7899
      %v7932 = vadd.f32 %v7726, %v7900
      %v7933 = vadd.f32 %v7729, %v7901
      %v7934 = vadd.f32 %v7734, %v7902
      %v7935 = vadd.f32 %v7737, %v7903
      %v7936 = vadd.f32 %v7742, %v7904
      %v7937 = vadd.f32 %v7745, %v7905
      %v7938 = vadd.f32 %v7750, %v7906
      %v7939 = vadd.f32 %v7753, %v7907
      %v7940 = vadd.f32 %v7758, %v7908
      %v7941 = vadd.f32 %v7761, %v7909
      %v7942 = vadd.f32 %v7766, %v7910
      %v7943 = vadd.f32 %v7769, %v7911
      %v7944 = vadd.f32 %v7774, %v7912
      %v7945 = vadd.f32 %v7777, %v7913
      %v7946 = vadd.f32 %v7782, %v7914
      %v7947 = vadd.f32 %v7785, %v7915
      %v7948 = vmul.f32 %v7916, 0.7978846
      %v7949 = vmul.f32 %v7917, 0.7978846
      %v7950 = vmul.f32 %v7918, 0.7978846
      %v7951 = vmul.f32 %v7919, 0.7978846
      %v7952 = vmul.f32 %v7920, 0.7978846
      %v7953 = vmul.f32 %v7921, 0.7978846
      %v7954 = vmul.f32 %v7922, 0.7978846
      %v7955 = vmul.f32 %v7923, 0.7978846
      %v7956 = vmul.f32 %v7924, 0.7978846
      %v7957 = vmul.f32 %v7925, 0.7978846
      %v7958 = vmul.f32 %v7926, 0.7978846
      %v7959 = vmul.f32 %v7927, 0.7978846
      %v7960 = vmul.f32 %v7928, 0.7978846
      %v7961 = vmul.f32 %v7929, 0.7978846
      %v7962 = vmul.f32 %v7930, 0.7978846
      %v7963 = vmul.f32 %v7931, 0.7978846
      %v7964 = vmul.f32 %v7932, 0.7978846
      %v7965 = vmul.f32 %v7933, 0.7978846
      %v7966 = vmul.f32 %v7934, 0.7978846
      %v7967 = vmul.f32 %v7935, 0.7978846
      %v7968 = vmul.f32 %v7936, 0.7978846
      %v7969 = vmul.f32 %v7937, 0.7978846
      %v7970 = vmul.f32 %v7938, 0.7978846
      %v7971 = vmul.f32 %v7939, 0.7978846
      %v7972 = vmul.f32 %v7940, 0.7978846
      %v7973 = vmul.f32 %v7941, 0.7978846
      %v7974 = vmul.f32 %v7942, 0.7978846
      %v7975 = vmul.f32 %v7943, 0.7978846
      %v7976 = vmul.f32 %v7944, 0.7978846
      %v7977 = vmul.f32 %v7945, 0.7978846
      %v7978 = vmul.f32 %v7946, 0.7978846
      %v7979 = vmul.f32 %v7947, 0.7978846
      %v7980 = vtanh.pop %v7948
      %v7981 = vtanh.pop %v7949
      %v7982 = vtanh.pop %v7950
      %v7983 = vtanh.pop %v7951
      %v7984 = vtanh.pop %v7952
      %v7985 = vtanh.pop %v7953
      %v7986 = vtanh.pop %v7954
      %v7987 = vtanh.pop %v7955
      %v7988 = vtanh.pop %v7956
      %v7989 = vtanh.pop %v7957
      %v7990 = vtanh.pop %v7958
      %v7991 = vtanh.pop %v7959
      %v7992 = vtanh.pop %v7960
      %v7993 = vtanh.pop %v7961
      %v7994 = vtanh.pop %v7962
      %v7995 = vtanh.pop %v7963
      %v7996 = vtanh.pop %v7964
      %v7997 = vtanh.pop %v7965
      %v7998 = vtanh.pop %v7966
      %v7999 = vtanh.pop %v7967
      %v8000 = vtanh.pop %v7968
      %v8001 = vtanh.pop %v7969
      %v8002 = vtanh.pop %v7970
      %v8003 = vtanh.pop %v7971
      %v8004 = vtanh.pop %v7972
      %v8005 = vtanh.pop %v7973
      %v8006 = vtanh.pop %v7974
      %v8007 = vtanh.pop %v7975
      %v8008 = vtanh.pop %v7976
      %v8009 = vtanh.pop %v7977
      %v8010 = vtanh.pop %v7978
      %v8011 = vtanh.pop %v7979
      %v8012 = vadd.f32 %v7980, 1.0
      %v8013 = vadd.f32 %v7981, 1.0
      %v8014 = vadd.f32 %v7982, 1.0
      %v8015 = vadd.f32 %v7983, 1.0
      %v8016 = vadd.f32 %v7984, 1.0
      %v8017 = vadd.f32 %v7985, 1.0
      %v8018 = vadd.f32 %v7986, 1.0
      %v8019 = vadd.f32 %v7987, 1.0
      %v8020 = vadd.f32 %v7988, 1.0
      %v8021 = vadd.f32 %v7989, 1.0
      %v8022 = vadd.f32 %v7990, 1.0
      %v8023 = vadd.f32 %v7991, 1.0
      %v8024 = vadd.f32 %v7992, 1.0
      %v8025 = vadd.f32 %v7993, 1.0
      %v8026 = vadd.f32 %v7994, 1.0
      %v8027 = vadd.f32 %v7995, 1.0
      %v8028 = vadd.f32 %v7996, 1.0
      %v8029 = vadd.f32 %v7997, 1.0
      %v8030 = vadd.f32 %v7998, 1.0
      %v8031 = vadd.f32 %v7999, 1.0
      %v8032 = vadd.f32 %v8000, 1.0
      %v8033 = vadd.f32 %v8001, 1.0
      %v8034 = vadd.f32 %v8002, 1.0
      %v8035 = vadd.f32 %v8003, 1.0
      %v8036 = vadd.f32 %v8004, 1.0
      %v8037 = vadd.f32 %v8005, 1.0
      %v8038 = vadd.f32 %v8006, 1.0
      %v8039 = vadd.f32 %v8007, 1.0
      %v8040 = vadd.f32 %v8008, 1.0
      %v8041 = vadd.f32 %v8009, 1.0
      %v8042 = vadd.f32 %v8010, 1.0
      %v8043 = vadd.f32 %v8011, 1.0
      %v8044 = vmul.f32 %v7788, %v8012
      %v8045 = vmul.f32 %v7789, %v8013
      %v8046 = vmul.f32 %v7790, %v8014
      %v8047 = vmul.f32 %v7791, %v8015
      %v8048 = vmul.f32 %v7792, %v8016
      %v8049 = vmul.f32 %v7793, %v8017
      %v8050 = vmul.f32 %v7794, %v8018
      %v8051 = vmul.f32 %v7795, %v8019
      %v8052 = vmul.f32 %v7796, %v8020
      %v8053 = vmul.f32 %v7797, %v8021
      %v8054 = vmul.f32 %v7798, %v8022
      %v8055 = vmul.f32 %v7799, %v8023
      %v8056 = vmul.f32 %v7800, %v8024
      %v8057 = vmul.f32 %v7801, %v8025
      %v8058 = vmul.f32 %v7802, %v8026
      %v8059 = vmul.f32 %v7803, %v8027
      %v8060 = vmul.f32 %v7804, %v8028
      %v8061 = vmul.f32 %v7805, %v8029
      %v8062 = vmul.f32 %v7806, %v8030
      %v8063 = vmul.f32 %v7807, %v8031
      %v8064 = vmul.f32 %v7808, %v8032
      %v8065 = vmul.f32 %v7809, %v8033
      %v8066 = vmul.f32 %v7810, %v8034
      %v8067 = vmul.f32 %v7811, %v8035
      %v8068 = vmul.f32 %v7812, %v8036
      %v8069 = vmul.f32 %v7813, %v8037
      %v8070 = vmul.f32 %v7814, %v8038
      %v8071 = vmul.f32 %v7815, %v8039
      %v8072 = vmul.f32 %v7816, %v8040
      %v8073 = vmul.f32 %v7817, %v8041
      %v8074 = vmul.f32 %v7818, %v8042
      %v8075 = vmul.f32 %v7819, %v8043
      %v8076 = vpack.c.bf16 %v8045, %v8044
      %v8077 = vpack.c.bf16 %v8047, %v8046
      %v8078 = vpack.c.bf16 %v8049, %v8048
      %v8079 = vpack.c.bf16 %v8051, %v8050
      %v8080 = vpack.c.bf16 %v8053, %v8052
      %v8081 = vpack.c.bf16 %v8055, %v8054
      %v8082 = vpack.c.bf16 %v8057, %v8056
      %v8083 = vpack.c.bf16 %v8059, %v8058
      %v8084 = vpack.c.bf16 %v8061, %v8060
      %v8085 = vpack.c.bf16 %v8063, %v8062
      %v8086 = vpack.c.bf16 %v8065, %v8064
      %v8087 = vpack.c.bf16 %v8067, %v8066
      %v8088 = vpack.c.bf16 %v8069, %v8068
      %v8089 = vpack.c.bf16 %v8071, %v8070
      %v8090 = vpack.c.bf16 %v8073, %v8072
      %v8091 = vpack.c.bf16 %v8075, %v8074
      %v8092 = vld [vmem:[%s716] sm:$0xf]
      %v8093 = vld [vmem:[%s716 + $0x4] sm:$0xf]
      %v8094 = vld [vmem:[%s716 + $0x8] sm:$0xf]
      %v8095 = vld [vmem:[%s716 + $0xc] sm:$0xf]
      %v8096 = vld [vmem:[%s716 + $0x10] sm:$0xf]
      %v8097 = vld [vmem:[%s716 + $0x14] sm:$0xf]
      %v8098 = vld [vmem:[%s716 + $0x18] sm:$0xf]
      %v8099 = vld [vmem:[%s716 + $0x1c] sm:$0xf]
      %v8100 = vld [vmem:[%s716 + $0x20] sm:$0xf]
      %v8101 = vld [vmem:[%s716 + $0x24] sm:$0xf]
      %v8102 = vld [vmem:[%s716 + $0x28] sm:$0xf]
      %v8103 = vld [vmem:[%s716 + $0x2c] sm:$0xf]
      %v8104 = vld [vmem:[%s716 + $0x30] sm:$0xf]
      %v8105 = vld [vmem:[%s716 + $0x34] sm:$0xf]
      %v8106 = vld [vmem:[%s716 + $0x38] sm:$0xf]
      %v8107 = vld [vmem:[%s716 + $0x3c] sm:$0xf]
      %v8108 = vld [vmem:[%s719] sm:$0x1]
      %v8110 = vlaneseq
      %v8111 = vshrl.u32 %v8110, 7
      %v8112 = vsub.s32 0, %v8111
      %v8113 = vrot.slane %v8108, %v8112
      %v8131 = vunpack.c.l.b16 %v8092
      %v8132 = vunpack.c.l.b16 %v8093
      %v8133 = vunpack.c.l.b16 %v8094
      %v8134 = vunpack.c.l.b16 %v8095
      %v8135 = vunpack.c.l.b16 %v8096
      %v8136 = vunpack.c.l.b16 %v8097
      %v8137 = vunpack.c.l.b16 %v8098
      %v8138 = vunpack.c.l.b16 %v8099
      %v8139 = vunpack.c.l.b16 %v8100
      %v8140 = vunpack.c.l.b16 %v8101
      %v8141 = vunpack.c.l.b16 %v8102
      %v8142 = vunpack.c.l.b16 %v8103
      %v8143 = vunpack.c.l.b16 %v8104
      %v8144 = vunpack.c.l.b16 %v8105
      %v8145 = vunpack.c.l.b16 %v8106
      %v8146 = vunpack.c.l.b16 %v8107
      %v8147 = vpack.c.b16 %v8132, %v8131
      %v8148 = vpack.c.b16 %v8134, %v8133
      %v8149 = vpack.c.b16 %v8136, %v8135
      %v8150 = vpack.c.b16 %v8138, %v8137
      %v8151 = vpack.c.b16 %v8140, %v8139
      %v8152 = vpack.c.b16 %v8142, %v8141
      %v8153 = vpack.c.b16 %v8144, %v8143
      %v8154 = vpack.c.b16 %v8146, %v8145
      %8163 = vmatprep.subr.bf16.mxu0 0
      %8164 = vmatpush1.bf16.msra.mxu0 %v8154
      %8165 = vmatprep.subr.bf16.mxu0 0
      %8166 = vmatpush1.bf16.msra.mxu0 %v8153
      %8167 = vmatprep.subr.bf16.mxu0 0
      %8168 = vmatpush1.bf16.msra.mxu0 %v8152
      %8169 = vmatprep.subr.bf16.mxu0 0
      %8170 = vmatpush1.bf16.msra.mxu0 %v8151
      %8171 = vmatprep.subr.bf16.mxu0 0
      %8172 = vmatpush1.bf16.msra.mxu0 %v8150
      %8173 = vmatprep.subr.bf16.mxu0 0
      %8174 = vmatpush1.bf16.msra.mxu0 %v8149
      %8175 = vmatprep.subr.bf16.mxu0 0
      %8176 = vmatpush1.bf16.msra.mxu0 %v8148
      %8177 = vmatprep.subr.bf16.mxu0 0
      %8178 = vmatpush1.bf16.msra.mxu0 %v8147
      %8179 = vmatprep.subr.bf16.mxu0 0
      %8180 = vmatpush2.bf16.msra.mxu0 0
      %8181 = vmatprep.subr.bf16.mxu0 0
      %8182 = vmatpush2.bf16.msra.mxu0 0
      %8183 = vmatprep.subr.bf16.mxu0 0
      %8184 = vmatpush2.bf16.msra.mxu0 0
      %8185 = vmatprep.subr.bf16.mxu0 0
      %8186 = vmatpush2.bf16.msra.mxu0 0
      %8187 = vmatprep.subr.bf16.mxu0 0
      %8188 = vmatpush2.bf16.msra.mxu0 0
      %8189 = vmatprep.subr.bf16.mxu0 0
      %8190 = vmatpush2.bf16.msra.mxu0 0
      %8191 = vmatprep.subr.bf16.mxu0 0
      %8192 = vmatpush2.bf16.msra.mxu0 0
      %8193 = vmatprep.subr.bf16.mxu0 0
      %8194 = vmatpush2.bf16.msra.mxu0 0
      %8195 = vmatprep.mubr.bf16.mxu0 0
      %8196 = vmatmul.mubr.bf16.gmra.mxu0 %v8076
      %v8197 = vpop.f32.mrf.mxu0
      %v8198 = vadd.f32 %v8113, %v8197
      %v8199 = vpop.f32.mrf.mxu0
      %v8200 = vpop.f32.mrf.mxu0
      %v8201 = vadd.f32 %v8113, %v8200
      %v8202 = vpop.f32.mrf.mxu0
      %8203 = vmatprep.mubr.bf16.mxu0 0
      %8204 = vmatmul.mubr.bf16.gmra.mxu0 %v8077
      %v8205 = vpop.f32.mrf.mxu0
      %v8206 = vadd.f32 %v8113, %v8205
      %v8207 = vpop.f32.mrf.mxu0
      %v8208 = vpop.f32.mrf.mxu0
      %v8209 = vadd.f32 %v8113, %v8208
      %v8210 = vpop.f32.mrf.mxu0
      %8211 = vmatprep.mubr.bf16.mxu0 0
      %8212 = vmatmul.mubr.bf16.gmra.mxu0 %v8078
      %v8213 = vpop.f32.mrf.mxu0
      %v8214 = vadd.f32 %v8113, %v8213
      %v8215 = vpop.f32.mrf.mxu0
      %v8216 = vpop.f32.mrf.mxu0
      %v8217 = vadd.f32 %v8113, %v8216
      %v8218 = vpop.f32.mrf.mxu0
      %8219 = vmatprep.mubr.bf16.mxu0 0
      %8220 = vmatmul.mubr.bf16.gmra.mxu0 %v8079
      %v8221 = vpop.f32.mrf.mxu0
      %v8222 = vadd.f32 %v8113, %v8221
      %v8223 = vpop.f32.mrf.mxu0
      %v8224 = vpop.f32.mrf.mxu0
      %v8225 = vadd.f32 %v8113, %v8224
      %v8226 = vpop.f32.mrf.mxu0
      %8227 = vmatprep.mubr.bf16.mxu0 0
      %8228 = vmatmul.mubr.bf16.gmra.mxu0 %v8080
      %v8229 = vpop.f32.mrf.mxu0
      %v8230 = vadd.f32 %v8113, %v8229
      %v8231 = vpop.f32.mrf.mxu0
      %v8232 = vpop.f32.mrf.mxu0
      %v8233 = vadd.f32 %v8113, %v8232
      %v8234 = vpop.f32.mrf.mxu0
      %8235 = vmatprep.mubr.bf16.mxu0 0
      %8236 = vmatmul.mubr.bf16.gmra.mxu0 %v8081
      %v8237 = vpop.f32.mrf.mxu0
      %v8238 = vadd.f32 %v8113, %v8237
      %v8239 = vpop.f32.mrf.mxu0
      %v8240 = vpop.f32.mrf.mxu0
      %v8241 = vadd.f32 %v8113, %v8240
      %v8242 = vpop.f32.mrf.mxu0
      %8243 = vmatprep.mubr.bf16.mxu0 0
      %8244 = vmatmul.mubr.bf16.gmra.mxu0 %v8082
      %v8245 = vpop.f32.mrf.mxu0
      %v8246 = vadd.f32 %v8113, %v8245
      %v8247 = vpop.f32.mrf.mxu0
      %v8248 = vpop.f32.mrf.mxu0
      %v8249 = vadd.f32 %v8113, %v8248
      %v8250 = vpop.f32.mrf.mxu0
      %8251 = vmatprep.mubr.bf16.mxu0 0
      %8252 = vmatmul.mubr.bf16.gmra.mxu0 %v8083
      %v8253 = vpop.f32.mrf.mxu0
      %v8254 = vadd.f32 %v8113, %v8253
      %v8255 = vpop.f32.mrf.mxu0
      %v8256 = vpop.f32.mrf.mxu0
      %v8257 = vadd.f32 %v8113, %v8256
      %v8258 = vpop.f32.mrf.mxu0
      %8259 = vmatprep.mubr.bf16.mxu0 0
      %8260 = vmatmul.mubr.bf16.gmra.mxu0 %v8084
      %v8261 = vpop.f32.mrf.mxu0
      %v8262 = vadd.f32 %v8113, %v8261
      %v8263 = vpop.f32.mrf.mxu0
      %v8264 = vpop.f32.mrf.mxu0
      %v8265 = vadd.f32 %v8113, %v8264
      %v8266 = vpop.f32.mrf.mxu0
      %8267 = vmatprep.mubr.bf16.mxu0 0
      %8268 = vmatmul.mubr.bf16.gmra.mxu0 %v8085
      %v8269 = vpop.f32.mrf.mxu0
      %v8270 = vadd.f32 %v8113, %v8269
      %v8271 = vpop.f32.mrf.mxu0
      %v8272 = vpop.f32.mrf.mxu0
      %v8273 = vadd.f32 %v8113, %v8272
      %v8274 = vpop.f32.mrf.mxu0
      %8275 = vmatprep.mubr.bf16.mxu0 0
      %8276 = vmatmul.mubr.bf16.gmra.mxu0 %v8086
      %v8277 = vpop.f32.mrf.mxu0
      %v8278 = vadd.f32 %v8113, %v8277
      %v8279 = vpop.f32.mrf.mxu0
      %v8280 = vpop.f32.mrf.mxu0
      %v8281 = vadd.f32 %v8113, %v8280
      %v8282 = vpop.f32.mrf.mxu0
      %8283 = vmatprep.mubr.bf16.mxu0 0
      %8284 = vmatmul.mubr.bf16.gmra.mxu0 %v8087
      %v8285 = vpop.f32.mrf.mxu0
      %v8286 = vadd.f32 %v8113, %v8285
      %v8287 = vpop.f32.mrf.mxu0
      %v8288 = vpop.f32.mrf.mxu0
      %v8289 = vadd.f32 %v8113, %v8288
      %v8290 = vpop.f32.mrf.mxu0
      %8291 = vmatprep.mubr.bf16.mxu0 0
      %8292 = vmatmul.mubr.bf16.gmra.mxu0 %v8088
      %v8293 = vpop.f32.mrf.mxu0
      %v8294 = vadd.f32 %v8113, %v8293
      %v8295 = vpop.f32.mrf.mxu0
      %v8296 = vpop.f32.mrf.mxu0
      %v8297 = vadd.f32 %v8113, %v8296
      %v8298 = vpop.f32.mrf.mxu0
      %8299 = vmatprep.mubr.bf16.mxu0 0
      %8300 = vmatmul.mubr.bf16.gmra.mxu0 %v8089
      %v8301 = vpop.f32.mrf.mxu0
      %v8302 = vadd.f32 %v8113, %v8301
      %v8303 = vpop.f32.mrf.mxu0
      %v8304 = vpop.f32.mrf.mxu0
      %v8305 = vadd.f32 %v8113, %v8304
      %v8306 = vpop.f32.mrf.mxu0
      %8307 = vmatprep.mubr.bf16.mxu0 0
      %8308 = vmatmul.mubr.bf16.gmra.mxu0 %v8090
      %v8309 = vpop.f32.mrf.mxu0
      %v8310 = vadd.f32 %v8113, %v8309
      %v8311 = vpop.f32.mrf.mxu0
      %v8312 = vpop.f32.mrf.mxu0
      %v8313 = vadd.f32 %v8113, %v8312
      %v8314 = vpop.f32.mrf.mxu0
      %8315 = vmatprep.mubr.bf16.mxu0 0
      %8316 = vmatmul.mubr.bf16.gmra.mxu0 %v8091
      %v8317 = vpop.f32.mrf.mxu0
      %v8318 = vadd.f32 %v8113, %v8317
      %v8319 = vpop.f32.mrf.mxu0
      %v8320 = vpop.f32.mrf.mxu0
      %v8321 = vadd.f32 %v8113, %v8320
      %v8322 = vpop.f32.mrf.mxu0
      %8323 = vdwg.mxu0
      %v8324 = vadd.f32 %v7014, %v8198
      %v8325 = vadd.f32 %v7015, %v8201
      %v8326 = vadd.f32 %v7016, %v8206
      %v8327 = vadd.f32 %v7017, %v8209
      %v8328 = vadd.f32 %v7018, %v8214
      %v8329 = vadd.f32 %v7019, %v8217
      %v8330 = vadd.f32 %v7020, %v8222
      %v8331 = vadd.f32 %v7021, %v8225
      %v8332 = vadd.f32 %v7022, %v8230
      %v8333 = vadd.f32 %v7023, %v8233
      %v8334 = vadd.f32 %v7024, %v8238
      %v8335 = vadd.f32 %v7025, %v8241
      %v8336 = vadd.f32 %v7026, %v8246
      %v8337 = vadd.f32 %v7027, %v8249
      %v8338 = vadd.f32 %v7028, %v8254
      %v8339 = vadd.f32 %v7029, %v8257
      %v8340 = vadd.f32 %v7030, %v8262
      %v8341 = vadd.f32 %v7031, %v8265
      %v8342 = vadd.f32 %v7032, %v8270
      %v8343 = vadd.f32 %v7033, %v8273
      %v8344 = vadd.f32 %v7034, %v8278
      %v8345 = vadd.f32 %v7035, %v8281
      %v8346 = vadd.f32 %v7036, %v8286
      %v8347 = vadd.f32 %v7037, %v8289
      %v8348 = vadd.f32 %v7038, %v8294
      %v8349 = vadd.f32 %v7039, %v8297
      %v8350 = vadd.f32 %v7040, %v8302
      %v8351 = vadd.f32 %v7041, %v8305
      %v8352 = vadd.f32 %v7042, %v8310
      %v8353 = vadd.f32 %v7043, %v8313
      %v8354 = vadd.f32 %v7044, %v8318
      %v8355 = vadd.f32 %v7045, %v8321
      %8356 = vst.msk [vmem:[%s729] sm:$0xff] %vm835, %v8324
      %8357 = vst.msk [vmem:[%s729 + $0x8] sm:$0xff] %vm835, %v8325
      %8358 = vst.msk [vmem:[%s729 + $0x10] sm:$0xff] %vm835, %v8326
      %8359 = vst.msk [vmem:[%s729 + $0x18] sm:$0xff] %vm835, %v8327
      %8360 = vst.msk [vmem:[%s729 + $0x20] sm:$0xff] %vm835, %v8328
      %8361 = vst.msk [vmem:[%s729 + $0x28] sm:$0xff] %vm835, %v8329
      %8362 = vst.msk [vmem:[%s729 + $0x30] sm:$0xff] %vm835, %v8330
      %8363 = vst.msk [vmem:[%s729 + $0x38] sm:$0xff] %vm835, %v8331
      %8364 = vst.msk [vmem:[%s729 + $0x40] sm:$0xff] %vm835, %v8332
      %8365 = vst.msk [vmem:[%s729 + $0x48] sm:$0xff] %vm835, %v8333
      %8366 = vst.msk [vmem:[%s729 + $0x50] sm:$0xff] %vm835, %v8334
      %8367 = vst.msk [vmem:[%s729 + $0x58] sm:$0xff] %vm835, %v8335
      %8368 = vst.msk [vmem:[%s729 + $0x60] sm:$0xff] %vm835, %v8336
      %8369 = vst.msk [vmem:[%s729 + $0x68] sm:$0xff] %vm835, %v8337
      %8370 = vst.msk [vmem:[%s729 + $0x70] sm:$0xff] %vm835, %v8338
      %8371 = vst.msk [vmem:[%s729 + $0x78] sm:$0xff] %vm835, %v8339
      %8372 = vst.msk [vmem:[%s729 + $0x80] sm:$0xff] %vm835, %v8340
      %8373 = vst.msk [vmem:[%s729 + $0x88] sm:$0xff] %vm835, %v8341
      %8374 = vst.msk [vmem:[%s729 + $0x90] sm:$0xff] %vm835, %v8342
      %8375 = vst.msk [vmem:[%s729 + $0x98] sm:$0xff] %vm835, %v8343
      %8376 = vst.msk [vmem:[%s729 + $0xa0] sm:$0xff] %vm835, %v8344
      %8377 = vst.msk [vmem:[%s729 + $0xa8] sm:$0xff] %vm835, %v8345
      %8378 = vst.msk [vmem:[%s729 + $0xb0] sm:$0xff] %vm835, %v8346
      %8379 = vst.msk [vmem:[%s729 + $0xb8] sm:$0xff] %vm835, %v8347
      %8380 = vst.msk [vmem:[%s729 + $0xc0] sm:$0xff] %vm835, %v8348
      %8381 = vst.msk [vmem:[%s729 + $0xc8] sm:$0xff] %vm835, %v8349
      %8382 = vst.msk [vmem:[%s729 + $0xd0] sm:$0xff] %vm835, %v8350
      %8383 = vst.msk [vmem:[%s729 + $0xd8] sm:$0xff] %vm835, %v8351
      %8384 = vst.msk [vmem:[%s729 + $0xe0] sm:$0xff] %vm835, %v8352
      %8385 = vst.msk [vmem:[%s729 + $0xe8] sm:$0xff] %vm835, %v8353
      %8386 = vst.msk [vmem:[%s729 + $0xf0] sm:$0xff] %vm835, %v8354
      %8387 = vst.msk [vmem:[%s729 + $0xf8] sm:$0xff] %vm835, %v8355
      %s8388 = smul.u32 4, %s31
      %p8389 = scmp.lt.s32.totalorder %s30, 1
      %s8390 = scalar_select %p8389, %s30, 1
      %p8391 = scmp.lt.s32.totalorder %s8388, 3
      %s8392 = scalar_select %p8391, %s8388, 3
      %s8393 = smul.addr %s8392, 8
      %s8394 = smul.addr %s8390, 32
      %s8395 = sadd.s32 %s8393, %s8394
      %s8396 = smul.addr %s8395, 8
      %s8397 = scalar_lea.vmem %s14, %s8396
      // Predicated region
      $region81: #{uformer_layer_forward.1} parent=75 // pred_check
        %p8398 = pneg %p430
      $region82: #{uformer_layer_forward.1} parent=75 // pred_check_branch
        %8400 = sbr.rel (%p8398) target = $region84
      $region83: #{uformer_layer_forward.1} parent=75 // pred_region
        %s8401 = smul.u32 4, %s31
      $region84: #{uformer_layer_forward.1} parent=75 // pred_fallthru
        _
    $region76: #{uformer_layer_forward.1} parent=5 // pred_fallthru
      _
    %p8402 = scmp.le.s32.totalorder 2, %s20
    // Predicated region
    $region85: #{uformer_layer_forward.1} parent=5 // pred_check
      %p8403 = pneg %p8402
    $region86: #{uformer_layer_forward.1} parent=5 // pred_check_branch
      %8405 = sbr.rel (%p8403) target = $region88
    $region87: #{uformer_layer_forward.1} parent=5 // pred_region
      %s8406 = ssub.s32 %s20, 2
      // Predicated region
      $region89: #{uformer_layer_forward.1} parent=87 // pred_check
        %p8407 = pneg %p436
      $region90: #{uformer_layer_forward.1} parent=87 // pred_check_branch
        %8409 = sbr.rel (%p8407) target = $region92
      $region91: #{uformer_layer_forward.1} parent=87 // pred_region
        %s8410 = smul.u32 4, %s34
        %p8411 = scmp.lt.s32.totalorder %s33, 1
        %s8412 = scalar_select %p8411, %s33, 1
        %p8413 = scmp.lt.s32.totalorder %s8410, 3
        %s8414 = scalar_select %p8413, %s8410, 3
        %s8415 = smul.addr %s8414, 8
        %s8416 = smul.addr %s8412, 32
        %s8417 = sadd.s32 %s8415, %s8416
        %s8418 = smul.addr %s8417, 8
        %s8419 = scalar_lea.vmem %s14, %s8418
      $region92: #{uformer_layer_forward.1} parent=87 // pred_fallthru
        _
    $region88: #{uformer_layer_forward.1} parent=5 // pred_fallthru
      _
  $region6: #{uformer_layer_forward.1} parent=0 // loop_footer
    %s24 = sadd.s32 1, %s20
  $region7: #{uformer_layer_forward.1} parent=0 // loop_footer_branch
    %19 = sbr.rel target = $region3
  $region8: #{uformer_layer_forward.1} parent=0 // loop_exit
    _

</llo_original>
